<compile_context>
chip_gen: v5e
topology: v5e:2x2
jax: 0.10.0
libtpu: 0.0.40
codegen_flags: <defaults>
</compile_context>

<pallas_src>
import numpy as np
import jax
import jax.numpy as jnp
from jax import lax
from jax.experimental import pallas as pl
from jax.experimental.pallas import tpu as pltpu

_EPS = 1e-5


# ----------------------------------------------------------------------------
# Pallas kernel: fused conv-as-matmul (+ optional gating) + CumulativeLN + PReLU
# ----------------------------------------------------------------------------
def _make_fused_kernel(Cout, gated):
    def kernel(p_ref, w_ref, prm_ref, mc_ref, ms_ref, o_ref):
        # p_ref  : (1, K, N)    bf16 im2col patches, lane index p = t*F_out + f
        # w_ref  : (Co_tot, K)  bf16 weight matrix
        # prm_ref: (Co_tot, 4)  f32 packed [bias | gain | beta | alpha]
        # mc_ref : (N, T)       f32 causal mask scaled by 1/((t+1)*Cout*F_out)
        # ms_ref : (T, N)       f32 "same time step" indicator
        # o_ref  : (1, Cout, N) f32
        acc = jnp.dot(w_ref[...], p_ref[0],
                      preferred_element_type=jnp.float32)          # (Co_tot, N)
        acc = acc + prm_ref[:, 0:1]                                 # conv bias

        if gated:
            y = acc[:Cout, :] * jax.nn.sigmoid(acc[Cout:, :])       # (Cout, N)
        else:
            y = acc

        # Cumulative layer norm over (C, F), cumulative along time.
        # Channel reduce on the VPU/XLU; causal time reduce as one MXU matmul
        # against the pre-scaled mask (gives mean and E[x^2] directly).
        cs = jnp.sum(y, axis=0, keepdims=True)                      # (1, N)
        cp = jnp.sum(y * y, axis=0, keepdims=True)                  # (1, N)
        stats = jnp.concatenate([cs, cp], axis=0)                   # (2, N)
        mm = jnp.dot(stats, mc_ref[...],
                     preferred_element_type=jnp.float32)            # (2, T)
        mean = mm[0:1, :]
        var = mm[1:2, :] - mean * mean
        inv_std = lax.rsqrt(var + _EPS)                             # EUP, not a divide
        st = jnp.concatenate([mean, inv_std], axis=0)               # (2, T)
        lane = jnp.dot(st, ms_ref[...],
                       preferred_element_type=jnp.float32)          # (2, N) per-lane stats

        gain = prm_ref[:Cout, 1:2]
        beta = prm_ref[:Cout, 2:3]
        alpha = prm_ref[:Cout, 3:4]
        z = (y - lane[0:1, :]) * lane[1:2, :] * gain + beta
        z = jnp.where(z > 0, z, alpha * z)                          # PReLU
        o_ref[0] = z

    return kernel


# ----------------------------------------------------------------------------
# Layout plumbing (plain JAX) + pallas_call wrapper
# ----------------------------------------------------------------------------
def _cln_consts(T, F_out, Cout):
    N = T * F_out
    t_of_lane = np.arange(N) // F_out
    t_idx = np.arange(T)
    cnt = ((t_idx + 1) * Cout * F_out).astype(np.float32)
    mc = (t_of_lane[:, None] <= t_idx[None, :]).astype(np.float32) / cnt[None, :]
    ms = (t_idx[:, None] == t_of_lane[None, :]).astype(np.float32)
    return jnp.asarray(mc), jnp.asarray(ms)


def _im2col(x_pre, kt, kf, stride_f):
    # x_pre: (B, C, T_pad, F_eff) already padded -> P (B, K, N), K order = (dt, df, ci)
    B, C, T_pad, F_eff = x_pre.shape
    T = T_pad - (kt - 1)
    F_out = (F_eff - kf) // stride_f + 1
    tI = np.arange(T)[:, None] + np.arange(kt)[None, :]                  # (T, kt)
    fI = np.arange(F_out)[:, None] * stride_f + np.arange(kf)[None, :]   # (F_out, kf)
    g = x_pre[:, :, tI[:, :, None, None], fI[None, None, :, :]]   # (B,C,T,kt,F_out,kf)
    g = jnp.transpose(g, (0, 3, 5, 1, 2, 4))                      # (B,kt,kf,C,T,F_out)
    return g.reshape(B, kt * kf * C, T * F_out), T, F_out


def _pack_params(b, gain, beta, alpha, Co_tot):
    def pad(v):
        return jnp.pad(v, (0, Co_tot - v.shape[0]))
    return jnp.stack([b, pad(gain), pad(beta), pad(alpha)], axis=1).astype(jnp.float32)


def _run_fused_layer(x_pre, w_mat, prm, kt, kf, stride_f, Cout, gated):
    B = x_pre.shape[0]
    Co_tot = w_mat.shape[0]
    P, T, F_out = _im2col(x_pre, kt, kf, stride_f)
    K = P.shape[1]
    N = T * F_out
    mc, ms = _cln_consts(T, F_out, Cout)

    out = pl.pallas_call(
        _make_fused_kernel(Cout, gated),
        out_shape=jax.ShapeDtypeStruct((B, Cout, N), jnp.float32),
        grid_spec=pltpu.PrefetchScalarGridSpec(
            num_scalar_prefetch=0,
            grid=(B,),
            in_specs=[
                pl.BlockSpec((1, K, N), lambda bi: (bi, 0, 0)),
                pl.BlockSpec((Co_tot, K), lambda bi: (0, 0)),
                pl.BlockSpec((Co_tot, 4), lambda bi: (0, 0)),
                pl.BlockSpec((N, T), lambda bi: (0, 0)),
                pl.BlockSpec((T, N), lambda bi: (0, 0)),
            ],
            out_specs=pl.BlockSpec((1, Cout, N), lambda bi: (bi, 0, 0)),
        ),
        compiler_params=pltpu.CompilerParams(
            dimension_semantics=("parallel",)),
    )(P.astype(jnp.bfloat16), w_mat.astype(jnp.bfloat16), prm, mc, ms)
    return out.reshape(B, Cout, T, F_out)


def conv_unit(x, p, *, gated):
    # (Gate)Conv2d(stride=(1,2), causal time pad) + CumulativeLayerNorm2d + PReLU
    w = p['w']                                    # torch layout (Co_tot, Cin, kt, kf)
    Co_tot, Cin, kt, kf = w.shape
    Cout = Co_tot // 2 if gated else Co_tot
    if kt > 1:
        x = jnp.pad(x, ((0, 0), (0, 0), (kt - 1, 0), (0, 0)))
    w_mat = jnp.transpose(w, (0, 2, 3, 1)).reshape(Co_tot, kt * kf * Cin)
    prm = _pack_params(p['b'], p['gain'], p['beta'], p['alpha'], Co_tot)
    return _run_fused_layer(x, w_mat, prm, kt, kf, 2, Cout, gated)


def deconv_unit(x, p):
    # ConvTranspose2d(stride=(1,2)) [+ Chomp_T(kt-1)] + CumulativeLayerNorm2d + PReLU.
    # Expressed exactly as a stride-1 conv over the zero-upsampled, edge-padded
    # input with the transposed & spatially-flipped kernel.
    w_t = p['w']                                  # torch layout (Cin, Cout, kt, kf)
    Cin, Cout, kt, kf = w_t.shape
    if kt > 1:
        x = jnp.pad(x, ((0, 0), (0, 0), (kt - 1, 0), (0, 0)))
    B, C, Tp, F = x.shape
    up = jnp.stack([x, jnp.zeros_like(x)], axis=-1).reshape(B, C, Tp, 2 * F)
    up = up[..., : 2 * F - 1]
    up = jnp.pad(up, ((0, 0), (0, 0), (0, 0), (kf - 1, kf - 1)))
    wc = jnp.flip(jnp.transpose(w_t, (1, 0, 2, 3)), axis=(2, 3))  # (Cout, Cin, kt, kf)
    w_mat = jnp.transpose(wc, (0, 2, 3, 1)).reshape(Cout, kt * kf * Cin)
    prm = _pack_params(p['b'], p['gain'], p['beta'], p['alpha'], Cout)
    return _run_fused_layer(up, w_mat, prm, kt, kf, 1, Cout, gated=False)


# ----------------------------------------------------------------------------
# U2Net_Encoder forward (Pallas path), NCHW everywhere
# ----------------------------------------------------------------------------
def en_unet_module(x, mp, intra_connect):
    x_resi = conv_unit(x, mp['in_conv'], gated=True)
    x = x_resi
    x_list = []
    for ep in mp['enco']:
        x = conv_unit(x, ep, gated=False)
        x_list.append(x)
    for i, dp in enumerate(mp['deco']):
        if i == 0:
            inp = x
        else:
            aux = x_list[-(i + 1)]
            inp = jnp.concatenate([x, aux], axis=1) if intra_connect == 'cat' else x + aux
        x = deconv_unit(inp, dp)
    return x_resi + x


def u2net_encoder_forward(x, params, intra_connect):
    en_list = []
    for mp in params['modules']:
        x = en_unet_module(x, mp, intra_connect)
        en_list.append(x)
    x = conv_unit(x, params['last'], gated=True)
    en_list.append(x)
    return x, en_list


# ----------------------------------------------------------------------------
# Deterministic parameter init (matches the PyTorch module's parameter shapes)
# ----------------------------------------------------------------------------
def init_params(key, cin, c, k1, k2, intra_connect):
    c_last = 64
    kernel_begin = (2, 5)
    kit = iter(jax.random.split(key, 128))

    def conv_p(ci, co, k, gated):
        co_tot = 2 * co if gated else co
        kt, kf = k
        w = jax.random.normal(next(kit), (co_tot, ci, kt, kf), jnp.float32)
        w = w / np.sqrt(ci * kt * kf)
        b = jax.random.normal(next(kit), (co_tot,), jnp.float32) * 0.05
        return {'w': w, 'b': b,
                'gain': jnp.ones((co,), jnp.float32),
                'beta': jnp.zeros((co,), jnp.float32),
                'alpha': jnp.full((co,), 0.25, jnp.float32)}

    def deconv_p(ci, co, k):
        kt, kf = k
        w = jax.random.normal(next(kit), (ci, co, kt, kf), jnp.float32)
        w = w / np.sqrt(ci * kt * kf)
        b = jax.random.normal(next(kit), (co,), jnp.float32) * 0.05
        return {'w': w, 'b': b,
                'gain': jnp.ones((co,), jnp.float32),
                'beta': jnp.zeros((co,), jnp.float32),
                'alpha': jnp.full((co,), 0.25, jnp.float32)}

    modules = []
    for ci_mod, k_in, scale in [(cin, kernel_begin, 4), (c, k1, 3), (c, k1, 2), (c, k1, 1)]:
        mp = {'in_conv': conv_p(ci_mod, c, k_in, True),
              'enco': [conv_p(c, c, k2, False) for _ in range(scale)],
              'deco': [deconv_p(c if (i == 0 or intra_connect == 'add') else 2 * c, c, k2)
                       for i in range(scale)]}
        modules.append(mp)
    return {'modules': modules, 'last': conv_p(c, c_last, k1, True)}


# ----------------------------------------------------------------------------
# Pure-JAX reference mirroring the PyTorch forward (same bf16 MXU-operand cast)
# ----------------------------------------------------------------------------
def _ref_cln_prelu(y, gain, beta, alpha):
    _, C, T, F = y.shape
    step_sum = jnp.sum(y, axis=(1, 3), keepdims=True)
    step_pow = jnp.sum(y * y, axis=(1, 3), keepdims=True)
    cum_sum = jnp.cumsum(step_sum, axis=2)
    cum_pow = jnp.cumsum(step_pow, axis=2)
    cnt = (jnp.arange(1, T + 1, dtype=jnp.float32) * (C * F)).reshape(1, 1, T, 1)
    mean = cum_sum / cnt
    var = (cum_pow - 2.0 * mean * cum_sum) / cnt + mean * mean
    y = (y - mean) * lax.rsqrt(var + _EPS)
    y = y * gain[None, :, None, None] + beta[None, :, None, None]
    return jnp.where(y > 0, y, alpha[None, :, None, None] * y)


def _ref_conv_unit(x, p, *, gated):
    w = p['w']
    Co_tot, Cin, kt, kf = w.shape
    if kt > 1:
        x = jnp.pad(x, ((0, 0), (0, 0), (kt - 1, 0), (0, 0)))
    y = lax.conv_general_dilated(
        x.astype(jnp.bfloat16), w.astype(jnp.bfloat16),
        window_strides=(1, 2), padding='VALID',
        dimension_numbers=('NCHW', 'OIHW', 'NCHW'),
        preferred_element_type=jnp.float32)
    y = y + p['b'][None, :, None, None]
    if gated:
        Cout = Co_tot // 2
        y = y[:, :Cout] * jax.nn.sigmoid(y[:, Cout:])
    return _ref_cln_prelu(y, p['gain'], p['beta'], p['alpha'])


def _ref_deconv_unit(x, p):
    w_t = p['w']
    Cin, Cout, kt, kf = w_t.shape
    wc = jnp.flip(jnp.transpose(w_t, (1, 0, 2, 3)), axis=(2, 3))
    y = lax.conv_general_dilated(
        x.astype(jnp.bfloat16), wc.astype(jnp.bfloat16),
        window_strides=(1, 1), padding=((kt - 1, 0), (kf - 1, kf - 1)),
        lhs_dilation=(1, 2),
        dimension_numbers=('NCHW', 'OIHW', 'NCHW'),
        preferred_element_type=jnp.float32)
    y = y + p['b'][None, :, None, None]
    return _ref_cln_prelu(y, p['gain'], p['beta'], p['alpha'])


def _ref_module(x, mp, intra_connect):
    x_resi = _ref_conv_unit(x, mp['in_conv'], gated=True)
    x = x_resi
    xl = []
    for ep in mp['enco']:
        x = _ref_conv_unit(x, ep, gated=False)
        xl.append(x)
    for i, dp in enumerate(mp['deco']):
        if i == 0:
            inp = x
        else:
            aux = xl[-(i + 1)]
            inp = jnp.concatenate([x, aux], axis=1) if intra_connect == 'cat' else x + aux
        x = _ref_deconv_unit(inp, dp)
    return x_resi + x


def ref_forward(x, params, intra_connect):
    en = []
    for mp in params['modules']:
        x = _ref_module(x, mp, intra_connect)
        en.append(x)
    x = _ref_conv_unit(x, params['last'], gated=True)
    en.append(x)
    return x, en


# ----------------------------------------------------------------------------
if __name__ == "__main__":
    key = jax.random.PRNGKey(0)

    # Small config consistent with U2Net_Encoder(cin=2, k1=(2,3), k2=(1,3), c=16, 'cat').
    # F=65 keeps every inner-UNet conv/deconv frequency shape consistent:
    # 65 -> 31 -> 15 -> 7 -> 3 -> 1 (and the deconvs reverse it exactly).
    B, T, F = 2, 8, 65
    cin, c = 2, 16
    k1, k2 = (2, 3), (1, 3)
    intra_connect = 'cat'

    params = init_params(key, cin, c, k1, k2, intra_connect)
    x = jax.random.normal(jax.random.fold_in(key, 123), (B, cin, T, F), jnp.float32)

    fwd = jax.jit(lambda xx, pp: u2net_encoder_forward(xx, pp, intra_connect))
    x_out, en_list = fwd(x, params)
    jax.block_until_ready(x_out)

    ref = jax.jit(lambda xx, pp: ref_forward(xx, pp, intra_connect))
    x_ref, en_ref = ref(x, params)
    jax.block_until_ready(x_ref)

    np.testing.assert_allclose(np.asarray(x_out), np.asarray(x_ref), atol=2e-2, rtol=2e-2)
    for a, r in zip(en_list, en_ref):
        np.testing.assert_allclose(np.asarray(a), np.asarray(r), atol=2e-2, rtol=2e-2)

    print("KERNEL_OK")
</pallas_src>

<mosaic_0001>
module attributes {stable_mosaic.version = 11 : i64} {
  func.func @kernel(%arg0: i32, %arg1: memref<1x20x248xbf16, #tpu.memory_space<vmem>>, %arg2: memref<32x20xbf16, #tpu.memory_space<vmem>>, %arg3: memref<32x4xf32, #tpu.memory_space<vmem>>, %arg4: memref<248x8xf32, #tpu.memory_space<vmem>>, %arg5: memref<8x248xf32, #tpu.memory_space<vmem>>, %arg6: memref<1x16x248xf32, #tpu.memory_space<vmem>>) attributes {dimension_semantics = [#tpu.dimension_semantics<parallel>], iteration_bounds = array<i64: 2>, scalar_prefetch = 0 : i64, scratch_operands = 0 : i64, tpu.core_type = #tpu.core_type<tc>, window_params = [{transform_indices = @transform_0, window_bounds = array<i64: 1, 20, 248>}, {pipeline_mode = #tpu.pipeline_mode<synchronous>, transform_indices = @transform_1, window_bounds = array<i64: 32, 20>}, {pipeline_mode = #tpu.pipeline_mode<synchronous>, transform_indices = @transform_2, window_bounds = array<i64: 32, 4>}, {pipeline_mode = #tpu.pipeline_mode<synchronous>, transform_indices = @transform_3, window_bounds = array<i64: 248, 8>}, {pipeline_mode = #tpu.pipeline_mode<synchronous>, transform_indices = @transform_4, window_bounds = array<i64: 8, 248>}, {transform_indices = @transform_5, window_bounds = array<i64: 1, 16, 248>}]} {
    %c0 = arith.constant 0 : index
    %c0_0 = arith.constant 0 : index
    %0 = vector.load %arg2[%c0, %c0_0] : memref<32x20xbf16, #tpu.memory_space<vmem>>, vector<32x20xbf16>
    %c0_1 = arith.constant 0 : index
    %c0_2 = arith.constant 0 : index
    %c0_3 = arith.constant 0 : index
    %1 = vector.load %arg1[%c0_1, %c0_2, %c0_3] : memref<1x20x248xbf16, #tpu.memory_space<vmem>>, vector<1x20x248xbf16>
    %2 = vector.shape_cast %1 : vector<1x20x248xbf16> to vector<20x248xbf16>
    %cst = arith.constant dense<0.000000e+00> : vector<32x248xf32>
    %3 = tpu.matmul %0, %2, %cst {dimension_numbers = #tpu.dot_dimension_numbers<[1], [0], [0], [1], [0, 0, 1, 1], [], []>} : vector<32x20xbf16>, vector<20x248xbf16>, vector<32x248xf32> -> vector<32x248xf32>
    %c0_4 = arith.constant 0 : index
    %c0_5 = arith.constant 0 : index
    %4 = vector.load %arg3[%c0_4, %c0_5] : memref<32x4xf32, #tpu.memory_space<vmem>>, vector<32x1xf32>
    %5 = vector.broadcast %4 : vector<32x1xf32> to vector<32x248xf32>
    %6 = arith.addf %3, %5 : vector<32x248xf32>
    %7 = vector.extract_strided_slice %6 {offsets = [0, 0], sizes = [16, 248], strides = [1, 1]} : vector<32x248xf32> to vector<16x248xf32>
    %8 = vector.extract_strided_slice %6 {offsets = [16, 0], sizes = [16, 248], strides = [1, 1]} : vector<32x248xf32> to vector<16x248xf32>
    %9 = arith.negf %8 : vector<16x248xf32>
    %10 = math.exp %9 : vector<16x248xf32>
    %cst_6 = arith.constant 1.000000e+00 : f32
    %11 = vector.broadcast %cst_6 : f32 to vector<16x248xf32>
    %12 = arith.addf %11, %10 : vector<16x248xf32>
    %13 = arith.divf %11, %12 : vector<16x248xf32>
    %14 = arith.mulf %7, %13 : vector<16x248xf32>
    %cst_7 = arith.constant dense<0.000000e+00> : vector<248xf32>
    %15 = vector.multi_reduction <add>, %14, %cst_7 [0] : vector<16x248xf32> to vector<248xf32>
    %16 = vector.shape_cast %15 : vector<248xf32> to vector<1x248xf32>
    %17 = arith.mulf %14, %14 : vector<16x248xf32>
    %cst_8 = arith.constant dense<0.000000e+00> : vector<248xf32>
    %18 = vector.multi_reduction <add>, %17, %cst_8 [0] : vector<16x248xf32> to vector<248xf32>
    %19 = vector.shape_cast %18 : vector<248xf32> to vector<1x248xf32>
    %20 = tpu.concatenate %16, %19 in 0 : vector<1x248xf32>, vector<1x248xf32> -> vector<2x248xf32>
    %c0_9 = arith.constant 0 : index
    %c0_10 = arith.constant 0 : index
    %21 = vector.load %arg4[%c0_9, %c0_10] : memref<248x8xf32, #tpu.memory_space<vmem>>, vector<248x8xf32>
    %cst_11 = arith.constant dense<0.000000e+00> : vector<2x8xf32>
    %22 = tpu.matmul %20, %21, %cst_11 {dimension_numbers = #tpu.dot_dimension_numbers<[1], [0], [0], [1], [0, 0, 1, 1], [], []>} : vector<2x248xf32>, vector<248x8xf32>, vector<2x8xf32> -> vector<2x8xf32>
    %23 = vector.extract_strided_slice %22 {offsets = [0, 0], sizes = [1, 8], strides = [1, 1]} : vector<2x8xf32> to vector<1x8xf32>
    %24 = vector.extract_strided_slice %22 {offsets = [1, 0], sizes = [1, 8], strides = [1, 1]} : vector<2x8xf32> to vector<1x8xf32>
    %25 = arith.mulf %23, %23 : vector<1x8xf32>
    %26 = arith.subf %24, %25 : vector<1x8xf32>
    %cst_12 = arith.constant 9.99999974E-6 : f32
    %27 = vector.broadcast %cst_12 : f32 to vector<1x8xf32>
    %28 = arith.addf %26, %27 : vector<1x8xf32>
    %29 = math.rsqrt %28 : vector<1x8xf32>
    %30 = tpu.concatenate %23, %29 in 0 : vector<1x8xf32>, vector<1x8xf32> -> vector<2x8xf32>
    %c0_13 = arith.constant 0 : index
    %c0_14 = arith.constant 0 : index
    %31 = vector.load %arg5[%c0_13, %c0_14] : memref<8x248xf32, #tpu.memory_space<vmem>>, vector<8x248xf32>
    %cst_15 = arith.constant dense<0.000000e+00> : vector<2x248xf32>
    %32 = tpu.matmul %30, %31, %cst_15 {dimension_numbers = #tpu.dot_dimension_numbers<[1], [0], [0], [1], [0, 0, 1, 1], [], []>} : vector<2x8xf32>, vector<8x248xf32>, vector<2x248xf32> -> vector<2x248xf32>
    %c0_16 = arith.constant 0 : index
    %c1 = arith.constant 1 : index
    %33 = vector.load %arg3[%c0_16, %c1] : memref<32x4xf32, #tpu.memory_space<vmem>>, vector<16x1xf32>
    %c0_17 = arith.constant 0 : index
    %c2 = arith.constant 2 : index
    %34 = vector.load %arg3[%c0_17, %c2] : memref<32x4xf32, #tpu.memory_space<vmem>>, vector<16x1xf32>
    %c0_18 = arith.constant 0 : index
    %c3 = arith.constant 3 : index
    %35 = vector.load %arg3[%c0_18, %c3] : memref<32x4xf32, #tpu.memory_space<vmem>>, vector<16x1xf32>
    %36 = vector.extract_strided_slice %32 {offsets = [0, 0], sizes = [1, 248], strides = [1, 1]} : vector<2x248xf32> to vector<1x248xf32>
    %37 = vector.broadcast %36 : vector<1x248xf32> to vector<16x248xf32>
    %38 = arith.subf %14, %37 : vector<16x248xf32>
    %39 = vector.extract_strided_slice %32 {offsets = [1, 0], sizes = [1, 248], strides = [1, 1]} : vector<2x248xf32> to vector<1x248xf32>
    %40 = vector.broadcast %39 : vector<1x248xf32> to vector<16x248xf32>
    %41 = arith.mulf %38, %40 : vector<16x248xf32>
    %42 = vector.broadcast %33 : vector<16x1xf32> to vector<16x248xf32>
    %43 = arith.mulf %41, %42 : vector<16x248xf32>
    %44 = vector.broadcast %34 : vector<16x1xf32> to vector<16x248xf32>
    %45 = arith.addf %43, %44 : vector<16x248xf32>
    %cst_19 = arith.constant 0.000000e+00 : f32
    %46 = vector.broadcast %cst_19 : f32 to vector<16x248xf32>
    %47 = arith.cmpf ogt, %45, %46 : vector<16x248xf32>
    %48 = vector.broadcast %35 : vector<16x1xf32> to vector<16x248xf32>
    %49 = arith.mulf %48, %45 : vector<16x248xf32>
    %50 = arith.select %47, %45, %49 : vector<16x248xi1>, vector<16x248xf32>
    %c0_20 = arith.constant 0 : index
    %c0_21 = arith.constant 0 : index
    %c0_22 = arith.constant 0 : index
    %51 = vector.load %arg6[%c0_20, %c0_21, %c0_22] : memref<1x16x248xf32, #tpu.memory_space<vmem>>, vector<1x16x248xf32>
    %52 = vector.shape_cast %51 : vector<1x16x248xf32> to vector<16x248xf32>
    %53 = vector.shape_cast %50 : vector<16x248xf32> to vector<1x16x248xf32>
    tpu.vector_store %arg6[%c0_20, %c0_21, %c0_22], %53 {strides = array<i32>} : memref<1x16x248xf32, #tpu.memory_space<vmem>>, vector<1x16x248xf32>,
    return
  }
  func.func @transform_0(%arg0: i32) -> (i32, i32, i32) {
    %c0_i32 = arith.constant 0 : i32
    %c0_i32_0 = arith.constant 0 : i32
    %c0_i32_1 = arith.constant 0 : i32
    return %arg0, %c0_i32, %c0_i32_0 : i32, i32, i32
  }
  func.func @transform_1(%arg0: i32) -> (i32, i32) {
    %c0_i32 = arith.constant 0 : i32
    %c0_i32_0 = arith.constant 0 : i32
    %c0_i32_1 = arith.constant 0 : i32
    return %c0_i32, %c0_i32_0 : i32, i32
  }
  func.func @transform_2(%arg0: i32) -> (i32, i32) {
    %c0_i32 = arith.constant 0 : i32
    %c0_i32_0 = arith.constant 0 : i32
    %c0_i32_1 = arith.constant 0 : i32
    return %c0_i32, %c0_i32_0 : i32, i32
  }
  func.func @transform_3(%arg0: i32) -> (i32, i32) {
    %c0_i32 = arith.constant 0 : i32
    %c0_i32_0 = arith.constant 0 : i32
    %c0_i32_1 = arith.constant 0 : i32
    return %c0_i32, %c0_i32_0 : i32, i32
  }
  func.func @transform_4(%arg0: i32) -> (i32, i32) {
    %c0_i32 = arith.constant 0 : i32
    %c0_i32_0 = arith.constant 0 : i32
    %c0_i32_1 = arith.constant 0 : i32
    return %c0_i32, %c0_i32_0 : i32, i32
  }
  func.func @transform_5(%arg0: i32) -> (i32, i32, i32) {
    %c0_i32 = arith.constant 0 : i32
    %c0_i32_0 = arith.constant 0 : i32
    %c0_i32_1 = arith.constant 0 : i32
    return %arg0, %c0_i32, %c0_i32_0 : i32, i32, i32
  }
}

module attributes {stable_mosaic.version = 11 : i64} {
  func.func @kernel(%arg0: i32, %arg1: memref<1x48x120xbf16, #tpu.memory_space<vmem>>, %arg2: memref<16x48xbf16, #tpu.memory_space<vmem>>, %arg3: memref<16x4xf32, #tpu.memory_space<vmem>>, %arg4: memref<120x8xf32, #tpu.memory_space<vmem>>, %arg5: memref<8x120xf32, #tpu.memory_space<vmem>>, %arg6: memref<1x16x120xf32, #tpu.memory_space<vmem>>) attributes {dimension_semantics = [#tpu.dimension_semantics<parallel>], iteration_bounds = array<i64: 2>, scalar_prefetch = 0 : i64, scratch_operands = 0 : i64, tpu.core_type = #tpu.core_type<tc>, window_params = [{transform_indices = @transform_0, window_bounds = array<i64: 1, 48, 120>}, {pipeline_mode = #tpu.pipeline_mode<synchronous>, transform_indices = @transform_1, window_bounds = array<i64: 16, 48>}, {pipeline_mode = #tpu.pipeline_mode<synchronous>, transform_indices = @transform_2, window_bounds = array<i64: 16, 4>}, {pipeline_mode = #tpu.pipeline_mode<synchronous>, transform_indices = @transform_3, window_bounds = array<i64: 120, 8>}, {pipeline_mode = #tpu.pipeline_mode<synchronous>, transform_indices = @transform_4, window_bounds = array<i64: 8, 120>}, {transform_indices = @transform_5, window_bounds = array<i64: 1, 16, 120>}]} {
    %c0 = arith.constant 0 : index
    %c0_0 = arith.constant 0 : index
    %0 = vector.load %arg2[%c0, %c0_0] : memref<16x48xbf16, #tpu.memory_space<vmem>>, vector<16x48xbf16>
    %c0_1 = arith.constant 0 : index
    %c0_2 = arith.constant 0 : index
    %c0_3 = arith.constant 0 : index
    %1 = vector.load %arg1[%c0_1, %c0_2, %c0_3] : memref<1x48x120xbf16, #tpu.memory_space<vmem>>, vector<1x48x120xbf16>
    %2 = vector.shape_cast %1 : vector<1x48x120xbf16> to vector<48x120xbf16>
    %cst = arith.constant dense<0.000000e+00> : vector<16x120xf32>
    %3 = tpu.matmul %0, %2, %cst {dimension_numbers = #tpu.dot_dimension_numbers<[1], [0], [0], [1], [0, 0, 1, 1], [], []>} : vector<16x48xbf16>, vector<48x120xbf16>, vector<16x120xf32> -> vector<16x120xf32>
    %c0_4 = arith.constant 0 : index
    %c0_5 = arith.constant 0 : index
    %4 = vector.load %arg3[%c0_4, %c0_5] : memref<16x4xf32, #tpu.memory_space<vmem>>, vector<16x1xf32>
    %5 = vector.broadcast %4 : vector<16x1xf32> to vector<16x120xf32>
    %6 = arith.addf %3, %5 : vector<16x120xf32>
    %cst_6 = arith.constant dense<0.000000e+00> : vector<120xf32>
    %7 = vector.multi_reduction <add>, %6, %cst_6 [0] : vector<16x120xf32> to vector<120xf32>
    %8 = vector.shape_cast %7 : vector<120xf32> to vector<1x120xf32>
    %9 = arith.mulf %6, %6 : vector<16x120xf32>
    %cst_7 = arith.constant dense<0.000000e+00> : vector<120xf32>
    %10 = vector.multi_reduction <add>, %9, %cst_7 [0] : vector<16x120xf32> to vector<120xf32>
    %11 = vector.shape_cast %10 : vector<120xf32> to vector<1x120xf32>
    %12 = tpu.concatenate %8, %11 in 0 : vector<1x120xf32>, vector<1x120xf32> -> vector<2x120xf32>
    %c0_8 = arith.constant 0 : index
    %c0_9 = arith.constant 0 : index
    %13 = vector.load %arg4[%c0_8, %c0_9] : memref<120x8xf32, #tpu.memory_space<vmem>>, vector<120x8xf32>
    %cst_10 = arith.constant dense<0.000000e+00> : vector<2x8xf32>
    %14 = tpu.matmul %12, %13, %cst_10 {dimension_numbers = #tpu.dot_dimension_numbers<[1], [0], [0], [1], [0, 0, 1, 1], [], []>} : vector<2x120xf32>, vector<120x8xf32>, vector<2x8xf32> -> vector<2x8xf32>
    %15 = vector.extract_strided_slice %14 {offsets = [0, 0], sizes = [1, 8], strides = [1, 1]} : vector<2x8xf32> to vector<1x8xf32>
    %16 = vector.extract_strided_slice %14 {offsets = [1, 0], sizes = [1, 8], strides = [1, 1]} : vector<2x8xf32> to vector<1x8xf32>
    %17 = arith.mulf %15, %15 : vector<1x8xf32>
    %18 = arith.subf %16, %17 : vector<1x8xf32>
    %cst_11 = arith.constant 9.99999974E-6 : f32
    %19 = vector.broadcast %cst_11 : f32 to vector<1x8xf32>
    %20 = arith.addf %18, %19 : vector<1x8xf32>
    %21 = math.rsqrt %20 : vector<1x8xf32>
    %22 = tpu.concatenate %15, %21 in 0 : vector<1x8xf32>, vector<1x8xf32> -> vector<2x8xf32>
    %c0_12 = arith.constant 0 : index
    %c0_13 = arith.constant 0 : index
    %23 = vector.load %arg5[%c0_12, %c0_13] : memref<8x120xf32, #tpu.memory_space<vmem>>, vector<8x120xf32>
    %cst_14 = arith.constant dense<0.000000e+00> : vector<2x120xf32>
    %24 = tpu.matmul %22, %23, %cst_14 {dimension_numbers = #tpu.dot_dimension_numbers<[1], [0], [0], [1], [0, 0, 1, 1], [], []>} : vector<2x8xf32>, vector<8x120xf32>, vector<2x120xf32> -> vector<2x120xf32>
    %c0_15 = arith.constant 0 : index
    %c1 = arith.constant 1 : index
    %25 = vector.load %arg3[%c0_15, %c1] : memref<16x4xf32, #tpu.memory_space<vmem>>, vector<16x1xf32>
    %c0_16 = arith.constant 0 : index
    %c2 = arith.constant 2 : index
    %26 = vector.load %arg3[%c0_16, %c2] : memref<16x4xf32, #tpu.memory_space<vmem>>, vector<16x1xf32>
    %c0_17 = arith.constant 0 : index
    %c3 = arith.constant 3 : index
    %27 = vector.load %arg3[%c0_17, %c3] : memref<16x4xf32, #tpu.memory_space<vmem>>, vector<16x1xf32>
    %28 = vector.extract_strided_slice %24 {offsets = [0, 0], sizes = [1, 120], strides = [1, 1]} : vector<2x120xf32> to vector<1x120xf32>
    %29 = vector.broadcast %28 : vector<1x120xf32> to vector<16x120xf32>
    %30 = arith.subf %6, %29 : vector<16x120xf32>
    %31 = vector.extract_strided_slice %24 {offsets = [1, 0], sizes = [1, 120], strides = [1, 1]} : vector<2x120xf32> to vector<1x120xf32>
    %32 = vector.broadcast %31 : vector<1x120xf32> to vector<16x120xf32>
    %33 = arith.mulf %30, %32 : vector<16x120xf32>
    %34 = vector.broadcast %25 : vector<16x1xf32> to vector<16x120xf32>
    %35 = arith.mulf %33, %34 : vector<16x120xf32>
    %36 = vector.broadcast %26 : vector<16x1xf32> to vector<16x120xf32>
    %37 = arith.addf %35, %36 : vector<16x120xf32>
    %cst_18 = arith.constant 0.000000e+00 : f32
    %38 = vector.broadcast %cst_18 : f32 to vector<16x120xf32>
    %39 = arith.cmpf ogt, %37, %38 : vector<16x120xf32>
    %40 = vector.broadcast %27 : vector<16x1xf32> to vector<16x120xf32>
    %41 = arith.mulf %40, %37 : vector<16x120xf32>
    %42 = arith.select %39, %37, %41 : vector<16x120xi1>, vector<16x120xf32>
    %c0_19 = arith.constant 0 : index
    %c0_20 = arith.constant 0 : index
    %c0_21 = arith.constant 0 : index
    %43 = vector.load %arg6[%c0_19, %c0_20, %c0_21] : memref<1x16x120xf32, #tpu.memory_space<vmem>>, vector<1x16x120xf32>
    %44 = vector.shape_cast %43 : vector<1x16x120xf32> to vector<16x120xf32>
    %45 = vector.shape_cast %42 : vector<16x120xf32> to vector<1x16x120xf32>
    tpu.vector_store %arg6[%c0_19, %c0_20, %c0_21], %45 {strides = array<i32>} : memref<1x16x120xf32, #tpu.memory_space<vmem>>, vector<1x16x120xf32>,
    return
  }
  func.func @transform_0(%arg0: i32) -> (i32, i32, i32) {
    %c0_i32 = arith.constant 0 : i32
    %c0_i32_0 = arith.constant 0 : i32
    %c0_i32_1 = arith.constant 0 : i32
    return %arg0, %c0_i32, %c0_i32_0 : i32, i32, i32
  }
  func.func @transform_1(%arg0: i32) -> (i32, i32) {
    %c0_i32 = arith.constant 0 : i32
    %c0_i32_0 = arith.constant 0 : i32
    %c0_i32_1 = arith.constant 0 : i32
    return %c0_i32, %c0_i32_0 : i32, i32
  }
  func.func @transform_2(%arg0: i32) -> (i32, i32) {
    %c0_i32 = arith.constant 0 : i32
    %c0_i32_0 = arith.constant 0 : i32
    %c0_i32_1 = arith.constant 0 : i32
    return %c0_i32, %c0_i32_0 : i32, i32
  }
  func.func @transform_3(%arg0: i32) -> (i32, i32) {
    %c0_i32 = arith.constant 0 : i32
    %c0_i32_0 = arith.constant 0 : i32
    %c0_i32_1 = arith.constant 0 : i32
    return %c0_i32, %c0_i32_0 : i32, i32
  }
  func.func @transform_4(%arg0: i32) -> (i32, i32) {
    %c0_i32 = arith.constant 0 : i32
    %c0_i32_0 = arith.constant 0 : i32
    %c0_i32_1 = arith.constant 0 : i32
    return %c0_i32, %c0_i32_0 : i32, i32
  }
  func.func @transform_5(%arg0: i32) -> (i32, i32, i32) {
    %c0_i32 = arith.constant 0 : i32
    %c0_i32_0 = arith.constant 0 : i32
    %c0_i32_1 = arith.constant 0 : i32
    return %arg0, %c0_i32, %c0_i32_0 : i32, i32, i32
  }
}

module attributes {stable_mosaic.version = 11 : i64} {
  func.func @kernel(%arg0: i32, %arg1: memref<1x48x56xbf16, #tpu.memory_space<vmem>>, %arg2: memref<16x48xbf16, #tpu.memory_space<vmem>>, %arg3: memref<16x4xf32, #tpu.memory_space<vmem>>, %arg4: memref<56x8xf32, #tpu.memory_space<vmem>>, %arg5: memref<8x56xf32, #tpu.memory_space<vmem>>, %arg6: memref<1x16x56xf32, #tpu.memory_space<vmem>>) attributes {dimension_semantics = [#tpu.dimension_semantics<parallel>], iteration_bounds = array<i64: 2>, scalar_prefetch = 0 : i64, scratch_operands = 0 : i64, tpu.core_type = #tpu.core_type<tc>, window_params = [{transform_indices = @transform_0, window_bounds = array<i64: 1, 48, 56>}, {pipeline_mode = #tpu.pipeline_mode<synchronous>, transform_indices = @transform_1, window_bounds = array<i64: 16, 48>}, {pipeline_mode = #tpu.pipeline_mode<synchronous>, transform_indices = @transform_2, window_bounds = array<i64: 16, 4>}, {pipeline_mode = #tpu.pipeline_mode<synchronous>, transform_indices = @transform_3, window_bounds = array<i64: 56, 8>}, {pipeline_mode = #tpu.pipeline_mode<synchronous>, transform_indices = @transform_4, window_bounds = array<i64: 8, 56>}, {transform_indices = @transform_5, window_bounds = array<i64: 1, 16, 56>}]} {
    %c0 = arith.constant 0 : index
    %c0_0 = arith.constant 0 : index
    %0 = vector.load %arg2[%c0, %c0_0] : memref<16x48xbf16, #tpu.memory_space<vmem>>, vector<16x48xbf16>
    %c0_1 = arith.constant 0 : index
    %c0_2 = arith.constant 0 : index
    %c0_3 = arith.constant 0 : index
    %1 = vector.load %arg1[%c0_1, %c0_2, %c0_3] : memref<1x48x56xbf16, #tpu.memory_space<vmem>>, vector<1x48x56xbf16>
    %2 = vector.shape_cast %1 : vector<1x48x56xbf16> to vector<48x56xbf16>
    %cst = arith.constant dense<0.000000e+00> : vector<16x56xf32>
    %3 = tpu.matmul %0, %2, %cst {dimension_numbers = #tpu.dot_dimension_numbers<[1], [0], [0], [1], [0, 0, 1, 1], [], []>} : vector<16x48xbf16>, vector<48x56xbf16>, vector<16x56xf32> -> vector<16x56xf32>
    %c0_4 = arith.constant 0 : index
    %c0_5 = arith.constant 0 : index
    %4 = vector.load %arg3[%c0_4, %c0_5] : memref<16x4xf32, #tpu.memory_space<vmem>>, vector<16x1xf32>
    %5 = vector.broadcast %4 : vector<16x1xf32> to vector<16x56xf32>
    %6 = arith.addf %3, %5 : vector<16x56xf32>
    %cst_6 = arith.constant dense<0.000000e+00> : vector<56xf32>
    %7 = vector.multi_reduction <add>, %6, %cst_6 [0] : vector<16x56xf32> to vector<56xf32>
    %8 = vector.shape_cast %7 : vector<56xf32> to vector<1x56xf32>
    %9 = arith.mulf %6, %6 : vector<16x56xf32>
    %cst_7 = arith.constant dense<0.000000e+00> : vector<56xf32>
    %10 = vector.multi_reduction <add>, %9, %cst_7 [0] : vector<16x56xf32> to vector<56xf32>
    %11 = vector.shape_cast %10 : vector<56xf32> to vector<1x56xf32>
    %12 = tpu.concatenate %8, %11 in 0 : vector<1x56xf32>, vector<1x56xf32> -> vector<2x56xf32>
    %c0_8 = arith.constant 0 : index
    %c0_9 = arith.constant 0 : index
    %13 = vector.load %arg4[%c0_8, %c0_9] : memref<56x8xf32, #tpu.memory_space<vmem>>, vector<56x8xf32>
    %cst_10 = arith.constant dense<0.000000e+00> : vector<2x8xf32>
    %14 = tpu.matmul %12, %13, %cst_10 {dimension_numbers = #tpu.dot_dimension_numbers<[1], [0], [0], [1], [0, 0, 1, 1], [], []>} : vector<2x56xf32>, vector<56x8xf32>, vector<2x8xf32> -> vector<2x8xf32>
    %15 = vector.extract_strided_slice %14 {offsets = [0, 0], sizes = [1, 8], strides = [1, 1]} : vector<2x8xf32> to vector<1x8xf32>
    %16 = vector.extract_strided_slice %14 {offsets = [1, 0], sizes = [1, 8], strides = [1, 1]} : vector<2x8xf32> to vector<1x8xf32>
    %17 = arith.mulf %15, %15 : vector<1x8xf32>
    %18 = arith.subf %16, %17 : vector<1x8xf32>
    %cst_11 = arith.constant 9.99999974E-6 : f32
    %19 = vector.broadcast %cst_11 : f32 to vector<1x8xf32>
    %20 = arith.addf %18, %19 : vector<1x8xf32>
    %21 = math.rsqrt %20 : vector<1x8xf32>
    %22 = tpu.concatenate %15, %21 in 0 : vector<1x8xf32>, vector<1x8xf32> -> vector<2x8xf32>
    %c0_12 = arith.constant 0 : index
    %c0_13 = arith.constant 0 : index
    %23 = vector.load %arg5[%c0_12, %c0_13] : memref<8x56xf32, #tpu.memory_space<vmem>>, vector<8x56xf32>
    %cst_14 = arith.constant dense<0.000000e+00> : vector<2x56xf32>
    %24 = tpu.matmul %22, %23, %cst_14 {dimension_numbers = #tpu.dot_dimension_numbers<[1], [0], [0], [1], [0, 0, 1, 1], [], []>} : vector<2x8xf32>, vector<8x56xf32>, vector<2x56xf32> -> vector<2x56xf32>
    %c0_15 = arith.constant 0 : index
    %c1 = arith.constant 1 : index
    %25 = vector.load %arg3[%c0_15, %c1] : memref<16x4xf32, #tpu.memory_space<vmem>>, vector<16x1xf32>
    %c0_16 = arith.constant 0 : index
    %c2 = arith.constant 2 : index
    %26 = vector.load %arg3[%c0_16, %c2] : memref<16x4xf32, #tpu.memory_space<vmem>>, vector<16x1xf32>
    %c0_17 = arith.constant 0 : index
    %c3 = arith.constant 3 : index
    %27 = vector.load %arg3[%c0_17, %c3] : memref<16x4xf32, #tpu.memory_space<vmem>>, vector<16x1xf32>
    %28 = vector.extract_strided_slice %24 {offsets = [0, 0], sizes = [1, 56], strides = [1, 1]} : vector<2x56xf32> to vector<1x56xf32>
    %29 = vector.broadcast %28 : vector<1x56xf32> to vector<16x56xf32>
    %30 = arith.subf %6, %29 : vector<16x56xf32>
    %31 = vector.extract_strided_slice %24 {offsets = [1, 0], sizes = [1, 56], strides = [1, 1]} : vector<2x56xf32> to vector<1x56xf32>
    %32 = vector.broadcast %31 : vector<1x56xf32> to vector<16x56xf32>
    %33 = arith.mulf %30, %32 : vector<16x56xf32>
    %34 = vector.broadcast %25 : vector<16x1xf32> to vector<16x56xf32>
    %35 = arith.mulf %33, %34 : vector<16x56xf32>
    %36 = vector.broadcast %26 : vector<16x1xf32> to vector<16x56xf32>
    %37 = arith.addf %35, %36 : vector<16x56xf32>
    %cst_18 = arith.constant 0.000000e+00 : f32
    %38 = vector.broadcast %cst_18 : f32 to vector<16x56xf32>
    %39 = arith.cmpf ogt, %37, %38 : vector<16x56xf32>
    %40 = vector.broadcast %27 : vector<16x1xf32> to vector<16x56xf32>
    %41 = arith.mulf %40, %37 : vector<16x56xf32>
    %42 = arith.select %39, %37, %41 : vector<16x56xi1>, vector<16x56xf32>
    %c0_19 = arith.constant 0 : index
    %c0_20 = arith.constant 0 : index
    %c0_21 = arith.constant 0 : index
    %43 = vector.load %arg6[%c0_19, %c0_20, %c0_21] : memref<1x16x56xf32, #tpu.memory_space<vmem>>, vector<1x16x56xf32>
    %44 = vector.shape_cast %43 : vector<1x16x56xf32> to vector<16x56xf32>
    %45 = vector.shape_cast %42 : vector<16x56xf32> to vector<1x16x56xf32>
    tpu.vector_store %arg6[%c0_19, %c0_20, %c0_21], %45 {strides = array<i32>} : memref<1x16x56xf32, #tpu.memory_space<vmem>>, vector<1x16x56xf32>,
    return
  }
  func.func @transform_0(%arg0: i32) -> (i32, i32, i32) {
    %c0_i32 = arith.constant 0 : i32
    %c0_i32_0 = arith.constant 0 : i32
    %c0_i32_1 = arith.constant 0 : i32
    return %arg0, %c0_i32, %c0_i32_0 : i32, i32, i32
  }
  func.func @transform_1(%arg0: i32) -> (i32, i32) {
    %c0_i32 = arith.constant 0 : i32
    %c0_i32_0 = arith.constant 0 : i32
    %c0_i32_1 = arith.constant 0 : i32
    return %c0_i32, %c0_i32_0 : i32, i32
  }
  func.func @transform_2(%arg0: i32) -> (i32, i32) {
    %c0_i32 = arith.constant 0 : i32
    %c0_i32_0 = arith.constant 0 : i32
    %c0_i32_1 = arith.constant 0 : i32
    return %c0_i32, %c0_i32_0 : i32, i32
  }
  func.func @transform_3(%arg0: i32) -> (i32, i32) {
    %c0_i32 = arith.constant 0 : i32
    %c0_i32_0 = arith.constant 0 : i32
    %c0_i32_1 = arith.constant 0 : i32
    return %c0_i32, %c0_i32_0 : i32, i32
  }
  func.func @transform_4(%arg0: i32) -> (i32, i32) {
    %c0_i32 = arith.constant 0 : i32
    %c0_i32_0 = arith.constant 0 : i32
    %c0_i32_1 = arith.constant 0 : i32
    return %c0_i32, %c0_i32_0 : i32, i32
  }
  func.func @transform_5(%arg0: i32) -> (i32, i32, i32) {
    %c0_i32 = arith.constant 0 : i32
    %c0_i32_0 = arith.constant 0 : i32
    %c0_i32_1 = arith.constant 0 : i32
    return %arg0, %c0_i32, %c0_i32_0 : i32, i32, i32
  }
}

module attributes {stable_mosaic.version = 11 : i64} {
  func.func @kernel(%arg0: i32, %arg1: memref<1x48x24xbf16, #tpu.memory_space<vmem>>, %arg2: memref<16x48xbf16, #tpu.memory_space<vmem>>, %arg3: memref<16x4xf32, #tpu.memory_space<vmem>>, %arg4: memref<24x8xf32, #tpu.memory_space<vmem>>, %arg5: memref<8x24xf32, #tpu.memory_space<vmem>>, %arg6: memref<1x16x24xf32, #tpu.memory_space<vmem>>) attributes {dimension_semantics = [#tpu.dimension_semantics<parallel>], iteration_bounds = array<i64: 2>, scalar_prefetch = 0 : i64, scratch_operands = 0 : i64, tpu.core_type = #tpu.core_type<tc>, window_params = [{transform_indices = @transform_0, window_bounds = array<i64: 1, 48, 24>}, {pipeline_mode = #tpu.pipeline_mode<synchronous>, transform_indices = @transform_1, window_bounds = array<i64: 16, 48>}, {pipeline_mode = #tpu.pipeline_mode<synchronous>, transform_indices = @transform_2, window_bounds = array<i64: 16, 4>}, {pipeline_mode = #tpu.pipeline_mode<synchronous>, transform_indices = @transform_3, window_bounds = array<i64: 24, 8>}, {pipeline_mode = #tpu.pipeline_mode<synchronous>, transform_indices = @transform_4, window_bounds = array<i64: 8, 24>}, {transform_indices = @transform_5, window_bounds = array<i64: 1, 16, 24>}]} {
    %c0 = arith.constant 0 : index
    %c0_0 = arith.constant 0 : index
    %0 = vector.load %arg2[%c0, %c0_0] : memref<16x48xbf16, #tpu.memory_space<vmem>>, vector<16x48xbf16>
    %c0_1 = arith.constant 0 : index
    %c0_2 = arith.constant 0 : index
    %c0_3 = arith.constant 0 : index
    %1 = vector.load %arg1[%c0_1, %c0_2, %c0_3] : memref<1x48x24xbf16, #tpu.memory_space<vmem>>, vector<1x48x24xbf16>
    %2 = vector.shape_cast %1 : vector<1x48x24xbf16> to vector<48x24xbf16>
    %cst = arith.constant dense<0.000000e+00> : vector<16x24xf32>
    %3 = tpu.matmul %0, %2, %cst {dimension_numbers = #tpu.dot_dimension_numbers<[1], [0], [0], [1], [0, 0, 1, 1], [], []>} : vector<16x48xbf16>, vector<48x24xbf16>, vector<16x24xf32> -> vector<16x24xf32>
    %c0_4 = arith.constant 0 : index
    %c0_5 = arith.constant 0 : index
    %4 = vector.load %arg3[%c0_4, %c0_5] : memref<16x4xf32, #tpu.memory_space<vmem>>, vector<16x1xf32>
    %5 = vector.broadcast %4 : vector<16x1xf32> to vector<16x24xf32>
    %6 = arith.addf %3, %5 : vector<16x24xf32>
    %cst_6 = arith.constant dense<0.000000e+00> : vector<24xf32>
    %7 = vector.multi_reduction <add>, %6, %cst_6 [0] : vector<16x24xf32> to vector<24xf32>
    %8 = vector.shape_cast %7 : vector<24xf32> to vector<1x24xf32>
    %9 = arith.mulf %6, %6 : vector<16x24xf32>
    %cst_7 = arith.constant dense<0.000000e+00> : vector<24xf32>
    %10 = vector.multi_reduction <add>, %9, %cst_7 [0] : vector<16x24xf32> to vector<24xf32>
    %11 = vector.shape_cast %10 : vector<24xf32> to vector<1x24xf32>
    %12 = tpu.concatenate %8, %11 in 0 : vector<1x24xf32>, vector<1x24xf32> -> vector<2x24xf32>
    %c0_8 = arith.constant 0 : index
    %c0_9 = arith.constant 0 : index
    %13 = vector.load %arg4[%c0_8, %c0_9] : memref<24x8xf32, #tpu.memory_space<vmem>>, vector<24x8xf32>
    %cst_10 = arith.constant dense<0.000000e+00> : vector<2x8xf32>
    %14 = tpu.matmul %12, %13, %cst_10 {dimension_numbers = #tpu.dot_dimension_numbers<[1], [0], [0], [1], [0, 0, 1, 1], [], []>} : vector<2x24xf32>, vector<24x8xf32>, vector<2x8xf32> -> vector<2x8xf32>
    %15 = vector.extract_strided_slice %14 {offsets = [0, 0], sizes = [1, 8], strides = [1, 1]} : vector<2x8xf32> to vector<1x8xf32>
    %16 = vector.extract_strided_slice %14 {offsets = [1, 0], sizes = [1, 8], strides = [1, 1]} : vector<2x8xf32> to vector<1x8xf32>
    %17 = arith.mulf %15, %15 : vector<1x8xf32>
    %18 = arith.subf %16, %17 : vector<1x8xf32>
    %cst_11 = arith.constant 9.99999974E-6 : f32
    %19 = vector.broadcast %cst_11 : f32 to vector<1x8xf32>
    %20 = arith.addf %18, %19 : vector<1x8xf32>
    %21 = math.rsqrt %20 : vector<1x8xf32>
    %22 = tpu.concatenate %15, %21 in 0 : vector<1x8xf32>, vector<1x8xf32> -> vector<2x8xf32>
    %c0_12 = arith.constant 0 : index
    %c0_13 = arith.constant 0 : index
    %23 = vector.load %arg5[%c0_12, %c0_13] : memref<8x24xf32, #tpu.memory_space<vmem>>, vector<8x24xf32>
    %cst_14 = arith.constant dense<0.000000e+00> : vector<2x24xf32>
    %24 = tpu.matmul %22, %23, %cst_14 {dimension_numbers = #tpu.dot_dimension_numbers<[1], [0], [0], [1], [0, 0, 1, 1], [], []>} : vector<2x8xf32>, vector<8x24xf32>, vector<2x24xf32> -> vector<2x24xf32>
    %c0_15 = arith.constant 0 : index
    %c1 = arith.constant 1 : index
    %25 = vector.load %arg3[%c0_15, %c1] : memref<16x4xf32, #tpu.memory_space<vmem>>, vector<16x1xf32>
    %c0_16 = arith.constant 0 : index
    %c2 = arith.constant 2 : index
    %26 = vector.load %arg3[%c0_16, %c2] : memref<16x4xf32, #tpu.memory_space<vmem>>, vector<16x1xf32>
    %c0_17 = arith.constant 0 : index
    %c3 = arith.constant 3 : index
    %27 = vector.load %arg3[%c0_17, %c3] : memref<16x4xf32, #tpu.memory_space<vmem>>, vector<16x1xf32>
    %28 = vector.extract_strided_slice %24 {offsets = [0, 0], sizes = [1, 24], strides = [1, 1]} : vector<2x24xf32> to vector<1x24xf32>
    %29 = vector.broadcast %28 : vector<1x24xf32> to vector<16x24xf32>
    %30 = arith.subf %6, %29 : vector<16x24xf32>
    %31 = vector.extract_strided_slice %24 {offsets = [1, 0], sizes = [1, 24], strides = [1, 1]} : vector<2x24xf32> to vector<1x24xf32>
    %32 = vector.broadcast %31 : vector<1x24xf32> to vector<16x24xf32>
    %33 = arith.mulf %30, %32 : vector<16x24xf32>
    %34 = vector.broadcast %25 : vector<16x1xf32> to vector<16x24xf32>
    %35 = arith.mulf %33, %34 : vector<16x24xf32>
    %36 = vector.broadcast %26 : vector<16x1xf32> to vector<16x24xf32>
    %37 = arith.addf %35, %36 : vector<16x24xf32>
    %cst_18 = arith.constant 0.000000e+00 : f32
    %38 = vector.broadcast %cst_18 : f32 to vector<16x24xf32>
    %39 = arith.cmpf ogt, %37, %38 : vector<16x24xf32>
    %40 = vector.broadcast %27 : vector<16x1xf32> to vector<16x24xf32>
    %41 = arith.mulf %40, %37 : vector<16x24xf32>
    %42 = arith.select %39, %37, %41 : vector<16x24xi1>, vector<16x24xf32>
    %c0_19 = arith.constant 0 : index
    %c0_20 = arith.constant 0 : index
    %c0_21 = arith.constant 0 : index
    %43 = vector.load %arg6[%c0_19, %c0_20, %c0_21] : memref<1x16x24xf32, #tpu.memory_space<vmem>>, vector<1x16x24xf32>
    %44 = vector.shape_cast %43 : vector<1x16x24xf32> to vector<16x24xf32>
    %45 = vector.shape_cast %42 : vector<16x24xf32> to vector<1x16x24xf32>
    tpu.vector_store %arg6[%c0_19, %c0_20, %c0_21], %45 {strides = array<i32>} : memref<1x16x24xf32, #tpu.memory_space<vmem>>, vector<1x16x24xf32>,
    return
  }
  func.func @transform_0(%arg0: i32) -> (i32, i32, i32) {
    %c0_i32 = arith.constant 0 : i32
    %c0_i32_0 = arith.constant 0 : i32
    %c0_i32_1 = arith.constant 0 : i32
    return %arg0, %c0_i32, %c0_i32_0 : i32, i32, i32
  }
  func.func @transform_1(%arg0: i32) -> (i32, i32) {
    %c0_i32 = arith.constant 0 : i32
    %c0_i32_0 = arith.constant 0 : i32
    %c0_i32_1 = arith.constant 0 : i32
    return %c0_i32, %c0_i32_0 : i32, i32
  }
  func.func @transform_2(%arg0: i32) -> (i32, i32) {
    %c0_i32 = arith.constant 0 : i32
    %c0_i32_0 = arith.constant 0 : i32
    %c0_i32_1 = arith.constant 0 : i32
    return %c0_i32, %c0_i32_0 : i32, i32
  }
  func.func @transform_3(%arg0: i32) -> (i32, i32) {
    %c0_i32 = arith.constant 0 : i32
    %c0_i32_0 = arith.constant 0 : i32
    %c0_i32_1 = arith.constant 0 : i32
    return %c0_i32, %c0_i32_0 : i32, i32
  }
  func.func @transform_4(%arg0: i32) -> (i32, i32) {
    %c0_i32 = arith.constant 0 : i32
    %c0_i32_0 = arith.constant 0 : i32
    %c0_i32_1 = arith.constant 0 : i32
    return %c0_i32, %c0_i32_0 : i32, i32
  }
  func.func @transform_5(%arg0: i32) -> (i32, i32, i32) {
    %c0_i32 = arith.constant 0 : i32
    %c0_i32_0 = arith.constant 0 : i32
    %c0_i32_1 = arith.constant 0 : i32
    return %arg0, %c0_i32, %c0_i32_0 : i32, i32, i32
  }
}

module attributes {stable_mosaic.version = 11 : i64} {
  func.func @kernel(%arg0: i32, %arg1: memref<1x48x8xbf16, #tpu.memory_space<vmem>>, %arg2: memref<16x48xbf16, #tpu.memory_space<vmem>>, %arg3: memref<16x4xf32, #tpu.memory_space<vmem>>, %arg4: memref<8x8xf32, #tpu.memory_space<vmem>>, %arg5: memref<8x8xf32, #tpu.memory_space<vmem>>, %arg6: memref<1x16x8xf32, #tpu.memory_space<vmem>>) attributes {dimension_semantics = [#tpu.dimension_semantics<parallel>], iteration_bounds = array<i64: 2>, scalar_prefetch = 0 : i64, scratch_operands = 0 : i64, tpu.core_type = #tpu.core_type<tc>, window_params = [{transform_indices = @transform_0, window_bounds = array<i64: 1, 48, 8>}, {pipeline_mode = #tpu.pipeline_mode<synchronous>, transform_indices = @transform_1, window_bounds = array<i64: 16, 48>}, {pipeline_mode = #tpu.pipeline_mode<synchronous>, transform_indices = @transform_2, window_bounds = array<i64: 16, 4>}, {pipeline_mode = #tpu.pipeline_mode<synchronous>, transform_indices = @transform_3, window_bounds = array<i64: 8, 8>}, {pipeline_mode = #tpu.pipeline_mode<synchronous>, transform_indices = @transform_4, window_bounds = array<i64: 8, 8>}, {transform_indices = @transform_5, window_bounds = array<i64: 1, 16, 8>}]} {
    %c0 = arith.constant 0 : index
    %c0_0 = arith.constant 0 : index
    %0 = vector.load %arg2[%c0, %c0_0] : memref<16x48xbf16, #tpu.memory_space<vmem>>, vector<16x48xbf16>
    %c0_1 = arith.constant 0 : index
    %c0_2 = arith.constant 0 : index
    %c0_3 = arith.constant 0 : index
    %1 = vector.load %arg1[%c0_1, %c0_2, %c0_3] : memref<1x48x8xbf16, #tpu.memory_space<vmem>>, vector<1x48x8xbf16>
    %2 = vector.shape_cast %1 : vector<1x48x8xbf16> to vector<48x8xbf16>
    %cst = arith.constant dense<0.000000e+00> : vector<16x8xf32>
    %3 = tpu.matmul %0, %2, %cst {dimension_numbers = #tpu.dot_dimension_numbers<[1], [0], [0], [1], [0, 0, 1, 1], [], []>} : vector<16x48xbf16>, vector<48x8xbf16>, vector<16x8xf32> -> vector<16x8xf32>
    %c0_4 = arith.constant 0 : index
    %c0_5 = arith.constant 0 : index
    %4 = vector.load %arg3[%c0_4, %c0_5] : memref<16x4xf32, #tpu.memory_space<vmem>>, vector<16x1xf32>
    %5 = vector.broadcast %4 : vector<16x1xf32> to vector<16x8xf32>
    %6 = arith.addf %3, %5 : vector<16x8xf32>
    %cst_6 = arith.constant dense<0.000000e+00> : vector<8xf32>
    %7 = vector.multi_reduction <add>, %6, %cst_6 [0] : vector<16x8xf32> to vector<8xf32>
    %8 = vector.shape_cast %7 : vector<8xf32> to vector<1x8xf32>
    %9 = arith.mulf %6, %6 : vector<16x8xf32>
    %cst_7 = arith.constant dense<0.000000e+00> : vector<8xf32>
    %10 = vector.multi_reduction <add>, %9, %cst_7 [0] : vector<16x8xf32> to vector<8xf32>
    %11 = vector.shape_cast %10 : vector<8xf32> to vector<1x8xf32>
    %12 = tpu.concatenate %8, %11 in 0 : vector<1x8xf32>, vector<1x8xf32> -> vector<2x8xf32>
    %c0_8 = arith.constant 0 : index
    %c0_9 = arith.constant 0 : index
    %13 = vector.load %arg4[%c0_8, %c0_9] : memref<8x8xf32, #tpu.memory_space<vmem>>, vector<8x8xf32>
    %cst_10 = arith.constant dense<0.000000e+00> : vector<2x8xf32>
    %14 = tpu.matmul %12, %13, %cst_10 {dimension_numbers = #tpu.dot_dimension_numbers<[1], [0], [0], [1], [0, 0, 1, 1], [], []>} : vector<2x8xf32>, vector<8x8xf32>, vector<2x8xf32> -> vector<2x8xf32>
    %15 = vector.extract_strided_slice %14 {offsets = [0, 0], sizes = [1, 8], strides = [1, 1]} : vector<2x8xf32> to vector<1x8xf32>
    %16 = vector.extract_strided_slice %14 {offsets = [1, 0], sizes = [1, 8], strides = [1, 1]} : vector<2x8xf32> to vector<1x8xf32>
    %17 = arith.mulf %15, %15 : vector<1x8xf32>
    %18 = arith.subf %16, %17 : vector<1x8xf32>
    %cst_11 = arith.constant 9.99999974E-6 : f32
    %19 = vector.broadcast %cst_11 : f32 to vector<1x8xf32>
    %20 = arith.addf %18, %19 : vector<1x8xf32>
    %21 = math.rsqrt %20 : vector<1x8xf32>
    %22 = tpu.concatenate %15, %21 in 0 : vector<1x8xf32>, vector<1x8xf32> -> vector<2x8xf32>
    %c0_12 = arith.constant 0 : index
    %c0_13 = arith.constant 0 : index
    %23 = vector.load %arg5[%c0_12, %c0_13] : memref<8x8xf32, #tpu.memory_space<vmem>>, vector<8x8xf32>
    %cst_14 = arith.constant dense<0.000000e+00> : vector<2x8xf32>
    %24 = tpu.matmul %22, %23, %cst_14 {dimension_numbers = #tpu.dot_dimension_numbers<[1], [0], [0], [1], [0, 0, 1, 1], [], []>} : vector<2x8xf32>, vector<8x8xf32>, vector<2x8xf32> -> vector<2x8xf32>
    %c0_15 = arith.constant 0 : index
    %c1 = arith.constant 1 : index
    %25 = vector.load %arg3[%c0_15, %c1] : memref<16x4xf32, #tpu.memory_space<vmem>>, vector<16x1xf32>
    %c0_16 = arith.constant 0 : index
    %c2 = arith.constant 2 : index
    %26 = vector.load %arg3[%c0_16, %c2] : memref<16x4xf32, #tpu.memory_space<vmem>>, vector<16x1xf32>
    %c0_17 = arith.constant 0 : index
    %c3 = arith.constant 3 : index
    %27 = vector.load %arg3[%c0_17, %c3] : memref<16x4xf32, #tpu.memory_space<vmem>>, vector<16x1xf32>
    %28 = vector.extract_strided_slice %24 {offsets = [0, 0], sizes = [1, 8], strides = [1, 1]} : vector<2x8xf32> to vector<1x8xf32>
    %29 = vector.broadcast %28 : vector<1x8xf32> to vector<16x8xf32>
    %30 = arith.subf %6, %29 : vector<16x8xf32>
    %31 = vector.extract_strided_slice %24 {offsets = [1, 0], sizes = [1, 8], strides = [1, 1]} : vector<2x8xf32> to vector<1x8xf32>
    %32 = vector.broadcast %31 : vector<1x8xf32> to vector<16x8xf32>
    %33 = arith.mulf %30, %32 : vector<16x8xf32>
    %34 = vector.broadcast %25 : vector<16x1xf32> to vector<16x8xf32>
    %35 = arith.mulf %33, %34 : vector<16x8xf32>
    %36 = vector.broadcast %26 : vector<16x1xf32> to vector<16x8xf32>
    %37 = arith.addf %35, %36 : vector<16x8xf32>
    %cst_18 = arith.constant 0.000000e+00 : f32
    %38 = vector.broadcast %cst_18 : f32 to vector<16x8xf32>
    %39 = arith.cmpf ogt, %37, %38 : vector<16x8xf32>
    %40 = vector.broadcast %27 : vector<16x1xf32> to vector<16x8xf32>
    %41 = arith.mulf %40, %37 : vector<16x8xf32>
    %42 = arith.select %39, %37, %41 : vector<16x8xi1>, vector<16x8xf32>
    %c0_19 = arith.constant 0 : index
    %c0_20 = arith.constant 0 : index
    %c0_21 = arith.constant 0 : index
    %43 = vector.load %arg6[%c0_19, %c0_20, %c0_21] : memref<1x16x8xf32, #tpu.memory_space<vmem>>, vector<1x16x8xf32>
    %44 = vector.shape_cast %43 : vector<1x16x8xf32> to vector<16x8xf32>
    %45 = vector.shape_cast %42 : vector<16x8xf32> to vector<1x16x8xf32>
    tpu.vector_store %arg6[%c0_19, %c0_20, %c0_21], %45 {strides = array<i32>} : memref<1x16x8xf32, #tpu.memory_space<vmem>>, vector<1x16x8xf32>,
    return
  }
  func.func @transform_0(%arg0: i32) -> (i32, i32, i32) {
    %c0_i32 = arith.constant 0 : i32
    %c0_i32_0 = arith.constant 0 : i32
    %c0_i32_1 = arith.constant 0 : i32
    return %arg0, %c0_i32, %c0_i32_0 : i32, i32, i32
  }
  func.func @transform_1(%arg0: i32) -> (i32, i32) {
    %c0_i32 = arith.constant 0 : i32
    %c0_i32_0 = arith.constant 0 : i32
    %c0_i32_1 = arith.constant 0 : i32
    return %c0_i32, %c0_i32_0 : i32, i32
  }
  func.func @transform_2(%arg0: i32) -> (i32, i32) {
    %c0_i32 = arith.constant 0 : i32
    %c0_i32_0 = arith.constant 0 : i32
    %c0_i32_1 = arith.constant 0 : i32
    return %c0_i32, %c0_i32_0 : i32, i32
  }
  func.func @transform_3(%arg0: i32) -> (i32, i32) {
    %c0_i32 = arith.constant 0 : i32
    %c0_i32_0 = arith.constant 0 : i32
    %c0_i32_1 = arith.constant 0 : i32
    return %c0_i32, %c0_i32_0 : i32, i32
  }
  func.func @transform_4(%arg0: i32) -> (i32, i32) {
    %c0_i32 = arith.constant 0 : i32
    %c0_i32_0 = arith.constant 0 : i32
    %c0_i32_1 = arith.constant 0 : i32
    return %c0_i32, %c0_i32_0 : i32, i32
  }
  func.func @transform_5(%arg0: i32) -> (i32, i32, i32) {
    %c0_i32 = arith.constant 0 : i32
    %c0_i32_0 = arith.constant 0 : i32
    %c0_i32_1 = arith.constant 0 : i32
    return %arg0, %c0_i32, %c0_i32_0 : i32, i32, i32
  }
}

module attributes {stable_mosaic.version = 11 : i64} {
  func.func @kernel(%arg0: i32, %arg1: memref<1x96x56xbf16, #tpu.memory_space<vmem>>, %arg2: memref<16x96xbf16, #tpu.memory_space<vmem>>, %arg3: memref<16x4xf32, #tpu.memory_space<vmem>>, %arg4: memref<56x8xf32, #tpu.memory_space<vmem>>, %arg5: memref<8x56xf32, #tpu.memory_space<vmem>>, %arg6: memref<1x16x56xf32, #tpu.memory_space<vmem>>) attributes {dimension_semantics = [#tpu.dimension_semantics<parallel>], iteration_bounds = array<i64: 2>, scalar_prefetch = 0 : i64, scratch_operands = 0 : i64, tpu.core_type = #tpu.core_type<tc>, window_params = [{transform_indices = @transform_0, window_bounds = array<i64: 1, 96, 56>}, {pipeline_mode = #tpu.pipeline_mode<synchronous>, transform_indices = @transform_1, window_bounds = array<i64: 16, 96>}, {pipeline_mode = #tpu.pipeline_mode<synchronous>, transform_indices = @transform_2, window_bounds = array<i64: 16, 4>}, {pipeline_mode = #tpu.pipeline_mode<synchronous>, transform_indices = @transform_3, window_bounds = array<i64: 56, 8>}, {pipeline_mode = #tpu.pipeline_mode<synchronous>, transform_indices = @transform_4, window_bounds = array<i64: 8, 56>}, {transform_indices = @transform_5, window_bounds = array<i64: 1, 16, 56>}]} {
    %c0 = arith.constant 0 : index
    %c0_0 = arith.constant 0 : index
    %0 = vector.load %arg2[%c0, %c0_0] : memref<16x96xbf16, #tpu.memory_space<vmem>>, vector<16x96xbf16>
    %c0_1 = arith.constant 0 : index
    %c0_2 = arith.constant 0 : index
    %c0_3 = arith.constant 0 : index
    %1 = vector.load %arg1[%c0_1, %c0_2, %c0_3] : memref<1x96x56xbf16, #tpu.memory_space<vmem>>, vector<1x96x56xbf16>
    %2 = vector.shape_cast %1 : vector<1x96x56xbf16> to vector<96x56xbf16>
    %cst = arith.constant dense<0.000000e+00> : vector<16x56xf32>
    %3 = tpu.matmul %0, %2, %cst {dimension_numbers = #tpu.dot_dimension_numbers<[1], [0], [0], [1], [0, 0, 1, 1], [], []>} : vector<16x96xbf16>, vector<96x56xbf16>, vector<16x56xf32> -> vector<16x56xf32>
    %c0_4 = arith.constant 0 : index
    %c0_5 = arith.constant 0 : index
    %4 = vector.load %arg3[%c0_4, %c0_5] : memref<16x4xf32, #tpu.memory_space<vmem>>, vector<16x1xf32>
    %5 = vector.broadcast %4 : vector<16x1xf32> to vector<16x56xf32>
    %6 = arith.addf %3, %5 : vector<16x56xf32>
    %cst_6 = arith.constant dense<0.000000e+00> : vector<56xf32>
    %7 = vector.multi_reduction <add>, %6, %cst_6 [0] : vector<16x56xf32> to vector<56xf32>
    %8 = vector.shape_cast %7 : vector<56xf32> to vector<1x56xf32>
    %9 = arith.mulf %6, %6 : vector<16x56xf32>
    %cst_7 = arith.constant dense<0.000000e+00> : vector<56xf32>
    %10 = vector.multi_reduction <add>, %9, %cst_7 [0] : vector<16x56xf32> to vector<56xf32>
    %11 = vector.shape_cast %10 : vector<56xf32> to vector<1x56xf32>
    %12 = tpu.concatenate %8, %11 in 0 : vector<1x56xf32>, vector<1x56xf32> -> vector<2x56xf32>
    %c0_8 = arith.constant 0 : index
    %c0_9 = arith.constant 0 : index
    %13 = vector.load %arg4[%c0_8, %c0_9] : memref<56x8xf32, #tpu.memory_space<vmem>>, vector<56x8xf32>
    %cst_10 = arith.constant dense<0.000000e+00> : vector<2x8xf32>
    %14 = tpu.matmul %12, %13, %cst_10 {dimension_numbers = #tpu.dot_dimension_numbers<[1], [0], [0], [1], [0, 0, 1, 1], [], []>} : vector<2x56xf32>, vector<56x8xf32>, vector<2x8xf32> -> vector<2x8xf32>
    %15 = vector.extract_strided_slice %14 {offsets = [0, 0], sizes = [1, 8], strides = [1, 1]} : vector<2x8xf32> to vector<1x8xf32>
    %16 = vector.extract_strided_slice %14 {offsets = [1, 0], sizes = [1, 8], strides = [1, 1]} : vector<2x8xf32> to vector<1x8xf32>
    %17 = arith.mulf %15, %15 : vector<1x8xf32>
    %18 = arith.subf %16, %17 : vector<1x8xf32>
    %cst_11 = arith.constant 9.99999974E-6 : f32
    %19 = vector.broadcast %cst_11 : f32 to vector<1x8xf32>
    %20 = arith.addf %18, %19 : vector<1x8xf32>
    %21 = math.rsqrt %20 : vector<1x8xf32>
    %22 = tpu.concatenate %15, %21 in 0 : vector<1x8xf32>, vector<1x8xf32> -> vector<2x8xf32>
    %c0_12 = arith.constant 0 : index
    %c0_13 = arith.constant 0 : index
    %23 = vector.load %arg5[%c0_12, %c0_13] : memref<8x56xf32, #tpu.memory_space<vmem>>, vector<8x56xf32>
    %cst_14 = arith.constant dense<0.000000e+00> : vector<2x56xf32>
    %24 = tpu.matmul %22, %23, %cst_14 {dimension_numbers = #tpu.dot_dimension_numbers<[1], [0], [0], [1], [0, 0, 1, 1], [], []>} : vector<2x8xf32>, vector<8x56xf32>, vector<2x56xf32> -> vector<2x56xf32>
    %c0_15 = arith.constant 0 : index
    %c1 = arith.constant 1 : index
    %25 = vector.load %arg3[%c0_15, %c1] : memref<16x4xf32, #tpu.memory_space<vmem>>, vector<16x1xf32>
    %c0_16 = arith.constant 0 : index
    %c2 = arith.constant 2 : index
    %26 = vector.load %arg3[%c0_16, %c2] : memref<16x4xf32, #tpu.memory_space<vmem>>, vector<16x1xf32>
    %c0_17 = arith.constant 0 : index
    %c3 = arith.constant 3 : index
    %27 = vector.load %arg3[%c0_17, %c3] : memref<16x4xf32, #tpu.memory_space<vmem>>, vector<16x1xf32>
    %28 = vector.extract_strided_slice %24 {offsets = [0, 0], sizes = [1, 56], strides = [1, 1]} : vector<2x56xf32> to vector<1x56xf32>
    %29 = vector.broadcast %28 : vector<1x56xf32> to vector<16x56xf32>
    %30 = arith.subf %6, %29 : vector<16x56xf32>
    %31 = vector.extract_strided_slice %24 {offsets = [1, 0], sizes = [1, 56], strides = [1, 1]} : vector<2x56xf32> to vector<1x56xf32>
    %32 = vector.broadcast %31 : vector<1x56xf32> to vector<16x56xf32>
    %33 = arith.mulf %30, %32 : vector<16x56xf32>
    %34 = vector.broadcast %25 : vector<16x1xf32> to vector<16x56xf32>
    %35 = arith.mulf %33, %34 : vector<16x56xf32>
    %36 = vector.broadcast %26 : vector<16x1xf32> to vector<16x56xf32>
    %37 = arith.addf %35, %36 : vector<16x56xf32>
    %cst_18 = arith.constant 0.000000e+00 : f32
    %38 = vector.broadcast %cst_18 : f32 to vector<16x56xf32>
    %39 = arith.cmpf ogt, %37, %38 : vector<16x56xf32>
    %40 = vector.broadcast %27 : vector<16x1xf32> to vector<16x56xf32>
    %41 = arith.mulf %40, %37 : vector<16x56xf32>
    %42 = arith.select %39, %37, %41 : vector<16x56xi1>, vector<16x56xf32>
    %c0_19 = arith.constant 0 : index
    %c0_20 = arith.constant 0 : index
    %c0_21 = arith.constant 0 : index
    %43 = vector.load %arg6[%c0_19, %c0_20, %c0_21] : memref<1x16x56xf32, #tpu.memory_space<vmem>>, vector<1x16x56xf32>
    %44 = vector.shape_cast %43 : vector<1x16x56xf32> to vector<16x56xf32>
    %45 = vector.shape_cast %42 : vector<16x56xf32> to vector<1x16x56xf32>
    tpu.vector_store %arg6[%c0_19, %c0_20, %c0_21], %45 {strides = array<i32>} : memref<1x16x56xf32, #tpu.memory_space<vmem>>, vector<1x16x56xf32>,
    return
  }
  func.func @transform_0(%arg0: i32) -> (i32, i32, i32) {
    %c0_i32 = arith.constant 0 : i32
    %c0_i32_0 = arith.constant 0 : i32
    %c0_i32_1 = arith.constant 0 : i32
    return %arg0, %c0_i32, %c0_i32_0 : i32, i32, i32
  }
  func.func @transform_1(%arg0: i32) -> (i32, i32) {
    %c0_i32 = arith.constant 0 : i32
    %c0_i32_0 = arith.constant 0 : i32
    %c0_i32_1 = arith.constant 0 : i32
    return %c0_i32, %c0_i32_0 : i32, i32
  }
  func.func @transform_2(%arg0: i32) -> (i32, i32) {
    %c0_i32 = arith.constant 0 : i32
    %c0_i32_0 = arith.constant 0 : i32
    %c0_i32_1 = arith.constant 0 : i32
    return %c0_i32, %c0_i32_0 : i32, i32
  }
  func.func @transform_3(%arg0: i32) -> (i32, i32) {
    %c0_i32 = arith.constant 0 : i32
    %c0_i32_0 = arith.constant 0 : i32
    %c0_i32_1 = arith.constant 0 : i32
    return %c0_i32, %c0_i32_0 : i32, i32
  }
  func.func @transform_4(%arg0: i32) -> (i32, i32) {
    %c0_i32 = arith.constant 0 : i32
    %c0_i32_0 = arith.constant 0 : i32
    %c0_i32_1 = arith.constant 0 : i32
    return %c0_i32, %c0_i32_0 : i32, i32
  }
  func.func @transform_5(%arg0: i32) -> (i32, i32, i32) {
    %c0_i32 = arith.constant 0 : i32
    %c0_i32_0 = arith.constant 0 : i32
    %c0_i32_1 = arith.constant 0 : i32
    return %arg0, %c0_i32, %c0_i32_0 : i32, i32, i32
  }
}

module attributes {stable_mosaic.version = 11 : i64} {
  func.func @kernel(%arg0: i32, %arg1: memref<1x96x120xbf16, #tpu.memory_space<vmem>>, %arg2: memref<16x96xbf16, #tpu.memory_space<vmem>>, %arg3: memref<16x4xf32, #tpu.memory_space<vmem>>, %arg4: memref<120x8xf32, #tpu.memory_space<vmem>>, %arg5: memref<8x120xf32, #tpu.memory_space<vmem>>, %arg6: memref<1x16x120xf32, #tpu.memory_space<vmem>>) attributes {dimension_semantics = [#tpu.dimension_semantics<parallel>], iteration_bounds = array<i64: 2>, scalar_prefetch = 0 : i64, scratch_operands = 0 : i64, tpu.core_type = #tpu.core_type<tc>, window_params = [{transform_indices = @transform_0, window_bounds = array<i64: 1, 96, 120>}, {pipeline_mode = #tpu.pipeline_mode<synchronous>, transform_indices = @transform_1, window_bounds = array<i64: 16, 96>}, {pipeline_mode = #tpu.pipeline_mode<synchronous>, transform_indices = @transform_2, window_bounds = array<i64: 16, 4>}, {pipeline_mode = #tpu.pipeline_mode<synchronous>, transform_indices = @transform_3, window_bounds = array<i64: 120, 8>}, {pipeline_mode = #tpu.pipeline_mode<synchronous>, transform_indices = @transform_4, window_bounds = array<i64: 8, 120>}, {transform_indices = @transform_5, window_bounds = array<i64: 1, 16, 120>}]} {
    %c0 = arith.constant 0 : index
    %c0_0 = arith.constant 0 : index
    %0 = vector.load %arg2[%c0, %c0_0] : memref<16x96xbf16, #tpu.memory_space<vmem>>, vector<16x96xbf16>
    %c0_1 = arith.constant 0 : index
    %c0_2 = arith.constant 0 : index
    %c0_3 = arith.constant 0 : index
    %1 = vector.load %arg1[%c0_1, %c0_2, %c0_3] : memref<1x96x120xbf16, #tpu.memory_space<vmem>>, vector<1x96x120xbf16>
    %2 = vector.shape_cast %1 : vector<1x96x120xbf16> to vector<96x120xbf16>
    %cst = arith.constant dense<0.000000e+00> : vector<16x120xf32>
    %3 = tpu.matmul %0, %2, %cst {dimension_numbers = #tpu.dot_dimension_numbers<[1], [0], [0], [1], [0, 0, 1, 1], [], []>} : vector<16x96xbf16>, vector<96x120xbf16>, vector<16x120xf32> -> vector<16x120xf32>
    %c0_4 = arith.constant 0 : index
    %c0_5 = arith.constant 0 : index
    %4 = vector.load %arg3[%c0_4, %c0_5] : memref<16x4xf32, #tpu.memory_space<vmem>>, vector<16x1xf32>
    %5 = vector.broadcast %4 : vector<16x1xf32> to vector<16x120xf32>
    %6 = arith.addf %3, %5 : vector<16x120xf32>
    %cst_6 = arith.constant dense<0.000000e+00> : vector<120xf32>
    %7 = vector.multi_reduction <add>, %6, %cst_6 [0] : vector<16x120xf32> to vector<120xf32>
    %8 = vector.shape_cast %7 : vector<120xf32> to vector<1x120xf32>
    %9 = arith.mulf %6, %6 : vector<16x120xf32>
    %cst_7 = arith.constant dense<0.000000e+00> : vector<120xf32>
    %10 = vector.multi_reduction <add>, %9, %cst_7 [0] : vector<16x120xf32> to vector<120xf32>
    %11 = vector.shape_cast %10 : vector<120xf32> to vector<1x120xf32>
    %12 = tpu.concatenate %8, %11 in 0 : vector<1x120xf32>, vector<1x120xf32> -> vector<2x120xf32>
    %c0_8 = arith.constant 0 : index
    %c0_9 = arith.constant 0 : index
    %13 = vector.load %arg4[%c0_8, %c0_9] : memref<120x8xf32, #tpu.memory_space<vmem>>, vector<120x8xf32>
    %cst_10 = arith.constant dense<0.000000e+00> : vector<2x8xf32>
    %14 = tpu.matmul %12, %13, %cst_10 {dimension_numbers = #tpu.dot_dimension_numbers<[1], [0], [0], [1], [0, 0, 1, 1], [], []>} : vector<2x120xf32>, vector<120x8xf32>, vector<2x8xf32> -> vector<2x8xf32>
    %15 = vector.extract_strided_slice %14 {offsets = [0, 0], sizes = [1, 8], strides = [1, 1]} : vector<2x8xf32> to vector<1x8xf32>
    %16 = vector.extract_strided_slice %14 {offsets = [1, 0], sizes = [1, 8], strides = [1, 1]} : vector<2x8xf32> to vector<1x8xf32>
    %17 = arith.mulf %15, %15 : vector<1x8xf32>
    %18 = arith.subf %16, %17 : vector<1x8xf32>
    %cst_11 = arith.constant 9.99999974E-6 : f32
    %19 = vector.broadcast %cst_11 : f32 to vector<1x8xf32>
    %20 = arith.addf %18, %19 : vector<1x8xf32>
    %21 = math.rsqrt %20 : vector<1x8xf32>
    %22 = tpu.concatenate %15, %21 in 0 : vector<1x8xf32>, vector<1x8xf32> -> vector<2x8xf32>
    %c0_12 = arith.constant 0 : index
    %c0_13 = arith.constant 0 : index
    %23 = vector.load %arg5[%c0_12, %c0_13] : memref<8x120xf32, #tpu.memory_space<vmem>>, vector<8x120xf32>
    %cst_14 = arith.constant dense<0.000000e+00> : vector<2x120xf32>
    %24 = tpu.matmul %22, %23, %cst_14 {dimension_numbers = #tpu.dot_dimension_numbers<[1], [0], [0], [1], [0, 0, 1, 1], [], []>} : vector<2x8xf32>, vector<8x120xf32>, vector<2x120xf32> -> vector<2x120xf32>
    %c0_15 = arith.constant 0 : index
    %c1 = arith.constant 1 : index
    %25 = vector.load %arg3[%c0_15, %c1] : memref<16x4xf32, #tpu.memory_space<vmem>>, vector<16x1xf32>
    %c0_16 = arith.constant 0 : index
    %c2 = arith.constant 2 : index
    %26 = vector.load %arg3[%c0_16, %c2] : memref<16x4xf32, #tpu.memory_space<vmem>>, vector<16x1xf32>
    %c0_17 = arith.constant 0 : index
    %c3 = arith.constant 3 : index
    %27 = vector.load %arg3[%c0_17, %c3] : memref<16x4xf32, #tpu.memory_space<vmem>>, vector<16x1xf32>
    %28 = vector.extract_strided_slice %24 {offsets = [0, 0], sizes = [1, 120], strides = [1, 1]} : vector<2x120xf32> to vector<1x120xf32>
    %29 = vector.broadcast %28 : vector<1x120xf32> to vector<16x120xf32>
    %30 = arith.subf %6, %29 : vector<16x120xf32>
    %31 = vector.extract_strided_slice %24 {offsets = [1, 0], sizes = [1, 120], strides = [1, 1]} : vector<2x120xf32> to vector<1x120xf32>
    %32 = vector.broadcast %31 : vector<1x120xf32> to vector<16x120xf32>
    %33 = arith.mulf %30, %32 : vector<16x120xf32>
    %34 = vector.broadcast %25 : vector<16x1xf32> to vector<16x120xf32>
    %35 = arith.mulf %33, %34 : vector<16x120xf32>
    %36 = vector.broadcast %26 : vector<16x1xf32> to vector<16x120xf32>
    %37 = arith.addf %35, %36 : vector<16x120xf32>
    %cst_18 = arith.constant 0.000000e+00 : f32
    %38 = vector.broadcast %cst_18 : f32 to vector<16x120xf32>
    %39 = arith.cmpf ogt, %37, %38 : vector<16x120xf32>
    %40 = vector.broadcast %27 : vector<16x1xf32> to vector<16x120xf32>
    %41 = arith.mulf %40, %37 : vector<16x120xf32>
    %42 = arith.select %39, %37, %41 : vector<16x120xi1>, vector<16x120xf32>
    %c0_19 = arith.constant 0 : index
    %c0_20 = arith.constant 0 : index
    %c0_21 = arith.constant 0 : index
    %43 = vector.load %arg6[%c0_19, %c0_20, %c0_21] : memref<1x16x120xf32, #tpu.memory_space<vmem>>, vector<1x16x120xf32>
    %44 = vector.shape_cast %43 : vector<1x16x120xf32> to vector<16x120xf32>
    %45 = vector.shape_cast %42 : vector<16x120xf32> to vector<1x16x120xf32>
    tpu.vector_store %arg6[%c0_19, %c0_20, %c0_21], %45 {strides = array<i32>} : memref<1x16x120xf32, #tpu.memory_space<vmem>>, vector<1x16x120xf32>,
    return
  }
  func.func @transform_0(%arg0: i32) -> (i32, i32, i32) {
    %c0_i32 = arith.constant 0 : i32
    %c0_i32_0 = arith.constant 0 : i32
    %c0_i32_1 = arith.constant 0 : i32
    return %arg0, %c0_i32, %c0_i32_0 : i32, i32, i32
  }
  func.func @transform_1(%arg0: i32) -> (i32, i32) {
    %c0_i32 = arith.constant 0 : i32
    %c0_i32_0 = arith.constant 0 : i32
    %c0_i32_1 = arith.constant 0 : i32
    return %c0_i32, %c0_i32_0 : i32, i32
  }
  func.func @transform_2(%arg0: i32) -> (i32, i32) {
    %c0_i32 = arith.constant 0 : i32
    %c0_i32_0 = arith.constant 0 : i32
    %c0_i32_1 = arith.constant 0 : i32
    return %c0_i32, %c0_i32_0 : i32, i32
  }
  func.func @transform_3(%arg0: i32) -> (i32, i32) {
    %c0_i32 = arith.constant 0 : i32
    %c0_i32_0 = arith.constant 0 : i32
    %c0_i32_1 = arith.constant 0 : i32
    return %c0_i32, %c0_i32_0 : i32, i32
  }
  func.func @transform_4(%arg0: i32) -> (i32, i32) {
    %c0_i32 = arith.constant 0 : i32
    %c0_i32_0 = arith.constant 0 : i32
    %c0_i32_1 = arith.constant 0 : i32
    return %c0_i32, %c0_i32_0 : i32, i32
  }
  func.func @transform_5(%arg0: i32) -> (i32, i32, i32) {
    %c0_i32 = arith.constant 0 : i32
    %c0_i32_0 = arith.constant 0 : i32
    %c0_i32_1 = arith.constant 0 : i32
    return %arg0, %c0_i32, %c0_i32_0 : i32, i32, i32
  }
}

module attributes {stable_mosaic.version = 11 : i64} {
  func.func @kernel(%arg0: i32, %arg1: memref<1x96x248xbf16, #tpu.memory_space<vmem>>, %arg2: memref<16x96xbf16, #tpu.memory_space<vmem>>, %arg3: memref<16x4xf32, #tpu.memory_space<vmem>>, %arg4: memref<248x8xf32, #tpu.memory_space<vmem>>, %arg5: memref<8x248xf32, #tpu.memory_space<vmem>>, %arg6: memref<1x16x248xf32, #tpu.memory_space<vmem>>) attributes {dimension_semantics = [#tpu.dimension_semantics<parallel>], iteration_bounds = array<i64: 2>, scalar_prefetch = 0 : i64, scratch_operands = 0 : i64, tpu.core_type = #tpu.core_type<tc>, window_params = [{transform_indices = @transform_0, window_bounds = array<i64: 1, 96, 248>}, {pipeline_mode = #tpu.pipeline_mode<synchronous>, transform_indices = @transform_1, window_bounds = array<i64: 16, 96>}, {pipeline_mode = #tpu.pipeline_mode<synchronous>, transform_indices = @transform_2, window_bounds = array<i64: 16, 4>}, {pipeline_mode = #tpu.pipeline_mode<synchronous>, transform_indices = @transform_3, window_bounds = array<i64: 248, 8>}, {pipeline_mode = #tpu.pipeline_mode<synchronous>, transform_indices = @transform_4, window_bounds = array<i64: 8, 248>}, {transform_indices = @transform_5, window_bounds = array<i64: 1, 16, 248>}]} {
    %c0 = arith.constant 0 : index
    %c0_0 = arith.constant 0 : index
    %0 = vector.load %arg2[%c0, %c0_0] : memref<16x96xbf16, #tpu.memory_space<vmem>>, vector<16x96xbf16>
    %c0_1 = arith.constant 0 : index
    %c0_2 = arith.constant 0 : index
    %c0_3 = arith.constant 0 : index
    %1 = vector.load %arg1[%c0_1, %c0_2, %c0_3] : memref<1x96x248xbf16, #tpu.memory_space<vmem>>, vector<1x96x248xbf16>
    %2 = vector.shape_cast %1 : vector<1x96x248xbf16> to vector<96x248xbf16>
    %cst = arith.constant dense<0.000000e+00> : vector<16x248xf32>
    %3 = tpu.matmul %0, %2, %cst {dimension_numbers = #tpu.dot_dimension_numbers<[1], [0], [0], [1], [0, 0, 1, 1], [], []>} : vector<16x96xbf16>, vector<96x248xbf16>, vector<16x248xf32> -> vector<16x248xf32>
    %c0_4 = arith.constant 0 : index
    %c0_5 = arith.constant 0 : index
    %4 = vector.load %arg3[%c0_4, %c0_5] : memref<16x4xf32, #tpu.memory_space<vmem>>, vector<16x1xf32>
    %5 = vector.broadcast %4 : vector<16x1xf32> to vector<16x248xf32>
    %6 = arith.addf %3, %5 : vector<16x248xf32>
    %cst_6 = arith.constant dense<0.000000e+00> : vector<248xf32>
    %7 = vector.multi_reduction <add>, %6, %cst_6 [0] : vector<16x248xf32> to vector<248xf32>
    %8 = vector.shape_cast %7 : vector<248xf32> to vector<1x248xf32>
    %9 = arith.mulf %6, %6 : vector<16x248xf32>
    %cst_7 = arith.constant dense<0.000000e+00> : vector<248xf32>
    %10 = vector.multi_reduction <add>, %9, %cst_7 [0] : vector<16x248xf32> to vector<248xf32>
    %11 = vector.shape_cast %10 : vector<248xf32> to vector<1x248xf32>
    %12 = tpu.concatenate %8, %11 in 0 : vector<1x248xf32>, vector<1x248xf32> -> vector<2x248xf32>
    %c0_8 = arith.constant 0 : index
    %c0_9 = arith.constant 0 : index
    %13 = vector.load %arg4[%c0_8, %c0_9] : memref<248x8xf32, #tpu.memory_space<vmem>>, vector<248x8xf32>
    %cst_10 = arith.constant dense<0.000000e+00> : vector<2x8xf32>
    %14 = tpu.matmul %12, %13, %cst_10 {dimension_numbers = #tpu.dot_dimension_numbers<[1], [0], [0], [1], [0, 0, 1, 1], [], []>} : vector<2x248xf32>, vector<248x8xf32>, vector<2x8xf32> -> vector<2x8xf32>
    %15 = vector.extract_strided_slice %14 {offsets = [0, 0], sizes = [1, 8], strides = [1, 1]} : vector<2x8xf32> to vector<1x8xf32>
    %16 = vector.extract_strided_slice %14 {offsets = [1, 0], sizes = [1, 8], strides = [1, 1]} : vector<2x8xf32> to vector<1x8xf32>
    %17 = arith.mulf %15, %15 : vector<1x8xf32>
    %18 = arith.subf %16, %17 : vector<1x8xf32>
    %cst_11 = arith.constant 9.99999974E-6 : f32
    %19 = vector.broadcast %cst_11 : f32 to vector<1x8xf32>
    %20 = arith.addf %18, %19 : vector<1x8xf32>
    %21 = math.rsqrt %20 : vector<1x8xf32>
    %22 = tpu.concatenate %15, %21 in 0 : vector<1x8xf32>, vector<1x8xf32> -> vector<2x8xf32>
    %c0_12 = arith.constant 0 : index
    %c0_13 = arith.constant 0 : index
    %23 = vector.load %arg5[%c0_12, %c0_13] : memref<8x248xf32, #tpu.memory_space<vmem>>, vector<8x248xf32>
    %cst_14 = arith.constant dense<0.000000e+00> : vector<2x248xf32>
    %24 = tpu.matmul %22, %23, %cst_14 {dimension_numbers = #tpu.dot_dimension_numbers<[1], [0], [0], [1], [0, 0, 1, 1], [], []>} : vector<2x8xf32>, vector<8x248xf32>, vector<2x248xf32> -> vector<2x248xf32>
    %c0_15 = arith.constant 0 : index
    %c1 = arith.constant 1 : index
    %25 = vector.load %arg3[%c0_15, %c1] : memref<16x4xf32, #tpu.memory_space<vmem>>, vector<16x1xf32>
    %c0_16 = arith.constant 0 : index
    %c2 = arith.constant 2 : index
    %26 = vector.load %arg3[%c0_16, %c2] : memref<16x4xf32, #tpu.memory_space<vmem>>, vector<16x1xf32>
    %c0_17 = arith.constant 0 : index
    %c3 = arith.constant 3 : index
    %27 = vector.load %arg3[%c0_17, %c3] : memref<16x4xf32, #tpu.memory_space<vmem>>, vector<16x1xf32>
    %28 = vector.extract_strided_slice %24 {offsets = [0, 0], sizes = [1, 248], strides = [1, 1]} : vector<2x248xf32> to vector<1x248xf32>
    %29 = vector.broadcast %28 : vector<1x248xf32> to vector<16x248xf32>
    %30 = arith.subf %6, %29 : vector<16x248xf32>
    %31 = vector.extract_strided_slice %24 {offsets = [1, 0], sizes = [1, 248], strides = [1, 1]} : vector<2x248xf32> to vector<1x248xf32>
    %32 = vector.broadcast %31 : vector<1x248xf32> to vector<16x248xf32>
    %33 = arith.mulf %30, %32 : vector<16x248xf32>
    %34 = vector.broadcast %25 : vector<16x1xf32> to vector<16x248xf32>
    %35 = arith.mulf %33, %34 : vector<16x248xf32>
    %36 = vector.broadcast %26 : vector<16x1xf32> to vector<16x248xf32>
    %37 = arith.addf %35, %36 : vector<16x248xf32>
    %cst_18 = arith.constant 0.000000e+00 : f32
    %38 = vector.broadcast %cst_18 : f32 to vector<16x248xf32>
    %39 = arith.cmpf ogt, %37, %38 : vector<16x248xf32>
    %40 = vector.broadcast %27 : vector<16x1xf32> to vector<16x248xf32>
    %41 = arith.mulf %40, %37 : vector<16x248xf32>
    %42 = arith.select %39, %37, %41 : vector<16x248xi1>, vector<16x248xf32>
    %c0_19 = arith.constant 0 : index
    %c0_20 = arith.constant 0 : index
    %c0_21 = arith.constant 0 : index
    %43 = vector.load %arg6[%c0_19, %c0_20, %c0_21] : memref<1x16x248xf32, #tpu.memory_space<vmem>>, vector<1x16x248xf32>
    %44 = vector.shape_cast %43 : vector<1x16x248xf32> to vector<16x248xf32>
    %45 = vector.shape_cast %42 : vector<16x248xf32> to vector<1x16x248xf32>
    tpu.vector_store %arg6[%c0_19, %c0_20, %c0_21], %45 {strides = array<i32>} : memref<1x16x248xf32, #tpu.memory_space<vmem>>, vector<1x16x248xf32>,
    return
  }
  func.func @transform_0(%arg0: i32) -> (i32, i32, i32) {
    %c0_i32 = arith.constant 0 : i32
    %c0_i32_0 = arith.constant 0 : i32
    %c0_i32_1 = arith.constant 0 : i32
    return %arg0, %c0_i32, %c0_i32_0 : i32, i32, i32
  }
  func.func @transform_1(%arg0: i32) -> (i32, i32) {
    %c0_i32 = arith.constant 0 : i32
    %c0_i32_0 = arith.constant 0 : i32
    %c0_i32_1 = arith.constant 0 : i32
    return %c0_i32, %c0_i32_0 : i32, i32
  }
  func.func @transform_2(%arg0: i32) -> (i32, i32) {
    %c0_i32 = arith.constant 0 : i32
    %c0_i32_0 = arith.constant 0 : i32
    %c0_i32_1 = arith.constant 0 : i32
    return %c0_i32, %c0_i32_0 : i32, i32
  }
  func.func @transform_3(%arg0: i32) -> (i32, i32) {
    %c0_i32 = arith.constant 0 : i32
    %c0_i32_0 = arith.constant 0 : i32
    %c0_i32_1 = arith.constant 0 : i32
    return %c0_i32, %c0_i32_0 : i32, i32
  }
  func.func @transform_4(%arg0: i32) -> (i32, i32) {
    %c0_i32 = arith.constant 0 : i32
    %c0_i32_0 = arith.constant 0 : i32
    %c0_i32_1 = arith.constant 0 : i32
    return %c0_i32, %c0_i32_0 : i32, i32
  }
  func.func @transform_5(%arg0: i32) -> (i32, i32, i32) {
    %c0_i32 = arith.constant 0 : i32
    %c0_i32_0 = arith.constant 0 : i32
    %c0_i32_1 = arith.constant 0 : i32
    return %arg0, %c0_i32, %c0_i32_0 : i32, i32, i32
  }
}

module attributes {stable_mosaic.version = 11 : i64} {
  func.func @kernel(%arg0: i32, %arg1: memref<1x96x120xbf16, #tpu.memory_space<vmem>>, %arg2: memref<32x96xbf16, #tpu.memory_space<vmem>>, %arg3: memref<32x4xf32, #tpu.memory_space<vmem>>, %arg4: memref<120x8xf32, #tpu.memory_space<vmem>>, %arg5: memref<8x120xf32, #tpu.memory_space<vmem>>, %arg6: memref<1x16x120xf32, #tpu.memory_space<vmem>>) attributes {dimension_semantics = [#tpu.dimension_semantics<parallel>], iteration_bounds = array<i64: 2>, scalar_prefetch = 0 : i64, scratch_operands = 0 : i64, tpu.core_type = #tpu.core_type<tc>, window_params = [{transform_indices = @transform_0, window_bounds = array<i64: 1, 96, 120>}, {pipeline_mode = #tpu.pipeline_mode<synchronous>, transform_indices = @transform_1, window_bounds = array<i64: 32, 96>}, {pipeline_mode = #tpu.pipeline_mode<synchronous>, transform_indices = @transform_2, window_bounds = array<i64: 32, 4>}, {pipeline_mode = #tpu.pipeline_mode<synchronous>, transform_indices = @transform_3, window_bounds = array<i64: 120, 8>}, {pipeline_mode = #tpu.pipeline_mode<synchronous>, transform_indices = @transform_4, window_bounds = array<i64: 8, 120>}, {transform_indices = @transform_5, window_bounds = array<i64: 1, 16, 120>}]} {
    %c0 = arith.constant 0 : index
    %c0_0 = arith.constant 0 : index
    %0 = vector.load %arg2[%c0, %c0_0] : memref<32x96xbf16, #tpu.memory_space<vmem>>, vector<32x96xbf16>
    %c0_1 = arith.constant 0 : index
    %c0_2 = arith.constant 0 : index
    %c0_3 = arith.constant 0 : index
    %1 = vector.load %arg1[%c0_1, %c0_2, %c0_3] : memref<1x96x120xbf16, #tpu.memory_space<vmem>>, vector<1x96x120xbf16>
    %2 = vector.shape_cast %1 : vector<1x96x120xbf16> to vector<96x120xbf16>
    %cst = arith.constant dense<0.000000e+00> : vector<32x120xf32>
    %3 = tpu.matmul %0, %2, %cst {dimension_numbers = #tpu.dot_dimension_numbers<[1], [0], [0], [1], [0, 0, 1, 1], [], []>} : vector<32x96xbf16>, vector<96x120xbf16>, vector<32x120xf32> -> vector<32x120xf32>
    %c0_4 = arith.constant 0 : index
    %c0_5 = arith.constant 0 : index
    %4 = vector.load %arg3[%c0_4, %c0_5] : memref<32x4xf32, #tpu.memory_space<vmem>>, vector<32x1xf32>
    %5 = vector.broadcast %4 : vector<32x1xf32> to vector<32x120xf32>
    %6 = arith.addf %3, %5 : vector<32x120xf32>
    %7 = vector.extract_strided_slice %6 {offsets = [0, 0], sizes = [16, 120], strides = [1, 1]} : vector<32x120xf32> to vector<16x120xf32>
    %8 = vector.extract_strided_slice %6 {offsets = [16, 0], sizes = [16, 120], strides = [1, 1]} : vector<32x120xf32> to vector<16x120xf32>
    %9 = arith.negf %8 : vector<16x120xf32>
    %10 = math.exp %9 : vector<16x120xf32>
    %cst_6 = arith.constant 1.000000e+00 : f32
    %11 = vector.broadcast %cst_6 : f32 to vector<16x120xf32>
    %12 = arith.addf %11, %10 : vector<16x120xf32>
    %13 = arith.divf %11, %12 : vector<16x120xf32>
    %14 = arith.mulf %7, %13 : vector<16x120xf32>
    %cst_7 = arith.constant dense<0.000000e+00> : vector<120xf32>
    %15 = vector.multi_reduction <add>, %14, %cst_7 [0] : vector<16x120xf32> to vector<120xf32>
    %16 = vector.shape_cast %15 : vector<120xf32> to vector<1x120xf32>
    %17 = arith.mulf %14, %14 : vector<16x120xf32>
    %cst_8 = arith.constant dense<0.000000e+00> : vector<120xf32>
    %18 = vector.multi_reduction <add>, %17, %cst_8 [0] : vector<16x120xf32> to vector<120xf32>
    %19 = vector.shape_cast %18 : vector<120xf32> to vector<1x120xf32>
    %20 = tpu.concatenate %16, %19 in 0 : vector<1x120xf32>, vector<1x120xf32> -> vector<2x120xf32>
    %c0_9 = arith.constant 0 : index
    %c0_10 = arith.constant 0 : index
    %21 = vector.load %arg4[%c0_9, %c0_10] : memref<120x8xf32, #tpu.memory_space<vmem>>, vector<120x8xf32>
    %cst_11 = arith.constant dense<0.000000e+00> : vector<2x8xf32>
    %22 = tpu.matmul %20, %21, %cst_11 {dimension_numbers = #tpu.dot_dimension_numbers<[1], [0], [0], [1], [0, 0, 1, 1], [], []>} : vector<2x120xf32>, vector<120x8xf32>, vector<2x8xf32> -> vector<2x8xf32>
    %23 = vector.extract_strided_slice %22 {offsets = [0, 0], sizes = [1, 8], strides = [1, 1]} : vector<2x8xf32> to vector<1x8xf32>
    %24 = vector.extract_strided_slice %22 {offsets = [1, 0], sizes = [1, 8], strides = [1, 1]} : vector<2x8xf32> to vector<1x8xf32>
    %25 = arith.mulf %23, %23 : vector<1x8xf32>
    %26 = arith.subf %24, %25 : vector<1x8xf32>
    %cst_12 = arith.constant 9.99999974E-6 : f32
    %27 = vector.broadcast %cst_12 : f32 to vector<1x8xf32>
    %28 = arith.addf %26, %27 : vector<1x8xf32>
    %29 = math.rsqrt %28 : vector<1x8xf32>
    %30 = tpu.concatenate %23, %29 in 0 : vector<1x8xf32>, vector<1x8xf32> -> vector<2x8xf32>
    %c0_13 = arith.constant 0 : index
    %c0_14 = arith.constant 0 : index
    %31 = vector.load %arg5[%c0_13, %c0_14] : memref<8x120xf32, #tpu.memory_space<vmem>>, vector<8x120xf32>
    %cst_15 = arith.constant dense<0.000000e+00> : vector<2x120xf32>
    %32 = tpu.matmul %30, %31, %cst_15 {dimension_numbers = #tpu.dot_dimension_numbers<[1], [0], [0], [1], [0, 0, 1, 1], [], []>} : vector<2x8xf32>, vector<8x120xf32>, vector<2x120xf32> -> vector<2x120xf32>
    %c0_16 = arith.constant 0 : index
    %c1 = arith.constant 1 : index
    %33 = vector.load %arg3[%c0_16, %c1] : memref<32x4xf32, #tpu.memory_space<vmem>>, vector<16x1xf32>
    %c0_17 = arith.constant 0 : index
    %c2 = arith.constant 2 : index
    %34 = vector.load %arg3[%c0_17, %c2] : memref<32x4xf32, #tpu.memory_space<vmem>>, vector<16x1xf32>
    %c0_18 = arith.constant 0 : index
    %c3 = arith.constant 3 : index
    %35 = vector.load %arg3[%c0_18, %c3] : memref<32x4xf32, #tpu.memory_space<vmem>>, vector<16x1xf32>
    %36 = vector.extract_strided_slice %32 {offsets = [0, 0], sizes = [1, 120], strides = [1, 1]} : vector<2x120xf32> to vector<1x120xf32>
    %37 = vector.broadcast %36 : vector<1x120xf32> to vector<16x120xf32>
    %38 = arith.subf %14, %37 : vector<16x120xf32>
    %39 = vector.extract_strided_slice %32 {offsets = [1, 0], sizes = [1, 120], strides = [1, 1]} : vector<2x120xf32> to vector<1x120xf32>
    %40 = vector.broadcast %39 : vector<1x120xf32> to vector<16x120xf32>
    %41 = arith.mulf %38, %40 : vector<16x120xf32>
    %42 = vector.broadcast %33 : vector<16x1xf32> to vector<16x120xf32>
    %43 = arith.mulf %41, %42 : vector<16x120xf32>
    %44 = vector.broadcast %34 : vector<16x1xf32> to vector<16x120xf32>
    %45 = arith.addf %43, %44 : vector<16x120xf32>
    %cst_19 = arith.constant 0.000000e+00 : f32
    %46 = vector.broadcast %cst_19 : f32 to vector<16x120xf32>
    %47 = arith.cmpf ogt, %45, %46 : vector<16x120xf32>
    %48 = vector.broadcast %35 : vector<16x1xf32> to vector<16x120xf32>
    %49 = arith.mulf %48, %45 : vector<16x120xf32>
    %50 = arith.select %47, %45, %49 : vector<16x120xi1>, vector<16x120xf32>
    %c0_20 = arith.constant 0 : index
    %c0_21 = arith.constant 0 : index
    %c0_22 = arith.constant 0 : index
    %51 = vector.load %arg6[%c0_20, %c0_21, %c0_22] : memref<1x16x120xf32, #tpu.memory_space<vmem>>, vector<1x16x120xf32>
    %52 = vector.shape_cast %51 : vector<1x16x120xf32> to vector<16x120xf32>
    %53 = vector.shape_cast %50 : vector<16x120xf32> to vector<1x16x120xf32>
    tpu.vector_store %arg6[%c0_20, %c0_21, %c0_22], %53 {strides = array<i32>} : memref<1x16x120xf32, #tpu.memory_space<vmem>>, vector<1x16x120xf32>,
    return
  }
  func.func @transform_0(%arg0: i32) -> (i32, i32, i32) {
    %c0_i32 = arith.constant 0 : i32
    %c0_i32_0 = arith.constant 0 : i32
    %c0_i32_1 = arith.constant 0 : i32
    return %arg0, %c0_i32, %c0_i32_0 : i32, i32, i32
  }
  func.func @transform_1(%arg0: i32) -> (i32, i32) {
    %c0_i32 = arith.constant 0 : i32
    %c0_i32_0 = arith.constant 0 : i32
    %c0_i32_1 = arith.constant 0 : i32
    return %c0_i32, %c0_i32_0 : i32, i32
  }
  func.func @transform_2(%arg0: i32) -> (i32, i32) {
    %c0_i32 = arith.constant 0 : i32
    %c0_i32_0 = arith.constant 0 : i32
    %c0_i32_1 = arith.constant 0 : i32
    return %c0_i32, %c0_i32_0 : i32, i32
  }
  func.func @transform_3(%arg0: i32) -> (i32, i32) {
    %c0_i32 = arith.constant 0 : i32
    %c0_i32_0 = arith.constant 0 : i32
    %c0_i32_1 = arith.constant 0 : i32
    return %c0_i32, %c0_i32_0 : i32, i32
  }
  func.func @transform_4(%arg0: i32) -> (i32, i32) {
    %c0_i32 = arith.constant 0 : i32
    %c0_i32_0 = arith.constant 0 : i32
    %c0_i32_1 = arith.constant 0 : i32
    return %c0_i32, %c0_i32_0 : i32, i32
  }
  func.func @transform_5(%arg0: i32) -> (i32, i32, i32) {
    %c0_i32 = arith.constant 0 : i32
    %c0_i32_0 = arith.constant 0 : i32
    %c0_i32_1 = arith.constant 0 : i32
    return %arg0, %c0_i32, %c0_i32_0 : i32, i32, i32
  }
}

module attributes {stable_mosaic.version = 11 : i64} {
  func.func @kernel(%arg0: i32, %arg1: memref<1x96x56xbf16, #tpu.memory_space<vmem>>, %arg2: memref<32x96xbf16, #tpu.memory_space<vmem>>, %arg3: memref<32x4xf32, #tpu.memory_space<vmem>>, %arg4: memref<56x8xf32, #tpu.memory_space<vmem>>, %arg5: memref<8x56xf32, #tpu.memory_space<vmem>>, %arg6: memref<1x16x56xf32, #tpu.memory_space<vmem>>) attributes {dimension_semantics = [#tpu.dimension_semantics<parallel>], iteration_bounds = array<i64: 2>, scalar_prefetch = 0 : i64, scratch_operands = 0 : i64, tpu.core_type = #tpu.core_type<tc>, window_params = [{transform_indices = @transform_0, window_bounds = array<i64: 1, 96, 56>}, {pipeline_mode = #tpu.pipeline_mode<synchronous>, transform_indices = @transform_1, window_bounds = array<i64: 32, 96>}, {pipeline_mode = #tpu.pipeline_mode<synchronous>, transform_indices = @transform_2, window_bounds = array<i64: 32, 4>}, {pipeline_mode = #tpu.pipeline_mode<synchronous>, transform_indices = @transform_3, window_bounds = array<i64: 56, 8>}, {pipeline_mode = #tpu.pipeline_mode<synchronous>, transform_indices = @transform_4, window_bounds = array<i64: 8, 56>}, {transform_indices = @transform_5, window_bounds = array<i64: 1, 16, 56>}]} {
    %c0 = arith.constant 0 : index
    %c0_0 = arith.constant 0 : index
    %0 = vector.load %arg2[%c0, %c0_0] : memref<32x96xbf16, #tpu.memory_space<vmem>>, vector<32x96xbf16>
    %c0_1 = arith.constant 0 : index
    %c0_2 = arith.constant 0 : index
    %c0_3 = arith.constant 0 : index
    %1 = vector.load %arg1[%c0_1, %c0_2, %c0_3] : memref<1x96x56xbf16, #tpu.memory_space<vmem>>, vector<1x96x56xbf16>
    %2 = vector.shape_cast %1 : vector<1x96x56xbf16> to vector<96x56xbf16>
    %cst = arith.constant dense<0.000000e+00> : vector<32x56xf32>
    %3 = tpu.matmul %0, %2, %cst {dimension_numbers = #tpu.dot_dimension_numbers<[1], [0], [0], [1], [0, 0, 1, 1], [], []>} : vector<32x96xbf16>, vector<96x56xbf16>, vector<32x56xf32> -> vector<32x56xf32>
    %c0_4 = arith.constant 0 : index
    %c0_5 = arith.constant 0 : index
    %4 = vector.load %arg3[%c0_4, %c0_5] : memref<32x4xf32, #tpu.memory_space<vmem>>, vector<32x1xf32>
    %5 = vector.broadcast %4 : vector<32x1xf32> to vector<32x56xf32>
    %6 = arith.addf %3, %5 : vector<32x56xf32>
    %7 = vector.extract_strided_slice %6 {offsets = [0, 0], sizes = [16, 56], strides = [1, 1]} : vector<32x56xf32> to vector<16x56xf32>
    %8 = vector.extract_strided_slice %6 {offsets = [16, 0], sizes = [16, 56], strides = [1, 1]} : vector<32x56xf32> to vector<16x56xf32>
    %9 = arith.negf %8 : vector<16x56xf32>
    %10 = math.exp %9 : vector<16x56xf32>
    %cst_6 = arith.constant 1.000000e+00 : f32
    %11 = vector.broadcast %cst_6 : f32 to vector<16x56xf32>
    %12 = arith.addf %11, %10 : vector<16x56xf32>
    %13 = arith.divf %11, %12 : vector<16x56xf32>
    %14 = arith.mulf %7, %13 : vector<16x56xf32>
    %cst_7 = arith.constant dense<0.000000e+00> : vector<56xf32>
    %15 = vector.multi_reduction <add>, %14, %cst_7 [0] : vector<16x56xf32> to vector<56xf32>
    %16 = vector.shape_cast %15 : vector<56xf32> to vector<1x56xf32>
    %17 = arith.mulf %14, %14 : vector<16x56xf32>
    %cst_8 = arith.constant dense<0.000000e+00> : vector<56xf32>
    %18 = vector.multi_reduction <add>, %17, %cst_8 [0] : vector<16x56xf32> to vector<56xf32>
    %19 = vector.shape_cast %18 : vector<56xf32> to vector<1x56xf32>
    %20 = tpu.concatenate %16, %19 in 0 : vector<1x56xf32>, vector<1x56xf32> -> vector<2x56xf32>
    %c0_9 = arith.constant 0 : index
    %c0_10 = arith.constant 0 : index
    %21 = vector.load %arg4[%c0_9, %c0_10] : memref<56x8xf32, #tpu.memory_space<vmem>>, vector<56x8xf32>
    %cst_11 = arith.constant dense<0.000000e+00> : vector<2x8xf32>
    %22 = tpu.matmul %20, %21, %cst_11 {dimension_numbers = #tpu.dot_dimension_numbers<[1], [0], [0], [1], [0, 0, 1, 1], [], []>} : vector<2x56xf32>, vector<56x8xf32>, vector<2x8xf32> -> vector<2x8xf32>
    %23 = vector.extract_strided_slice %22 {offsets = [0, 0], sizes = [1, 8], strides = [1, 1]} : vector<2x8xf32> to vector<1x8xf32>
    %24 = vector.extract_strided_slice %22 {offsets = [1, 0], sizes = [1, 8], strides = [1, 1]} : vector<2x8xf32> to vector<1x8xf32>
    %25 = arith.mulf %23, %23 : vector<1x8xf32>
    %26 = arith.subf %24, %25 : vector<1x8xf32>
    %cst_12 = arith.constant 9.99999974E-6 : f32
    %27 = vector.broadcast %cst_12 : f32 to vector<1x8xf32>
    %28 = arith.addf %26, %27 : vector<1x8xf32>
    %29 = math.rsqrt %28 : vector<1x8xf32>
    %30 = tpu.concatenate %23, %29 in 0 : vector<1x8xf32>, vector<1x8xf32> -> vector<2x8xf32>
    %c0_13 = arith.constant 0 : index
    %c0_14 = arith.constant 0 : index
    %31 = vector.load %arg5[%c0_13, %c0_14] : memref<8x56xf32, #tpu.memory_space<vmem>>, vector<8x56xf32>
    %cst_15 = arith.constant dense<0.000000e+00> : vector<2x56xf32>
    %32 = tpu.matmul %30, %31, %cst_15 {dimension_numbers = #tpu.dot_dimension_numbers<[1], [0], [0], [1], [0, 0, 1, 1], [], []>} : vector<2x8xf32>, vector<8x56xf32>, vector<2x56xf32> -> vector<2x56xf32>
    %c0_16 = arith.constant 0 : index
    %c1 = arith.constant 1 : index
    %33 = vector.load %arg3[%c0_16, %c1] : memref<32x4xf32, #tpu.memory_space<vmem>>, vector<16x1xf32>
    %c0_17 = arith.constant 0 : index
    %c2 = arith.constant 2 : index
    %34 = vector.load %arg3[%c0_17, %c2] : memref<32x4xf32, #tpu.memory_space<vmem>>, vector<16x1xf32>
    %c0_18 = arith.constant 0 : index
    %c3 = arith.constant 3 : index
    %35 = vector.load %arg3[%c0_18, %c3] : memref<32x4xf32, #tpu.memory_space<vmem>>, vector<16x1xf32>
    %36 = vector.extract_strided_slice %32 {offsets = [0, 0], sizes = [1, 56], strides = [1, 1]} : vector<2x56xf32> to vector<1x56xf32>
    %37 = vector.broadcast %36 : vector<1x56xf32> to vector<16x56xf32>
    %38 = arith.subf %14, %37 : vector<16x56xf32>
    %39 = vector.extract_strided_slice %32 {offsets = [1, 0], sizes = [1, 56], strides = [1, 1]} : vector<2x56xf32> to vector<1x56xf32>
    %40 = vector.broadcast %39 : vector<1x56xf32> to vector<16x56xf32>
    %41 = arith.mulf %38, %40 : vector<16x56xf32>
    %42 = vector.broadcast %33 : vector<16x1xf32> to vector<16x56xf32>
    %43 = arith.mulf %41, %42 : vector<16x56xf32>
    %44 = vector.broadcast %34 : vector<16x1xf32> to vector<16x56xf32>
    %45 = arith.addf %43, %44 : vector<16x56xf32>
    %cst_19 = arith.constant 0.000000e+00 : f32
    %46 = vector.broadcast %cst_19 : f32 to vector<16x56xf32>
    %47 = arith.cmpf ogt, %45, %46 : vector<16x56xf32>
    %48 = vector.broadcast %35 : vector<16x1xf32> to vector<16x56xf32>
    %49 = arith.mulf %48, %45 : vector<16x56xf32>
    %50 = arith.select %47, %45, %49 : vector<16x56xi1>, vector<16x56xf32>
    %c0_20 = arith.constant 0 : index
    %c0_21 = arith.constant 0 : index
    %c0_22 = arith.constant 0 : index
    %51 = vector.load %arg6[%c0_20, %c0_21, %c0_22] : memref<1x16x56xf32, #tpu.memory_space<vmem>>, vector<1x16x56xf32>
    %52 = vector.shape_cast %51 : vector<1x16x56xf32> to vector<16x56xf32>
    %53 = vector.shape_cast %50 : vector<16x56xf32> to vector<1x16x56xf32>
    tpu.vector_store %arg6[%c0_20, %c0_21, %c0_22], %53 {strides = array<i32>} : memref<1x16x56xf32, #tpu.memory_space<vmem>>, vector<1x16x56xf32>,
    return
  }
  func.func @transform_0(%arg0: i32) -> (i32, i32, i32) {
    %c0_i32 = arith.constant 0 : i32
    %c0_i32_0 = arith.constant 0 : i32
    %c0_i32_1 = arith.constant 0 : i32
    return %arg0, %c0_i32, %c0_i32_0 : i32, i32, i32
  }
  func.func @transform_1(%arg0: i32) -> (i32, i32) {
    %c0_i32 = arith.constant 0 : i32
    %c0_i32_0 = arith.constant 0 : i32
    %c0_i32_1 = arith.constant 0 : i32
    return %c0_i32, %c0_i32_0 : i32, i32
  }
  func.func @transform_2(%arg0: i32) -> (i32, i32) {
    %c0_i32 = arith.constant 0 : i32
    %c0_i32_0 = arith.constant 0 : i32
    %c0_i32_1 = arith.constant 0 : i32
    return %c0_i32, %c0_i32_0 : i32, i32
  }
  func.func @transform_3(%arg0: i32) -> (i32, i32) {
    %c0_i32 = arith.constant 0 : i32
    %c0_i32_0 = arith.constant 0 : i32
    %c0_i32_1 = arith.constant 0 : i32
    return %c0_i32, %c0_i32_0 : i32, i32
  }
  func.func @transform_4(%arg0: i32) -> (i32, i32) {
    %c0_i32 = arith.constant 0 : i32
    %c0_i32_0 = arith.constant 0 : i32
    %c0_i32_1 = arith.constant 0 : i32
    return %c0_i32, %c0_i32_0 : i32, i32
  }
  func.func @transform_5(%arg0: i32) -> (i32, i32, i32) {
    %c0_i32 = arith.constant 0 : i32
    %c0_i32_0 = arith.constant 0 : i32
    %c0_i32_1 = arith.constant 0 : i32
    return %arg0, %c0_i32, %c0_i32_0 : i32, i32, i32
  }
}

module attributes {stable_mosaic.version = 11 : i64} {
  func.func @kernel(%arg0: i32, %arg1: memref<1x96x24xbf16, #tpu.memory_space<vmem>>, %arg2: memref<32x96xbf16, #tpu.memory_space<vmem>>, %arg3: memref<32x4xf32, #tpu.memory_space<vmem>>, %arg4: memref<24x8xf32, #tpu.memory_space<vmem>>, %arg5: memref<8x24xf32, #tpu.memory_space<vmem>>, %arg6: memref<1x16x24xf32, #tpu.memory_space<vmem>>) attributes {dimension_semantics = [#tpu.dimension_semantics<parallel>], iteration_bounds = array<i64: 2>, scalar_prefetch = 0 : i64, scratch_operands = 0 : i64, tpu.core_type = #tpu.core_type<tc>, window_params = [{transform_indices = @transform_0, window_bounds = array<i64: 1, 96, 24>}, {pipeline_mode = #tpu.pipeline_mode<synchronous>, transform_indices = @transform_1, window_bounds = array<i64: 32, 96>}, {pipeline_mode = #tpu.pipeline_mode<synchronous>, transform_indices = @transform_2, window_bounds = array<i64: 32, 4>}, {pipeline_mode = #tpu.pipeline_mode<synchronous>, transform_indices = @transform_3, window_bounds = array<i64: 24, 8>}, {pipeline_mode = #tpu.pipeline_mode<synchronous>, transform_indices = @transform_4, window_bounds = array<i64: 8, 24>}, {transform_indices = @transform_5, window_bounds = array<i64: 1, 16, 24>}]} {
    %c0 = arith.constant 0 : index
    %c0_0 = arith.constant 0 : index
    %0 = vector.load %arg2[%c0, %c0_0] : memref<32x96xbf16, #tpu.memory_space<vmem>>, vector<32x96xbf16>
    %c0_1 = arith.constant 0 : index
    %c0_2 = arith.constant 0 : index
    %c0_3 = arith.constant 0 : index
    %1 = vector.load %arg1[%c0_1, %c0_2, %c0_3] : memref<1x96x24xbf16, #tpu.memory_space<vmem>>, vector<1x96x24xbf16>
    %2 = vector.shape_cast %1 : vector<1x96x24xbf16> to vector<96x24xbf16>
    %cst = arith.constant dense<0.000000e+00> : vector<32x24xf32>
    %3 = tpu.matmul %0, %2, %cst {dimension_numbers = #tpu.dot_dimension_numbers<[1], [0], [0], [1], [0, 0, 1, 1], [], []>} : vector<32x96xbf16>, vector<96x24xbf16>, vector<32x24xf32> -> vector<32x24xf32>
    %c0_4 = arith.constant 0 : index
    %c0_5 = arith.constant 0 : index
    %4 = vector.load %arg3[%c0_4, %c0_5] : memref<32x4xf32, #tpu.memory_space<vmem>>, vector<32x1xf32>
    %5 = vector.broadcast %4 : vector<32x1xf32> to vector<32x24xf32>
    %6 = arith.addf %3, %5 : vector<32x24xf32>
    %7 = vector.extract_strided_slice %6 {offsets = [0, 0], sizes = [16, 24], strides = [1, 1]} : vector<32x24xf32> to vector<16x24xf32>
    %8 = vector.extract_strided_slice %6 {offsets = [16, 0], sizes = [16, 24], strides = [1, 1]} : vector<32x24xf32> to vector<16x24xf32>
    %9 = arith.negf %8 : vector<16x24xf32>
    %10 = math.exp %9 : vector<16x24xf32>
    %cst_6 = arith.constant 1.000000e+00 : f32
    %11 = vector.broadcast %cst_6 : f32 to vector<16x24xf32>
    %12 = arith.addf %11, %10 : vector<16x24xf32>
    %13 = arith.divf %11, %12 : vector<16x24xf32>
    %14 = arith.mulf %7, %13 : vector<16x24xf32>
    %cst_7 = arith.constant dense<0.000000e+00> : vector<24xf32>
    %15 = vector.multi_reduction <add>, %14, %cst_7 [0] : vector<16x24xf32> to vector<24xf32>
    %16 = vector.shape_cast %15 : vector<24xf32> to vector<1x24xf32>
    %17 = arith.mulf %14, %14 : vector<16x24xf32>
    %cst_8 = arith.constant dense<0.000000e+00> : vector<24xf32>
    %18 = vector.multi_reduction <add>, %17, %cst_8 [0] : vector<16x24xf32> to vector<24xf32>
    %19 = vector.shape_cast %18 : vector<24xf32> to vector<1x24xf32>
    %20 = tpu.concatenate %16, %19 in 0 : vector<1x24xf32>, vector<1x24xf32> -> vector<2x24xf32>
    %c0_9 = arith.constant 0 : index
    %c0_10 = arith.constant 0 : index
    %21 = vector.load %arg4[%c0_9, %c0_10] : memref<24x8xf32, #tpu.memory_space<vmem>>, vector<24x8xf32>
    %cst_11 = arith.constant dense<0.000000e+00> : vector<2x8xf32>
    %22 = tpu.matmul %20, %21, %cst_11 {dimension_numbers = #tpu.dot_dimension_numbers<[1], [0], [0], [1], [0, 0, 1, 1], [], []>} : vector<2x24xf32>, vector<24x8xf32>, vector<2x8xf32> -> vector<2x8xf32>
    %23 = vector.extract_strided_slice %22 {offsets = [0, 0], sizes = [1, 8], strides = [1, 1]} : vector<2x8xf32> to vector<1x8xf32>
    %24 = vector.extract_strided_slice %22 {offsets = [1, 0], sizes = [1, 8], strides = [1, 1]} : vector<2x8xf32> to vector<1x8xf32>
    %25 = arith.mulf %23, %23 : vector<1x8xf32>
    %26 = arith.subf %24, %25 : vector<1x8xf32>
    %cst_12 = arith.constant 9.99999974E-6 : f32
    %27 = vector.broadcast %cst_12 : f32 to vector<1x8xf32>
    %28 = arith.addf %26, %27 : vector<1x8xf32>
    %29 = math.rsqrt %28 : vector<1x8xf32>
    %30 = tpu.concatenate %23, %29 in 0 : vector<1x8xf32>, vector<1x8xf32> -> vector<2x8xf32>
    %c0_13 = arith.constant 0 : index
    %c0_14 = arith.constant 0 : index
    %31 = vector.load %arg5[%c0_13, %c0_14] : memref<8x24xf32, #tpu.memory_space<vmem>>, vector<8x24xf32>
    %cst_15 = arith.constant dense<0.000000e+00> : vector<2x24xf32>
    %32 = tpu.matmul %30, %31, %cst_15 {dimension_numbers = #tpu.dot_dimension_numbers<[1], [0], [0], [1], [0, 0, 1, 1], [], []>} : vector<2x8xf32>, vector<8x24xf32>, vector<2x24xf32> -> vector<2x24xf32>
    %c0_16 = arith.constant 0 : index
    %c1 = arith.constant 1 : index
    %33 = vector.load %arg3[%c0_16, %c1] : memref<32x4xf32, #tpu.memory_space<vmem>>, vector<16x1xf32>
    %c0_17 = arith.constant 0 : index
    %c2 = arith.constant 2 : index
    %34 = vector.load %arg3[%c0_17, %c2] : memref<32x4xf32, #tpu.memory_space<vmem>>, vector<16x1xf32>
    %c0_18 = arith.constant 0 : index
    %c3 = arith.constant 3 : index
    %35 = vector.load %arg3[%c0_18, %c3] : memref<32x4xf32, #tpu.memory_space<vmem>>, vector<16x1xf32>
    %36 = vector.extract_strided_slice %32 {offsets = [0, 0], sizes = [1, 24], strides = [1, 1]} : vector<2x24xf32> to vector<1x24xf32>
    %37 = vector.broadcast %36 : vector<1x24xf32> to vector<16x24xf32>
    %38 = arith.subf %14, %37 : vector<16x24xf32>
    %39 = vector.extract_strided_slice %32 {offsets = [1, 0], sizes = [1, 24], strides = [1, 1]} : vector<2x24xf32> to vector<1x24xf32>
    %40 = vector.broadcast %39 : vector<1x24xf32> to vector<16x24xf32>
    %41 = arith.mulf %38, %40 : vector<16x24xf32>
    %42 = vector.broadcast %33 : vector<16x1xf32> to vector<16x24xf32>
    %43 = arith.mulf %41, %42 : vector<16x24xf32>
    %44 = vector.broadcast %34 : vector<16x1xf32> to vector<16x24xf32>
    %45 = arith.addf %43, %44 : vector<16x24xf32>
    %cst_19 = arith.constant 0.000000e+00 : f32
    %46 = vector.broadcast %cst_19 : f32 to vector<16x24xf32>
    %47 = arith.cmpf ogt, %45, %46 : vector<16x24xf32>
    %48 = vector.broadcast %35 : vector<16x1xf32> to vector<16x24xf32>
    %49 = arith.mulf %48, %45 : vector<16x24xf32>
    %50 = arith.select %47, %45, %49 : vector<16x24xi1>, vector<16x24xf32>
    %c0_20 = arith.constant 0 : index
    %c0_21 = arith.constant 0 : index
    %c0_22 = arith.constant 0 : index
    %51 = vector.load %arg6[%c0_20, %c0_21, %c0_22] : memref<1x16x24xf32, #tpu.memory_space<vmem>>, vector<1x16x24xf32>
    %52 = vector.shape_cast %51 : vector<1x16x24xf32> to vector<16x24xf32>
    %53 = vector.shape_cast %50 : vector<16x24xf32> to vector<1x16x24xf32>
    tpu.vector_store %arg6[%c0_20, %c0_21, %c0_22], %53 {strides = array<i32>} : memref<1x16x24xf32, #tpu.memory_space<vmem>>, vector<1x16x24xf32>,
    return
  }
  func.func @transform_0(%arg0: i32) -> (i32, i32, i32) {
    %c0_i32 = arith.constant 0 : i32
    %c0_i32_0 = arith.constant 0 : i32
    %c0_i32_1 = arith.constant 0 : i32
    return %arg0, %c0_i32, %c0_i32_0 : i32, i32, i32
  }
  func.func @transform_1(%arg0: i32) -> (i32, i32) {
    %c0_i32 = arith.constant 0 : i32
    %c0_i32_0 = arith.constant 0 : i32
    %c0_i32_1 = arith.constant 0 : i32
    return %c0_i32, %c0_i32_0 : i32, i32
  }
  func.func @transform_2(%arg0: i32) -> (i32, i32) {
    %c0_i32 = arith.constant 0 : i32
    %c0_i32_0 = arith.constant 0 : i32
    %c0_i32_1 = arith.constant 0 : i32
    return %c0_i32, %c0_i32_0 : i32, i32
  }
  func.func @transform_3(%arg0: i32) -> (i32, i32) {
    %c0_i32 = arith.constant 0 : i32
    %c0_i32_0 = arith.constant 0 : i32
    %c0_i32_1 = arith.constant 0 : i32
    return %c0_i32, %c0_i32_0 : i32, i32
  }
  func.func @transform_4(%arg0: i32) -> (i32, i32) {
    %c0_i32 = arith.constant 0 : i32
    %c0_i32_0 = arith.constant 0 : i32
    %c0_i32_1 = arith.constant 0 : i32
    return %c0_i32, %c0_i32_0 : i32, i32
  }
  func.func @transform_5(%arg0: i32) -> (i32, i32, i32) {
    %c0_i32 = arith.constant 0 : i32
    %c0_i32_0 = arith.constant 0 : i32
    %c0_i32_1 = arith.constant 0 : i32
    return %arg0, %c0_i32, %c0_i32_0 : i32, i32, i32
  }
}

module attributes {stable_mosaic.version = 11 : i64} {
  func.func @kernel(%arg0: i32, %arg1: memref<1x96x8xbf16, #tpu.memory_space<vmem>>, %arg2: memref<128x96xbf16, #tpu.memory_space<vmem>>, %arg3: memref<128x4xf32, #tpu.memory_space<vmem>>, %arg4: memref<8x8xf32, #tpu.memory_space<vmem>>, %arg5: memref<8x8xf32, #tpu.memory_space<vmem>>, %arg6: memref<1x64x8xf32, #tpu.memory_space<vmem>>) attributes {dimension_semantics = [#tpu.dimension_semantics<parallel>], iteration_bounds = array<i64: 2>, scalar_prefetch = 0 : i64, scratch_operands = 0 : i64, tpu.core_type = #tpu.core_type<tc>, window_params = [{transform_indices = @transform_0, window_bounds = array<i64: 1, 96, 8>}, {pipeline_mode = #tpu.pipeline_mode<synchronous>, transform_indices = @transform_1, window_bounds = array<i64: 128, 96>}, {pipeline_mode = #tpu.pipeline_mode<synchronous>, transform_indices = @transform_2, window_bounds = array<i64: 128, 4>}, {pipeline_mode = #tpu.pipeline_mode<synchronous>, transform_indices = @transform_3, window_bounds = array<i64: 8, 8>}, {pipeline_mode = #tpu.pipeline_mode<synchronous>, transform_indices = @transform_4, window_bounds = array<i64: 8, 8>}, {transform_indices = @transform_5, window_bounds = array<i64: 1, 64, 8>}]} {
    %c0 = arith.constant 0 : index
    %c0_0 = arith.constant 0 : index
    %0 = vector.load %arg2[%c0, %c0_0] : memref<128x96xbf16, #tpu.memory_space<vmem>>, vector<128x96xbf16>
    %c0_1 = arith.constant 0 : index
    %c0_2 = arith.constant 0 : index
    %c0_3 = arith.constant 0 : index
    %1 = vector.load %arg1[%c0_1, %c0_2, %c0_3] : memref<1x96x8xbf16, #tpu.memory_space<vmem>>, vector<1x96x8xbf16>
    %2 = vector.shape_cast %1 : vector<1x96x8xbf16> to vector<96x8xbf16>
    %cst = arith.constant dense<0.000000e+00> : vector<128x8xf32>
    %3 = tpu.matmul %0, %2, %cst {dimension_numbers = #tpu.dot_dimension_numbers<[1], [0], [0], [1], [0, 0, 1, 1], [], []>} : vector<128x96xbf16>, vector<96x8xbf16>, vector<128x8xf32> -> vector<128x8xf32>
    %c0_4 = arith.constant 0 : index
    %c0_5 = arith.constant 0 : index
    %4 = vector.load %arg3[%c0_4, %c0_5] : memref<128x4xf32, #tpu.memory_space<vmem>>, vector<128x1xf32>
    %5 = vector.broadcast %4 : vector<128x1xf32> to vector<128x8xf32>
    %6 = arith.addf %3, %5 : vector<128x8xf32>
    %7 = vector.extract_strided_slice %6 {offsets = [0, 0], sizes = [64, 8], strides = [1, 1]} : vector<128x8xf32> to vector<64x8xf32>
    %8 = vector.extract_strided_slice %6 {offsets = [64, 0], sizes = [64, 8], strides = [1, 1]} : vector<128x8xf32> to vector<64x8xf32>
    %9 = arith.negf %8 : vector<64x8xf32>
    %10 = math.exp %9 : vector<64x8xf32>
    %cst_6 = arith.constant 1.000000e+00 : f32
    %11 = vector.broadcast %cst_6 : f32 to vector<64x8xf32>
    %12 = arith.addf %11, %10 : vector<64x8xf32>
    %13 = arith.divf %11, %12 : vector<64x8xf32>
    %14 = arith.mulf %7, %13 : vector<64x8xf32>
    %cst_7 = arith.constant dense<0.000000e+00> : vector<8xf32>
    %15 = vector.multi_reduction <add>, %14, %cst_7 [0] : vector<64x8xf32> to vector<8xf32>
    %16 = vector.shape_cast %15 : vector<8xf32> to vector<1x8xf32>
    %17 = arith.mulf %14, %14 : vector<64x8xf32>
    %cst_8 = arith.constant dense<0.000000e+00> : vector<8xf32>
    %18 = vector.multi_reduction <add>, %17, %cst_8 [0] : vector<64x8xf32> to vector<8xf32>
    %19 = vector.shape_cast %18 : vector<8xf32> to vector<1x8xf32>
    %20 = tpu.concatenate %16, %19 in 0 : vector<1x8xf32>, vector<1x8xf32> -> vector<2x8xf32>
    %c0_9 = arith.constant 0 : index
    %c0_10 = arith.constant 0 : index
    %21 = vector.load %arg4[%c0_9, %c0_10] : memref<8x8xf32, #tpu.memory_space<vmem>>, vector<8x8xf32>
    %cst_11 = arith.constant dense<0.000000e+00> : vector<2x8xf32>
    %22 = tpu.matmul %20, %21, %cst_11 {dimension_numbers = #tpu.dot_dimension_numbers<[1], [0], [0], [1], [0, 0, 1, 1], [], []>} : vector<2x8xf32>, vector<8x8xf32>, vector<2x8xf32> -> vector<2x8xf32>
    %23 = vector.extract_strided_slice %22 {offsets = [0, 0], sizes = [1, 8], strides = [1, 1]} : vector<2x8xf32> to vector<1x8xf32>
    %24 = vector.extract_strided_slice %22 {offsets = [1, 0], sizes = [1, 8], strides = [1, 1]} : vector<2x8xf32> to vector<1x8xf32>
    %25 = arith.mulf %23, %23 : vector<1x8xf32>
    %26 = arith.subf %24, %25 : vector<1x8xf32>
    %cst_12 = arith.constant 9.99999974E-6 : f32
    %27 = vector.broadcast %cst_12 : f32 to vector<1x8xf32>
    %28 = arith.addf %26, %27 : vector<1x8xf32>
    %29 = math.rsqrt %28 : vector<1x8xf32>
    %30 = tpu.concatenate %23, %29 in 0 : vector<1x8xf32>, vector<1x8xf32> -> vector<2x8xf32>
    %c0_13 = arith.constant 0 : index
    %c0_14 = arith.constant 0 : index
    %31 = vector.load %arg5[%c0_13, %c0_14] : memref<8x8xf32, #tpu.memory_space<vmem>>, vector<8x8xf32>
    %cst_15 = arith.constant dense<0.000000e+00> : vector<2x8xf32>
    %32 = tpu.matmul %30, %31, %cst_15 {dimension_numbers = #tpu.dot_dimension_numbers<[1], [0], [0], [1], [0, 0, 1, 1], [], []>} : vector<2x8xf32>, vector<8x8xf32>, vector<2x8xf32> -> vector<2x8xf32>
    %c0_16 = arith.constant 0 : index
    %c1 = arith.constant 1 : index
    %33 = vector.load %arg3[%c0_16, %c1] : memref<128x4xf32, #tpu.memory_space<vmem>>, vector<64x1xf32>
    %c0_17 = arith.constant 0 : index
    %c2 = arith.constant 2 : index
    %34 = vector.load %arg3[%c0_17, %c2] : memref<128x4xf32, #tpu.memory_space<vmem>>, vector<64x1xf32>
    %c0_18 = arith.constant 0 : index
    %c3 = arith.constant 3 : index
    %35 = vector.load %arg3[%c0_18, %c3] : memref<128x4xf32, #tpu.memory_space<vmem>>, vector<64x1xf32>
    %36 = vector.extract_strided_slice %32 {offsets = [0, 0], sizes = [1, 8], strides = [1, 1]} : vector<2x8xf32> to vector<1x8xf32>
    %37 = vector.broadcast %36 : vector<1x8xf32> to vector<64x8xf32>
    %38 = arith.subf %14, %37 : vector<64x8xf32>
    %39 = vector.extract_strided_slice %32 {offsets = [1, 0], sizes = [1, 8], strides = [1, 1]} : vector<2x8xf32> to vector<1x8xf32>
    %40 = vector.broadcast %39 : vector<1x8xf32> to vector<64x8xf32>
    %41 = arith.mulf %38, %40 : vector<64x8xf32>
    %42 = vector.broadcast %33 : vector<64x1xf32> to vector<64x8xf32>
    %43 = arith.mulf %41, %42 : vector<64x8xf32>
    %44 = vector.broadcast %34 : vector<64x1xf32> to vector<64x8xf32>
    %45 = arith.addf %43, %44 : vector<64x8xf32>
    %cst_19 = arith.constant 0.000000e+00 : f32
    %46 = vector.broadcast %cst_19 : f32 to vector<64x8xf32>
    %47 = arith.cmpf ogt, %45, %46 : vector<64x8xf32>
    %48 = vector.broadcast %35 : vector<64x1xf32> to vector<64x8xf32>
    %49 = arith.mulf %48, %45 : vector<64x8xf32>
    %50 = arith.select %47, %45, %49 : vector<64x8xi1>, vector<64x8xf32>
    %c0_20 = arith.constant 0 : index
    %c0_21 = arith.constant 0 : index
    %c0_22 = arith.constant 0 : index
    %51 = vector.load %arg6[%c0_20, %c0_21, %c0_22] : memref<1x64x8xf32, #tpu.memory_space<vmem>>, vector<1x64x8xf32>
    %52 = vector.shape_cast %51 : vector<1x64x8xf32> to vector<64x8xf32>
    %53 = vector.shape_cast %50 : vector<64x8xf32> to vector<1x64x8xf32>
    tpu.vector_store %arg6[%c0_20, %c0_21, %c0_22], %53 {strides = array<i32>} : memref<1x64x8xf32, #tpu.memory_space<vmem>>, vector<1x64x8xf32>,
    return
  }
  func.func @transform_0(%arg0: i32) -> (i32, i32, i32) {
    %c0_i32 = arith.constant 0 : i32
    %c0_i32_0 = arith.constant 0 : i32
    %c0_i32_1 = arith.constant 0 : i32
    return %arg0, %c0_i32, %c0_i32_0 : i32, i32, i32
  }
  func.func @transform_1(%arg0: i32) -> (i32, i32) {
    %c0_i32 = arith.constant 0 : i32
    %c0_i32_0 = arith.constant 0 : i32
    %c0_i32_1 = arith.constant 0 : i32
    return %c0_i32, %c0_i32_0 : i32, i32
  }
  func.func @transform_2(%arg0: i32) -> (i32, i32) {
    %c0_i32 = arith.constant 0 : i32
    %c0_i32_0 = arith.constant 0 : i32
    %c0_i32_1 = arith.constant 0 : i32
    return %c0_i32, %c0_i32_0 : i32, i32
  }
  func.func @transform_3(%arg0: i32) -> (i32, i32) {
    %c0_i32 = arith.constant 0 : i32
    %c0_i32_0 = arith.constant 0 : i32
    %c0_i32_1 = arith.constant 0 : i32
    return %c0_i32, %c0_i32_0 : i32, i32
  }
  func.func @transform_4(%arg0: i32) -> (i32, i32) {
    %c0_i32 = arith.constant 0 : i32
    %c0_i32_0 = arith.constant 0 : i32
    %c0_i32_1 = arith.constant 0 : i32
    return %c0_i32, %c0_i32_0 : i32, i32
  }
  func.func @transform_5(%arg0: i32) -> (i32, i32, i32) {
    %c0_i32 = arith.constant 0 : i32
    %c0_i32_0 = arith.constant 0 : i32
    %c0_i32_1 = arith.constant 0 : i32
    return %arg0, %c0_i32, %c0_i32_0 : i32, i32, i32
  }
}

</mosaic_0001>

<llo_original>
// kernel: _lambda_.25
$region0: #{_lambda_.25}
  #allocation0 [shape = 'u32[]', space=smem, size = 0x4, offset = 0x4, fixed_abs, tag = 'smem constant byte address 0x4 - core index']
  #allocation1 [shape = 'u32[72,128]{1,0:T(1,128)}', space=vmem, size = 0x9000, scoped, tag = 'internal scratch']
  %s0 = inlined_call_operand.vmem [shape: bf16[2,20,248], index: 0, kind: input, shape index: {}]
  %s1 = inlined_call_operand.vmem [shape: bf16[32,20], index: 1, kind: input, shape index: {}]
  %s2 = inlined_call_operand.vmem [shape: f32[32,4], index: 2, kind: input, shape index: {}]
  %s3 = inlined_call_operand.vmem [shape: f32[248,8], index: 3, kind: input, shape index: {}]
  %s4 = inlined_call_operand.vmem [shape: f32[8,248], index: 4, kind: input, shape index: {}]
  %s5 = inlined_call_operand.vmem [shape: f32[2,16,248], index: 5, kind: output, shape index: {}]
  %s6 = sld [smem:[#allocation0]]
  $region53: #{_lambda_.25} parent=0
    _
  %s8 = ssub.s32 1, %s6
  %s9 = scalar_select 0, %s8, %s6
  loop: start=0, step=1, limit=4
  $region2: #{_lambda_.25} parent=0 // loop_pre_header
    _
  $region3: #{_lambda_.25} parent=0 // loop_header
    %s11 = sphi 0, %s15
    %p12 = scmp.ge.s32.totalorder %s11, 4
    %s21 = sphi 0, %s23
    %s24 = sphi 0, %s21
    %s25 = sphi 0, %s24
    %s41 = sphi 0, %s25
    %s45 = sphi 0, %s45
    %s47 = sphi 0, %s45
    %s48 = sphi 0, %s47
    %s62 = sphi 0, %s48
    %s66 = sphi 0, %s66
    %s68 = sphi 0, %s66
    %s69 = sphi 0, %s68
    %s83 = sphi 0, %s69
    %s87 = sphi 0, %s87
    %s89 = sphi 0, %s87
    %s90 = sphi 0, %s89
    %s104 = sphi 0, %s90
    %s108 = sphi 0, %s108
    %s110 = sphi 0, %s108
    %s111 = sphi 0, %s110
    %s125 = sphi 0, %s111
    %s131 = sphi 0, %s133
    %s134 = sphi 0, %s131
    %s135 = sphi 0, %s134
    %s151 = sphi 0, %s135
  $region4: #{_lambda_.25} parent=0 // loop_header_branch
    %14 = sbr.rel (%p12) target = $region8
  $region5: #{_lambda_.25} parent=0 // loop_body
    %s16 = ssub.s32 %s11, 1
    %s17 = ssub.s32 %s11, 2
    %s18 = sadd.s32 %s11, 1
    %s19 = ssub.s32 %s11, %s18
    %p20 = scmp.eq.s32.totalorder %s19, 0
    %s22 = sadd.s32 %s21, 1
    %s23 = scalar_select %p20, %s21, %s22
    %p26 = pneg %p20
    %p27 = scmp.eq.s32.totalorder %s11, 1
    %p28 = por %p26, %p27
    %p29 = scmp.ne.s32.totalorder %s21, %s24
    %p30 = scmp.eq.s32.totalorder %s11, 0
    %p31 = por %p29, %p30
    %p32 = scmp.ne.s32.totalorder %s21, %s24
    %p33 = scmp.eq.s32.totalorder %s16, 1
    %p34 = por %p32, %p33
    %p35 = scmp.ne.s32.totalorder %s24, %s25
    %p36 = scmp.eq.s32.totalorder %s16, 0
    %p37 = por %p35, %p36
    %p38 = scmp.ne.s32.totalorder %s24, %s25
    %p39 = scmp.eq.s32.totalorder %s17, 1
    %p40 = por %p38, %p39
    %p42 = scmp.ne.s32.totalorder %s25, %s41
    %p43 = scmp.eq.s32.totalorder %s17, 0
    %p44 = por %p42, %p43
    %s46 = sadd.s32 %s45, 1
    %p49 = scmp.eq.s32.totalorder %s11, 1
    %p50 = scmp.ne.s32.totalorder %s45, %s47
    %p51 = scmp.eq.s32.totalorder %s11, 0
    %p52 = por %p50, %p51
    %p53 = scmp.ne.s32.totalorder %s45, %s47
    %p54 = scmp.eq.s32.totalorder %s16, 1
    %p55 = por %p53, %p54
    %p56 = scmp.ne.s32.totalorder %s47, %s48
    %p57 = scmp.eq.s32.totalorder %s16, 0
    %p58 = por %p56, %p57
    %p59 = scmp.ne.s32.totalorder %s47, %s48
    %p60 = scmp.eq.s32.totalorder %s17, 1
    %p61 = por %p59, %p60
    %p63 = scmp.ne.s32.totalorder %s48, %s62
    %p64 = scmp.eq.s32.totalorder %s17, 0
    %p65 = por %p63, %p64
    %s67 = sadd.s32 %s66, 1
    %p70 = scmp.eq.s32.totalorder %s11, 1
    %p71 = scmp.ne.s32.totalorder %s66, %s68
    %p72 = scmp.eq.s32.totalorder %s11, 0
    %p73 = por %p71, %p72
    %p74 = scmp.ne.s32.totalorder %s66, %s68
    %p75 = scmp.eq.s32.totalorder %s16, 1
    %p76 = por %p74, %p75
    %p77 = scmp.ne.s32.totalorder %s68, %s69
    %p78 = scmp.eq.s32.totalorder %s16, 0
    %p79 = por %p77, %p78
    %p80 = scmp.ne.s32.totalorder %s68, %s69
    %p81 = scmp.eq.s32.totalorder %s17, 1
    %p82 = por %p80, %p81
    %p84 = scmp.ne.s32.totalorder %s69, %s83
    %p85 = scmp.eq.s32.totalorder %s17, 0
    %p86 = por %p84, %p85
    %s88 = sadd.s32 %s87, 1
    %p91 = scmp.eq.s32.totalorder %s11, 1
    %p92 = scmp.ne.s32.totalorder %s87, %s89
    %p93 = scmp.eq.s32.totalorder %s11, 0
    %p94 = por %p92, %p93
    %p95 = scmp.ne.s32.totalorder %s87, %s89
    %p96 = scmp.eq.s32.totalorder %s16, 1
    %p97 = por %p95, %p96
    %p98 = scmp.ne.s32.totalorder %s89, %s90
    %p99 = scmp.eq.s32.totalorder %s16, 0
    %p100 = por %p98, %p99
    %p101 = scmp.ne.s32.totalorder %s89, %s90
    %p102 = scmp.eq.s32.totalorder %s17, 1
    %p103 = por %p101, %p102
    %p105 = scmp.ne.s32.totalorder %s90, %s104
    %p106 = scmp.eq.s32.totalorder %s17, 0
    %p107 = por %p105, %p106
    %s109 = sadd.s32 %s108, 1
    %p112 = scmp.eq.s32.totalorder %s11, 1
    %p113 = scmp.ne.s32.totalorder %s108, %s110
    %p114 = scmp.eq.s32.totalorder %s11, 0
    %p115 = por %p113, %p114
    %p116 = scmp.ne.s32.totalorder %s108, %s110
    %p117 = scmp.eq.s32.totalorder %s16, 1
    %p118 = por %p116, %p117
    %p119 = scmp.ne.s32.totalorder %s110, %s111
    %p120 = scmp.eq.s32.totalorder %s16, 0
    %p121 = por %p119, %p120
    %p122 = scmp.ne.s32.totalorder %s110, %s111
    %p123 = scmp.eq.s32.totalorder %s17, 1
    %p124 = por %p122, %p123
    %p126 = scmp.ne.s32.totalorder %s111, %s125
    %p127 = scmp.eq.s32.totalorder %s17, 0
    %p128 = por %p126, %p127
    %s129 = ssub.s32 %s11, %s18
    %p130 = scmp.eq.s32.totalorder %s129, 0
    %s132 = sadd.s32 %s131, 1
    %s133 = scalar_select %p130, %s131, %s132
    %p136 = pneg %p130
    %p137 = scmp.eq.s32.totalorder %s11, 1
    %p138 = por %p136, %p137
    %p139 = scmp.ne.s32.totalorder %s131, %s134
    %p140 = scmp.eq.s32.totalorder %s11, 0
    %p141 = por %p139, %p140
    %p142 = scmp.ne.s32.totalorder %s131, %s134
    %p143 = scmp.eq.s32.totalorder %s16, 1
    %p144 = por %p142, %p143
    %p145 = scmp.ne.s32.totalorder %s134, %s135
    %p146 = scmp.eq.s32.totalorder %s16, 0
    %p147 = por %p145, %p146
    %p148 = scmp.ne.s32.totalorder %s134, %s135
    %p149 = scmp.eq.s32.totalorder %s17, 1
    %p150 = por %p148, %p149
    %p152 = scmp.ne.s32.totalorder %s135, %s151
    %p153 = scmp.eq.s32.totalorder %s17, 0
    %p154 = por %p152, %p153
    %p155 = scmp.le.s32.totalorder 1, %s11
    %p156 = scmp.lt.s32.totalorder %s11, 3
    %p157 = pnand %p155, %p156
    %p158 = pneg %p157
    // Predicated region
    $region9: #{_lambda_.25} parent=5 // pred_check
      _
    $region10: #{_lambda_.25} parent=5 // pred_check_branch
      %160 = sbr.rel (%p157) target = $region12
    $region11: #{_lambda_.25} parent=5 // pred_region
      %s161 = ssub.s32 %s11, 1
      // Predicated region
      $region13: #{_lambda_.25} parent=11 // pred_check
        %p162 = pneg %p58
      $region14: #{_lambda_.25} parent=11 // pred_check_branch
        %164 = sbr.rel (%p162) target = $region16
      $region15: #{_lambda_.25} parent=11 // pred_region
        _
      $region16: #{_lambda_.25} parent=11 // pred_fallthru
        _
      // Predicated region
      $region17: #{_lambda_.25} parent=11 // pred_check
        %p165 = pneg %p79
      $region18: #{_lambda_.25} parent=11 // pred_check_branch
        %167 = sbr.rel (%p165) target = $region20
      $region19: #{_lambda_.25} parent=11 // pred_region
        _
      $region20: #{_lambda_.25} parent=11 // pred_fallthru
        _
      // Predicated region
      $region21: #{_lambda_.25} parent=11 // pred_check
        %p168 = pneg %p100
      $region22: #{_lambda_.25} parent=11 // pred_check_branch
        %170 = sbr.rel (%p168) target = $region24
      $region23: #{_lambda_.25} parent=11 // pred_region
        _
      $region24: #{_lambda_.25} parent=11 // pred_fallthru
        _
      // Predicated region
      $region25: #{_lambda_.25} parent=11 // pred_check
        %p171 = pneg %p121
      $region26: #{_lambda_.25} parent=11 // pred_check_branch
        %173 = sbr.rel (%p171) target = $region28
      $region27: #{_lambda_.25} parent=11 // pred_region
        _
      $region28: #{_lambda_.25} parent=11 // pred_fallthru
        _
    $region12: #{_lambda_.25} parent=5 // pred_fallthru
      _
    %p174 = scmp.lt.s32.totalorder %s11, 2
    // Predicated region
    $region29: #{_lambda_.25} parent=5 // pred_check
      %p175 = pneg %p174
    $region30: #{_lambda_.25} parent=5 // pred_check_branch
      %177 = sbr.rel (%p175) target = $region32
    $region31: #{_lambda_.25} parent=5 // pred_region
      // Predicated region
      $region33: #{_lambda_.25} parent=31 // pred_check
        %p178 = pneg %p31
      $region34: #{_lambda_.25} parent=31 // pred_check_branch
        %180 = sbr.rel (%p178) target = $region36
      $region35: #{_lambda_.25} parent=31 // pred_region
        %p181 = scmp.lt.s32.totalorder %s11, 1
        %s182 = scalar_select %p181, %s11, 1
        %s183 = smul.addr %s182, 6
        %s184 = smul.addr %s183, 4
        %s185 = scalar_lea.vmem %s0, %s184
      $region36: #{_lambda_.25} parent=31 // pred_fallthru
        _
    $region32: #{_lambda_.25} parent=5 // pred_fallthru
      _
    %p186 = scmp.le.s32.totalorder 1, %s11
    %p187 = scmp.lt.s32.totalorder %s11, 3
    %p188 = pnand %p186, %p187
    %p189 = pneg %p188
    // Predicated region
    $region37: #{_lambda_.25} parent=5 // pred_check
      _
    $region38: #{_lambda_.25} parent=5 // pred_check_branch
      %191 = sbr.rel (%p188) target = $region40
    $region39: #{_lambda_.25} parent=5 // pred_region
      %s192 = ssub.s32 %s11, 1
      %p193 = scmp.lt.s32.totalorder %s16, 1
      %s194 = scalar_select %p193, %s16, 1
      %s195 = smul.addr %s194, 6
      %s196 = smul.addr %s195, 4
      %s197 = scalar_lea.vmem %s0, %s196
      %p198 = pneg %p37
      %p199 = pneg %p34
      %p200 = pneg %p58
      %p201 = pneg %p55
      %p202 = pneg %p79
      %p203 = pneg %p76
      %p204 = pneg %p100
      %p205 = pneg %p97
      %p206 = pneg %p121
      %p207 = pneg %p118
      %p208 = pneg %p147
      %p209 = pneg %p144
      %p210 = scmp.lt.s32.totalorder %s16, 1
      %s211 = scalar_select %p210, %s16, 1
      %s212 = smul.addr %s211, 4
      %s213 = smul.addr %s212, 8
      %s214 = scalar_lea.vmem %s5, %s213
      %p215 = scmp.lt.s32.totalorder %s16, 1
      %s216 = scalar_select %p215, %s16, 1
      %s217 = smul.addr %s216, 6
      %s218 = smul.addr %s217, 4
      %s219 = scalar_lea.vmem %s0, %s218
      %p220 = scmp.lt.s32.totalorder %s16, 1
      %s221 = scalar_select %p220, %s16, 1
      %s222 = smul.addr %s221, 4
      %s223 = smul.addr %s222, 8
      %s224 = scalar_lea.vmem %s5, %s223
      %v226 = vld [vmem:[%s1] sm:$0xf]
      %v227 = vld [vmem:[%s1 + $0x4] sm:$0xf]
      %v228 = vld [vmem:[%s1 + $0x8] sm:$0xf]
      %v229 = vld [vmem:[%s1 + $0xc] sm:$0xf]
      %v230 = vld [vmem:[%s219] sm:$0xff]
      %v231 = vld [vmem:[%s219 + $0x8] sm:$0xff]
      %v232 = vld [vmem:[%s219 + $0x10] sm:$0x33]
      %v233 = vld [vmem:[%s2] sm:$0xff]
      %v234 = vld [vmem:[%s2 + $0x8] sm:$0xff]
      %v235 = vld [vmem:[%s2 + $0x10] sm:$0xff]
      %v236 = vld [vmem:[%s2 + $0x18] sm:$0xff]
      %238 = vset.pattern.permute.xlu0 0
      %239 = vperm.xlu0 %238, %v233
      %v240 = vpop.permute.xlu0 %239
      %243 = vset.pattern.permute.xlu0 0
      %244 = vperm.xlu0 %243, %v234
      %v245 = vpop.permute.xlu0 %244
      %248 = vset.pattern.permute.xlu0 0
      %249 = vperm.xlu0 %248, %v235
      %v250 = vpop.permute.xlu0 %249
      %253 = vset.pattern.permute.xlu0 0
      %254 = vperm.xlu0 %253, %v236
      %v255 = vpop.permute.xlu0 %254
      %v261 = vunpack.c.l.b16 %v226
      %v262 = vunpack.c.l.b16 %v227
      %v263 = vunpack.c.l.b16 %v228
      %v264 = vunpack.c.l.b16 %v229
      %v265 = vpack.c.b16 %v262, %v261
      %v266 = vpack.c.b16 %v264, %v263
      %v270 = vunpack.c.l.b16 %v230
      %v271 = vunpack.c.h.b16 %v230
      %v272 = vunpack.c.l.b16 %v231
      %v273 = vunpack.c.h.b16 %v231
      %v274 = vunpack.c.l.b16 %v232
      %v275 = vunpack.c.h.b16 %v232
      %v276 = vpack.c.b16 %v272, %v270
      %v277 = vpack.c.b16 %v273, %v271
      %v278 = vpack.c.b16 %v274, %v274
      %v279 = vpack.c.b16 %v275, %v275
      %vm282 = vcmask 162816
      %v284 = vsel %vm282, %v265, 0
      %v287 = vsel %vm282, %v266, 0
      %vm289 = vcmask 1041408
      %v291 = vsel %vm289, %v278, 0
      %v294 = vsel %vm289, %v279, 0
      %296 = vmatpush.bf16.msra.mxu0 0
      %297 = vmatpush.bf16.msra.mxu0 0
      %298 = vmatpush.bf16.msra.mxu0 0
      %299 = vmatpush.bf16.msra.mxu0 0
      %300 = vmatpush.bf16.msra.mxu0 0
      %301 = vmatpush.bf16.msra.mxu0 0
      %302 = vmatpush.bf16.msra.mxu0 %v291
      %303 = vmatpush.bf16.msra.mxu0 %v276
      %304 = vmatmul.bf16.gmra.mxu0 %v284
      %v305 = vpop.f32.mrf.mxu0
      %v306 = vadd.f32 %v240, %v305
      %v307 = vpop.f32.mrf.mxu0
      %v308 = vadd.f32 %v245, %v307
      %309 = vmatmul.bf16.gmra.mxu0 %v287
      %v310 = vpop.f32.mrf.mxu0
      %v311 = vadd.f32 %v250, %v310
      %v312 = vpop.f32.mrf.mxu0
      %v313 = vadd.f32 %v255, %v312
      %314 = vdwg.mxu0
      %315 = vmatpush.bf16.msra.mxu0 0
      %316 = vmatpush.bf16.msra.mxu0 0
      %317 = vmatpush.bf16.msra.mxu0 0
      %318 = vmatpush.bf16.msra.mxu0 0
      %319 = vmatpush.bf16.msra.mxu0 0
      %320 = vmatpush.bf16.msra.mxu0 0
      %321 = vmatpush.bf16.msra.mxu0 %v294
      %322 = vmatpush.bf16.msra.mxu0 %v277
      %323 = vmatmul.bf16.gmra.mxu0 %v284
      %v324 = vpop.f32.mrf.mxu0
      %v325 = vadd.f32 %v240, %v324
      %v326 = vpop.f32.mrf.mxu0
      %v327 = vadd.f32 %v245, %v326
      %328 = vmatmul.bf16.gmra.mxu0 %v287
      %v329 = vpop.f32.mrf.mxu0
      %v330 = vadd.f32 %v250, %v329
      %v331 = vpop.f32.mrf.mxu0
      %v332 = vadd.f32 %v255, %v331
      %333 = vdwg.mxu0
      %v334 = vxor.u32 %v311, 2147483648
      %v335 = vxor.u32 %v330, 2147483648
      %v336 = vxor.u32 %v313, 2147483648
      %v337 = vxor.u32 %v332, 2147483648
      %v338 = vmul.f32 %v334, 1.442695
      %v339 = vpow.pop %v338
      %v340 = vmul.f32 %v335, 1.442695
      %v341 = vpow.pop %v340
      %v342 = vmul.f32 %v336, 1.442695
      %v343 = vpow.pop %v342
      %v344 = vmul.f32 %v337, 1.442695
      %v345 = vpow.pop %v344
      %v346 = vadd.f32 %v339, 1.0
      %v347 = vadd.f32 %v341, 1.0
      %v348 = vadd.f32 %v343, 1.0
      %v349 = vadd.f32 %v345, 1.0
      %v350 = vrcp.pop %v346
      %v351 = vmul.f32 %v346, %v350
      %v352 = vsub.f32 1.0, %v351
      %v353 = vmul.f32 %v350, %v352
      %v354 = vadd.f32 %v350, %v353
      %vm355 = vweird.f32 %v346
      %vm356 = vweird.f32 %v350
      %vm357 = vmor %vm355, %vm356
      %v358 = vsel %vm357, %v350, %v354
      %v359 = vand.u32 2147483647, %v346
      %vm360 = vcmp.eq.f32.partialorder %v359, 8.507059e+37
      %v361 = vand.u32 %v346, 2147483648
      %v362 = vor.u32 1.1754944e-38, %v361
      %v363 = vsel %vm360, %v362, %v358
      %v364 = vmul.f32 1.0, %v363
      %v365 = vrcp.pop %v347
      %v366 = vmul.f32 %v347, %v365
      %v367 = vsub.f32 1.0, %v366
      %v368 = vmul.f32 %v365, %v367
      %v369 = vadd.f32 %v365, %v368
      %vm370 = vweird.f32 %v347
      %vm371 = vweird.f32 %v365
      %vm372 = vmor %vm370, %vm371
      %v373 = vsel %vm372, %v365, %v369
      %v374 = vand.u32 2147483647, %v347
      %vm375 = vcmp.eq.f32.partialorder %v374, 8.507059e+37
      %v376 = vand.u32 %v347, 2147483648
      %v377 = vor.u32 1.1754944e-38, %v376
      %v378 = vsel %vm375, %v377, %v373
      %v379 = vmul.f32 1.0, %v378
      %v380 = vrcp.pop %v348
      %v381 = vmul.f32 %v348, %v380
      %v382 = vsub.f32 1.0, %v381
      %v383 = vmul.f32 %v380, %v382
      %v384 = vadd.f32 %v380, %v383
      %vm385 = vweird.f32 %v348
      %vm386 = vweird.f32 %v380
      %vm387 = vmor %vm385, %vm386
      %v388 = vsel %vm387, %v380, %v384
      %v389 = vand.u32 2147483647, %v348
      %vm390 = vcmp.eq.f32.partialorder %v389, 8.507059e+37
      %v391 = vand.u32 %v348, 2147483648
      %v392 = vor.u32 1.1754944e-38, %v391
      %v393 = vsel %vm390, %v392, %v388
      %v394 = vmul.f32 1.0, %v393
      %v395 = vrcp.pop %v349
      %v396 = vmul.f32 %v349, %v395
      %v397 = vsub.f32 1.0, %v396
      %v398 = vmul.f32 %v395, %v397
      %v399 = vadd.f32 %v395, %v398
      %vm400 = vweird.f32 %v349
      %vm401 = vweird.f32 %v395
      %vm402 = vmor %vm400, %vm401
      %v403 = vsel %vm402, %v395, %v399
      %v404 = vand.u32 2147483647, %v349
      %vm405 = vcmp.eq.f32.partialorder %v404, 8.507059e+37
      %v406 = vand.u32 %v349, 2147483648
      %v407 = vor.u32 1.1754944e-38, %v406
      %v408 = vsel %vm405, %v407, %v403
      %v409 = vmul.f32 1.0, %v408
      %v410 = vmul.f32 %v306, %v364
      %v411 = vmul.f32 %v325, %v379
      %v412 = vmul.f32 %v308, %v394
      %v413 = vmul.f32 %v327, %v409
      %v414 = vadd.f32 %v410, %v412
      %v415 = vrot.slane %v414, 4
      %v416 = vadd.f32 %v414, %v415
      %v417 = vrot.slane %v416, 2
      %v418 = vadd.f32 %v416, %v417
      %v419 = vrot.slane %v418, 1
      %v420 = vadd.f32 %v418, %v419
      %vm421 = vcmask 982016
      %v422 = vsel %vm421, %v411, 0.0
      %v423 = vsel %vm421, %v413, 0.0
      %v424 = vadd.f32 %v422, %v423
      %v425 = vrot.slane %v424, 4
      %v426 = vadd.f32 %v424, %v425
      %v427 = vrot.slane %v426, 2
      %v428 = vadd.f32 %v426, %v427
      %v429 = vrot.slane %v428, 1
      %v430 = vadd.f32 %v428, %v429
      %v431 = vmul.f32 %v410, %v410
      %v432 = vmul.f32 %v411, %v411
      %v433 = vmul.f32 %v412, %v412
      %v434 = vmul.f32 %v413, %v413
      %v435 = vadd.f32 %v431, %v433
      %v436 = vrot.slane %v435, 4
      %v437 = vadd.f32 %v435, %v436
      %v438 = vrot.slane %v437, 2
      %v439 = vadd.f32 %v437, %v438
      %v440 = vrot.slane %v439, 1
      %v441 = vadd.f32 %v439, %v440
      %v442 = vsel %vm421, %v432, 0.0
      %v443 = vsel %vm421, %v434, 0.0
      %v444 = vadd.f32 %v442, %v443
      %v445 = vrot.slane %v444, 4
      %v446 = vadd.f32 %v444, %v445
      %v447 = vrot.slane %v446, 2
      %v448 = vadd.f32 %v446, %v447
      %v449 = vrot.slane %v448, 1
      %v450 = vadd.f32 %v448, %v449
      %vm451 = vcmask 1040384
      %v452 = vsel %vm451, %v420, %v441
      %v453 = vsel %vm451, %v430, %v450
      %v454 = vld [vmem:[%s3] sm:$0xff]
      %v455 = vld [vmem:[%s3 + $0x8] sm:$0xff]
      %v456 = vld [vmem:[%s3 + $0x10] sm:$0xff]
      %v457 = vld [vmem:[%s3 + $0x18] sm:$0xff]
      %v458 = vld [vmem:[%s3 + $0x20] sm:$0xff]
      %v459 = vld [vmem:[%s3 + $0x28] sm:$0xff]
      %v460 = vld [vmem:[%s3 + $0x30] sm:$0xff]
      %v461 = vld [vmem:[%s3 + $0x38] sm:$0xff]
      %v462 = vld [vmem:[%s3 + $0x40] sm:$0xff]
      %v463 = vld [vmem:[%s3 + $0x48] sm:$0xff]
      %v464 = vld [vmem:[%s3 + $0x50] sm:$0xff]
      %v465 = vld [vmem:[%s3 + $0x58] sm:$0xff]
      %v466 = vld [vmem:[%s3 + $0x60] sm:$0xff]
      %v467 = vld [vmem:[%s3 + $0x68] sm:$0xff]
      %v468 = vld [vmem:[%s3 + $0x70] sm:$0xff]
      %v469 = vld [vmem:[%s3 + $0x78] sm:$0xff]
      %v470 = vld [vmem:[%s3 + $0x80] sm:$0xff]
      %v471 = vld [vmem:[%s3 + $0x88] sm:$0xff]
      %v472 = vld [vmem:[%s3 + $0x90] sm:$0xff]
      %v473 = vld [vmem:[%s3 + $0x98] sm:$0xff]
      %v474 = vld [vmem:[%s3 + $0xa0] sm:$0xff]
      %v475 = vld [vmem:[%s3 + $0xa8] sm:$0xff]
      %v476 = vld [vmem:[%s3 + $0xb0] sm:$0xff]
      %v477 = vld [vmem:[%s3 + $0xb8] sm:$0xff]
      %v478 = vld [vmem:[%s3 + $0xc0] sm:$0xff]
      %v479 = vld [vmem:[%s3 + $0xc8] sm:$0xff]
      %v480 = vld [vmem:[%s3 + $0xd0] sm:$0xff]
      %v481 = vld [vmem:[%s3 + $0xd8] sm:$0xff]
      %v482 = vld [vmem:[%s3 + $0xe0] sm:$0xff]
      %v483 = vld [vmem:[%s3 + $0xe8] sm:$0xff]
      %v484 = vld [vmem:[%s3 + $0xf0] sm:$0xff]
      %v486 = vsel %vm421, %v453, 0
      %488 = vmatpush.msra.mxu0 %v469
      %489 = vmatpush.msra.mxu0 %v468
      %490 = vmatpush.msra.mxu0 %v467
      %491 = vmatpush.msra.mxu0 %v466
      %492 = vmatpush.msra.mxu0 %v465
      %493 = vmatpush.msra.mxu0 %v464
      %494 = vmatpush.msra.mxu0 %v463
      %495 = vmatpush.msra.mxu0 %v462
      %496 = vmatpush.msra.mxu0 %v461
      %497 = vmatpush.msra.mxu0 %v460
      %498 = vmatpush.msra.mxu0 %v459
      %499 = vmatpush.msra.mxu0 %v458
      %500 = vmatpush.msra.mxu0 %v457
      %501 = vmatpush.msra.mxu0 %v456
      %502 = vmatpush.msra.mxu0 %v455
      %503 = vmatpush.msra.mxu0 %v454
      %504 = vmatmul.f32.gmra.mxu0 %v452
      %v505 = vpop.f32.mrf.mxu0
      %v506 = vadd.f32 0.0, %v505
      %507 = vdwg.mxu0
      %508 = vmatpush.msra.mxu0 0.0
      %509 = vmatpush.msra.mxu0 %v484
      %510 = vmatpush.msra.mxu0 %v483
      %511 = vmatpush.msra.mxu0 %v482
      %512 = vmatpush.msra.mxu0 %v481
      %513 = vmatpush.msra.mxu0 %v480
      %514 = vmatpush.msra.mxu0 %v479
      %515 = vmatpush.msra.mxu0 %v478
      %516 = vmatpush.msra.mxu0 %v477
      %517 = vmatpush.msra.mxu0 %v476
      %518 = vmatpush.msra.mxu0 %v475
      %519 = vmatpush.msra.mxu0 %v474
      %520 = vmatpush.msra.mxu0 %v473
      %521 = vmatpush.msra.mxu0 %v472
      %522 = vmatpush.msra.mxu0 %v471
      %523 = vmatpush.msra.mxu0 %v470
      %524 = vmatmul.f32.gmra.mxu0 %v486
      %v525 = vpop.f32.mrf.mxu0
      %v526 = vadd.f32 %v506, %v525
      %527 = vdwg.mxu0
      %v528 = vmul.f32 %v526, %v526
      %v530 = vrot.slane %v528, 7
      %v532 = vsub.f32 %v526, %v530
      %v533 = vadd.f32 %v532, 1e-05
      %v534 = vrsqrt.pop %v533
      %v535 = vmul.f32 %v534, %v533
      %v536 = vmul.f32 %v535, %v534
      %v537 = vmul.f32 0.5, %v536
      %v538 = vsub.f32 1.5, %v537
      %v539 = vmul.f32 %v534, %v538
      %vm540 = vweird.f32 %v533
      %vm541 = vweird.f32 %v534
      %vm542 = vmor %vm540, %vm541
      %v543 = vsel %vm542, %v534, %v539
      %v544 = vsel %vm451, %v526, %v543
      %v545 = vld [vmem:[%s4] sm:$0xff]
      %v546 = vld [vmem:[%s4 + $0x8] sm:$0xff]
      %vm547 = vcmask 64512
      %v549 = vsel %vm547, %v544, 0
      %551 = vmatpush.msra.mxu0 0.0
      %552 = vmatpush.msra.mxu0 0.0
      %553 = vmatpush.msra.mxu0 0.0
      %554 = vmatpush.msra.mxu0 0.0
      %555 = vmatpush.msra.mxu0 0.0
      %556 = vmatpush.msra.mxu0 0.0
      %557 = vmatpush.msra.mxu0 0.0
      %558 = vmatpush.msra.mxu0 0.0
      %559 = vmatpush.msra.mxu0 0.0
      %560 = vmatpush.msra.mxu0 0.0
      %561 = vmatpush.msra.mxu0 0.0
      %562 = vmatpush.msra.mxu0 0.0
      %563 = vmatpush.msra.mxu0 0.0
      %564 = vmatpush.msra.mxu0 0.0
      %565 = vmatpush.msra.mxu0 0.0
      %566 = vmatpush.msra.mxu0 %v545
      %567 = vmatmul.f32.gmra.mxu0 %v549
      %v568 = vpop.f32.mrf.mxu0
      %v569 = vadd.f32 0.0, %v568
      %570 = vdwg.mxu0
      %571 = vmatpush.msra.mxu0 0.0
      %572 = vmatpush.msra.mxu0 0.0
      %573 = vmatpush.msra.mxu0 0.0
      %574 = vmatpush.msra.mxu0 0.0
      %575 = vmatpush.msra.mxu0 0.0
      %576 = vmatpush.msra.mxu0 0.0
      %577 = vmatpush.msra.mxu0 0.0
      %578 = vmatpush.msra.mxu0 0.0
      %579 = vmatpush.msra.mxu0 0.0
      %580 = vmatpush.msra.mxu0 0.0
      %581 = vmatpush.msra.mxu0 0.0
      %582 = vmatpush.msra.mxu0 0.0
      %583 = vmatpush.msra.mxu0 0.0
      %584 = vmatpush.msra.mxu0 0.0
      %585 = vmatpush.msra.mxu0 0.0
      %586 = vmatpush.msra.mxu0 %v546
      %587 = vmatmul.f32.gmra.mxu0 %v549
      %v588 = vpop.f32.mrf.mxu0
      %v589 = vadd.f32 0.0, %v588
      %590 = vdwg.mxu0
      %v591 = vld [vmem:[%s2] sm:$0xff]
      %v592 = vld [vmem:[%s2 + $0x8] sm:$0xff]
      %v593 = vperm.slane %v569, 0
      %v594 = vperm.slane %v589, 0
      %v595 = vsub.f32 %v410, %v593
      %v596 = vsub.f32 %v411, %v594
      %v597 = vsub.f32 %v412, %v593
      %v598 = vsub.f32 %v413, %v594
      %v599 = vperm.slane %v569, 1
      %v600 = vperm.slane %v589, 1
      %v601 = vmul.f32 %v595, %v599
      %v602 = vmul.f32 %v596, %v600
      %v603 = vmul.f32 %v597, %v599
      %v604 = vmul.f32 %v598, %v600
      %606 = vset.pattern.permute.xlu0 1
      %607 = vperm.xlu0 %606, %v591
      %v608 = vpop.permute.xlu0 %607
      %611 = vset.pattern.permute.xlu0 1
      %612 = vperm.xlu0 %611, %v592
      %v613 = vpop.permute.xlu0 %612
      %v615 = vmul.f32 %v601, %v608
      %v616 = vmul.f32 %v602, %v608
      %v617 = vmul.f32 %v603, %v613
      %v618 = vmul.f32 %v604, %v613
      %619 = vset.pattern.permute.xlu0 2
      %620 = vperm.xlu0 %619, %v591
      %v621 = vpop.permute.xlu0 %620
      %623 = vset.pattern.permute.xlu0 2
      %624 = vperm.xlu0 %623, %v592
      %v625 = vpop.permute.xlu0 %624
      %v627 = vadd.f32 %v615, %v621
      %v628 = vadd.f32 %v616, %v621
      %v629 = vadd.f32 %v617, %v625
      %v630 = vadd.f32 %v618, %v625
      %vm631 = vcmp.gt.f32.partialorder %v627, 0.0
      %vm632 = vcmp.gt.f32.partialorder %v628, 0.0
      %vm633 = vcmp.gt.f32.partialorder %v629, 0.0
      %vm634 = vcmp.gt.f32.partialorder %v630, 0.0
      %635 = vset.pattern.permute.xlu0 3
      %636 = vperm.xlu0 %635, %v591
      %v637 = vpop.permute.xlu0 %636
      %639 = vset.pattern.permute.xlu0 3
      %640 = vperm.xlu0 %639, %v592
      %v641 = vpop.permute.xlu0 %640
      %v643 = vmul.f32 %v637, %v627
      %v644 = vmul.f32 %v637, %v628
      %v645 = vmul.f32 %v641, %v629
      %v646 = vmul.f32 %v641, %v630
      %v647 = vsel %vm631, %v627, %v643
      %v648 = vsel %vm632, %v628, %v644
      %v649 = vsel %vm633, %v629, %v645
      %v650 = vsel %vm634, %v630, %v646
      %651 = vst [vmem:[%s224] sm:$0xff] %v647
      %652 = vst.msk [vmem:[%s224 + $0x8] sm:$0xff] %vm421, %v648
      %653 = vst [vmem:[%s224 + $0x10] sm:$0xff] %v649
      %654 = vst.msk [vmem:[%s224 + $0x18] sm:$0xff] %vm421, %v650
      %p655 = scmp.lt.s32.totalorder %s16, 1
      %s656 = scalar_select %p655, %s16, 1
      %s657 = smul.addr %s656, 4
      %s658 = smul.addr %s657, 8
      %s659 = scalar_lea.vmem %s5, %s658
      // Predicated region
      $region41: #{_lambda_.25} parent=39 // pred_check
        %p660 = pneg %p144
      $region42: #{_lambda_.25} parent=39 // pred_check_branch
        %662 = sbr.rel (%p660) target = $region44
      $region43: #{_lambda_.25} parent=39 // pred_region
        _
      $region44: #{_lambda_.25} parent=39 // pred_fallthru
        _
    $region40: #{_lambda_.25} parent=5 // pred_fallthru
      _
    %p663 = scmp.le.s32.totalorder 2, %s11
    // Predicated region
    $region45: #{_lambda_.25} parent=5 // pred_check
      %p664 = pneg %p663
    $region46: #{_lambda_.25} parent=5 // pred_check_branch
      %666 = sbr.rel (%p664) target = $region48
    $region47: #{_lambda_.25} parent=5 // pred_region
      %s667 = ssub.s32 %s11, 2
      // Predicated region
      $region49: #{_lambda_.25} parent=47 // pred_check
        %p668 = pneg %p150
      $region50: #{_lambda_.25} parent=47 // pred_check_branch
        %670 = sbr.rel (%p668) target = $region52
      $region51: #{_lambda_.25} parent=47 // pred_region
        %p671 = scmp.lt.s32.totalorder %s17, 1
        %s672 = scalar_select %p671, %s17, 1
        %s673 = smul.addr %s672, 4
        %s674 = smul.addr %s673, 8
        %s675 = scalar_lea.vmem %s5, %s674
      $region52: #{_lambda_.25} parent=47 // pred_fallthru
        _
    $region48: #{_lambda_.25} parent=5 // pred_fallthru
      _
  $region6: #{_lambda_.25} parent=0 // loop_footer
    %s15 = sadd.s32 1, %s11
  $region7: #{_lambda_.25} parent=0 // loop_footer_branch
    %10 = sbr.rel target = $region3
  $region8: #{_lambda_.25} parent=0 // loop_exit
    _

// kernel: _lambda_.26
$region0: #{_lambda_.26}
  #allocation0 [shape = 'u32[]', space=smem, size = 0x4, offset = 0x4, fixed_abs, tag = 'smem constant byte address 0x4 - core index']
  #allocation1 [shape = 'u32[72,128]{1,0:T(1,128)}', space=vmem, size = 0x9000, scoped, tag = 'internal scratch']
  %s0 = inlined_call_operand.vmem [shape: bf16[2,48,120], index: 0, kind: input, shape index: {}]
  %s1 = inlined_call_operand.vmem [shape: bf16[16,48], index: 1, kind: input, shape index: {}]
  %s2 = inlined_call_operand.vmem [shape: f32[16,4], index: 2, kind: input, shape index: {}]
  %s3 = inlined_call_operand.vmem [shape: f32[120,8], index: 3, kind: input, shape index: {}]
  %s4 = inlined_call_operand.vmem [shape: f32[8,120], index: 4, kind: input, shape index: {}]
  %s5 = inlined_call_operand.vmem [shape: f32[2,16,120], index: 5, kind: output, shape index: {}]
  %s6 = sld [smem:[#allocation0]]
  $region53: #{_lambda_.26} parent=0
    _
  %s8 = ssub.s32 1, %s6
  %s9 = scalar_select 0, %s8, %s6
  loop: start=0, step=1, limit=4
  $region2: #{_lambda_.26} parent=0 // loop_pre_header
    _
  $region3: #{_lambda_.26} parent=0 // loop_header
    %s11 = sphi 0, %s15
    %p12 = scmp.ge.s32.totalorder %s11, 4
    %s21 = sphi 0, %s23
    %s24 = sphi 0, %s21
    %s25 = sphi 0, %s24
    %s41 = sphi 0, %s25
    %s45 = sphi 0, %s45
    %s47 = sphi 0, %s45
    %s48 = sphi 0, %s47
    %s62 = sphi 0, %s48
    %s66 = sphi 0, %s66
    %s68 = sphi 0, %s66
    %s69 = sphi 0, %s68
    %s83 = sphi 0, %s69
    %s87 = sphi 0, %s87
    %s89 = sphi 0, %s87
    %s90 = sphi 0, %s89
    %s104 = sphi 0, %s90
    %s108 = sphi 0, %s108
    %s110 = sphi 0, %s108
    %s111 = sphi 0, %s110
    %s125 = sphi 0, %s111
    %s131 = sphi 0, %s133
    %s134 = sphi 0, %s131
    %s135 = sphi 0, %s134
    %s151 = sphi 0, %s135
  $region4: #{_lambda_.26} parent=0 // loop_header_branch
    %14 = sbr.rel (%p12) target = $region8
  $region5: #{_lambda_.26} parent=0 // loop_body
    %s16 = ssub.s32 %s11, 1
    %s17 = ssub.s32 %s11, 2
    %s18 = sadd.s32 %s11, 1
    %s19 = ssub.s32 %s11, %s18
    %p20 = scmp.eq.s32.totalorder %s19, 0
    %s22 = sadd.s32 %s21, 1
    %s23 = scalar_select %p20, %s21, %s22
    %p26 = pneg %p20
    %p27 = scmp.eq.s32.totalorder %s11, 1
    %p28 = por %p26, %p27
    %p29 = scmp.ne.s32.totalorder %s21, %s24
    %p30 = scmp.eq.s32.totalorder %s11, 0
    %p31 = por %p29, %p30
    %p32 = scmp.ne.s32.totalorder %s21, %s24
    %p33 = scmp.eq.s32.totalorder %s16, 1
    %p34 = por %p32, %p33
    %p35 = scmp.ne.s32.totalorder %s24, %s25
    %p36 = scmp.eq.s32.totalorder %s16, 0
    %p37 = por %p35, %p36
    %p38 = scmp.ne.s32.totalorder %s24, %s25
    %p39 = scmp.eq.s32.totalorder %s17, 1
    %p40 = por %p38, %p39
    %p42 = scmp.ne.s32.totalorder %s25, %s41
    %p43 = scmp.eq.s32.totalorder %s17, 0
    %p44 = por %p42, %p43
    %s46 = sadd.s32 %s45, 1
    %p49 = scmp.eq.s32.totalorder %s11, 1
    %p50 = scmp.ne.s32.totalorder %s45, %s47
    %p51 = scmp.eq.s32.totalorder %s11, 0
    %p52 = por %p50, %p51
    %p53 = scmp.ne.s32.totalorder %s45, %s47
    %p54 = scmp.eq.s32.totalorder %s16, 1
    %p55 = por %p53, %p54
    %p56 = scmp.ne.s32.totalorder %s47, %s48
    %p57 = scmp.eq.s32.totalorder %s16, 0
    %p58 = por %p56, %p57
    %p59 = scmp.ne.s32.totalorder %s47, %s48
    %p60 = scmp.eq.s32.totalorder %s17, 1
    %p61 = por %p59, %p60
    %p63 = scmp.ne.s32.totalorder %s48, %s62
    %p64 = scmp.eq.s32.totalorder %s17, 0
    %p65 = por %p63, %p64
    %s67 = sadd.s32 %s66, 1
    %p70 = scmp.eq.s32.totalorder %s11, 1
    %p71 = scmp.ne.s32.totalorder %s66, %s68
    %p72 = scmp.eq.s32.totalorder %s11, 0
    %p73 = por %p71, %p72
    %p74 = scmp.ne.s32.totalorder %s66, %s68
    %p75 = scmp.eq.s32.totalorder %s16, 1
    %p76 = por %p74, %p75
    %p77 = scmp.ne.s32.totalorder %s68, %s69
    %p78 = scmp.eq.s32.totalorder %s16, 0
    %p79 = por %p77, %p78
    %p80 = scmp.ne.s32.totalorder %s68, %s69
    %p81 = scmp.eq.s32.totalorder %s17, 1
    %p82 = por %p80, %p81
    %p84 = scmp.ne.s32.totalorder %s69, %s83
    %p85 = scmp.eq.s32.totalorder %s17, 0
    %p86 = por %p84, %p85
    %s88 = sadd.s32 %s87, 1
    %p91 = scmp.eq.s32.totalorder %s11, 1
    %p92 = scmp.ne.s32.totalorder %s87, %s89
    %p93 = scmp.eq.s32.totalorder %s11, 0
    %p94 = por %p92, %p93
    %p95 = scmp.ne.s32.totalorder %s87, %s89
    %p96 = scmp.eq.s32.totalorder %s16, 1
    %p97 = por %p95, %p96
    %p98 = scmp.ne.s32.totalorder %s89, %s90
    %p99 = scmp.eq.s32.totalorder %s16, 0
    %p100 = por %p98, %p99
    %p101 = scmp.ne.s32.totalorder %s89, %s90
    %p102 = scmp.eq.s32.totalorder %s17, 1
    %p103 = por %p101, %p102
    %p105 = scmp.ne.s32.totalorder %s90, %s104
    %p106 = scmp.eq.s32.totalorder %s17, 0
    %p107 = por %p105, %p106
    %s109 = sadd.s32 %s108, 1
    %p112 = scmp.eq.s32.totalorder %s11, 1
    %p113 = scmp.ne.s32.totalorder %s108, %s110
    %p114 = scmp.eq.s32.totalorder %s11, 0
    %p115 = por %p113, %p114
    %p116 = scmp.ne.s32.totalorder %s108, %s110
    %p117 = scmp.eq.s32.totalorder %s16, 1
    %p118 = por %p116, %p117
    %p119 = scmp.ne.s32.totalorder %s110, %s111
    %p120 = scmp.eq.s32.totalorder %s16, 0
    %p121 = por %p119, %p120
    %p122 = scmp.ne.s32.totalorder %s110, %s111
    %p123 = scmp.eq.s32.totalorder %s17, 1
    %p124 = por %p122, %p123
    %p126 = scmp.ne.s32.totalorder %s111, %s125
    %p127 = scmp.eq.s32.totalorder %s17, 0
    %p128 = por %p126, %p127
    %s129 = ssub.s32 %s11, %s18
    %p130 = scmp.eq.s32.totalorder %s129, 0
    %s132 = sadd.s32 %s131, 1
    %s133 = scalar_select %p130, %s131, %s132
    %p136 = pneg %p130
    %p137 = scmp.eq.s32.totalorder %s11, 1
    %p138 = por %p136, %p137
    %p139 = scmp.ne.s32.totalorder %s131, %s134
    %p140 = scmp.eq.s32.totalorder %s11, 0
    %p141 = por %p139, %p140
    %p142 = scmp.ne.s32.totalorder %s131, %s134
    %p143 = scmp.eq.s32.totalorder %s16, 1
    %p144 = por %p142, %p143
    %p145 = scmp.ne.s32.totalorder %s134, %s135
    %p146 = scmp.eq.s32.totalorder %s16, 0
    %p147 = por %p145, %p146
    %p148 = scmp.ne.s32.totalorder %s134, %s135
    %p149 = scmp.eq.s32.totalorder %s17, 1
    %p150 = por %p148, %p149
    %p152 = scmp.ne.s32.totalorder %s135, %s151
    %p153 = scmp.eq.s32.totalorder %s17, 0
    %p154 = por %p152, %p153
    %p155 = scmp.le.s32.totalorder 1, %s11
    %p156 = scmp.lt.s32.totalorder %s11, 3
    %p157 = pnand %p155, %p156
    %p158 = pneg %p157
    // Predicated region
    $region9: #{_lambda_.26} parent=5 // pred_check
      _
    $region10: #{_lambda_.26} parent=5 // pred_check_branch
      %160 = sbr.rel (%p157) target = $region12
    $region11: #{_lambda_.26} parent=5 // pred_region
      %s161 = ssub.s32 %s11, 1
      // Predicated region
      $region13: #{_lambda_.26} parent=11 // pred_check
        %p162 = pneg %p58
      $region14: #{_lambda_.26} parent=11 // pred_check_branch
        %164 = sbr.rel (%p162) target = $region16
      $region15: #{_lambda_.26} parent=11 // pred_region
        _
      $region16: #{_lambda_.26} parent=11 // pred_fallthru
        _
      // Predicated region
      $region17: #{_lambda_.26} parent=11 // pred_check
        %p165 = pneg %p79
      $region18: #{_lambda_.26} parent=11 // pred_check_branch
        %167 = sbr.rel (%p165) target = $region20
      $region19: #{_lambda_.26} parent=11 // pred_region
        _
      $region20: #{_lambda_.26} parent=11 // pred_fallthru
        _
      // Predicated region
      $region21: #{_lambda_.26} parent=11 // pred_check
        %p168 = pneg %p100
      $region22: #{_lambda_.26} parent=11 // pred_check_branch
        %170 = sbr.rel (%p168) target = $region24
      $region23: #{_lambda_.26} parent=11 // pred_region
        _
      $region24: #{_lambda_.26} parent=11 // pred_fallthru
        _
      // Predicated region
      $region25: #{_lambda_.26} parent=11 // pred_check
        %p171 = pneg %p121
      $region26: #{_lambda_.26} parent=11 // pred_check_branch
        %173 = sbr.rel (%p171) target = $region28
      $region27: #{_lambda_.26} parent=11 // pred_region
        _
      $region28: #{_lambda_.26} parent=11 // pred_fallthru
        _
    $region12: #{_lambda_.26} parent=5 // pred_fallthru
      _
    %p174 = scmp.lt.s32.totalorder %s11, 2
    // Predicated region
    $region29: #{_lambda_.26} parent=5 // pred_check
      %p175 = pneg %p174
    $region30: #{_lambda_.26} parent=5 // pred_check_branch
      %177 = sbr.rel (%p175) target = $region32
    $region31: #{_lambda_.26} parent=5 // pred_region
      // Predicated region
      $region33: #{_lambda_.26} parent=31 // pred_check
        %p178 = pneg %p31
      $region34: #{_lambda_.26} parent=31 // pred_check_branch
        %180 = sbr.rel (%p178) target = $region36
      $region35: #{_lambda_.26} parent=31 // pred_region
        %p181 = scmp.lt.s32.totalorder %s11, 1
        %s182 = scalar_select %p181, %s11, 1
        %s183 = smul.addr %s182, 6
        %s184 = smul.addr %s183, 4
        %s185 = scalar_lea.vmem %s0, %s184
      $region36: #{_lambda_.26} parent=31 // pred_fallthru
        _
    $region32: #{_lambda_.26} parent=5 // pred_fallthru
      _
    %p186 = scmp.le.s32.totalorder 1, %s11
    %p187 = scmp.lt.s32.totalorder %s11, 3
    %p188 = pnand %p186, %p187
    %p189 = pneg %p188
    // Predicated region
    $region37: #{_lambda_.26} parent=5 // pred_check
      _
    $region38: #{_lambda_.26} parent=5 // pred_check_branch
      %191 = sbr.rel (%p188) target = $region40
    $region39: #{_lambda_.26} parent=5 // pred_region
      %s192 = ssub.s32 %s11, 1
      %p193 = scmp.lt.s32.totalorder %s16, 1
      %s194 = scalar_select %p193, %s16, 1
      %s195 = smul.addr %s194, 6
      %s196 = smul.addr %s195, 4
      %s197 = scalar_lea.vmem %s0, %s196
      %p198 = pneg %p37
      %p199 = pneg %p34
      %p200 = pneg %p58
      %p201 = pneg %p55
      %p202 = pneg %p79
      %p203 = pneg %p76
      %p204 = pneg %p100
      %p205 = pneg %p97
      %p206 = pneg %p121
      %p207 = pneg %p118
      %p208 = pneg %p147
      %p209 = pneg %p144
      %p210 = scmp.lt.s32.totalorder %s16, 1
      %s211 = scalar_select %p210, %s16, 1
      %s212 = smul.addr %s211, 2
      %s213 = smul.addr %s212, 8
      %s214 = scalar_lea.vmem %s5, %s213
      %p215 = scmp.lt.s32.totalorder %s16, 1
      %s216 = scalar_select %p215, %s16, 1
      %s217 = smul.addr %s216, 6
      %s218 = smul.addr %s217, 4
      %s219 = scalar_lea.vmem %s0, %s218
      %p220 = scmp.lt.s32.totalorder %s16, 1
      %s221 = scalar_select %p220, %s16, 1
      %s222 = smul.addr %s221, 2
      %s223 = smul.addr %s222, 8
      %s224 = scalar_lea.vmem %s5, %s223
      %v226 = vld [vmem:[%s1] sm:$0xf]
      %v227 = vld [vmem:[%s1 + $0x4] sm:$0xf]
      %v228 = vld [vmem:[%s219] sm:$0xf]
      %v229 = vld [vmem:[%s219 + $0x4] sm:$0xf]
      %v230 = vld [vmem:[%s219 + $0x8] sm:$0xf]
      %v231 = vld [vmem:[%s219 + $0xc] sm:$0xf]
      %v232 = vld [vmem:[%s219 + $0x10] sm:$0xf]
      %v233 = vld [vmem:[%s219 + $0x14] sm:$0xf]
      %v234 = vld [vmem:[%s2] sm:$0xff]
      %v235 = vld [vmem:[%s2 + $0x8] sm:$0xff]
      %237 = vset.pattern.permute.xlu0 0
      %238 = vperm.xlu0 %237, %v234
      %v239 = vpop.permute.xlu0 %238
      %242 = vset.pattern.permute.xlu0 0
      %243 = vperm.xlu0 %242, %v235
      %v244 = vpop.permute.xlu0 %243
      %v248 = vunpack.c.l.b16 %v226
      %v249 = vunpack.c.l.b16 %v227
      %v250 = vpack.c.b16 %v249, %v248
      %v257 = vunpack.c.l.b16 %v228
      %v258 = vunpack.c.l.b16 %v229
      %v259 = vunpack.c.l.b16 %v230
      %v260 = vunpack.c.l.b16 %v231
      %v261 = vunpack.c.l.b16 %v232
      %v262 = vunpack.c.l.b16 %v233
      %v263 = vpack.c.b16 %v258, %v257
      %v264 = vpack.c.b16 %v260, %v259
      %v265 = vpack.c.b16 %v262, %v261
      %vm269 = vcmask 392192
      %v271 = vsel %vm269, %v250, 0
      %273 = vmatpush.bf16.msra.mxu0 0
      %274 = vmatpush.bf16.msra.mxu0 0
      %275 = vmatpush.bf16.msra.mxu0 0
      %276 = vmatpush.bf16.msra.mxu0 0
      %277 = vmatpush.bf16.msra.mxu0 0
      %278 = vmatpush.bf16.msra.mxu0 %v265
      %279 = vmatpush.bf16.msra.mxu0 %v264
      %280 = vmatpush.bf16.msra.mxu0 %v263
      %281 = vmatmul.bf16.gmra.mxu0 %v271
      %v282 = vpop.f32.mrf.mxu0
      %v283 = vadd.f32 %v239, %v282
      %v284 = vpop.f32.mrf.mxu0
      %v285 = vadd.f32 %v244, %v284
      %286 = vdwg.mxu0
      %vm287 = vcmask 982016
      %v288 = vsel %vm287, %v283, 0.0
      %v289 = vsel %vm287, %v285, 0.0
      %v290 = vadd.f32 %v288, %v289
      %v291 = vrot.slane %v290, 4
      %v292 = vadd.f32 %v290, %v291
      %v293 = vrot.slane %v292, 2
      %v294 = vadd.f32 %v292, %v293
      %v295 = vrot.slane %v294, 1
      %v296 = vadd.f32 %v294, %v295
      %v297 = vmul.f32 %v283, %v283
      %v298 = vmul.f32 %v285, %v285
      %v299 = vsel %vm287, %v297, 0.0
      %v300 = vsel %vm287, %v298, 0.0
      %v301 = vadd.f32 %v299, %v300
      %v302 = vrot.slane %v301, 4
      %v303 = vadd.f32 %v301, %v302
      %v304 = vrot.slane %v303, 2
      %v305 = vadd.f32 %v303, %v304
      %v306 = vrot.slane %v305, 1
      %v307 = vadd.f32 %v305, %v306
      %vm308 = vcmask 1040384
      %v309 = vsel %vm308, %v296, %v307
      %v310 = vld [vmem:[%s3] sm:$0xff]
      %v311 = vld [vmem:[%s3 + $0x8] sm:$0xff]
      %v312 = vld [vmem:[%s3 + $0x10] sm:$0xff]
      %v313 = vld [vmem:[%s3 + $0x18] sm:$0xff]
      %v314 = vld [vmem:[%s3 + $0x20] sm:$0xff]
      %v315 = vld [vmem:[%s3 + $0x28] sm:$0xff]
      %v316 = vld [vmem:[%s3 + $0x30] sm:$0xff]
      %v317 = vld [vmem:[%s3 + $0x38] sm:$0xff]
      %v318 = vld [vmem:[%s3 + $0x40] sm:$0xff]
      %v319 = vld [vmem:[%s3 + $0x48] sm:$0xff]
      %v320 = vld [vmem:[%s3 + $0x50] sm:$0xff]
      %v321 = vld [vmem:[%s3 + $0x58] sm:$0xff]
      %v322 = vld [vmem:[%s3 + $0x60] sm:$0xff]
      %v323 = vld [vmem:[%s3 + $0x68] sm:$0xff]
      %v324 = vld [vmem:[%s3 + $0x70] sm:$0xff]
      %v326 = vsel %vm287, %v309, 0
      %328 = vmatpush.msra.mxu0 0.0
      %329 = vmatpush.msra.mxu0 %v324
      %330 = vmatpush.msra.mxu0 %v323
      %331 = vmatpush.msra.mxu0 %v322
      %332 = vmatpush.msra.mxu0 %v321
      %333 = vmatpush.msra.mxu0 %v320
      %334 = vmatpush.msra.mxu0 %v319
      %335 = vmatpush.msra.mxu0 %v318
      %336 = vmatpush.msra.mxu0 %v317
      %337 = vmatpush.msra.mxu0 %v316
      %338 = vmatpush.msra.mxu0 %v315
      %339 = vmatpush.msra.mxu0 %v314
      %340 = vmatpush.msra.mxu0 %v313
      %341 = vmatpush.msra.mxu0 %v312
      %342 = vmatpush.msra.mxu0 %v311
      %343 = vmatpush.msra.mxu0 %v310
      %344 = vmatmul.f32.gmra.mxu0 %v326
      %v345 = vpop.f32.mrf.mxu0
      %v346 = vadd.f32 0.0, %v345
      %347 = vdwg.mxu0
      %v348 = vmul.f32 %v346, %v346
      %v350 = vrot.slane %v348, 7
      %v352 = vsub.f32 %v346, %v350
      %v353 = vadd.f32 %v352, 1e-05
      %v354 = vrsqrt.pop %v353
      %v355 = vmul.f32 %v354, %v353
      %v356 = vmul.f32 %v355, %v354
      %v357 = vmul.f32 0.5, %v356
      %v358 = vsub.f32 1.5, %v357
      %v359 = vmul.f32 %v354, %v358
      %vm360 = vweird.f32 %v353
      %vm361 = vweird.f32 %v354
      %vm362 = vmor %vm360, %vm361
      %v363 = vsel %vm362, %v354, %v359
      %v364 = vsel %vm308, %v346, %v363
      %v365 = vld [vmem:[%s4] sm:$0xff]
      %vm366 = vcmask 64512
      %v368 = vsel %vm366, %v364, 0
      %370 = vmatpush.msra.mxu0 0.0
      %371 = vmatpush.msra.mxu0 0.0
      %372 = vmatpush.msra.mxu0 0.0
      %373 = vmatpush.msra.mxu0 0.0
      %374 = vmatpush.msra.mxu0 0.0
      %375 = vmatpush.msra.mxu0 0.0
      %376 = vmatpush.msra.mxu0 0.0
      %377 = vmatpush.msra.mxu0 0.0
      %378 = vmatpush.msra.mxu0 0.0
      %379 = vmatpush.msra.mxu0 0.0
      %380 = vmatpush.msra.mxu0 0.0
      %381 = vmatpush.msra.mxu0 0.0
      %382 = vmatpush.msra.mxu0 0.0
      %383 = vmatpush.msra.mxu0 0.0
      %384 = vmatpush.msra.mxu0 0.0
      %385 = vmatpush.msra.mxu0 %v365
      %386 = vmatmul.f32.gmra.mxu0 %v368
      %v387 = vpop.f32.mrf.mxu0
      %v388 = vadd.f32 0.0, %v387
      %389 = vdwg.mxu0
      %v390 = vperm.slane %v388, 0
      %v391 = vsub.f32 %v283, %v390
      %v392 = vsub.f32 %v285, %v390
      %v393 = vperm.slane %v388, 1
      %v394 = vmul.f32 %v391, %v393
      %v395 = vmul.f32 %v392, %v393
      %396 = vset.pattern.permute.xlu0 1
      %397 = vperm.xlu0 %396, %v234
      %v398 = vpop.permute.xlu0 %397
      %400 = vset.pattern.permute.xlu0 1
      %401 = vperm.xlu0 %400, %v235
      %v402 = vpop.permute.xlu0 %401
      %v404 = vmul.f32 %v394, %v398
      %v405 = vmul.f32 %v395, %v402
      %406 = vset.pattern.permute.xlu0 2
      %407 = vperm.xlu0 %406, %v234
      %v408 = vpop.permute.xlu0 %407
      %410 = vset.pattern.permute.xlu0 2
      %411 = vperm.xlu0 %410, %v235
      %v412 = vpop.permute.xlu0 %411
      %v414 = vadd.f32 %v404, %v408
      %v415 = vadd.f32 %v405, %v412
      %vm416 = vcmp.gt.f32.partialorder %v414, 0.0
      %vm417 = vcmp.gt.f32.partialorder %v415, 0.0
      %418 = vset.pattern.permute.xlu0 3
      %419 = vperm.xlu0 %418, %v234
      %v420 = vpop.permute.xlu0 %419
      %422 = vset.pattern.permute.xlu0 3
      %423 = vperm.xlu0 %422, %v235
      %v424 = vpop.permute.xlu0 %423
      %v426 = vmul.f32 %v420, %v414
      %v427 = vmul.f32 %v424, %v415
      %v428 = vsel %vm416, %v414, %v426
      %v429 = vsel %vm417, %v415, %v427
      %430 = vst.msk [vmem:[%s224] sm:$0xff] %vm287, %v428
      %431 = vst.msk [vmem:[%s224 + $0x8] sm:$0xff] %vm287, %v429
      %p432 = scmp.lt.s32.totalorder %s16, 1
      %s433 = scalar_select %p432, %s16, 1
      %s434 = smul.addr %s433, 2
      %s435 = smul.addr %s434, 8
      %s436 = scalar_lea.vmem %s5, %s435
      // Predicated region
      $region41: #{_lambda_.26} parent=39 // pred_check
        %p437 = pneg %p144
      $region42: #{_lambda_.26} parent=39 // pred_check_branch
        %439 = sbr.rel (%p437) target = $region44
      $region43: #{_lambda_.26} parent=39 // pred_region
        _
      $region44: #{_lambda_.26} parent=39 // pred_fallthru
        _
    $region40: #{_lambda_.26} parent=5 // pred_fallthru
      _
    %p440 = scmp.le.s32.totalorder 2, %s11
    // Predicated region
    $region45: #{_lambda_.26} parent=5 // pred_check
      %p441 = pneg %p440
    $region46: #{_lambda_.26} parent=5 // pred_check_branch
      %443 = sbr.rel (%p441) target = $region48
    $region47: #{_lambda_.26} parent=5 // pred_region
      %s444 = ssub.s32 %s11, 2
      // Predicated region
      $region49: #{_lambda_.26} parent=47 // pred_check
        %p445 = pneg %p150
      $region50: #{_lambda_.26} parent=47 // pred_check_branch
        %447 = sbr.rel (%p445) target = $region52
      $region51: #{_lambda_.26} parent=47 // pred_region
        %p448 = scmp.lt.s32.totalorder %s17, 1
        %s449 = scalar_select %p448, %s17, 1
        %s450 = smul.addr %s449, 2
        %s451 = smul.addr %s450, 8
        %s452 = scalar_lea.vmem %s5, %s451
      $region52: #{_lambda_.26} parent=47 // pred_fallthru
        _
    $region48: #{_lambda_.26} parent=5 // pred_fallthru
      _
  $region6: #{_lambda_.26} parent=0 // loop_footer
    %s15 = sadd.s32 1, %s11
  $region7: #{_lambda_.26} parent=0 // loop_footer_branch
    %10 = sbr.rel target = $region3
  $region8: #{_lambda_.26} parent=0 // loop_exit
    _

// kernel: _lambda_.27
$region0: #{_lambda_.27}
  #allocation0 [shape = 'u32[]', space=smem, size = 0x4, offset = 0x4, fixed_abs, tag = 'smem constant byte address 0x4 - core index']
  #allocation1 [shape = 'u32[72,128]{1,0:T(1,128)}', space=vmem, size = 0x9000, scoped, tag = 'internal scratch']
  %s0 = inlined_call_operand.vmem [shape: bf16[2,48,56], index: 0, kind: input, shape index: {}]
  %s1 = inlined_call_operand.vmem [shape: bf16[16,48], index: 1, kind: input, shape index: {}]
  %s2 = inlined_call_operand.vmem [shape: f32[16,4], index: 2, kind: input, shape index: {}]
  %s3 = inlined_call_operand.vmem [shape: f32[56,8], index: 3, kind: input, shape index: {}]
  %s4 = inlined_call_operand.vmem [shape: f32[8,56], index: 4, kind: input, shape index: {}]
  %s5 = inlined_call_operand.vmem [shape: f32[2,16,56], index: 5, kind: output, shape index: {}]
  %s6 = sld [smem:[#allocation0]]
  $region53: #{_lambda_.27} parent=0
    _
  %s8 = ssub.s32 1, %s6
  %s9 = scalar_select 0, %s8, %s6
  loop: start=0, step=1, limit=4
  $region2: #{_lambda_.27} parent=0 // loop_pre_header
    _
  $region3: #{_lambda_.27} parent=0 // loop_header
    %s11 = sphi 0, %s15
    %p12 = scmp.ge.s32.totalorder %s11, 4
    %s21 = sphi 0, %s23
    %s24 = sphi 0, %s21
    %s25 = sphi 0, %s24
    %s41 = sphi 0, %s25
    %s45 = sphi 0, %s45
    %s47 = sphi 0, %s45
    %s48 = sphi 0, %s47
    %s62 = sphi 0, %s48
    %s66 = sphi 0, %s66
    %s68 = sphi 0, %s66
    %s69 = sphi 0, %s68
    %s83 = sphi 0, %s69
    %s87 = sphi 0, %s87
    %s89 = sphi 0, %s87
    %s90 = sphi 0, %s89
    %s104 = sphi 0, %s90
    %s108 = sphi 0, %s108
    %s110 = sphi 0, %s108
    %s111 = sphi 0, %s110
    %s125 = sphi 0, %s111
    %s131 = sphi 0, %s133
    %s134 = sphi 0, %s131
    %s135 = sphi 0, %s134
    %s151 = sphi 0, %s135
  $region4: #{_lambda_.27} parent=0 // loop_header_branch
    %14 = sbr.rel (%p12) target = $region8
  $region5: #{_lambda_.27} parent=0 // loop_body
    %s16 = ssub.s32 %s11, 1
    %s17 = ssub.s32 %s11, 2
    %s18 = sadd.s32 %s11, 1
    %s19 = ssub.s32 %s11, %s18
    %p20 = scmp.eq.s32.totalorder %s19, 0
    %s22 = sadd.s32 %s21, 1
    %s23 = scalar_select %p20, %s21, %s22
    %p26 = pneg %p20
    %p27 = scmp.eq.s32.totalorder %s11, 1
    %p28 = por %p26, %p27
    %p29 = scmp.ne.s32.totalorder %s21, %s24
    %p30 = scmp.eq.s32.totalorder %s11, 0
    %p31 = por %p29, %p30
    %p32 = scmp.ne.s32.totalorder %s21, %s24
    %p33 = scmp.eq.s32.totalorder %s16, 1
    %p34 = por %p32, %p33
    %p35 = scmp.ne.s32.totalorder %s24, %s25
    %p36 = scmp.eq.s32.totalorder %s16, 0
    %p37 = por %p35, %p36
    %p38 = scmp.ne.s32.totalorder %s24, %s25
    %p39 = scmp.eq.s32.totalorder %s17, 1
    %p40 = por %p38, %p39
    %p42 = scmp.ne.s32.totalorder %s25, %s41
    %p43 = scmp.eq.s32.totalorder %s17, 0
    %p44 = por %p42, %p43
    %s46 = sadd.s32 %s45, 1
    %p49 = scmp.eq.s32.totalorder %s11, 1
    %p50 = scmp.ne.s32.totalorder %s45, %s47
    %p51 = scmp.eq.s32.totalorder %s11, 0
    %p52 = por %p50, %p51
    %p53 = scmp.ne.s32.totalorder %s45, %s47
    %p54 = scmp.eq.s32.totalorder %s16, 1
    %p55 = por %p53, %p54
    %p56 = scmp.ne.s32.totalorder %s47, %s48
    %p57 = scmp.eq.s32.totalorder %s16, 0
    %p58 = por %p56, %p57
    %p59 = scmp.ne.s32.totalorder %s47, %s48
    %p60 = scmp.eq.s32.totalorder %s17, 1
    %p61 = por %p59, %p60
    %p63 = scmp.ne.s32.totalorder %s48, %s62
    %p64 = scmp.eq.s32.totalorder %s17, 0
    %p65 = por %p63, %p64
    %s67 = sadd.s32 %s66, 1
    %p70 = scmp.eq.s32.totalorder %s11, 1
    %p71 = scmp.ne.s32.totalorder %s66, %s68
    %p72 = scmp.eq.s32.totalorder %s11, 0
    %p73 = por %p71, %p72
    %p74 = scmp.ne.s32.totalorder %s66, %s68
    %p75 = scmp.eq.s32.totalorder %s16, 1
    %p76 = por %p74, %p75
    %p77 = scmp.ne.s32.totalorder %s68, %s69
    %p78 = scmp.eq.s32.totalorder %s16, 0
    %p79 = por %p77, %p78
    %p80 = scmp.ne.s32.totalorder %s68, %s69
    %p81 = scmp.eq.s32.totalorder %s17, 1
    %p82 = por %p80, %p81
    %p84 = scmp.ne.s32.totalorder %s69, %s83
    %p85 = scmp.eq.s32.totalorder %s17, 0
    %p86 = por %p84, %p85
    %s88 = sadd.s32 %s87, 1
    %p91 = scmp.eq.s32.totalorder %s11, 1
    %p92 = scmp.ne.s32.totalorder %s87, %s89
    %p93 = scmp.eq.s32.totalorder %s11, 0
    %p94 = por %p92, %p93
    %p95 = scmp.ne.s32.totalorder %s87, %s89
    %p96 = scmp.eq.s32.totalorder %s16, 1
    %p97 = por %p95, %p96
    %p98 = scmp.ne.s32.totalorder %s89, %s90
    %p99 = scmp.eq.s32.totalorder %s16, 0
    %p100 = por %p98, %p99
    %p101 = scmp.ne.s32.totalorder %s89, %s90
    %p102 = scmp.eq.s32.totalorder %s17, 1
    %p103 = por %p101, %p102
    %p105 = scmp.ne.s32.totalorder %s90, %s104
    %p106 = scmp.eq.s32.totalorder %s17, 0
    %p107 = por %p105, %p106
    %s109 = sadd.s32 %s108, 1
    %p112 = scmp.eq.s32.totalorder %s11, 1
    %p113 = scmp.ne.s32.totalorder %s108, %s110
    %p114 = scmp.eq.s32.totalorder %s11, 0
    %p115 = por %p113, %p114
    %p116 = scmp.ne.s32.totalorder %s108, %s110
    %p117 = scmp.eq.s32.totalorder %s16, 1
    %p118 = por %p116, %p117
    %p119 = scmp.ne.s32.totalorder %s110, %s111
    %p120 = scmp.eq.s32.totalorder %s16, 0
    %p121 = por %p119, %p120
    %p122 = scmp.ne.s32.totalorder %s110, %s111
    %p123 = scmp.eq.s32.totalorder %s17, 1
    %p124 = por %p122, %p123
    %p126 = scmp.ne.s32.totalorder %s111, %s125
    %p127 = scmp.eq.s32.totalorder %s17, 0
    %p128 = por %p126, %p127
    %s129 = ssub.s32 %s11, %s18
    %p130 = scmp.eq.s32.totalorder %s129, 0
    %s132 = sadd.s32 %s131, 1
    %s133 = scalar_select %p130, %s131, %s132
    %p136 = pneg %p130
    %p137 = scmp.eq.s32.totalorder %s11, 1
    %p138 = por %p136, %p137
    %p139 = scmp.ne.s32.totalorder %s131, %s134
    %p140 = scmp.eq.s32.totalorder %s11, 0
    %p141 = por %p139, %p140
    %p142 = scmp.ne.s32.totalorder %s131, %s134
    %p143 = scmp.eq.s32.totalorder %s16, 1
    %p144 = por %p142, %p143
    %p145 = scmp.ne.s32.totalorder %s134, %s135
    %p146 = scmp.eq.s32.totalorder %s16, 0
    %p147 = por %p145, %p146
    %p148 = scmp.ne.s32.totalorder %s134, %s135
    %p149 = scmp.eq.s32.totalorder %s17, 1
    %p150 = por %p148, %p149
    %p152 = scmp.ne.s32.totalorder %s135, %s151
    %p153 = scmp.eq.s32.totalorder %s17, 0
    %p154 = por %p152, %p153
    %p155 = scmp.le.s32.totalorder 1, %s11
    %p156 = scmp.lt.s32.totalorder %s11, 3
    %p157 = pnand %p155, %p156
    %p158 = pneg %p157
    // Predicated region
    $region9: #{_lambda_.27} parent=5 // pred_check
      _
    $region10: #{_lambda_.27} parent=5 // pred_check_branch
      %160 = sbr.rel (%p157) target = $region12
    $region11: #{_lambda_.27} parent=5 // pred_region
      %s161 = ssub.s32 %s11, 1
      // Predicated region
      $region13: #{_lambda_.27} parent=11 // pred_check
        %p162 = pneg %p58
      $region14: #{_lambda_.27} parent=11 // pred_check_branch
        %164 = sbr.rel (%p162) target = $region16
      $region15: #{_lambda_.27} parent=11 // pred_region
        _
      $region16: #{_lambda_.27} parent=11 // pred_fallthru
        _
      // Predicated region
      $region17: #{_lambda_.27} parent=11 // pred_check
        %p165 = pneg %p79
      $region18: #{_lambda_.27} parent=11 // pred_check_branch
        %167 = sbr.rel (%p165) target = $region20
      $region19: #{_lambda_.27} parent=11 // pred_region
        _
      $region20: #{_lambda_.27} parent=11 // pred_fallthru
        _
      // Predicated region
      $region21: #{_lambda_.27} parent=11 // pred_check
        %p168 = pneg %p100
      $region22: #{_lambda_.27} parent=11 // pred_check_branch
        %170 = sbr.rel (%p168) target = $region24
      $region23: #{_lambda_.27} parent=11 // pred_region
        _
      $region24: #{_lambda_.27} parent=11 // pred_fallthru
        _
      // Predicated region
      $region25: #{_lambda_.27} parent=11 // pred_check
        %p171 = pneg %p121
      $region26: #{_lambda_.27} parent=11 // pred_check_branch
        %173 = sbr.rel (%p171) target = $region28
      $region27: #{_lambda_.27} parent=11 // pred_region
        _
      $region28: #{_lambda_.27} parent=11 // pred_fallthru
        _
    $region12: #{_lambda_.27} parent=5 // pred_fallthru
      _
    %p174 = scmp.lt.s32.totalorder %s11, 2
    // Predicated region
    $region29: #{_lambda_.27} parent=5 // pred_check
      %p175 = pneg %p174
    $region30: #{_lambda_.27} parent=5 // pred_check_branch
      %177 = sbr.rel (%p175) target = $region32
    $region31: #{_lambda_.27} parent=5 // pred_region
      // Predicated region
      $region33: #{_lambda_.27} parent=31 // pred_check
        %p178 = pneg %p31
      $region34: #{_lambda_.27} parent=31 // pred_check_branch
        %180 = sbr.rel (%p178) target = $region36
      $region35: #{_lambda_.27} parent=31 // pred_region
        %p181 = scmp.lt.s32.totalorder %s11, 1
        %s182 = scalar_select %p181, %s11, 1
        %s183 = smul.addr %s182, 6
        %s184 = smul.addr %s183, 4
        %s185 = scalar_lea.vmem %s0, %s184
      $region36: #{_lambda_.27} parent=31 // pred_fallthru
        _
    $region32: #{_lambda_.27} parent=5 // pred_fallthru
      _
    %p186 = scmp.le.s32.totalorder 1, %s11
    %p187 = scmp.lt.s32.totalorder %s11, 3
    %p188 = pnand %p186, %p187
    %p189 = pneg %p188
    // Predicated region
    $region37: #{_lambda_.27} parent=5 // pred_check
      _
    $region38: #{_lambda_.27} parent=5 // pred_check_branch
      %191 = sbr.rel (%p188) target = $region40
    $region39: #{_lambda_.27} parent=5 // pred_region
      %s192 = ssub.s32 %s11, 1
      %p193 = scmp.lt.s32.totalorder %s16, 1
      %s194 = scalar_select %p193, %s16, 1
      %s195 = smul.addr %s194, 6
      %s196 = smul.addr %s195, 4
      %s197 = scalar_lea.vmem %s0, %s196
      %p198 = pneg %p37
      %p199 = pneg %p34
      %p200 = pneg %p58
      %p201 = pneg %p55
      %p202 = pneg %p79
      %p203 = pneg %p76
      %p204 = pneg %p100
      %p205 = pneg %p97
      %p206 = pneg %p121
      %p207 = pneg %p118
      %p208 = pneg %p147
      %p209 = pneg %p144
      %p210 = scmp.lt.s32.totalorder %s16, 1
      %s211 = scalar_select %p210, %s16, 1
      %s212 = smul.addr %s211, 2
      %s213 = smul.addr %s212, 8
      %s214 = scalar_lea.vmem %s5, %s213
      %p215 = scmp.lt.s32.totalorder %s16, 1
      %s216 = scalar_select %p215, %s16, 1
      %s217 = smul.addr %s216, 6
      %s218 = smul.addr %s217, 4
      %s219 = scalar_lea.vmem %s0, %s218
      %p220 = scmp.lt.s32.totalorder %s16, 1
      %s221 = scalar_select %p220, %s16, 1
      %s222 = smul.addr %s221, 2
      %s223 = smul.addr %s222, 8
      %s224 = scalar_lea.vmem %s5, %s223
      %v226 = vld [vmem:[%s1] sm:$0xf]
      %v227 = vld [vmem:[%s1 + $0x4] sm:$0xf]
      %v228 = vld [vmem:[%s219] sm:$0xf]
      %v229 = vld [vmem:[%s219 + $0x4] sm:$0xf]
      %v230 = vld [vmem:[%s219 + $0x8] sm:$0xf]
      %v231 = vld [vmem:[%s219 + $0xc] sm:$0xf]
      %v232 = vld [vmem:[%s219 + $0x10] sm:$0xf]
      %v233 = vld [vmem:[%s219 + $0x14] sm:$0xf]
      %v234 = vld [vmem:[%s2] sm:$0xff]
      %v235 = vld [vmem:[%s2 + $0x8] sm:$0xff]
      %237 = vset.pattern.permute.xlu0 0
      %238 = vperm.xlu0 %237, %v234
      %v239 = vpop.permute.xlu0 %238
      %242 = vset.pattern.permute.xlu0 0
      %243 = vperm.xlu0 %242, %v235
      %v244 = vpop.permute.xlu0 %243
      %v248 = vunpack.c.l.b16 %v226
      %v249 = vunpack.c.l.b16 %v227
      %v250 = vpack.c.b16 %v249, %v248
      %v257 = vunpack.c.l.b16 %v228
      %v258 = vunpack.c.l.b16 %v229
      %v259 = vunpack.c.l.b16 %v230
      %v260 = vunpack.c.l.b16 %v231
      %v261 = vunpack.c.l.b16 %v232
      %v262 = vunpack.c.l.b16 %v233
      %v263 = vpack.c.b16 %v258, %v257
      %v264 = vpack.c.b16 %v260, %v259
      %v265 = vpack.c.b16 %v262, %v261
      %vm269 = vcmask 392192
      %v271 = vsel %vm269, %v250, 0
      %273 = vmatpush.bf16.msra.mxu0 0
      %274 = vmatpush.bf16.msra.mxu0 0
      %275 = vmatpush.bf16.msra.mxu0 0
      %276 = vmatpush.bf16.msra.mxu0 0
      %277 = vmatpush.bf16.msra.mxu0 0
      %278 = vmatpush.bf16.msra.mxu0 %v265
      %279 = vmatpush.bf16.msra.mxu0 %v264
      %280 = vmatpush.bf16.msra.mxu0 %v263
      %281 = vmatmul.bf16.gmra.mxu0 %v271
      %v282 = vpop.f32.mrf.mxu0
      %v283 = vadd.f32 %v239, %v282
      %v284 = vpop.f32.mrf.mxu0
      %v285 = vadd.f32 %v244, %v284
      %286 = vdwg.mxu0
      %vm287 = vcmask 457728
      %v288 = vsel %vm287, %v283, 0.0
      %v289 = vsel %vm287, %v285, 0.0
      %v290 = vadd.f32 %v288, %v289
      %v291 = vrot.slane %v290, 4
      %v292 = vadd.f32 %v290, %v291
      %v293 = vrot.slane %v292, 2
      %v294 = vadd.f32 %v292, %v293
      %v295 = vrot.slane %v294, 1
      %v296 = vadd.f32 %v294, %v295
      %v297 = vmul.f32 %v283, %v283
      %v298 = vmul.f32 %v285, %v285
      %v299 = vsel %vm287, %v297, 0.0
      %v300 = vsel %vm287, %v298, 0.0
      %v301 = vadd.f32 %v299, %v300
      %v302 = vrot.slane %v301, 4
      %v303 = vadd.f32 %v301, %v302
      %v304 = vrot.slane %v303, 2
      %v305 = vadd.f32 %v303, %v304
      %v306 = vrot.slane %v305, 1
      %v307 = vadd.f32 %v305, %v306
      %vm308 = vcmask 1040384
      %v309 = vsel %vm308, %v296, %v307
      %v310 = vld [vmem:[%s3] sm:$0xff]
      %v311 = vld [vmem:[%s3 + $0x8] sm:$0xff]
      %v312 = vld [vmem:[%s3 + $0x10] sm:$0xff]
      %v313 = vld [vmem:[%s3 + $0x18] sm:$0xff]
      %v314 = vld [vmem:[%s3 + $0x20] sm:$0xff]
      %v315 = vld [vmem:[%s3 + $0x28] sm:$0xff]
      %v316 = vld [vmem:[%s3 + $0x30] sm:$0xff]
      %v318 = vsel %vm287, %v309, 0
      %320 = vmatpush.msra.mxu0 0.0
      %321 = vmatpush.msra.mxu0 0.0
      %322 = vmatpush.msra.mxu0 0.0
      %323 = vmatpush.msra.mxu0 0.0
      %324 = vmatpush.msra.mxu0 0.0
      %325 = vmatpush.msra.mxu0 0.0
      %326 = vmatpush.msra.mxu0 0.0
      %327 = vmatpush.msra.mxu0 0.0
      %328 = vmatpush.msra.mxu0 0.0
      %329 = vmatpush.msra.mxu0 %v316
      %330 = vmatpush.msra.mxu0 %v315
      %331 = vmatpush.msra.mxu0 %v314
      %332 = vmatpush.msra.mxu0 %v313
      %333 = vmatpush.msra.mxu0 %v312
      %334 = vmatpush.msra.mxu0 %v311
      %335 = vmatpush.msra.mxu0 %v310
      %336 = vmatmul.f32.gmra.mxu0 %v318
      %v337 = vpop.f32.mrf.mxu0
      %v338 = vadd.f32 0.0, %v337
      %339 = vdwg.mxu0
      %v340 = vmul.f32 %v338, %v338
      %v342 = vrot.slane %v340, 7
      %v344 = vsub.f32 %v338, %v342
      %v345 = vadd.f32 %v344, 1e-05
      %v346 = vrsqrt.pop %v345
      %v347 = vmul.f32 %v346, %v345
      %v348 = vmul.f32 %v347, %v346
      %v349 = vmul.f32 0.5, %v348
      %v350 = vsub.f32 1.5, %v349
      %v351 = vmul.f32 %v346, %v350
      %vm352 = vweird.f32 %v345
      %vm353 = vweird.f32 %v346
      %vm354 = vmor %vm352, %vm353
      %v355 = vsel %vm354, %v346, %v351
      %v356 = vsel %vm308, %v338, %v355
      %v357 = vld [vmem:[%s4] sm:$0xff]
      %vm358 = vcmask 64512
      %v360 = vsel %vm358, %v356, 0
      %362 = vmatpush.msra.mxu0 0.0
      %363 = vmatpush.msra.mxu0 0.0
      %364 = vmatpush.msra.mxu0 0.0
      %365 = vmatpush.msra.mxu0 0.0
      %366 = vmatpush.msra.mxu0 0.0
      %367 = vmatpush.msra.mxu0 0.0
      %368 = vmatpush.msra.mxu0 0.0
      %369 = vmatpush.msra.mxu0 0.0
      %370 = vmatpush.msra.mxu0 0.0
      %371 = vmatpush.msra.mxu0 0.0
      %372 = vmatpush.msra.mxu0 0.0
      %373 = vmatpush.msra.mxu0 0.0
      %374 = vmatpush.msra.mxu0 0.0
      %375 = vmatpush.msra.mxu0 0.0
      %376 = vmatpush.msra.mxu0 0.0
      %377 = vmatpush.msra.mxu0 %v357
      %378 = vmatmul.f32.gmra.mxu0 %v360
      %v379 = vpop.f32.mrf.mxu0
      %v380 = vadd.f32 0.0, %v379
      %381 = vdwg.mxu0
      %v382 = vperm.slane %v380, 0
      %v383 = vsub.f32 %v283, %v382
      %v384 = vsub.f32 %v285, %v382
      %v385 = vperm.slane %v380, 1
      %v386 = vmul.f32 %v383, %v385
      %v387 = vmul.f32 %v384, %v385
      %388 = vset.pattern.permute.xlu0 1
      %389 = vperm.xlu0 %388, %v234
      %v390 = vpop.permute.xlu0 %389
      %392 = vset.pattern.permute.xlu0 1
      %393 = vperm.xlu0 %392, %v235
      %v394 = vpop.permute.xlu0 %393
      %v396 = vmul.f32 %v386, %v390
      %v397 = vmul.f32 %v387, %v394
      %398 = vset.pattern.permute.xlu0 2
      %399 = vperm.xlu0 %398, %v234
      %v400 = vpop.permute.xlu0 %399
      %402 = vset.pattern.permute.xlu0 2
      %403 = vperm.xlu0 %402, %v235
      %v404 = vpop.permute.xlu0 %403
      %v406 = vadd.f32 %v396, %v400
      %v407 = vadd.f32 %v397, %v404
      %vm408 = vcmp.gt.f32.partialorder %v406, 0.0
      %vm409 = vcmp.gt.f32.partialorder %v407, 0.0
      %410 = vset.pattern.permute.xlu0 3
      %411 = vperm.xlu0 %410, %v234
      %v412 = vpop.permute.xlu0 %411
      %414 = vset.pattern.permute.xlu0 3
      %415 = vperm.xlu0 %414, %v235
      %v416 = vpop.permute.xlu0 %415
      %v418 = vmul.f32 %v412, %v406
      %v419 = vmul.f32 %v416, %v407
      %v420 = vsel %vm408, %v406, %v418
      %v421 = vsel %vm409, %v407, %v419
      %422 = vst.msk [vmem:[%s224] sm:$0xff] %vm287, %v420
      %423 = vst.msk [vmem:[%s224 + $0x8] sm:$0xff] %vm287, %v421
      %p424 = scmp.lt.s32.totalorder %s16, 1
      %s425 = scalar_select %p424, %s16, 1
      %s426 = smul.addr %s425, 2
      %s427 = smul.addr %s426, 8
      %s428 = scalar_lea.vmem %s5, %s427
      // Predicated region
      $region41: #{_lambda_.27} parent=39 // pred_check
        %p429 = pneg %p144
      $region42: #{_lambda_.27} parent=39 // pred_check_branch
        %431 = sbr.rel (%p429) target = $region44
      $region43: #{_lambda_.27} parent=39 // pred_region
        _
      $region44: #{_lambda_.27} parent=39 // pred_fallthru
        _
    $region40: #{_lambda_.27} parent=5 // pred_fallthru
      _
    %p432 = scmp.le.s32.totalorder 2, %s11
    // Predicated region
    $region45: #{_lambda_.27} parent=5 // pred_check
      %p433 = pneg %p432
    $region46: #{_lambda_.27} parent=5 // pred_check_branch
      %435 = sbr.rel (%p433) target = $region48
    $region47: #{_lambda_.27} parent=5 // pred_region
      %s436 = ssub.s32 %s11, 2
      // Predicated region
      $region49: #{_lambda_.27} parent=47 // pred_check
        %p437 = pneg %p150
      $region50: #{_lambda_.27} parent=47 // pred_check_branch
        %439 = sbr.rel (%p437) target = $region52
      $region51: #{_lambda_.27} parent=47 // pred_region
        %p440 = scmp.lt.s32.totalorder %s17, 1
        %s441 = scalar_select %p440, %s17, 1
        %s442 = smul.addr %s441, 2
        %s443 = smul.addr %s442, 8
        %s444 = scalar_lea.vmem %s5, %s443
      $region52: #{_lambda_.27} parent=47 // pred_fallthru
        _
    $region48: #{_lambda_.27} parent=5 // pred_fallthru
      _
  $region6: #{_lambda_.27} parent=0 // loop_footer
    %s15 = sadd.s32 1, %s11
  $region7: #{_lambda_.27} parent=0 // loop_footer_branch
    %10 = sbr.rel target = $region3
  $region8: #{_lambda_.27} parent=0 // loop_exit
    _

// kernel: _lambda_.28
$region0: #{_lambda_.28}
  #allocation0 [shape = 'u32[]', space=smem, size = 0x4, offset = 0x4, fixed_abs, tag = 'smem constant byte address 0x4 - core index']
  #allocation1 [shape = 'u32[72,128]{1,0:T(1,128)}', space=vmem, size = 0x9000, scoped, tag = 'internal scratch']
  %s0 = inlined_call_operand.vmem [shape: bf16[2,48,24], index: 0, kind: input, shape index: {}]
  %s1 = inlined_call_operand.vmem [shape: bf16[16,48], index: 1, kind: input, shape index: {}]
  %s2 = inlined_call_operand.vmem [shape: f32[16,4], index: 2, kind: input, shape index: {}]
  %s3 = inlined_call_operand.vmem [shape: f32[24,8], index: 3, kind: input, shape index: {}]
  %s4 = inlined_call_operand.vmem [shape: f32[8,24], index: 4, kind: input, shape index: {}]
  %s5 = inlined_call_operand.vmem [shape: f32[2,16,24], index: 5, kind: output, shape index: {}]
  %s6 = sld [smem:[#allocation0]]
  $region53: #{_lambda_.28} parent=0
    _
  %s8 = ssub.s32 1, %s6
  %s9 = scalar_select 0, %s8, %s6
  loop: start=0, step=1, limit=4
  $region2: #{_lambda_.28} parent=0 // loop_pre_header
    _
  $region3: #{_lambda_.28} parent=0 // loop_header
    %s11 = sphi 0, %s15
    %p12 = scmp.ge.s32.totalorder %s11, 4
    %s21 = sphi 0, %s23
    %s24 = sphi 0, %s21
    %s25 = sphi 0, %s24
    %s41 = sphi 0, %s25
    %s45 = sphi 0, %s45
    %s47 = sphi 0, %s45
    %s48 = sphi 0, %s47
    %s62 = sphi 0, %s48
    %s66 = sphi 0, %s66
    %s68 = sphi 0, %s66
    %s69 = sphi 0, %s68
    %s83 = sphi 0, %s69
    %s87 = sphi 0, %s87
    %s89 = sphi 0, %s87
    %s90 = sphi 0, %s89
    %s104 = sphi 0, %s90
    %s108 = sphi 0, %s108
    %s110 = sphi 0, %s108
    %s111 = sphi 0, %s110
    %s125 = sphi 0, %s111
    %s131 = sphi 0, %s133
    %s134 = sphi 0, %s131
    %s135 = sphi 0, %s134
    %s151 = sphi 0, %s135
  $region4: #{_lambda_.28} parent=0 // loop_header_branch
    %14 = sbr.rel (%p12) target = $region8
  $region5: #{_lambda_.28} parent=0 // loop_body
    %s16 = ssub.s32 %s11, 1
    %s17 = ssub.s32 %s11, 2
    %s18 = sadd.s32 %s11, 1
    %s19 = ssub.s32 %s11, %s18
    %p20 = scmp.eq.s32.totalorder %s19, 0
    %s22 = sadd.s32 %s21, 1
    %s23 = scalar_select %p20, %s21, %s22
    %p26 = pneg %p20
    %p27 = scmp.eq.s32.totalorder %s11, 1
    %p28 = por %p26, %p27
    %p29 = scmp.ne.s32.totalorder %s21, %s24
    %p30 = scmp.eq.s32.totalorder %s11, 0
    %p31 = por %p29, %p30
    %p32 = scmp.ne.s32.totalorder %s21, %s24
    %p33 = scmp.eq.s32.totalorder %s16, 1
    %p34 = por %p32, %p33
    %p35 = scmp.ne.s32.totalorder %s24, %s25
    %p36 = scmp.eq.s32.totalorder %s16, 0
    %p37 = por %p35, %p36
    %p38 = scmp.ne.s32.totalorder %s24, %s25
    %p39 = scmp.eq.s32.totalorder %s17, 1
    %p40 = por %p38, %p39
    %p42 = scmp.ne.s32.totalorder %s25, %s41
    %p43 = scmp.eq.s32.totalorder %s17, 0
    %p44 = por %p42, %p43
    %s46 = sadd.s32 %s45, 1
    %p49 = scmp.eq.s32.totalorder %s11, 1
    %p50 = scmp.ne.s32.totalorder %s45, %s47
    %p51 = scmp.eq.s32.totalorder %s11, 0
    %p52 = por %p50, %p51
    %p53 = scmp.ne.s32.totalorder %s45, %s47
    %p54 = scmp.eq.s32.totalorder %s16, 1
    %p55 = por %p53, %p54
    %p56 = scmp.ne.s32.totalorder %s47, %s48
    %p57 = scmp.eq.s32.totalorder %s16, 0
    %p58 = por %p56, %p57
    %p59 = scmp.ne.s32.totalorder %s47, %s48
    %p60 = scmp.eq.s32.totalorder %s17, 1
    %p61 = por %p59, %p60
    %p63 = scmp.ne.s32.totalorder %s48, %s62
    %p64 = scmp.eq.s32.totalorder %s17, 0
    %p65 = por %p63, %p64
    %s67 = sadd.s32 %s66, 1
    %p70 = scmp.eq.s32.totalorder %s11, 1
    %p71 = scmp.ne.s32.totalorder %s66, %s68
    %p72 = scmp.eq.s32.totalorder %s11, 0
    %p73 = por %p71, %p72
    %p74 = scmp.ne.s32.totalorder %s66, %s68
    %p75 = scmp.eq.s32.totalorder %s16, 1
    %p76 = por %p74, %p75
    %p77 = scmp.ne.s32.totalorder %s68, %s69
    %p78 = scmp.eq.s32.totalorder %s16, 0
    %p79 = por %p77, %p78
    %p80 = scmp.ne.s32.totalorder %s68, %s69
    %p81 = scmp.eq.s32.totalorder %s17, 1
    %p82 = por %p80, %p81
    %p84 = scmp.ne.s32.totalorder %s69, %s83
    %p85 = scmp.eq.s32.totalorder %s17, 0
    %p86 = por %p84, %p85
    %s88 = sadd.s32 %s87, 1
    %p91 = scmp.eq.s32.totalorder %s11, 1
    %p92 = scmp.ne.s32.totalorder %s87, %s89
    %p93 = scmp.eq.s32.totalorder %s11, 0
    %p94 = por %p92, %p93
    %p95 = scmp.ne.s32.totalorder %s87, %s89
    %p96 = scmp.eq.s32.totalorder %s16, 1
    %p97 = por %p95, %p96
    %p98 = scmp.ne.s32.totalorder %s89, %s90
    %p99 = scmp.eq.s32.totalorder %s16, 0
    %p100 = por %p98, %p99
    %p101 = scmp.ne.s32.totalorder %s89, %s90
    %p102 = scmp.eq.s32.totalorder %s17, 1
    %p103 = por %p101, %p102
    %p105 = scmp.ne.s32.totalorder %s90, %s104
    %p106 = scmp.eq.s32.totalorder %s17, 0
    %p107 = por %p105, %p106
    %s109 = sadd.s32 %s108, 1
    %p112 = scmp.eq.s32.totalorder %s11, 1
    %p113 = scmp.ne.s32.totalorder %s108, %s110
    %p114 = scmp.eq.s32.totalorder %s11, 0
    %p115 = por %p113, %p114
    %p116 = scmp.ne.s32.totalorder %s108, %s110
    %p117 = scmp.eq.s32.totalorder %s16, 1
    %p118 = por %p116, %p117
    %p119 = scmp.ne.s32.totalorder %s110, %s111
    %p120 = scmp.eq.s32.totalorder %s16, 0
    %p121 = por %p119, %p120
    %p122 = scmp.ne.s32.totalorder %s110, %s111
    %p123 = scmp.eq.s32.totalorder %s17, 1
    %p124 = por %p122, %p123
    %p126 = scmp.ne.s32.totalorder %s111, %s125
    %p127 = scmp.eq.s32.totalorder %s17, 0
    %p128 = por %p126, %p127
    %s129 = ssub.s32 %s11, %s18
    %p130 = scmp.eq.s32.totalorder %s129, 0
    %s132 = sadd.s32 %s131, 1
    %s133 = scalar_select %p130, %s131, %s132
    %p136 = pneg %p130
    %p137 = scmp.eq.s32.totalorder %s11, 1
    %p138 = por %p136, %p137
    %p139 = scmp.ne.s32.totalorder %s131, %s134
    %p140 = scmp.eq.s32.totalorder %s11, 0
    %p141 = por %p139, %p140
    %p142 = scmp.ne.s32.totalorder %s131, %s134
    %p143 = scmp.eq.s32.totalorder %s16, 1
    %p144 = por %p142, %p143
    %p145 = scmp.ne.s32.totalorder %s134, %s135
    %p146 = scmp.eq.s32.totalorder %s16, 0
    %p147 = por %p145, %p146
    %p148 = scmp.ne.s32.totalorder %s134, %s135
    %p149 = scmp.eq.s32.totalorder %s17, 1
    %p150 = por %p148, %p149
    %p152 = scmp.ne.s32.totalorder %s135, %s151
    %p153 = scmp.eq.s32.totalorder %s17, 0
    %p154 = por %p152, %p153
    %p155 = scmp.le.s32.totalorder 1, %s11
    %p156 = scmp.lt.s32.totalorder %s11, 3
    %p157 = pnand %p155, %p156
    %p158 = pneg %p157
    // Predicated region
    $region9: #{_lambda_.28} parent=5 // pred_check
      _
    $region10: #{_lambda_.28} parent=5 // pred_check_branch
      %160 = sbr.rel (%p157) target = $region12
    $region11: #{_lambda_.28} parent=5 // pred_region
      %s161 = ssub.s32 %s11, 1
      // Predicated region
      $region13: #{_lambda_.28} parent=11 // pred_check
        %p162 = pneg %p58
      $region14: #{_lambda_.28} parent=11 // pred_check_branch
        %164 = sbr.rel (%p162) target = $region16
      $region15: #{_lambda_.28} parent=11 // pred_region
        _
      $region16: #{_lambda_.28} parent=11 // pred_fallthru
        _
      // Predicated region
      $region17: #{_lambda_.28} parent=11 // pred_check
        %p165 = pneg %p79
      $region18: #{_lambda_.28} parent=11 // pred_check_branch
        %167 = sbr.rel (%p165) target = $region20
      $region19: #{_lambda_.28} parent=11 // pred_region
        _
      $region20: #{_lambda_.28} parent=11 // pred_fallthru
        _
      // Predicated region
      $region21: #{_lambda_.28} parent=11 // pred_check
        %p168 = pneg %p100
      $region22: #{_lambda_.28} parent=11 // pred_check_branch
        %170 = sbr.rel (%p168) target = $region24
      $region23: #{_lambda_.28} parent=11 // pred_region
        _
      $region24: #{_lambda_.28} parent=11 // pred_fallthru
        _
      // Predicated region
      $region25: #{_lambda_.28} parent=11 // pred_check
        %p171 = pneg %p121
      $region26: #{_lambda_.28} parent=11 // pred_check_branch
        %173 = sbr.rel (%p171) target = $region28
      $region27: #{_lambda_.28} parent=11 // pred_region
        _
      $region28: #{_lambda_.28} parent=11 // pred_fallthru
        _
    $region12: #{_lambda_.28} parent=5 // pred_fallthru
      _
    %p174 = scmp.lt.s32.totalorder %s11, 2
    // Predicated region
    $region29: #{_lambda_.28} parent=5 // pred_check
      %p175 = pneg %p174
    $region30: #{_lambda_.28} parent=5 // pred_check_branch
      %177 = sbr.rel (%p175) target = $region32
    $region31: #{_lambda_.28} parent=5 // pred_region
      // Predicated region
      $region33: #{_lambda_.28} parent=31 // pred_check
        %p178 = pneg %p31
      $region34: #{_lambda_.28} parent=31 // pred_check_branch
        %180 = sbr.rel (%p178) target = $region36
      $region35: #{_lambda_.28} parent=31 // pred_region
        %p181 = scmp.lt.s32.totalorder %s11, 1
        %s182 = scalar_select %p181, %s11, 1
        %s183 = smul.addr %s182, 6
        %s184 = smul.addr %s183, 4
        %s185 = scalar_lea.vmem %s0, %s184
      $region36: #{_lambda_.28} parent=31 // pred_fallthru
        _
    $region32: #{_lambda_.28} parent=5 // pred_fallthru
      _
    %p186 = scmp.le.s32.totalorder 1, %s11
    %p187 = scmp.lt.s32.totalorder %s11, 3
    %p188 = pnand %p186, %p187
    %p189 = pneg %p188
    // Predicated region
    $region37: #{_lambda_.28} parent=5 // pred_check
      _
    $region38: #{_lambda_.28} parent=5 // pred_check_branch
      %191 = sbr.rel (%p188) target = $region40
    $region39: #{_lambda_.28} parent=5 // pred_region
      %s192 = ssub.s32 %s11, 1
      %p193 = scmp.lt.s32.totalorder %s16, 1
      %s194 = scalar_select %p193, %s16, 1
      %s195 = smul.addr %s194, 6
      %s196 = smul.addr %s195, 4
      %s197 = scalar_lea.vmem %s0, %s196
      %p198 = pneg %p37
      %p199 = pneg %p34
      %p200 = pneg %p58
      %p201 = pneg %p55
      %p202 = pneg %p79
      %p203 = pneg %p76
      %p204 = pneg %p100
      %p205 = pneg %p97
      %p206 = pneg %p121
      %p207 = pneg %p118
      %p208 = pneg %p147
      %p209 = pneg %p144
      %p210 = scmp.lt.s32.totalorder %s16, 1
      %s211 = scalar_select %p210, %s16, 1
      %s212 = smul.addr %s211, 2
      %s213 = smul.addr %s212, 8
      %s214 = scalar_lea.vmem %s5, %s213
      %p215 = scmp.lt.s32.totalorder %s16, 1
      %s216 = scalar_select %p215, %s16, 1
      %s217 = smul.addr %s216, 6
      %s218 = smul.addr %s217, 4
      %s219 = scalar_lea.vmem %s0, %s218
      %p220 = scmp.lt.s32.totalorder %s16, 1
      %s221 = scalar_select %p220, %s16, 1
      %s222 = smul.addr %s221, 2
      %s223 = smul.addr %s222, 8
      %s224 = scalar_lea.vmem %s5, %s223
      %v226 = vld [vmem:[%s1] sm:$0xf]
      %v227 = vld [vmem:[%s1 + $0x4] sm:$0xf]
      %v228 = vld [vmem:[%s219] sm:$0xf]
      %v229 = vld [vmem:[%s219 + $0x4] sm:$0xf]
      %v230 = vld [vmem:[%s219 + $0x8] sm:$0xf]
      %v231 = vld [vmem:[%s219 + $0xc] sm:$0xf]
      %v232 = vld [vmem:[%s219 + $0x10] sm:$0xf]
      %v233 = vld [vmem:[%s219 + $0x14] sm:$0xf]
      %v234 = vld [vmem:[%s2] sm:$0xff]
      %v235 = vld [vmem:[%s2 + $0x8] sm:$0xff]
      %237 = vset.pattern.permute.xlu0 0
      %238 = vperm.xlu0 %237, %v234
      %v239 = vpop.permute.xlu0 %238
      %242 = vset.pattern.permute.xlu0 0
      %243 = vperm.xlu0 %242, %v235
      %v244 = vpop.permute.xlu0 %243
      %v248 = vunpack.c.l.b16 %v226
      %v249 = vunpack.c.l.b16 %v227
      %v250 = vpack.c.b16 %v249, %v248
      %v257 = vunpack.c.l.b16 %v228
      %v258 = vunpack.c.l.b16 %v229
      %v259 = vunpack.c.l.b16 %v230
      %v260 = vunpack.c.l.b16 %v231
      %v261 = vunpack.c.l.b16 %v232
      %v262 = vunpack.c.l.b16 %v233
      %v263 = vpack.c.b16 %v258, %v257
      %v264 = vpack.c.b16 %v260, %v259
      %v265 = vpack.c.b16 %v262, %v261
      %vm269 = vcmask 392192
      %v271 = vsel %vm269, %v250, 0
      %273 = vmatpush.bf16.msra.mxu0 0
      %274 = vmatpush.bf16.msra.mxu0 0
      %275 = vmatpush.bf16.msra.mxu0 0
      %276 = vmatpush.bf16.msra.mxu0 0
      %277 = vmatpush.bf16.msra.mxu0 0
      %278 = vmatpush.bf16.msra.mxu0 %v265
      %279 = vmatpush.bf16.msra.mxu0 %v264
      %280 = vmatpush.bf16.msra.mxu0 %v263
      %281 = vmatmul.bf16.gmra.mxu0 %v271
      %v282 = vpop.f32.mrf.mxu0
      %v283 = vadd.f32 %v239, %v282
      %v284 = vpop.f32.mrf.mxu0
      %v285 = vadd.f32 %v244, %v284
      %286 = vdwg.mxu0
      %vm287 = vcmask 195584
      %v288 = vsel %vm287, %v283, 0.0
      %v289 = vsel %vm287, %v285, 0.0
      %v290 = vadd.f32 %v288, %v289
      %v291 = vrot.slane %v290, 4
      %v292 = vadd.f32 %v290, %v291
      %v293 = vrot.slane %v292, 2
      %v294 = vadd.f32 %v292, %v293
      %v295 = vrot.slane %v294, 1
      %v296 = vadd.f32 %v294, %v295
      %v297 = vmul.f32 %v283, %v283
      %v298 = vmul.f32 %v285, %v285
      %v299 = vsel %vm287, %v297, 0.0
      %v300 = vsel %vm287, %v298, 0.0
      %v301 = vadd.f32 %v299, %v300
      %v302 = vrot.slane %v301, 4
      %v303 = vadd.f32 %v301, %v302
      %v304 = vrot.slane %v303, 2
      %v305 = vadd.f32 %v303, %v304
      %v306 = vrot.slane %v305, 1
      %v307 = vadd.f32 %v305, %v306
      %vm308 = vcmask 1040384
      %v309 = vsel %vm308, %v296, %v307
      %v310 = vld [vmem:[%s3] sm:$0xff]
      %v311 = vld [vmem:[%s3 + $0x8] sm:$0xff]
      %v312 = vld [vmem:[%s3 + $0x10] sm:$0xff]
      %v314 = vsel %vm287, %v309, 0
      %316 = vmatpush.msra.mxu0 0.0
      %317 = vmatpush.msra.mxu0 0.0
      %318 = vmatpush.msra.mxu0 0.0
      %319 = vmatpush.msra.mxu0 0.0
      %320 = vmatpush.msra.mxu0 0.0
      %321 = vmatpush.msra.mxu0 0.0
      %322 = vmatpush.msra.mxu0 0.0
      %323 = vmatpush.msra.mxu0 0.0
      %324 = vmatpush.msra.mxu0 0.0
      %325 = vmatpush.msra.mxu0 0.0
      %326 = vmatpush.msra.mxu0 0.0
      %327 = vmatpush.msra.mxu0 0.0
      %328 = vmatpush.msra.mxu0 0.0
      %329 = vmatpush.msra.mxu0 %v312
      %330 = vmatpush.msra.mxu0 %v311
      %331 = vmatpush.msra.mxu0 %v310
      %332 = vmatmul.f32.gmra.mxu0 %v314
      %v333 = vpop.f32.mrf.mxu0
      %v334 = vadd.f32 0.0, %v333
      %335 = vdwg.mxu0
      %v336 = vmul.f32 %v334, %v334
      %v338 = vrot.slane %v336, 7
      %v340 = vsub.f32 %v334, %v338
      %v341 = vadd.f32 %v340, 1e-05
      %v342 = vrsqrt.pop %v341
      %v343 = vmul.f32 %v342, %v341
      %v344 = vmul.f32 %v343, %v342
      %v345 = vmul.f32 0.5, %v344
      %v346 = vsub.f32 1.5, %v345
      %v347 = vmul.f32 %v342, %v346
      %vm348 = vweird.f32 %v341
      %vm349 = vweird.f32 %v342
      %vm350 = vmor %vm348, %vm349
      %v351 = vsel %vm350, %v342, %v347
      %v352 = vsel %vm308, %v334, %v351
      %v353 = vld [vmem:[%s4] sm:$0xff]
      %vm354 = vcmask 64512
      %v356 = vsel %vm354, %v352, 0
      %358 = vmatpush.msra.mxu0 0.0
      %359 = vmatpush.msra.mxu0 0.0
      %360 = vmatpush.msra.mxu0 0.0
      %361 = vmatpush.msra.mxu0 0.0
      %362 = vmatpush.msra.mxu0 0.0
      %363 = vmatpush.msra.mxu0 0.0
      %364 = vmatpush.msra.mxu0 0.0
      %365 = vmatpush.msra.mxu0 0.0
      %366 = vmatpush.msra.mxu0 0.0
      %367 = vmatpush.msra.mxu0 0.0
      %368 = vmatpush.msra.mxu0 0.0
      %369 = vmatpush.msra.mxu0 0.0
      %370 = vmatpush.msra.mxu0 0.0
      %371 = vmatpush.msra.mxu0 0.0
      %372 = vmatpush.msra.mxu0 0.0
      %373 = vmatpush.msra.mxu0 %v353
      %374 = vmatmul.f32.gmra.mxu0 %v356
      %v375 = vpop.f32.mrf.mxu0
      %v376 = vadd.f32 0.0, %v375
      %377 = vdwg.mxu0
      %v378 = vperm.slane %v376, 0
      %v379 = vsub.f32 %v283, %v378
      %v380 = vsub.f32 %v285, %v378
      %v381 = vperm.slane %v376, 1
      %v382 = vmul.f32 %v379, %v381
      %v383 = vmul.f32 %v380, %v381
      %384 = vset.pattern.permute.xlu0 1
      %385 = vperm.xlu0 %384, %v234
      %v386 = vpop.permute.xlu0 %385
      %388 = vset.pattern.permute.xlu0 1
      %389 = vperm.xlu0 %388, %v235
      %v390 = vpop.permute.xlu0 %389
      %v392 = vmul.f32 %v382, %v386
      %v393 = vmul.f32 %v383, %v390
      %394 = vset.pattern.permute.xlu0 2
      %395 = vperm.xlu0 %394, %v234
      %v396 = vpop.permute.xlu0 %395
      %398 = vset.pattern.permute.xlu0 2
      %399 = vperm.xlu0 %398, %v235
      %v400 = vpop.permute.xlu0 %399
      %v402 = vadd.f32 %v392, %v396
      %v403 = vadd.f32 %v393, %v400
      %vm404 = vcmp.gt.f32.partialorder %v402, 0.0
      %vm405 = vcmp.gt.f32.partialorder %v403, 0.0
      %406 = vset.pattern.permute.xlu0 3
      %407 = vperm.xlu0 %406, %v234
      %v408 = vpop.permute.xlu0 %407
      %410 = vset.pattern.permute.xlu0 3
      %411 = vperm.xlu0 %410, %v235
      %v412 = vpop.permute.xlu0 %411
      %v414 = vmul.f32 %v408, %v402
      %v415 = vmul.f32 %v412, %v403
      %v416 = vsel %vm404, %v402, %v414
      %v417 = vsel %vm405, %v403, %v415
      %418 = vst.msk [vmem:[%s224] sm:$0xff] %vm287, %v416
      %419 = vst.msk [vmem:[%s224 + $0x8] sm:$0xff] %vm287, %v417
      %p420 = scmp.lt.s32.totalorder %s16, 1
      %s421 = scalar_select %p420, %s16, 1
      %s422 = smul.addr %s421, 2
      %s423 = smul.addr %s422, 8
      %s424 = scalar_lea.vmem %s5, %s423
      // Predicated region
      $region41: #{_lambda_.28} parent=39 // pred_check
        %p425 = pneg %p144
      $region42: #{_lambda_.28} parent=39 // pred_check_branch
        %427 = sbr.rel (%p425) target = $region44
      $region43: #{_lambda_.28} parent=39 // pred_region
        _
      $region44: #{_lambda_.28} parent=39 // pred_fallthru
        _
    $region40: #{_lambda_.28} parent=5 // pred_fallthru
      _
    %p428 = scmp.le.s32.totalorder 2, %s11
    // Predicated region
    $region45: #{_lambda_.28} parent=5 // pred_check
      %p429 = pneg %p428
    $region46: #{_lambda_.28} parent=5 // pred_check_branch
      %431 = sbr.rel (%p429) target = $region48
    $region47: #{_lambda_.28} parent=5 // pred_region
      %s432 = ssub.s32 %s11, 2
      // Predicated region
      $region49: #{_lambda_.28} parent=47 // pred_check
        %p433 = pneg %p150
      $region50: #{_lambda_.28} parent=47 // pred_check_branch
        %435 = sbr.rel (%p433) target = $region52
      $region51: #{_lambda_.28} parent=47 // pred_region
        %p436 = scmp.lt.s32.totalorder %s17, 1
        %s437 = scalar_select %p436, %s17, 1
        %s438 = smul.addr %s437, 2
        %s439 = smul.addr %s438, 8
        %s440 = scalar_lea.vmem %s5, %s439
      $region52: #{_lambda_.28} parent=47 // pred_fallthru
        _
    $region48: #{_lambda_.28} parent=5 // pred_fallthru
      _
  $region6: #{_lambda_.28} parent=0 // loop_footer
    %s15 = sadd.s32 1, %s11
  $region7: #{_lambda_.28} parent=0 // loop_footer_branch
    %10 = sbr.rel target = $region3
  $region8: #{_lambda_.28} parent=0 // loop_exit
    _

// kernel: _lambda_.29
$region0: #{_lambda_.29}
  #allocation0 [shape = 'u32[]', space=smem, size = 0x4, offset = 0x4, fixed_abs, tag = 'smem constant byte address 0x4 - core index']
  #allocation1 [shape = 'u32[72,128]{1,0:T(1,128)}', space=vmem, size = 0x9000, scoped, tag = 'internal scratch']
  %s0 = inlined_call_operand.vmem [shape: bf16[2,48,8], index: 0, kind: input, shape index: {}]
  %s1 = inlined_call_operand.vmem [shape: bf16[16,48], index: 1, kind: input, shape index: {}]
  %s2 = inlined_call_operand.vmem [shape: f32[16,4], index: 2, kind: input, shape index: {}]
  %s3 = inlined_call_operand.vmem [shape: f32[8,8], index: 3, kind: input, shape index: {}]
  %s4 = inlined_call_operand.vmem [shape: f32[8,8], index: 4, kind: input, shape index: {}]
  %s5 = inlined_call_operand.vmem [shape: f32[2,16,8], index: 5, kind: output, shape index: {}]
  %s6 = sld [smem:[#allocation0]]
  $region53: #{_lambda_.29} parent=0
    _
  %s8 = ssub.s32 1, %s6
  %s9 = scalar_select 0, %s8, %s6
  loop: start=0, step=1, limit=4
  $region2: #{_lambda_.29} parent=0 // loop_pre_header
    _
  $region3: #{_lambda_.29} parent=0 // loop_header
    %s11 = sphi 0, %s15
    %p12 = scmp.ge.s32.totalorder %s11, 4
    %s21 = sphi 0, %s23
    %s24 = sphi 0, %s21
    %s25 = sphi 0, %s24
    %s41 = sphi 0, %s25
    %s45 = sphi 0, %s45
    %s47 = sphi 0, %s45
    %s48 = sphi 0, %s47
    %s62 = sphi 0, %s48
    %s66 = sphi 0, %s66
    %s68 = sphi 0, %s66
    %s69 = sphi 0, %s68
    %s83 = sphi 0, %s69
    %s87 = sphi 0, %s87
    %s89 = sphi 0, %s87
    %s90 = sphi 0, %s89
    %s104 = sphi 0, %s90
    %s108 = sphi 0, %s108
    %s110 = sphi 0, %s108
    %s111 = sphi 0, %s110
    %s125 = sphi 0, %s111
    %s131 = sphi 0, %s133
    %s134 = sphi 0, %s131
    %s135 = sphi 0, %s134
    %s151 = sphi 0, %s135
  $region4: #{_lambda_.29} parent=0 // loop_header_branch
    %14 = sbr.rel (%p12) target = $region8
  $region5: #{_lambda_.29} parent=0 // loop_body
    %s16 = ssub.s32 %s11, 1
    %s17 = ssub.s32 %s11, 2
    %s18 = sadd.s32 %s11, 1
    %s19 = ssub.s32 %s11, %s18
    %p20 = scmp.eq.s32.totalorder %s19, 0
    %s22 = sadd.s32 %s21, 1
    %s23 = scalar_select %p20, %s21, %s22
    %p26 = pneg %p20
    %p27 = scmp.eq.s32.totalorder %s11, 1
    %p28 = por %p26, %p27
    %p29 = scmp.ne.s32.totalorder %s21, %s24
    %p30 = scmp.eq.s32.totalorder %s11, 0
    %p31 = por %p29, %p30
    %p32 = scmp.ne.s32.totalorder %s21, %s24
    %p33 = scmp.eq.s32.totalorder %s16, 1
    %p34 = por %p32, %p33
    %p35 = scmp.ne.s32.totalorder %s24, %s25
    %p36 = scmp.eq.s32.totalorder %s16, 0
    %p37 = por %p35, %p36
    %p38 = scmp.ne.s32.totalorder %s24, %s25
    %p39 = scmp.eq.s32.totalorder %s17, 1
    %p40 = por %p38, %p39
    %p42 = scmp.ne.s32.totalorder %s25, %s41
    %p43 = scmp.eq.s32.totalorder %s17, 0
    %p44 = por %p42, %p43
    %s46 = sadd.s32 %s45, 1
    %p49 = scmp.eq.s32.totalorder %s11, 1
    %p50 = scmp.ne.s32.totalorder %s45, %s47
    %p51 = scmp.eq.s32.totalorder %s11, 0
    %p52 = por %p50, %p51
    %p53 = scmp.ne.s32.totalorder %s45, %s47
    %p54 = scmp.eq.s32.totalorder %s16, 1
    %p55 = por %p53, %p54
    %p56 = scmp.ne.s32.totalorder %s47, %s48
    %p57 = scmp.eq.s32.totalorder %s16, 0
    %p58 = por %p56, %p57
    %p59 = scmp.ne.s32.totalorder %s47, %s48
    %p60 = scmp.eq.s32.totalorder %s17, 1
    %p61 = por %p59, %p60
    %p63 = scmp.ne.s32.totalorder %s48, %s62
    %p64 = scmp.eq.s32.totalorder %s17, 0
    %p65 = por %p63, %p64
    %s67 = sadd.s32 %s66, 1
    %p70 = scmp.eq.s32.totalorder %s11, 1
    %p71 = scmp.ne.s32.totalorder %s66, %s68
    %p72 = scmp.eq.s32.totalorder %s11, 0
    %p73 = por %p71, %p72
    %p74 = scmp.ne.s32.totalorder %s66, %s68
    %p75 = scmp.eq.s32.totalorder %s16, 1
    %p76 = por %p74, %p75
    %p77 = scmp.ne.s32.totalorder %s68, %s69
    %p78 = scmp.eq.s32.totalorder %s16, 0
    %p79 = por %p77, %p78
    %p80 = scmp.ne.s32.totalorder %s68, %s69
    %p81 = scmp.eq.s32.totalorder %s17, 1
    %p82 = por %p80, %p81
    %p84 = scmp.ne.s32.totalorder %s69, %s83
    %p85 = scmp.eq.s32.totalorder %s17, 0
    %p86 = por %p84, %p85
    %s88 = sadd.s32 %s87, 1
    %p91 = scmp.eq.s32.totalorder %s11, 1
    %p92 = scmp.ne.s32.totalorder %s87, %s89
    %p93 = scmp.eq.s32.totalorder %s11, 0
    %p94 = por %p92, %p93
    %p95 = scmp.ne.s32.totalorder %s87, %s89
    %p96 = scmp.eq.s32.totalorder %s16, 1
    %p97 = por %p95, %p96
    %p98 = scmp.ne.s32.totalorder %s89, %s90
    %p99 = scmp.eq.s32.totalorder %s16, 0
    %p100 = por %p98, %p99
    %p101 = scmp.ne.s32.totalorder %s89, %s90
    %p102 = scmp.eq.s32.totalorder %s17, 1
    %p103 = por %p101, %p102
    %p105 = scmp.ne.s32.totalorder %s90, %s104
    %p106 = scmp.eq.s32.totalorder %s17, 0
    %p107 = por %p105, %p106
    %s109 = sadd.s32 %s108, 1
    %p112 = scmp.eq.s32.totalorder %s11, 1
    %p113 = scmp.ne.s32.totalorder %s108, %s110
    %p114 = scmp.eq.s32.totalorder %s11, 0
    %p115 = por %p113, %p114
    %p116 = scmp.ne.s32.totalorder %s108, %s110
    %p117 = scmp.eq.s32.totalorder %s16, 1
    %p118 = por %p116, %p117
    %p119 = scmp.ne.s32.totalorder %s110, %s111
    %p120 = scmp.eq.s32.totalorder %s16, 0
    %p121 = por %p119, %p120
    %p122 = scmp.ne.s32.totalorder %s110, %s111
    %p123 = scmp.eq.s32.totalorder %s17, 1
    %p124 = por %p122, %p123
    %p126 = scmp.ne.s32.totalorder %s111, %s125
    %p127 = scmp.eq.s32.totalorder %s17, 0
    %p128 = por %p126, %p127
    %s129 = ssub.s32 %s11, %s18
    %p130 = scmp.eq.s32.totalorder %s129, 0
    %s132 = sadd.s32 %s131, 1
    %s133 = scalar_select %p130, %s131, %s132
    %p136 = pneg %p130
    %p137 = scmp.eq.s32.totalorder %s11, 1
    %p138 = por %p136, %p137
    %p139 = scmp.ne.s32.totalorder %s131, %s134
    %p140 = scmp.eq.s32.totalorder %s11, 0
    %p141 = por %p139, %p140
    %p142 = scmp.ne.s32.totalorder %s131, %s134
    %p143 = scmp.eq.s32.totalorder %s16, 1
    %p144 = por %p142, %p143
    %p145 = scmp.ne.s32.totalorder %s134, %s135
    %p146 = scmp.eq.s32.totalorder %s16, 0
    %p147 = por %p145, %p146
    %p148 = scmp.ne.s32.totalorder %s134, %s135
    %p149 = scmp.eq.s32.totalorder %s17, 1
    %p150 = por %p148, %p149
    %p152 = scmp.ne.s32.totalorder %s135, %s151
    %p153 = scmp.eq.s32.totalorder %s17, 0
    %p154 = por %p152, %p153
    %p155 = scmp.le.s32.totalorder 1, %s11
    %p156 = scmp.lt.s32.totalorder %s11, 3
    %p157 = pnand %p155, %p156
    %p158 = pneg %p157
    // Predicated region
    $region9: #{_lambda_.29} parent=5 // pred_check
      _
    $region10: #{_lambda_.29} parent=5 // pred_check_branch
      %160 = sbr.rel (%p157) target = $region12
    $region11: #{_lambda_.29} parent=5 // pred_region
      %s161 = ssub.s32 %s11, 1
      // Predicated region
      $region13: #{_lambda_.29} parent=11 // pred_check
        %p162 = pneg %p58
      $region14: #{_lambda_.29} parent=11 // pred_check_branch
        %164 = sbr.rel (%p162) target = $region16
      $region15: #{_lambda_.29} parent=11 // pred_region
        _
      $region16: #{_lambda_.29} parent=11 // pred_fallthru
        _
      // Predicated region
      $region17: #{_lambda_.29} parent=11 // pred_check
        %p165 = pneg %p79
      $region18: #{_lambda_.29} parent=11 // pred_check_branch
        %167 = sbr.rel (%p165) target = $region20
      $region19: #{_lambda_.29} parent=11 // pred_region
        _
      $region20: #{_lambda_.29} parent=11 // pred_fallthru
        _
      // Predicated region
      $region21: #{_lambda_.29} parent=11 // pred_check
        %p168 = pneg %p100
      $region22: #{_lambda_.29} parent=11 // pred_check_branch
        %170 = sbr.rel (%p168) target = $region24
      $region23: #{_lambda_.29} parent=11 // pred_region
        _
      $region24: #{_lambda_.29} parent=11 // pred_fallthru
        _
      // Predicated region
      $region25: #{_lambda_.29} parent=11 // pred_check
        %p171 = pneg %p121
      $region26: #{_lambda_.29} parent=11 // pred_check_branch
        %173 = sbr.rel (%p171) target = $region28
      $region27: #{_lambda_.29} parent=11 // pred_region
        _
      $region28: #{_lambda_.29} parent=11 // pred_fallthru
        _
    $region12: #{_lambda_.29} parent=5 // pred_fallthru
      _
    %p174 = scmp.lt.s32.totalorder %s11, 2
    // Predicated region
    $region29: #{_lambda_.29} parent=5 // pred_check
      %p175 = pneg %p174
    $region30: #{_lambda_.29} parent=5 // pred_check_branch
      %177 = sbr.rel (%p175) target = $region32
    $region31: #{_lambda_.29} parent=5 // pred_region
      // Predicated region
      $region33: #{_lambda_.29} parent=31 // pred_check
        %p178 = pneg %p31
      $region34: #{_lambda_.29} parent=31 // pred_check_branch
        %180 = sbr.rel (%p178) target = $region36
      $region35: #{_lambda_.29} parent=31 // pred_region
        %p181 = scmp.lt.s32.totalorder %s11, 1
        %s182 = scalar_select %p181, %s11, 1
        %s183 = smul.addr %s182, 6
        %s184 = smul.addr %s183, 4
        %s185 = scalar_lea.vmem %s0, %s184
      $region36: #{_lambda_.29} parent=31 // pred_fallthru
        _
    $region32: #{_lambda_.29} parent=5 // pred_fallthru
      _
    %p186 = scmp.le.s32.totalorder 1, %s11
    %p187 = scmp.lt.s32.totalorder %s11, 3
    %p188 = pnand %p186, %p187
    %p189 = pneg %p188
    // Predicated region
    $region37: #{_lambda_.29} parent=5 // pred_check
      _
    $region38: #{_lambda_.29} parent=5 // pred_check_branch
      %191 = sbr.rel (%p188) target = $region40
    $region39: #{_lambda_.29} parent=5 // pred_region
      %s192 = ssub.s32 %s11, 1
      %p193 = scmp.lt.s32.totalorder %s16, 1
      %s194 = scalar_select %p193, %s16, 1
      %s195 = smul.addr %s194, 6
      %s196 = smul.addr %s195, 4
      %s197 = scalar_lea.vmem %s0, %s196
      %p198 = pneg %p37
      %p199 = pneg %p34
      %p200 = pneg %p58
      %p201 = pneg %p55
      %p202 = pneg %p79
      %p203 = pneg %p76
      %p204 = pneg %p100
      %p205 = pneg %p97
      %p206 = pneg %p121
      %p207 = pneg %p118
      %p208 = pneg %p147
      %p209 = pneg %p144
      %p210 = scmp.lt.s32.totalorder %s16, 1
      %s211 = scalar_select %p210, %s16, 1
      %s212 = smul.addr %s211, 2
      %s213 = smul.addr %s212, 8
      %s214 = scalar_lea.vmem %s5, %s213
      %p215 = scmp.lt.s32.totalorder %s16, 1
      %s216 = scalar_select %p215, %s16, 1
      %s217 = smul.addr %s216, 6
      %s218 = smul.addr %s217, 4
      %s219 = scalar_lea.vmem %s0, %s218
      %p220 = scmp.lt.s32.totalorder %s16, 1
      %s221 = scalar_select %p220, %s16, 1
      %s222 = smul.addr %s221, 2
      %s223 = smul.addr %s222, 8
      %s224 = scalar_lea.vmem %s5, %s223
      %v226 = vld [vmem:[%s1] sm:$0xf]
      %v227 = vld [vmem:[%s1 + $0x4] sm:$0xf]
      %v228 = vld [vmem:[%s219] sm:$0xf]
      %v229 = vld [vmem:[%s219 + $0x4] sm:$0xf]
      %v230 = vld [vmem:[%s219 + $0x8] sm:$0xf]
      %v231 = vld [vmem:[%s219 + $0xc] sm:$0xf]
      %v232 = vld [vmem:[%s219 + $0x10] sm:$0xf]
      %v233 = vld [vmem:[%s219 + $0x14] sm:$0xf]
      %v234 = vld [vmem:[%s2] sm:$0xff]
      %v235 = vld [vmem:[%s2 + $0x8] sm:$0xff]
      %237 = vset.pattern.permute.xlu0 0
      %238 = vperm.xlu0 %237, %v234
      %v239 = vpop.permute.xlu0 %238
      %242 = vset.pattern.permute.xlu0 0
      %243 = vperm.xlu0 %242, %v235
      %v244 = vpop.permute.xlu0 %243
      %v248 = vunpack.c.l.b16 %v226
      %v249 = vunpack.c.l.b16 %v227
      %v250 = vpack.c.b16 %v249, %v248
      %v257 = vunpack.c.l.b16 %v228
      %v258 = vunpack.c.l.b16 %v229
      %v259 = vunpack.c.l.b16 %v230
      %v260 = vunpack.c.l.b16 %v231
      %v261 = vunpack.c.l.b16 %v232
      %v262 = vunpack.c.l.b16 %v233
      %v263 = vpack.c.b16 %v258, %v257
      %v264 = vpack.c.b16 %v260, %v259
      %v265 = vpack.c.b16 %v262, %v261
      %vm269 = vcmask 392192
      %v271 = vsel %vm269, %v250, 0
      %273 = vmatpush.bf16.msra.mxu0 0
      %274 = vmatpush.bf16.msra.mxu0 0
      %275 = vmatpush.bf16.msra.mxu0 0
      %276 = vmatpush.bf16.msra.mxu0 0
      %277 = vmatpush.bf16.msra.mxu0 0
      %278 = vmatpush.bf16.msra.mxu0 %v265
      %279 = vmatpush.bf16.msra.mxu0 %v264
      %280 = vmatpush.bf16.msra.mxu0 %v263
      %281 = vmatmul.bf16.gmra.mxu0 %v271
      %v282 = vpop.f32.mrf.mxu0
      %v283 = vadd.f32 %v239, %v282
      %v284 = vpop.f32.mrf.mxu0
      %v285 = vadd.f32 %v244, %v284
      %286 = vdwg.mxu0
      %vm287 = vcmask 64512
      %v288 = vsel %vm287, %v283, 0.0
      %v289 = vsel %vm287, %v285, 0.0
      %v290 = vadd.f32 %v288, %v289
      %v291 = vrot.slane %v290, 4
      %v292 = vadd.f32 %v290, %v291
      %v293 = vrot.slane %v292, 2
      %v294 = vadd.f32 %v292, %v293
      %v295 = vrot.slane %v294, 1
      %v296 = vadd.f32 %v294, %v295
      %v297 = vmul.f32 %v283, %v283
      %v298 = vmul.f32 %v285, %v285
      %v299 = vsel %vm287, %v297, 0.0
      %v300 = vsel %vm287, %v298, 0.0
      %v301 = vadd.f32 %v299, %v300
      %v302 = vrot.slane %v301, 4
      %v303 = vadd.f32 %v301, %v302
      %v304 = vrot.slane %v303, 2
      %v305 = vadd.f32 %v303, %v304
      %v306 = vrot.slane %v305, 1
      %v307 = vadd.f32 %v305, %v306
      %vm308 = vcmask 1040384
      %v309 = vsel %vm308, %v296, %v307
      %v310 = vld [vmem:[%s3] sm:$0xff]
      %v312 = vsel %vm287, %v309, 0
      %314 = vmatpush.msra.mxu0 0.0
      %315 = vmatpush.msra.mxu0 0.0
      %316 = vmatpush.msra.mxu0 0.0
      %317 = vmatpush.msra.mxu0 0.0
      %318 = vmatpush.msra.mxu0 0.0
      %319 = vmatpush.msra.mxu0 0.0
      %320 = vmatpush.msra.mxu0 0.0
      %321 = vmatpush.msra.mxu0 0.0
      %322 = vmatpush.msra.mxu0 0.0
      %323 = vmatpush.msra.mxu0 0.0
      %324 = vmatpush.msra.mxu0 0.0
      %325 = vmatpush.msra.mxu0 0.0
      %326 = vmatpush.msra.mxu0 0.0
      %327 = vmatpush.msra.mxu0 0.0
      %328 = vmatpush.msra.mxu0 0.0
      %329 = vmatpush.msra.mxu0 %v310
      %330 = vmatmul.f32.gmra.mxu0 %v312
      %v331 = vpop.f32.mrf.mxu0
      %v332 = vadd.f32 0.0, %v331
      %333 = vdwg.mxu0
      %v334 = vmul.f32 %v332, %v332
      %v336 = vrot.slane %v334, 7
      %v338 = vsub.f32 %v332, %v336
      %v339 = vadd.f32 %v338, 1e-05
      %v340 = vrsqrt.pop %v339
      %v341 = vmul.f32 %v340, %v339
      %v342 = vmul.f32 %v341, %v340
      %v343 = vmul.f32 0.5, %v342
      %v344 = vsub.f32 1.5, %v343
      %v345 = vmul.f32 %v340, %v344
      %vm346 = vweird.f32 %v339
      %vm347 = vweird.f32 %v340
      %vm348 = vmor %vm346, %vm347
      %v349 = vsel %vm348, %v340, %v345
      %v350 = vsel %vm308, %v332, %v349
      %v351 = vld [vmem:[%s4] sm:$0xff]
      %v353 = vsel %vm287, %v350, 0
      %355 = vmatpush.msra.mxu0 0.0
      %356 = vmatpush.msra.mxu0 0.0
      %357 = vmatpush.msra.mxu0 0.0
      %358 = vmatpush.msra.mxu0 0.0
      %359 = vmatpush.msra.mxu0 0.0
      %360 = vmatpush.msra.mxu0 0.0
      %361 = vmatpush.msra.mxu0 0.0
      %362 = vmatpush.msra.mxu0 0.0
      %363 = vmatpush.msra.mxu0 0.0
      %364 = vmatpush.msra.mxu0 0.0
      %365 = vmatpush.msra.mxu0 0.0
      %366 = vmatpush.msra.mxu0 0.0
      %367 = vmatpush.msra.mxu0 0.0
      %368 = vmatpush.msra.mxu0 0.0
      %369 = vmatpush.msra.mxu0 0.0
      %370 = vmatpush.msra.mxu0 %v351
      %371 = vmatmul.f32.gmra.mxu0 %v353
      %v372 = vpop.f32.mrf.mxu0
      %v373 = vadd.f32 0.0, %v372
      %374 = vdwg.mxu0
      %v375 = vperm.slane %v373, 0
      %v376 = vsub.f32 %v283, %v375
      %v377 = vsub.f32 %v285, %v375
      %v378 = vperm.slane %v373, 1
      %v379 = vmul.f32 %v376, %v378
      %v380 = vmul.f32 %v377, %v378
      %381 = vset.pattern.permute.xlu0 1
      %382 = vperm.xlu0 %381, %v234
      %v383 = vpop.permute.xlu0 %382
      %385 = vset.pattern.permute.xlu0 1
      %386 = vperm.xlu0 %385, %v235
      %v387 = vpop.permute.xlu0 %386
      %v389 = vmul.f32 %v379, %v383
      %v390 = vmul.f32 %v380, %v387
      %391 = vset.pattern.permute.xlu0 2
      %392 = vperm.xlu0 %391, %v234
      %v393 = vpop.permute.xlu0 %392
      %395 = vset.pattern.permute.xlu0 2
      %396 = vperm.xlu0 %395, %v235
      %v397 = vpop.permute.xlu0 %396
      %v399 = vadd.f32 %v389, %v393
      %v400 = vadd.f32 %v390, %v397
      %vm401 = vcmp.gt.f32.partialorder %v399, 0.0
      %vm402 = vcmp.gt.f32.partialorder %v400, 0.0
      %403 = vset.pattern.permute.xlu0 3
      %404 = vperm.xlu0 %403, %v234
      %v405 = vpop.permute.xlu0 %404
      %407 = vset.pattern.permute.xlu0 3
      %408 = vperm.xlu0 %407, %v235
      %v409 = vpop.permute.xlu0 %408
      %v411 = vmul.f32 %v405, %v399
      %v412 = vmul.f32 %v409, %v400
      %v413 = vsel %vm401, %v399, %v411
      %v414 = vsel %vm402, %v400, %v412
      %415 = vst.msk [vmem:[%s224] sm:$0xff] %vm287, %v413
      %416 = vst.msk [vmem:[%s224 + $0x8] sm:$0xff] %vm287, %v414
      %p417 = scmp.lt.s32.totalorder %s16, 1
      %s418 = scalar_select %p417, %s16, 1
      %s419 = smul.addr %s418, 2
      %s420 = smul.addr %s419, 8
      %s421 = scalar_lea.vmem %s5, %s420
      // Predicated region
      $region41: #{_lambda_.29} parent=39 // pred_check
        %p422 = pneg %p144
      $region42: #{_lambda_.29} parent=39 // pred_check_branch
        %424 = sbr.rel (%p422) target = $region44
      $region43: #{_lambda_.29} parent=39 // pred_region
        _
      $region44: #{_lambda_.29} parent=39 // pred_fallthru
        _
    $region40: #{_lambda_.29} parent=5 // pred_fallthru
      _
    %p425 = scmp.le.s32.totalorder 2, %s11
    // Predicated region
    $region45: #{_lambda_.29} parent=5 // pred_check
      %p426 = pneg %p425
    $region46: #{_lambda_.29} parent=5 // pred_check_branch
      %428 = sbr.rel (%p426) target = $region48
    $region47: #{_lambda_.29} parent=5 // pred_region
      %s429 = ssub.s32 %s11, 2
      // Predicated region
      $region49: #{_lambda_.29} parent=47 // pred_check
        %p430 = pneg %p150
      $region50: #{_lambda_.29} parent=47 // pred_check_branch
        %432 = sbr.rel (%p430) target = $region52
      $region51: #{_lambda_.29} parent=47 // pred_region
        %p433 = scmp.lt.s32.totalorder %s17, 1
        %s434 = scalar_select %p433, %s17, 1
        %s435 = smul.addr %s434, 2
        %s436 = smul.addr %s435, 8
        %s437 = scalar_lea.vmem %s5, %s436
      $region52: #{_lambda_.29} parent=47 // pred_fallthru
        _
    $region48: #{_lambda_.29} parent=5 // pred_fallthru
      _
  $region6: #{_lambda_.29} parent=0 // loop_footer
    %s15 = sadd.s32 1, %s11
  $region7: #{_lambda_.29} parent=0 // loop_footer_branch
    %10 = sbr.rel target = $region3
  $region8: #{_lambda_.29} parent=0 // loop_exit
    _

// kernel: _lambda_.31
$region0: #{_lambda_.31}
  #allocation0 [shape = 'u32[]', space=smem, size = 0x4, offset = 0x4, fixed_abs, tag = 'smem constant byte address 0x4 - core index']
  #allocation1 [shape = 'u32[72,128]{1,0:T(1,128)}', space=vmem, size = 0x9000, scoped, tag = 'internal scratch']
  %s0 = inlined_call_operand.vmem [shape: bf16[2,96,56], index: 0, kind: input, shape index: {}]
  %s1 = inlined_call_operand.vmem [shape: bf16[16,96], index: 1, kind: input, shape index: {}]
  %s2 = inlined_call_operand.vmem [shape: f32[16,4], index: 2, kind: input, shape index: {}]
  %s3 = inlined_call_operand.vmem [shape: f32[56,8], index: 3, kind: input, shape index: {}]
  %s4 = inlined_call_operand.vmem [shape: f32[8,56], index: 4, kind: input, shape index: {}]
  %s5 = inlined_call_operand.vmem [shape: f32[2,16,56], index: 5, kind: output, shape index: {}]
  %s6 = sld [smem:[#allocation0]]
  $region53: #{_lambda_.31} parent=0
    _
  %s8 = ssub.s32 1, %s6
  %s9 = scalar_select 0, %s8, %s6
  loop: start=0, step=1, limit=4
  $region2: #{_lambda_.31} parent=0 // loop_pre_header
    _
  $region3: #{_lambda_.31} parent=0 // loop_header
    %s11 = sphi 0, %s15
    %p12 = scmp.ge.s32.totalorder %s11, 4
    %s21 = sphi 0, %s23
    %s24 = sphi 0, %s21
    %s25 = sphi 0, %s24
    %s41 = sphi 0, %s25
    %s45 = sphi 0, %s45
    %s47 = sphi 0, %s45
    %s48 = sphi 0, %s47
    %s62 = sphi 0, %s48
    %s66 = sphi 0, %s66
    %s68 = sphi 0, %s66
    %s69 = sphi 0, %s68
    %s83 = sphi 0, %s69
    %s87 = sphi 0, %s87
    %s89 = sphi 0, %s87
    %s90 = sphi 0, %s89
    %s104 = sphi 0, %s90
    %s108 = sphi 0, %s108
    %s110 = sphi 0, %s108
    %s111 = sphi 0, %s110
    %s125 = sphi 0, %s111
    %s131 = sphi 0, %s133
    %s134 = sphi 0, %s131
    %s135 = sphi 0, %s134
    %s151 = sphi 0, %s135
  $region4: #{_lambda_.31} parent=0 // loop_header_branch
    %14 = sbr.rel (%p12) target = $region8
  $region5: #{_lambda_.31} parent=0 // loop_body
    %s16 = ssub.s32 %s11, 1
    %s17 = ssub.s32 %s11, 2
    %s18 = sadd.s32 %s11, 1
    %s19 = ssub.s32 %s11, %s18
    %p20 = scmp.eq.s32.totalorder %s19, 0
    %s22 = sadd.s32 %s21, 1
    %s23 = scalar_select %p20, %s21, %s22
    %p26 = pneg %p20
    %p27 = scmp.eq.s32.totalorder %s11, 1
    %p28 = por %p26, %p27
    %p29 = scmp.ne.s32.totalorder %s21, %s24
    %p30 = scmp.eq.s32.totalorder %s11, 0
    %p31 = por %p29, %p30
    %p32 = scmp.ne.s32.totalorder %s21, %s24
    %p33 = scmp.eq.s32.totalorder %s16, 1
    %p34 = por %p32, %p33
    %p35 = scmp.ne.s32.totalorder %s24, %s25
    %p36 = scmp.eq.s32.totalorder %s16, 0
    %p37 = por %p35, %p36
    %p38 = scmp.ne.s32.totalorder %s24, %s25
    %p39 = scmp.eq.s32.totalorder %s17, 1
    %p40 = por %p38, %p39
    %p42 = scmp.ne.s32.totalorder %s25, %s41
    %p43 = scmp.eq.s32.totalorder %s17, 0
    %p44 = por %p42, %p43
    %s46 = sadd.s32 %s45, 1
    %p49 = scmp.eq.s32.totalorder %s11, 1
    %p50 = scmp.ne.s32.totalorder %s45, %s47
    %p51 = scmp.eq.s32.totalorder %s11, 0
    %p52 = por %p50, %p51
    %p53 = scmp.ne.s32.totalorder %s45, %s47
    %p54 = scmp.eq.s32.totalorder %s16, 1
    %p55 = por %p53, %p54
    %p56 = scmp.ne.s32.totalorder %s47, %s48
    %p57 = scmp.eq.s32.totalorder %s16, 0
    %p58 = por %p56, %p57
    %p59 = scmp.ne.s32.totalorder %s47, %s48
    %p60 = scmp.eq.s32.totalorder %s17, 1
    %p61 = por %p59, %p60
    %p63 = scmp.ne.s32.totalorder %s48, %s62
    %p64 = scmp.eq.s32.totalorder %s17, 0
    %p65 = por %p63, %p64
    %s67 = sadd.s32 %s66, 1
    %p70 = scmp.eq.s32.totalorder %s11, 1
    %p71 = scmp.ne.s32.totalorder %s66, %s68
    %p72 = scmp.eq.s32.totalorder %s11, 0
    %p73 = por %p71, %p72
    %p74 = scmp.ne.s32.totalorder %s66, %s68
    %p75 = scmp.eq.s32.totalorder %s16, 1
    %p76 = por %p74, %p75
    %p77 = scmp.ne.s32.totalorder %s68, %s69
    %p78 = scmp.eq.s32.totalorder %s16, 0
    %p79 = por %p77, %p78
    %p80 = scmp.ne.s32.totalorder %s68, %s69
    %p81 = scmp.eq.s32.totalorder %s17, 1
    %p82 = por %p80, %p81
    %p84 = scmp.ne.s32.totalorder %s69, %s83
    %p85 = scmp.eq.s32.totalorder %s17, 0
    %p86 = por %p84, %p85
    %s88 = sadd.s32 %s87, 1
    %p91 = scmp.eq.s32.totalorder %s11, 1
    %p92 = scmp.ne.s32.totalorder %s87, %s89
    %p93 = scmp.eq.s32.totalorder %s11, 0
    %p94 = por %p92, %p93
    %p95 = scmp.ne.s32.totalorder %s87, %s89
    %p96 = scmp.eq.s32.totalorder %s16, 1
    %p97 = por %p95, %p96
    %p98 = scmp.ne.s32.totalorder %s89, %s90
    %p99 = scmp.eq.s32.totalorder %s16, 0
    %p100 = por %p98, %p99
    %p101 = scmp.ne.s32.totalorder %s89, %s90
    %p102 = scmp.eq.s32.totalorder %s17, 1
    %p103 = por %p101, %p102
    %p105 = scmp.ne.s32.totalorder %s90, %s104
    %p106 = scmp.eq.s32.totalorder %s17, 0
    %p107 = por %p105, %p106
    %s109 = sadd.s32 %s108, 1
    %p112 = scmp.eq.s32.totalorder %s11, 1
    %p113 = scmp.ne.s32.totalorder %s108, %s110
    %p114 = scmp.eq.s32.totalorder %s11, 0
    %p115 = por %p113, %p114
    %p116 = scmp.ne.s32.totalorder %s108, %s110
    %p117 = scmp.eq.s32.totalorder %s16, 1
    %p118 = por %p116, %p117
    %p119 = scmp.ne.s32.totalorder %s110, %s111
    %p120 = scmp.eq.s32.totalorder %s16, 0
    %p121 = por %p119, %p120
    %p122 = scmp.ne.s32.totalorder %s110, %s111
    %p123 = scmp.eq.s32.totalorder %s17, 1
    %p124 = por %p122, %p123
    %p126 = scmp.ne.s32.totalorder %s111, %s125
    %p127 = scmp.eq.s32.totalorder %s17, 0
    %p128 = por %p126, %p127
    %s129 = ssub.s32 %s11, %s18
    %p130 = scmp.eq.s32.totalorder %s129, 0
    %s132 = sadd.s32 %s131, 1
    %s133 = scalar_select %p130, %s131, %s132
    %p136 = pneg %p130
    %p137 = scmp.eq.s32.totalorder %s11, 1
    %p138 = por %p136, %p137
    %p139 = scmp.ne.s32.totalorder %s131, %s134
    %p140 = scmp.eq.s32.totalorder %s11, 0
    %p141 = por %p139, %p140
    %p142 = scmp.ne.s32.totalorder %s131, %s134
    %p143 = scmp.eq.s32.totalorder %s16, 1
    %p144 = por %p142, %p143
    %p145 = scmp.ne.s32.totalorder %s134, %s135
    %p146 = scmp.eq.s32.totalorder %s16, 0
    %p147 = por %p145, %p146
    %p148 = scmp.ne.s32.totalorder %s134, %s135
    %p149 = scmp.eq.s32.totalorder %s17, 1
    %p150 = por %p148, %p149
    %p152 = scmp.ne.s32.totalorder %s135, %s151
    %p153 = scmp.eq.s32.totalorder %s17, 0
    %p154 = por %p152, %p153
    %p155 = scmp.le.s32.totalorder 1, %s11
    %p156 = scmp.lt.s32.totalorder %s11, 3
    %p157 = pnand %p155, %p156
    %p158 = pneg %p157
    // Predicated region
    $region9: #{_lambda_.31} parent=5 // pred_check
      _
    $region10: #{_lambda_.31} parent=5 // pred_check_branch
      %160 = sbr.rel (%p157) target = $region12
    $region11: #{_lambda_.31} parent=5 // pred_region
      %s161 = ssub.s32 %s11, 1
      // Predicated region
      $region13: #{_lambda_.31} parent=11 // pred_check
        %p162 = pneg %p58
      $region14: #{_lambda_.31} parent=11 // pred_check_branch
        %164 = sbr.rel (%p162) target = $region16
      $region15: #{_lambda_.31} parent=11 // pred_region
        _
      $region16: #{_lambda_.31} parent=11 // pred_fallthru
        _
      // Predicated region
      $region17: #{_lambda_.31} parent=11 // pred_check
        %p165 = pneg %p79
      $region18: #{_lambda_.31} parent=11 // pred_check_branch
        %167 = sbr.rel (%p165) target = $region20
      $region19: #{_lambda_.31} parent=11 // pred_region
        _
      $region20: #{_lambda_.31} parent=11 // pred_fallthru
        _
      // Predicated region
      $region21: #{_lambda_.31} parent=11 // pred_check
        %p168 = pneg %p100
      $region22: #{_lambda_.31} parent=11 // pred_check_branch
        %170 = sbr.rel (%p168) target = $region24
      $region23: #{_lambda_.31} parent=11 // pred_region
        _
      $region24: #{_lambda_.31} parent=11 // pred_fallthru
        _
      // Predicated region
      $region25: #{_lambda_.31} parent=11 // pred_check
        %p171 = pneg %p121
      $region26: #{_lambda_.31} parent=11 // pred_check_branch
        %173 = sbr.rel (%p171) target = $region28
      $region27: #{_lambda_.31} parent=11 // pred_region
        _
      $region28: #{_lambda_.31} parent=11 // pred_fallthru
        _
    $region12: #{_lambda_.31} parent=5 // pred_fallthru
      _
    %p174 = scmp.lt.s32.totalorder %s11, 2
    // Predicated region
    $region29: #{_lambda_.31} parent=5 // pred_check
      %p175 = pneg %p174
    $region30: #{_lambda_.31} parent=5 // pred_check_branch
      %177 = sbr.rel (%p175) target = $region32
    $region31: #{_lambda_.31} parent=5 // pred_region
      // Predicated region
      $region33: #{_lambda_.31} parent=31 // pred_check
        %p178 = pneg %p31
      $region34: #{_lambda_.31} parent=31 // pred_check_branch
        %180 = sbr.rel (%p178) target = $region36
      $region35: #{_lambda_.31} parent=31 // pred_region
        %p181 = scmp.lt.s32.totalorder %s11, 1
        %s182 = scalar_select %p181, %s11, 1
        %s183 = smul.addr %s182, 12
        %s184 = smul.addr %s183, 4
        %s185 = scalar_lea.vmem %s0, %s184
      $region36: #{_lambda_.31} parent=31 // pred_fallthru
        _
    $region32: #{_lambda_.31} parent=5 // pred_fallthru
      _
    %p186 = scmp.le.s32.totalorder 1, %s11
    %p187 = scmp.lt.s32.totalorder %s11, 3
    %p188 = pnand %p186, %p187
    %p189 = pneg %p188
    // Predicated region
    $region37: #{_lambda_.31} parent=5 // pred_check
      _
    $region38: #{_lambda_.31} parent=5 // pred_check_branch
      %191 = sbr.rel (%p188) target = $region40
    $region39: #{_lambda_.31} parent=5 // pred_region
      %s192 = ssub.s32 %s11, 1
      %p193 = scmp.lt.s32.totalorder %s16, 1
      %s194 = scalar_select %p193, %s16, 1
      %s195 = smul.addr %s194, 12
      %s196 = smul.addr %s195, 4
      %s197 = scalar_lea.vmem %s0, %s196
      %p198 = pneg %p37
      %p199 = pneg %p34
      %p200 = pneg %p58
      %p201 = pneg %p55
      %p202 = pneg %p79
      %p203 = pneg %p76
      %p204 = pneg %p100
      %p205 = pneg %p97
      %p206 = pneg %p121
      %p207 = pneg %p118
      %p208 = pneg %p147
      %p209 = pneg %p144
      %p210 = scmp.lt.s32.totalorder %s16, 1
      %s211 = scalar_select %p210, %s16, 1
      %s212 = smul.addr %s211, 2
      %s213 = smul.addr %s212, 8
      %s214 = scalar_lea.vmem %s5, %s213
      %p215 = scmp.lt.s32.totalorder %s16, 1
      %s216 = scalar_select %p215, %s16, 1
      %s217 = smul.addr %s216, 12
      %s218 = smul.addr %s217, 4
      %s219 = scalar_lea.vmem %s0, %s218
      %p220 = scmp.lt.s32.totalorder %s16, 1
      %s221 = scalar_select %p220, %s16, 1
      %s222 = smul.addr %s221, 2
      %s223 = smul.addr %s222, 8
      %s224 = scalar_lea.vmem %s5, %s223
      %v226 = vld [vmem:[%s1] sm:$0xf]
      %v227 = vld [vmem:[%s1 + $0x4] sm:$0xf]
      %v228 = vld [vmem:[%s219] sm:$0xf]
      %v229 = vld [vmem:[%s219 + $0x4] sm:$0xf]
      %v230 = vld [vmem:[%s219 + $0x8] sm:$0xf]
      %v231 = vld [vmem:[%s219 + $0xc] sm:$0xf]
      %v232 = vld [vmem:[%s219 + $0x10] sm:$0xf]
      %v233 = vld [vmem:[%s219 + $0x14] sm:$0xf]
      %v234 = vld [vmem:[%s219 + $0x18] sm:$0xf]
      %v235 = vld [vmem:[%s219 + $0x1c] sm:$0xf]
      %v236 = vld [vmem:[%s219 + $0x20] sm:$0xf]
      %v237 = vld [vmem:[%s219 + $0x24] sm:$0xf]
      %v238 = vld [vmem:[%s219 + $0x28] sm:$0xf]
      %v239 = vld [vmem:[%s219 + $0x2c] sm:$0xf]
      %v240 = vld [vmem:[%s2] sm:$0xff]
      %v241 = vld [vmem:[%s2 + $0x8] sm:$0xff]
      %243 = vset.pattern.permute.xlu0 0
      %244 = vperm.xlu0 %243, %v240
      %v245 = vpop.permute.xlu0 %244
      %248 = vset.pattern.permute.xlu0 0
      %249 = vperm.xlu0 %248, %v241
      %v250 = vpop.permute.xlu0 %249
      %v254 = vunpack.c.l.b16 %v226
      %v255 = vunpack.c.l.b16 %v227
      %v256 = vpack.c.b16 %v255, %v254
      %v269 = vunpack.c.l.b16 %v228
      %v270 = vunpack.c.l.b16 %v229
      %v271 = vunpack.c.l.b16 %v230
      %v272 = vunpack.c.l.b16 %v231
      %v273 = vunpack.c.l.b16 %v232
      %v274 = vunpack.c.l.b16 %v233
      %v275 = vunpack.c.l.b16 %v234
      %v276 = vunpack.c.l.b16 %v235
      %v277 = vunpack.c.l.b16 %v236
      %v278 = vunpack.c.l.b16 %v237
      %v279 = vunpack.c.l.b16 %v238
      %v280 = vunpack.c.l.b16 %v239
      %v281 = vpack.c.b16 %v270, %v269
      %v282 = vpack.c.b16 %v272, %v271
      %v283 = vpack.c.b16 %v274, %v273
      %v284 = vpack.c.b16 %v276, %v275
      %v285 = vpack.c.b16 %v278, %v277
      %v286 = vpack.c.b16 %v280, %v279
      %vm293 = vcmask 785408
      %v295 = vsel %vm293, %v256, 0
      %297 = vmatpush.bf16.msra.mxu0 0
      %298 = vmatpush.bf16.msra.mxu0 0
      %299 = vmatpush.bf16.msra.mxu0 %v286
      %300 = vmatpush.bf16.msra.mxu0 %v285
      %301 = vmatpush.bf16.msra.mxu0 %v284
      %302 = vmatpush.bf16.msra.mxu0 %v283
      %303 = vmatpush.bf16.msra.mxu0 %v282
      %304 = vmatpush.bf16.msra.mxu0 %v281
      %305 = vmatmul.bf16.gmra.mxu0 %v295
      %v306 = vpop.f32.mrf.mxu0
      %v307 = vadd.f32 %v245, %v306
      %v308 = vpop.f32.mrf.mxu0
      %v309 = vadd.f32 %v250, %v308
      %310 = vdwg.mxu0
      %vm311 = vcmask 457728
      %v312 = vsel %vm311, %v307, 0.0
      %v313 = vsel %vm311, %v309, 0.0
      %v314 = vadd.f32 %v312, %v313
      %v315 = vrot.slane %v314, 4
      %v316 = vadd.f32 %v314, %v315
      %v317 = vrot.slane %v316, 2
      %v318 = vadd.f32 %v316, %v317
      %v319 = vrot.slane %v318, 1
      %v320 = vadd.f32 %v318, %v319
      %v321 = vmul.f32 %v307, %v307
      %v322 = vmul.f32 %v309, %v309
      %v323 = vsel %vm311, %v321, 0.0
      %v324 = vsel %vm311, %v322, 0.0
      %v325 = vadd.f32 %v323, %v324
      %v326 = vrot.slane %v325, 4
      %v327 = vadd.f32 %v325, %v326
      %v328 = vrot.slane %v327, 2
      %v329 = vadd.f32 %v327, %v328
      %v330 = vrot.slane %v329, 1
      %v331 = vadd.f32 %v329, %v330
      %vm332 = vcmask 1040384
      %v333 = vsel %vm332, %v320, %v331
      %v334 = vld [vmem:[%s3] sm:$0xff]
      %v335 = vld [vmem:[%s3 + $0x8] sm:$0xff]
      %v336 = vld [vmem:[%s3 + $0x10] sm:$0xff]
      %v337 = vld [vmem:[%s3 + $0x18] sm:$0xff]
      %v338 = vld [vmem:[%s3 + $0x20] sm:$0xff]
      %v339 = vld [vmem:[%s3 + $0x28] sm:$0xff]
      %v340 = vld [vmem:[%s3 + $0x30] sm:$0xff]
      %v342 = vsel %vm311, %v333, 0
      %344 = vmatpush.msra.mxu0 0.0
      %345 = vmatpush.msra.mxu0 0.0
      %346 = vmatpush.msra.mxu0 0.0
      %347 = vmatpush.msra.mxu0 0.0
      %348 = vmatpush.msra.mxu0 0.0
      %349 = vmatpush.msra.mxu0 0.0
      %350 = vmatpush.msra.mxu0 0.0
      %351 = vmatpush.msra.mxu0 0.0
      %352 = vmatpush.msra.mxu0 0.0
      %353 = vmatpush.msra.mxu0 %v340
      %354 = vmatpush.msra.mxu0 %v339
      %355 = vmatpush.msra.mxu0 %v338
      %356 = vmatpush.msra.mxu0 %v337
      %357 = vmatpush.msra.mxu0 %v336
      %358 = vmatpush.msra.mxu0 %v335
      %359 = vmatpush.msra.mxu0 %v334
      %360 = vmatmul.f32.gmra.mxu0 %v342
      %v361 = vpop.f32.mrf.mxu0
      %v362 = vadd.f32 0.0, %v361
      %363 = vdwg.mxu0
      %v364 = vmul.f32 %v362, %v362
      %v366 = vrot.slane %v364, 7
      %v368 = vsub.f32 %v362, %v366
      %v369 = vadd.f32 %v368, 1e-05
      %v370 = vrsqrt.pop %v369
      %v371 = vmul.f32 %v370, %v369
      %v372 = vmul.f32 %v371, %v370
      %v373 = vmul.f32 0.5, %v372
      %v374 = vsub.f32 1.5, %v373
      %v375 = vmul.f32 %v370, %v374
      %vm376 = vweird.f32 %v369
      %vm377 = vweird.f32 %v370
      %vm378 = vmor %vm376, %vm377
      %v379 = vsel %vm378, %v370, %v375
      %v380 = vsel %vm332, %v362, %v379
      %v381 = vld [vmem:[%s4] sm:$0xff]
      %vm382 = vcmask 64512
      %v384 = vsel %vm382, %v380, 0
      %386 = vmatpush.msra.mxu0 0.0
      %387 = vmatpush.msra.mxu0 0.0
      %388 = vmatpush.msra.mxu0 0.0
      %389 = vmatpush.msra.mxu0 0.0
      %390 = vmatpush.msra.mxu0 0.0
      %391 = vmatpush.msra.mxu0 0.0
      %392 = vmatpush.msra.mxu0 0.0
      %393 = vmatpush.msra.mxu0 0.0
      %394 = vmatpush.msra.mxu0 0.0
      %395 = vmatpush.msra.mxu0 0.0
      %396 = vmatpush.msra.mxu0 0.0
      %397 = vmatpush.msra.mxu0 0.0
      %398 = vmatpush.msra.mxu0 0.0
      %399 = vmatpush.msra.mxu0 0.0
      %400 = vmatpush.msra.mxu0 0.0
      %401 = vmatpush.msra.mxu0 %v381
      %402 = vmatmul.f32.gmra.mxu0 %v384
      %v403 = vpop.f32.mrf.mxu0
      %v404 = vadd.f32 0.0, %v403
      %405 = vdwg.mxu0
      %v406 = vperm.slane %v404, 0
      %v407 = vsub.f32 %v307, %v406
      %v408 = vsub.f32 %v309, %v406
      %v409 = vperm.slane %v404, 1
      %v410 = vmul.f32 %v407, %v409
      %v411 = vmul.f32 %v408, %v409
      %412 = vset.pattern.permute.xlu0 1
      %413 = vperm.xlu0 %412, %v240
      %v414 = vpop.permute.xlu0 %413
      %416 = vset.pattern.permute.xlu0 1
      %417 = vperm.xlu0 %416, %v241
      %v418 = vpop.permute.xlu0 %417
      %v420 = vmul.f32 %v410, %v414
      %v421 = vmul.f32 %v411, %v418
      %422 = vset.pattern.permute.xlu0 2
      %423 = vperm.xlu0 %422, %v240
      %v424 = vpop.permute.xlu0 %423
      %426 = vset.pattern.permute.xlu0 2
      %427 = vperm.xlu0 %426, %v241
      %v428 = vpop.permute.xlu0 %427
      %v430 = vadd.f32 %v420, %v424
      %v431 = vadd.f32 %v421, %v428
      %vm432 = vcmp.gt.f32.partialorder %v430, 0.0
      %vm433 = vcmp.gt.f32.partialorder %v431, 0.0
      %434 = vset.pattern.permute.xlu0 3
      %435 = vperm.xlu0 %434, %v240
      %v436 = vpop.permute.xlu0 %435
      %438 = vset.pattern.permute.xlu0 3
      %439 = vperm.xlu0 %438, %v241
      %v440 = vpop.permute.xlu0 %439
      %v442 = vmul.f32 %v436, %v430
      %v443 = vmul.f32 %v440, %v431
      %v444 = vsel %vm432, %v430, %v442
      %v445 = vsel %vm433, %v431, %v443
      %446 = vst.msk [vmem:[%s224] sm:$0xff] %vm311, %v444
      %447 = vst.msk [vmem:[%s224 + $0x8] sm:$0xff] %vm311, %v445
      %p448 = scmp.lt.s32.totalorder %s16, 1
      %s449 = scalar_select %p448, %s16, 1
      %s450 = smul.addr %s449, 2
      %s451 = smul.addr %s450, 8
      %s452 = scalar_lea.vmem %s5, %s451
      // Predicated region
      $region41: #{_lambda_.31} parent=39 // pred_check
        %p453 = pneg %p144
      $region42: #{_lambda_.31} parent=39 // pred_check_branch
        %455 = sbr.rel (%p453) target = $region44
      $region43: #{_lambda_.31} parent=39 // pred_region
        _
      $region44: #{_lambda_.31} parent=39 // pred_fallthru
        _
    $region40: #{_lambda_.31} parent=5 // pred_fallthru
      _
    %p456 = scmp.le.s32.totalorder 2, %s11
    // Predicated region
    $region45: #{_lambda_.31} parent=5 // pred_check
      %p457 = pneg %p456
    $region46: #{_lambda_.31} parent=5 // pred_check_branch
      %459 = sbr.rel (%p457) target = $region48
    $region47: #{_lambda_.31} parent=5 // pred_region
      %s460 = ssub.s32 %s11, 2
      // Predicated region
      $region49: #{_lambda_.31} parent=47 // pred_check
        %p461 = pneg %p150
      $region50: #{_lambda_.31} parent=47 // pred_check_branch
        %463 = sbr.rel (%p461) target = $region52
      $region51: #{_lambda_.31} parent=47 // pred_region
        %p464 = scmp.lt.s32.totalorder %s17, 1
        %s465 = scalar_select %p464, %s17, 1
        %s466 = smul.addr %s465, 2
        %s467 = smul.addr %s466, 8
        %s468 = scalar_lea.vmem %s5, %s467
      $region52: #{_lambda_.31} parent=47 // pred_fallthru
        _
    $region48: #{_lambda_.31} parent=5 // pred_fallthru
      _
  $region6: #{_lambda_.31} parent=0 // loop_footer
    %s15 = sadd.s32 1, %s11
  $region7: #{_lambda_.31} parent=0 // loop_footer_branch
    %10 = sbr.rel target = $region3
  $region8: #{_lambda_.31} parent=0 // loop_exit
    _

// kernel: _lambda_.32
$region0: #{_lambda_.32}
  #allocation0 [shape = 'u32[]', space=smem, size = 0x4, offset = 0x4, fixed_abs, tag = 'smem constant byte address 0x4 - core index']
  #allocation1 [shape = 'u32[72,128]{1,0:T(1,128)}', space=vmem, size = 0x9000, scoped, tag = 'internal scratch']
  %s0 = inlined_call_operand.vmem [shape: bf16[2,96,120], index: 0, kind: input, shape index: {}]
  %s1 = inlined_call_operand.vmem [shape: bf16[16,96], index: 1, kind: input, shape index: {}]
  %s2 = inlined_call_operand.vmem [shape: f32[16,4], index: 2, kind: input, shape index: {}]
  %s3 = inlined_call_operand.vmem [shape: f32[120,8], index: 3, kind: input, shape index: {}]
  %s4 = inlined_call_operand.vmem [shape: f32[8,120], index: 4, kind: input, shape index: {}]
  %s5 = inlined_call_operand.vmem [shape: f32[2,16,120], index: 5, kind: output, shape index: {}]
  %s6 = sld [smem:[#allocation0]]
  $region53: #{_lambda_.32} parent=0
    _
  %s8 = ssub.s32 1, %s6
  %s9 = scalar_select 0, %s8, %s6
  loop: start=0, step=1, limit=4
  $region2: #{_lambda_.32} parent=0 // loop_pre_header
    _
  $region3: #{_lambda_.32} parent=0 // loop_header
    %s11 = sphi 0, %s15
    %p12 = scmp.ge.s32.totalorder %s11, 4
    %s21 = sphi 0, %s23
    %s24 = sphi 0, %s21
    %s25 = sphi 0, %s24
    %s41 = sphi 0, %s25
    %s45 = sphi 0, %s45
    %s47 = sphi 0, %s45
    %s48 = sphi 0, %s47
    %s62 = sphi 0, %s48
    %s66 = sphi 0, %s66
    %s68 = sphi 0, %s66
    %s69 = sphi 0, %s68
    %s83 = sphi 0, %s69
    %s87 = sphi 0, %s87
    %s89 = sphi 0, %s87
    %s90 = sphi 0, %s89
    %s104 = sphi 0, %s90
    %s108 = sphi 0, %s108
    %s110 = sphi 0, %s108
    %s111 = sphi 0, %s110
    %s125 = sphi 0, %s111
    %s131 = sphi 0, %s133
    %s134 = sphi 0, %s131
    %s135 = sphi 0, %s134
    %s151 = sphi 0, %s135
  $region4: #{_lambda_.32} parent=0 // loop_header_branch
    %14 = sbr.rel (%p12) target = $region8
  $region5: #{_lambda_.32} parent=0 // loop_body
    %s16 = ssub.s32 %s11, 1
    %s17 = ssub.s32 %s11, 2
    %s18 = sadd.s32 %s11, 1
    %s19 = ssub.s32 %s11, %s18
    %p20 = scmp.eq.s32.totalorder %s19, 0
    %s22 = sadd.s32 %s21, 1
    %s23 = scalar_select %p20, %s21, %s22
    %p26 = pneg %p20
    %p27 = scmp.eq.s32.totalorder %s11, 1
    %p28 = por %p26, %p27
    %p29 = scmp.ne.s32.totalorder %s21, %s24
    %p30 = scmp.eq.s32.totalorder %s11, 0
    %p31 = por %p29, %p30
    %p32 = scmp.ne.s32.totalorder %s21, %s24
    %p33 = scmp.eq.s32.totalorder %s16, 1
    %p34 = por %p32, %p33
    %p35 = scmp.ne.s32.totalorder %s24, %s25
    %p36 = scmp.eq.s32.totalorder %s16, 0
    %p37 = por %p35, %p36
    %p38 = scmp.ne.s32.totalorder %s24, %s25
    %p39 = scmp.eq.s32.totalorder %s17, 1
    %p40 = por %p38, %p39
    %p42 = scmp.ne.s32.totalorder %s25, %s41
    %p43 = scmp.eq.s32.totalorder %s17, 0
    %p44 = por %p42, %p43
    %s46 = sadd.s32 %s45, 1
    %p49 = scmp.eq.s32.totalorder %s11, 1
    %p50 = scmp.ne.s32.totalorder %s45, %s47
    %p51 = scmp.eq.s32.totalorder %s11, 0
    %p52 = por %p50, %p51
    %p53 = scmp.ne.s32.totalorder %s45, %s47
    %p54 = scmp.eq.s32.totalorder %s16, 1
    %p55 = por %p53, %p54
    %p56 = scmp.ne.s32.totalorder %s47, %s48
    %p57 = scmp.eq.s32.totalorder %s16, 0
    %p58 = por %p56, %p57
    %p59 = scmp.ne.s32.totalorder %s47, %s48
    %p60 = scmp.eq.s32.totalorder %s17, 1
    %p61 = por %p59, %p60
    %p63 = scmp.ne.s32.totalorder %s48, %s62
    %p64 = scmp.eq.s32.totalorder %s17, 0
    %p65 = por %p63, %p64
    %s67 = sadd.s32 %s66, 1
    %p70 = scmp.eq.s32.totalorder %s11, 1
    %p71 = scmp.ne.s32.totalorder %s66, %s68
    %p72 = scmp.eq.s32.totalorder %s11, 0
    %p73 = por %p71, %p72
    %p74 = scmp.ne.s32.totalorder %s66, %s68
    %p75 = scmp.eq.s32.totalorder %s16, 1
    %p76 = por %p74, %p75
    %p77 = scmp.ne.s32.totalorder %s68, %s69
    %p78 = scmp.eq.s32.totalorder %s16, 0
    %p79 = por %p77, %p78
    %p80 = scmp.ne.s32.totalorder %s68, %s69
    %p81 = scmp.eq.s32.totalorder %s17, 1
    %p82 = por %p80, %p81
    %p84 = scmp.ne.s32.totalorder %s69, %s83
    %p85 = scmp.eq.s32.totalorder %s17, 0
    %p86 = por %p84, %p85
    %s88 = sadd.s32 %s87, 1
    %p91 = scmp.eq.s32.totalorder %s11, 1
    %p92 = scmp.ne.s32.totalorder %s87, %s89
    %p93 = scmp.eq.s32.totalorder %s11, 0
    %p94 = por %p92, %p93
    %p95 = scmp.ne.s32.totalorder %s87, %s89
    %p96 = scmp.eq.s32.totalorder %s16, 1
    %p97 = por %p95, %p96
    %p98 = scmp.ne.s32.totalorder %s89, %s90
    %p99 = scmp.eq.s32.totalorder %s16, 0
    %p100 = por %p98, %p99
    %p101 = scmp.ne.s32.totalorder %s89, %s90
    %p102 = scmp.eq.s32.totalorder %s17, 1
    %p103 = por %p101, %p102
    %p105 = scmp.ne.s32.totalorder %s90, %s104
    %p106 = scmp.eq.s32.totalorder %s17, 0
    %p107 = por %p105, %p106
    %s109 = sadd.s32 %s108, 1
    %p112 = scmp.eq.s32.totalorder %s11, 1
    %p113 = scmp.ne.s32.totalorder %s108, %s110
    %p114 = scmp.eq.s32.totalorder %s11, 0
    %p115 = por %p113, %p114
    %p116 = scmp.ne.s32.totalorder %s108, %s110
    %p117 = scmp.eq.s32.totalorder %s16, 1
    %p118 = por %p116, %p117
    %p119 = scmp.ne.s32.totalorder %s110, %s111
    %p120 = scmp.eq.s32.totalorder %s16, 0
    %p121 = por %p119, %p120
    %p122 = scmp.ne.s32.totalorder %s110, %s111
    %p123 = scmp.eq.s32.totalorder %s17, 1
    %p124 = por %p122, %p123
    %p126 = scmp.ne.s32.totalorder %s111, %s125
    %p127 = scmp.eq.s32.totalorder %s17, 0
    %p128 = por %p126, %p127
    %s129 = ssub.s32 %s11, %s18
    %p130 = scmp.eq.s32.totalorder %s129, 0
    %s132 = sadd.s32 %s131, 1
    %s133 = scalar_select %p130, %s131, %s132
    %p136 = pneg %p130
    %p137 = scmp.eq.s32.totalorder %s11, 1
    %p138 = por %p136, %p137
    %p139 = scmp.ne.s32.totalorder %s131, %s134
    %p140 = scmp.eq.s32.totalorder %s11, 0
    %p141 = por %p139, %p140
    %p142 = scmp.ne.s32.totalorder %s131, %s134
    %p143 = scmp.eq.s32.totalorder %s16, 1
    %p144 = por %p142, %p143
    %p145 = scmp.ne.s32.totalorder %s134, %s135
    %p146 = scmp.eq.s32.totalorder %s16, 0
    %p147 = por %p145, %p146
    %p148 = scmp.ne.s32.totalorder %s134, %s135
    %p149 = scmp.eq.s32.totalorder %s17, 1
    %p150 = por %p148, %p149
    %p152 = scmp.ne.s32.totalorder %s135, %s151
    %p153 = scmp.eq.s32.totalorder %s17, 0
    %p154 = por %p152, %p153
    %p155 = scmp.le.s32.totalorder 1, %s11
    %p156 = scmp.lt.s32.totalorder %s11, 3
    %p157 = pnand %p155, %p156
    %p158 = pneg %p157
    // Predicated region
    $region9: #{_lambda_.32} parent=5 // pred_check
      _
    $region10: #{_lambda_.32} parent=5 // pred_check_branch
      %160 = sbr.rel (%p157) target = $region12
    $region11: #{_lambda_.32} parent=5 // pred_region
      %s161 = ssub.s32 %s11, 1
      // Predicated region
      $region13: #{_lambda_.32} parent=11 // pred_check
        %p162 = pneg %p58
      $region14: #{_lambda_.32} parent=11 // pred_check_branch
        %164 = sbr.rel (%p162) target = $region16
      $region15: #{_lambda_.32} parent=11 // pred_region
        _
      $region16: #{_lambda_.32} parent=11 // pred_fallthru
        _
      // Predicated region
      $region17: #{_lambda_.32} parent=11 // pred_check
        %p165 = pneg %p79
      $region18: #{_lambda_.32} parent=11 // pred_check_branch
        %167 = sbr.rel (%p165) target = $region20
      $region19: #{_lambda_.32} parent=11 // pred_region
        _
      $region20: #{_lambda_.32} parent=11 // pred_fallthru
        _
      // Predicated region
      $region21: #{_lambda_.32} parent=11 // pred_check
        %p168 = pneg %p100
      $region22: #{_lambda_.32} parent=11 // pred_check_branch
        %170 = sbr.rel (%p168) target = $region24
      $region23: #{_lambda_.32} parent=11 // pred_region
        _
      $region24: #{_lambda_.32} parent=11 // pred_fallthru
        _
      // Predicated region
      $region25: #{_lambda_.32} parent=11 // pred_check
        %p171 = pneg %p121
      $region26: #{_lambda_.32} parent=11 // pred_check_branch
        %173 = sbr.rel (%p171) target = $region28
      $region27: #{_lambda_.32} parent=11 // pred_region
        _
      $region28: #{_lambda_.32} parent=11 // pred_fallthru
        _
    $region12: #{_lambda_.32} parent=5 // pred_fallthru
      _
    %p174 = scmp.lt.s32.totalorder %s11, 2
    // Predicated region
    $region29: #{_lambda_.32} parent=5 // pred_check
      %p175 = pneg %p174
    $region30: #{_lambda_.32} parent=5 // pred_check_branch
      %177 = sbr.rel (%p175) target = $region32
    $region31: #{_lambda_.32} parent=5 // pred_region
      // Predicated region
      $region33: #{_lambda_.32} parent=31 // pred_check
        %p178 = pneg %p31
      $region34: #{_lambda_.32} parent=31 // pred_check_branch
        %180 = sbr.rel (%p178) target = $region36
      $region35: #{_lambda_.32} parent=31 // pred_region
        %p181 = scmp.lt.s32.totalorder %s11, 1
        %s182 = scalar_select %p181, %s11, 1
        %s183 = smul.addr %s182, 12
        %s184 = smul.addr %s183, 4
        %s185 = scalar_lea.vmem %s0, %s184
      $region36: #{_lambda_.32} parent=31 // pred_fallthru
        _
    $region32: #{_lambda_.32} parent=5 // pred_fallthru
      _
    %p186 = scmp.le.s32.totalorder 1, %s11
    %p187 = scmp.lt.s32.totalorder %s11, 3
    %p188 = pnand %p186, %p187
    %p189 = pneg %p188
    // Predicated region
    $region37: #{_lambda_.32} parent=5 // pred_check
      _
    $region38: #{_lambda_.32} parent=5 // pred_check_branch
      %191 = sbr.rel (%p188) target = $region40
    $region39: #{_lambda_.32} parent=5 // pred_region
      %s192 = ssub.s32 %s11, 1
      %p193 = scmp.lt.s32.totalorder %s16, 1
      %s194 = scalar_select %p193, %s16, 1
      %s195 = smul.addr %s194, 12
      %s196 = smul.addr %s195, 4
      %s197 = scalar_lea.vmem %s0, %s196
      %p198 = pneg %p37
      %p199 = pneg %p34
      %p200 = pneg %p58
      %p201 = pneg %p55
      %p202 = pneg %p79
      %p203 = pneg %p76
      %p204 = pneg %p100
      %p205 = pneg %p97
      %p206 = pneg %p121
      %p207 = pneg %p118
      %p208 = pneg %p147
      %p209 = pneg %p144
      %p210 = scmp.lt.s32.totalorder %s16, 1
      %s211 = scalar_select %p210, %s16, 1
      %s212 = smul.addr %s211, 2
      %s213 = smul.addr %s212, 8
      %s214 = scalar_lea.vmem %s5, %s213
      %p215 = scmp.lt.s32.totalorder %s16, 1
      %s216 = scalar_select %p215, %s16, 1
      %s217 = smul.addr %s216, 12
      %s218 = smul.addr %s217, 4
      %s219 = scalar_lea.vmem %s0, %s218
      %p220 = scmp.lt.s32.totalorder %s16, 1
      %s221 = scalar_select %p220, %s16, 1
      %s222 = smul.addr %s221, 2
      %s223 = smul.addr %s222, 8
      %s224 = scalar_lea.vmem %s5, %s223
      %v226 = vld [vmem:[%s1] sm:$0xf]
      %v227 = vld [vmem:[%s1 + $0x4] sm:$0xf]
      %v228 = vld [vmem:[%s219] sm:$0xf]
      %v229 = vld [vmem:[%s219 + $0x4] sm:$0xf]
      %v230 = vld [vmem:[%s219 + $0x8] sm:$0xf]
      %v231 = vld [vmem:[%s219 + $0xc] sm:$0xf]
      %v232 = vld [vmem:[%s219 + $0x10] sm:$0xf]
      %v233 = vld [vmem:[%s219 + $0x14] sm:$0xf]
      %v234 = vld [vmem:[%s219 + $0x18] sm:$0xf]
      %v235 = vld [vmem:[%s219 + $0x1c] sm:$0xf]
      %v236 = vld [vmem:[%s219 + $0x20] sm:$0xf]
      %v237 = vld [vmem:[%s219 + $0x24] sm:$0xf]
      %v238 = vld [vmem:[%s219 + $0x28] sm:$0xf]
      %v239 = vld [vmem:[%s219 + $0x2c] sm:$0xf]
      %v240 = vld [vmem:[%s2] sm:$0xff]
      %v241 = vld [vmem:[%s2 + $0x8] sm:$0xff]
      %243 = vset.pattern.permute.xlu0 0
      %244 = vperm.xlu0 %243, %v240
      %v245 = vpop.permute.xlu0 %244
      %248 = vset.pattern.permute.xlu0 0
      %249 = vperm.xlu0 %248, %v241
      %v250 = vpop.permute.xlu0 %249
      %v254 = vunpack.c.l.b16 %v226
      %v255 = vunpack.c.l.b16 %v227
      %v256 = vpack.c.b16 %v255, %v254
      %v269 = vunpack.c.l.b16 %v228
      %v270 = vunpack.c.l.b16 %v229
      %v271 = vunpack.c.l.b16 %v230
      %v272 = vunpack.c.l.b16 %v231
      %v273 = vunpack.c.l.b16 %v232
      %v274 = vunpack.c.l.b16 %v233
      %v275 = vunpack.c.l.b16 %v234
      %v276 = vunpack.c.l.b16 %v235
      %v277 = vunpack.c.l.b16 %v236
      %v278 = vunpack.c.l.b16 %v237
      %v279 = vunpack.c.l.b16 %v238
      %v280 = vunpack.c.l.b16 %v239
      %v281 = vpack.c.b16 %v270, %v269
      %v282 = vpack.c.b16 %v272, %v271
      %v283 = vpack.c.b16 %v274, %v273
      %v284 = vpack.c.b16 %v276, %v275
      %v285 = vpack.c.b16 %v278, %v277
      %v286 = vpack.c.b16 %v280, %v279
      %vm293 = vcmask 785408
      %v295 = vsel %vm293, %v256, 0
      %297 = vmatpush.bf16.msra.mxu0 0
      %298 = vmatpush.bf16.msra.mxu0 0
      %299 = vmatpush.bf16.msra.mxu0 %v286
      %300 = vmatpush.bf16.msra.mxu0 %v285
      %301 = vmatpush.bf16.msra.mxu0 %v284
      %302 = vmatpush.bf16.msra.mxu0 %v283
      %303 = vmatpush.bf16.msra.mxu0 %v282
      %304 = vmatpush.bf16.msra.mxu0 %v281
      %305 = vmatmul.bf16.gmra.mxu0 %v295
      %v306 = vpop.f32.mrf.mxu0
      %v307 = vadd.f32 %v245, %v306
      %v308 = vpop.f32.mrf.mxu0
      %v309 = vadd.f32 %v250, %v308
      %310 = vdwg.mxu0
      %vm311 = vcmask 982016
      %v312 = vsel %vm311, %v307, 0.0
      %v313 = vsel %vm311, %v309, 0.0
      %v314 = vadd.f32 %v312, %v313
      %v315 = vrot.slane %v314, 4
      %v316 = vadd.f32 %v314, %v315
      %v317 = vrot.slane %v316, 2
      %v318 = vadd.f32 %v316, %v317
      %v319 = vrot.slane %v318, 1
      %v320 = vadd.f32 %v318, %v319
      %v321 = vmul.f32 %v307, %v307
      %v322 = vmul.f32 %v309, %v309
      %v323 = vsel %vm311, %v321, 0.0
      %v324 = vsel %vm311, %v322, 0.0
      %v325 = vadd.f32 %v323, %v324
      %v326 = vrot.slane %v325, 4
      %v327 = vadd.f32 %v325, %v326
      %v328 = vrot.slane %v327, 2
      %v329 = vadd.f32 %v327, %v328
      %v330 = vrot.slane %v329, 1
      %v331 = vadd.f32 %v329, %v330
      %vm332 = vcmask 1040384
      %v333 = vsel %vm332, %v320, %v331
      %v334 = vld [vmem:[%s3] sm:$0xff]
      %v335 = vld [vmem:[%s3 + $0x8] sm:$0xff]
      %v336 = vld [vmem:[%s3 + $0x10] sm:$0xff]
      %v337 = vld [vmem:[%s3 + $0x18] sm:$0xff]
      %v338 = vld [vmem:[%s3 + $0x20] sm:$0xff]
      %v339 = vld [vmem:[%s3 + $0x28] sm:$0xff]
      %v340 = vld [vmem:[%s3 + $0x30] sm:$0xff]
      %v341 = vld [vmem:[%s3 + $0x38] sm:$0xff]
      %v342 = vld [vmem:[%s3 + $0x40] sm:$0xff]
      %v343 = vld [vmem:[%s3 + $0x48] sm:$0xff]
      %v344 = vld [vmem:[%s3 + $0x50] sm:$0xff]
      %v345 = vld [vmem:[%s3 + $0x58] sm:$0xff]
      %v346 = vld [vmem:[%s3 + $0x60] sm:$0xff]
      %v347 = vld [vmem:[%s3 + $0x68] sm:$0xff]
      %v348 = vld [vmem:[%s3 + $0x70] sm:$0xff]
      %v350 = vsel %vm311, %v333, 0
      %352 = vmatpush.msra.mxu0 0.0
      %353 = vmatpush.msra.mxu0 %v348
      %354 = vmatpush.msra.mxu0 %v347
      %355 = vmatpush.msra.mxu0 %v346
      %356 = vmatpush.msra.mxu0 %v345
      %357 = vmatpush.msra.mxu0 %v344
      %358 = vmatpush.msra.mxu0 %v343
      %359 = vmatpush.msra.mxu0 %v342
      %360 = vmatpush.msra.mxu0 %v341
      %361 = vmatpush.msra.mxu0 %v340
      %362 = vmatpush.msra.mxu0 %v339
      %363 = vmatpush.msra.mxu0 %v338
      %364 = vmatpush.msra.mxu0 %v337
      %365 = vmatpush.msra.mxu0 %v336
      %366 = vmatpush.msra.mxu0 %v335
      %367 = vmatpush.msra.mxu0 %v334
      %368 = vmatmul.f32.gmra.mxu0 %v350
      %v369 = vpop.f32.mrf.mxu0
      %v370 = vadd.f32 0.0, %v369
      %371 = vdwg.mxu0
      %v372 = vmul.f32 %v370, %v370
      %v374 = vrot.slane %v372, 7
      %v376 = vsub.f32 %v370, %v374
      %v377 = vadd.f32 %v376, 1e-05
      %v378 = vrsqrt.pop %v377
      %v379 = vmul.f32 %v378, %v377
      %v380 = vmul.f32 %v379, %v378
      %v381 = vmul.f32 0.5, %v380
      %v382 = vsub.f32 1.5, %v381
      %v383 = vmul.f32 %v378, %v382
      %vm384 = vweird.f32 %v377
      %vm385 = vweird.f32 %v378
      %vm386 = vmor %vm384, %vm385
      %v387 = vsel %vm386, %v378, %v383
      %v388 = vsel %vm332, %v370, %v387
      %v389 = vld [vmem:[%s4] sm:$0xff]
      %vm390 = vcmask 64512
      %v392 = vsel %vm390, %v388, 0
      %394 = vmatpush.msra.mxu0 0.0
      %395 = vmatpush.msra.mxu0 0.0
      %396 = vmatpush.msra.mxu0 0.0
      %397 = vmatpush.msra.mxu0 0.0
      %398 = vmatpush.msra.mxu0 0.0
      %399 = vmatpush.msra.mxu0 0.0
      %400 = vmatpush.msra.mxu0 0.0
      %401 = vmatpush.msra.mxu0 0.0
      %402 = vmatpush.msra.mxu0 0.0
      %403 = vmatpush.msra.mxu0 0.0
      %404 = vmatpush.msra.mxu0 0.0
      %405 = vmatpush.msra.mxu0 0.0
      %406 = vmatpush.msra.mxu0 0.0
      %407 = vmatpush.msra.mxu0 0.0
      %408 = vmatpush.msra.mxu0 0.0
      %409 = vmatpush.msra.mxu0 %v389
      %410 = vmatmul.f32.gmra.mxu0 %v392
      %v411 = vpop.f32.mrf.mxu0
      %v412 = vadd.f32 0.0, %v411
      %413 = vdwg.mxu0
      %v414 = vperm.slane %v412, 0
      %v415 = vsub.f32 %v307, %v414
      %v416 = vsub.f32 %v309, %v414
      %v417 = vperm.slane %v412, 1
      %v418 = vmul.f32 %v415, %v417
      %v419 = vmul.f32 %v416, %v417
      %420 = vset.pattern.permute.xlu0 1
      %421 = vperm.xlu0 %420, %v240
      %v422 = vpop.permute.xlu0 %421
      %424 = vset.pattern.permute.xlu0 1
      %425 = vperm.xlu0 %424, %v241
      %v426 = vpop.permute.xlu0 %425
      %v428 = vmul.f32 %v418, %v422
      %v429 = vmul.f32 %v419, %v426
      %430 = vset.pattern.permute.xlu0 2
      %431 = vperm.xlu0 %430, %v240
      %v432 = vpop.permute.xlu0 %431
      %434 = vset.pattern.permute.xlu0 2
      %435 = vperm.xlu0 %434, %v241
      %v436 = vpop.permute.xlu0 %435
      %v438 = vadd.f32 %v428, %v432
      %v439 = vadd.f32 %v429, %v436
      %vm440 = vcmp.gt.f32.partialorder %v438, 0.0
      %vm441 = vcmp.gt.f32.partialorder %v439, 0.0
      %442 = vset.pattern.permute.xlu0 3
      %443 = vperm.xlu0 %442, %v240
      %v444 = vpop.permute.xlu0 %443
      %446 = vset.pattern.permute.xlu0 3
      %447 = vperm.xlu0 %446, %v241
      %v448 = vpop.permute.xlu0 %447
      %v450 = vmul.f32 %v444, %v438
      %v451 = vmul.f32 %v448, %v439
      %v452 = vsel %vm440, %v438, %v450
      %v453 = vsel %vm441, %v439, %v451
      %454 = vst.msk [vmem:[%s224] sm:$0xff] %vm311, %v452
      %455 = vst.msk [vmem:[%s224 + $0x8] sm:$0xff] %vm311, %v453
      %p456 = scmp.lt.s32.totalorder %s16, 1
      %s457 = scalar_select %p456, %s16, 1
      %s458 = smul.addr %s457, 2
      %s459 = smul.addr %s458, 8
      %s460 = scalar_lea.vmem %s5, %s459
      // Predicated region
      $region41: #{_lambda_.32} parent=39 // pred_check
        %p461 = pneg %p144
      $region42: #{_lambda_.32} parent=39 // pred_check_branch
        %463 = sbr.rel (%p461) target = $region44
      $region43: #{_lambda_.32} parent=39 // pred_region
        _
      $region44: #{_lambda_.32} parent=39 // pred_fallthru
        _
    $region40: #{_lambda_.32} parent=5 // pred_fallthru
      _
    %p464 = scmp.le.s32.totalorder 2, %s11
    // Predicated region
    $region45: #{_lambda_.32} parent=5 // pred_check
      %p465 = pneg %p464
    $region46: #{_lambda_.32} parent=5 // pred_check_branch
      %467 = sbr.rel (%p465) target = $region48
    $region47: #{_lambda_.32} parent=5 // pred_region
      %s468 = ssub.s32 %s11, 2
      // Predicated region
      $region49: #{_lambda_.32} parent=47 // pred_check
        %p469 = pneg %p150
      $region50: #{_lambda_.32} parent=47 // pred_check_branch
        %471 = sbr.rel (%p469) target = $region52
      $region51: #{_lambda_.32} parent=47 // pred_region
        %p472 = scmp.lt.s32.totalorder %s17, 1
        %s473 = scalar_select %p472, %s17, 1
        %s474 = smul.addr %s473, 2
        %s475 = smul.addr %s474, 8
        %s476 = scalar_lea.vmem %s5, %s475
      $region52: #{_lambda_.32} parent=47 // pred_fallthru
        _
    $region48: #{_lambda_.32} parent=5 // pred_fallthru
      _
  $region6: #{_lambda_.32} parent=0 // loop_footer
    %s15 = sadd.s32 1, %s11
  $region7: #{_lambda_.32} parent=0 // loop_footer_branch
    %10 = sbr.rel target = $region3
  $region8: #{_lambda_.32} parent=0 // loop_exit
    _

// kernel: _lambda_.33
$region0: #{_lambda_.33}
  #allocation0 [shape = 'u32[]', space=smem, size = 0x4, offset = 0x4, fixed_abs, tag = 'smem constant byte address 0x4 - core index']
  #allocation1 [shape = 'u32[72,128]{1,0:T(1,128)}', space=vmem, size = 0x9000, scoped, tag = 'internal scratch']
  %s0 = inlined_call_operand.vmem [shape: bf16[2,96,248], index: 0, kind: input, shape index: {}]
  %s1 = inlined_call_operand.vmem [shape: bf16[16,96], index: 1, kind: input, shape index: {}]
  %s2 = inlined_call_operand.vmem [shape: f32[16,4], index: 2, kind: input, shape index: {}]
  %s3 = inlined_call_operand.vmem [shape: f32[248,8], index: 3, kind: input, shape index: {}]
  %s4 = inlined_call_operand.vmem [shape: f32[8,248], index: 4, kind: input, shape index: {}]
  %s5 = inlined_call_operand.vmem [shape: f32[2,16,248], index: 5, kind: output, shape index: {}]
  %s6 = sld [smem:[#allocation0]]
  $region53: #{_lambda_.33} parent=0
    _
  %s8 = ssub.s32 1, %s6
  %s9 = scalar_select 0, %s8, %s6
  loop: start=0, step=1, limit=4
  $region2: #{_lambda_.33} parent=0 // loop_pre_header
    _
  $region3: #{_lambda_.33} parent=0 // loop_header
    %s11 = sphi 0, %s15
    %p12 = scmp.ge.s32.totalorder %s11, 4
    %s21 = sphi 0, %s23
    %s24 = sphi 0, %s21
    %s25 = sphi 0, %s24
    %s41 = sphi 0, %s25
    %s45 = sphi 0, %s45
    %s47 = sphi 0, %s45
    %s48 = sphi 0, %s47
    %s62 = sphi 0, %s48
    %s66 = sphi 0, %s66
    %s68 = sphi 0, %s66
    %s69 = sphi 0, %s68
    %s83 = sphi 0, %s69
    %s87 = sphi 0, %s87
    %s89 = sphi 0, %s87
    %s90 = sphi 0, %s89
    %s104 = sphi 0, %s90
    %s108 = sphi 0, %s108
    %s110 = sphi 0, %s108
    %s111 = sphi 0, %s110
    %s125 = sphi 0, %s111
    %s131 = sphi 0, %s133
    %s134 = sphi 0, %s131
    %s135 = sphi 0, %s134
    %s151 = sphi 0, %s135
  $region4: #{_lambda_.33} parent=0 // loop_header_branch
    %14 = sbr.rel (%p12) target = $region8
  $region5: #{_lambda_.33} parent=0 // loop_body
    %s16 = ssub.s32 %s11, 1
    %s17 = ssub.s32 %s11, 2
    %s18 = sadd.s32 %s11, 1
    %s19 = ssub.s32 %s11, %s18
    %p20 = scmp.eq.s32.totalorder %s19, 0
    %s22 = sadd.s32 %s21, 1
    %s23 = scalar_select %p20, %s21, %s22
    %p26 = pneg %p20
    %p27 = scmp.eq.s32.totalorder %s11, 1
    %p28 = por %p26, %p27
    %p29 = scmp.ne.s32.totalorder %s21, %s24
    %p30 = scmp.eq.s32.totalorder %s11, 0
    %p31 = por %p29, %p30
    %p32 = scmp.ne.s32.totalorder %s21, %s24
    %p33 = scmp.eq.s32.totalorder %s16, 1
    %p34 = por %p32, %p33
    %p35 = scmp.ne.s32.totalorder %s24, %s25
    %p36 = scmp.eq.s32.totalorder %s16, 0
    %p37 = por %p35, %p36
    %p38 = scmp.ne.s32.totalorder %s24, %s25
    %p39 = scmp.eq.s32.totalorder %s17, 1
    %p40 = por %p38, %p39
    %p42 = scmp.ne.s32.totalorder %s25, %s41
    %p43 = scmp.eq.s32.totalorder %s17, 0
    %p44 = por %p42, %p43
    %s46 = sadd.s32 %s45, 1
    %p49 = scmp.eq.s32.totalorder %s11, 1
    %p50 = scmp.ne.s32.totalorder %s45, %s47
    %p51 = scmp.eq.s32.totalorder %s11, 0
    %p52 = por %p50, %p51
    %p53 = scmp.ne.s32.totalorder %s45, %s47
    %p54 = scmp.eq.s32.totalorder %s16, 1
    %p55 = por %p53, %p54
    %p56 = scmp.ne.s32.totalorder %s47, %s48
    %p57 = scmp.eq.s32.totalorder %s16, 0
    %p58 = por %p56, %p57
    %p59 = scmp.ne.s32.totalorder %s47, %s48
    %p60 = scmp.eq.s32.totalorder %s17, 1
    %p61 = por %p59, %p60
    %p63 = scmp.ne.s32.totalorder %s48, %s62
    %p64 = scmp.eq.s32.totalorder %s17, 0
    %p65 = por %p63, %p64
    %s67 = sadd.s32 %s66, 1
    %p70 = scmp.eq.s32.totalorder %s11, 1
    %p71 = scmp.ne.s32.totalorder %s66, %s68
    %p72 = scmp.eq.s32.totalorder %s11, 0
    %p73 = por %p71, %p72
    %p74 = scmp.ne.s32.totalorder %s66, %s68
    %p75 = scmp.eq.s32.totalorder %s16, 1
    %p76 = por %p74, %p75
    %p77 = scmp.ne.s32.totalorder %s68, %s69
    %p78 = scmp.eq.s32.totalorder %s16, 0
    %p79 = por %p77, %p78
    %p80 = scmp.ne.s32.totalorder %s68, %s69
    %p81 = scmp.eq.s32.totalorder %s17, 1
    %p82 = por %p80, %p81
    %p84 = scmp.ne.s32.totalorder %s69, %s83
    %p85 = scmp.eq.s32.totalorder %s17, 0
    %p86 = por %p84, %p85
    %s88 = sadd.s32 %s87, 1
    %p91 = scmp.eq.s32.totalorder %s11, 1
    %p92 = scmp.ne.s32.totalorder %s87, %s89
    %p93 = scmp.eq.s32.totalorder %s11, 0
    %p94 = por %p92, %p93
    %p95 = scmp.ne.s32.totalorder %s87, %s89
    %p96 = scmp.eq.s32.totalorder %s16, 1
    %p97 = por %p95, %p96
    %p98 = scmp.ne.s32.totalorder %s89, %s90
    %p99 = scmp.eq.s32.totalorder %s16, 0
    %p100 = por %p98, %p99
    %p101 = scmp.ne.s32.totalorder %s89, %s90
    %p102 = scmp.eq.s32.totalorder %s17, 1
    %p103 = por %p101, %p102
    %p105 = scmp.ne.s32.totalorder %s90, %s104
    %p106 = scmp.eq.s32.totalorder %s17, 0
    %p107 = por %p105, %p106
    %s109 = sadd.s32 %s108, 1
    %p112 = scmp.eq.s32.totalorder %s11, 1
    %p113 = scmp.ne.s32.totalorder %s108, %s110
    %p114 = scmp.eq.s32.totalorder %s11, 0
    %p115 = por %p113, %p114
    %p116 = scmp.ne.s32.totalorder %s108, %s110
    %p117 = scmp.eq.s32.totalorder %s16, 1
    %p118 = por %p116, %p117
    %p119 = scmp.ne.s32.totalorder %s110, %s111
    %p120 = scmp.eq.s32.totalorder %s16, 0
    %p121 = por %p119, %p120
    %p122 = scmp.ne.s32.totalorder %s110, %s111
    %p123 = scmp.eq.s32.totalorder %s17, 1
    %p124 = por %p122, %p123
    %p126 = scmp.ne.s32.totalorder %s111, %s125
    %p127 = scmp.eq.s32.totalorder %s17, 0
    %p128 = por %p126, %p127
    %s129 = ssub.s32 %s11, %s18
    %p130 = scmp.eq.s32.totalorder %s129, 0
    %s132 = sadd.s32 %s131, 1
    %s133 = scalar_select %p130, %s131, %s132
    %p136 = pneg %p130
    %p137 = scmp.eq.s32.totalorder %s11, 1
    %p138 = por %p136, %p137
    %p139 = scmp.ne.s32.totalorder %s131, %s134
    %p140 = scmp.eq.s32.totalorder %s11, 0
    %p141 = por %p139, %p140
    %p142 = scmp.ne.s32.totalorder %s131, %s134
    %p143 = scmp.eq.s32.totalorder %s16, 1
    %p144 = por %p142, %p143
    %p145 = scmp.ne.s32.totalorder %s134, %s135
    %p146 = scmp.eq.s32.totalorder %s16, 0
    %p147 = por %p145, %p146
    %p148 = scmp.ne.s32.totalorder %s134, %s135
    %p149 = scmp.eq.s32.totalorder %s17, 1
    %p150 = por %p148, %p149
    %p152 = scmp.ne.s32.totalorder %s135, %s151
    %p153 = scmp.eq.s32.totalorder %s17, 0
    %p154 = por %p152, %p153
    %p155 = scmp.le.s32.totalorder 1, %s11
    %p156 = scmp.lt.s32.totalorder %s11, 3
    %p157 = pnand %p155, %p156
    %p158 = pneg %p157
    // Predicated region
    $region9: #{_lambda_.33} parent=5 // pred_check
      _
    $region10: #{_lambda_.33} parent=5 // pred_check_branch
      %160 = sbr.rel (%p157) target = $region12
    $region11: #{_lambda_.33} parent=5 // pred_region
      %s161 = ssub.s32 %s11, 1
      // Predicated region
      $region13: #{_lambda_.33} parent=11 // pred_check
        %p162 = pneg %p58
      $region14: #{_lambda_.33} parent=11 // pred_check_branch
        %164 = sbr.rel (%p162) target = $region16
      $region15: #{_lambda_.33} parent=11 // pred_region
        _
      $region16: #{_lambda_.33} parent=11 // pred_fallthru
        _
      // Predicated region
      $region17: #{_lambda_.33} parent=11 // pred_check
        %p165 = pneg %p79
      $region18: #{_lambda_.33} parent=11 // pred_check_branch
        %167 = sbr.rel (%p165) target = $region20
      $region19: #{_lambda_.33} parent=11 // pred_region
        _
      $region20: #{_lambda_.33} parent=11 // pred_fallthru
        _
      // Predicated region
      $region21: #{_lambda_.33} parent=11 // pred_check
        %p168 = pneg %p100
      $region22: #{_lambda_.33} parent=11 // pred_check_branch
        %170 = sbr.rel (%p168) target = $region24
      $region23: #{_lambda_.33} parent=11 // pred_region
        _
      $region24: #{_lambda_.33} parent=11 // pred_fallthru
        _
      // Predicated region
      $region25: #{_lambda_.33} parent=11 // pred_check
        %p171 = pneg %p121
      $region26: #{_lambda_.33} parent=11 // pred_check_branch
        %173 = sbr.rel (%p171) target = $region28
      $region27: #{_lambda_.33} parent=11 // pred_region
        _
      $region28: #{_lambda_.33} parent=11 // pred_fallthru
        _
    $region12: #{_lambda_.33} parent=5 // pred_fallthru
      _
    %p174 = scmp.lt.s32.totalorder %s11, 2
    // Predicated region
    $region29: #{_lambda_.33} parent=5 // pred_check
      %p175 = pneg %p174
    $region30: #{_lambda_.33} parent=5 // pred_check_branch
      %177 = sbr.rel (%p175) target = $region32
    $region31: #{_lambda_.33} parent=5 // pred_region
      // Predicated region
      $region33: #{_lambda_.33} parent=31 // pred_check
        %p178 = pneg %p31
      $region34: #{_lambda_.33} parent=31 // pred_check_branch
        %180 = sbr.rel (%p178) target = $region36
      $region35: #{_lambda_.33} parent=31 // pred_region
        %p181 = scmp.lt.s32.totalorder %s11, 1
        %s182 = scalar_select %p181, %s11, 1
        %s183 = smul.addr %s182, 24
        %s184 = smul.addr %s183, 4
        %s185 = scalar_lea.vmem %s0, %s184
      $region36: #{_lambda_.33} parent=31 // pred_fallthru
        _
    $region32: #{_lambda_.33} parent=5 // pred_fallthru
      _
    %p186 = scmp.le.s32.totalorder 1, %s11
    %p187 = scmp.lt.s32.totalorder %s11, 3
    %p188 = pnand %p186, %p187
    %p189 = pneg %p188
    // Predicated region
    $region37: #{_lambda_.33} parent=5 // pred_check
      _
    $region38: #{_lambda_.33} parent=5 // pred_check_branch
      %191 = sbr.rel (%p188) target = $region40
    $region39: #{_lambda_.33} parent=5 // pred_region
      %s192 = ssub.s32 %s11, 1
      %p193 = scmp.lt.s32.totalorder %s16, 1
      %s194 = scalar_select %p193, %s16, 1
      %s195 = smul.addr %s194, 24
      %s196 = smul.addr %s195, 4
      %s197 = scalar_lea.vmem %s0, %s196
      %p198 = pneg %p37
      %p199 = pneg %p34
      %p200 = pneg %p58
      %p201 = pneg %p55
      %p202 = pneg %p79
      %p203 = pneg %p76
      %p204 = pneg %p100
      %p205 = pneg %p97
      %p206 = pneg %p121
      %p207 = pneg %p118
      %p208 = pneg %p147
      %p209 = pneg %p144
      %p210 = scmp.lt.s32.totalorder %s16, 1
      %s211 = scalar_select %p210, %s16, 1
      %s212 = smul.addr %s211, 4
      %s213 = smul.addr %s212, 8
      %s214 = scalar_lea.vmem %s5, %s213
      %p215 = scmp.lt.s32.totalorder %s16, 1
      %s216 = scalar_select %p215, %s16, 1
      %s217 = smul.addr %s216, 24
      %s218 = smul.addr %s217, 4
      %s219 = scalar_lea.vmem %s0, %s218
      %p220 = scmp.lt.s32.totalorder %s16, 1
      %s221 = scalar_select %p220, %s16, 1
      %s222 = smul.addr %s221, 4
      %s223 = smul.addr %s222, 8
      %s224 = scalar_lea.vmem %s5, %s223
      %v226 = vld [vmem:[%s1] sm:$0xf]
      %v227 = vld [vmem:[%s1 + $0x4] sm:$0xf]
      %v228 = vld [vmem:[%s219] sm:$0xff]
      %v229 = vld [vmem:[%s219 + $0x8] sm:$0xff]
      %v230 = vld [vmem:[%s219 + $0x10] sm:$0xff]
      %v231 = vld [vmem:[%s219 + $0x18] sm:$0xff]
      %v232 = vld [vmem:[%s219 + $0x20] sm:$0xff]
      %v233 = vld [vmem:[%s219 + $0x28] sm:$0xff]
      %v234 = vld [vmem:[%s219 + $0x30] sm:$0xff]
      %v235 = vld [vmem:[%s219 + $0x38] sm:$0xff]
      %v236 = vld [vmem:[%s219 + $0x40] sm:$0xff]
      %v237 = vld [vmem:[%s219 + $0x48] sm:$0xff]
      %v238 = vld [vmem:[%s219 + $0x50] sm:$0xff]
      %v239 = vld [vmem:[%s219 + $0x58] sm:$0xff]
      %v240 = vld [vmem:[%s2] sm:$0xff]
      %v241 = vld [vmem:[%s2 + $0x8] sm:$0xff]
      %243 = vset.pattern.permute.xlu0 0
      %244 = vperm.xlu0 %243, %v240
      %v245 = vpop.permute.xlu0 %244
      %248 = vset.pattern.permute.xlu0 0
      %249 = vperm.xlu0 %248, %v241
      %v250 = vpop.permute.xlu0 %249
      %v254 = vunpack.c.l.b16 %v226
      %v255 = vunpack.c.l.b16 %v227
      %v256 = vpack.c.b16 %v255, %v254
      %v269 = vunpack.c.l.b16 %v228
      %v270 = vunpack.c.h.b16 %v228
      %v271 = vunpack.c.l.b16 %v229
      %v272 = vunpack.c.h.b16 %v229
      %v273 = vunpack.c.l.b16 %v230
      %v274 = vunpack.c.h.b16 %v230
      %v275 = vunpack.c.l.b16 %v231
      %v276 = vunpack.c.h.b16 %v231
      %v277 = vunpack.c.l.b16 %v232
      %v278 = vunpack.c.h.b16 %v232
      %v279 = vunpack.c.l.b16 %v233
      %v280 = vunpack.c.h.b16 %v233
      %v281 = vunpack.c.l.b16 %v234
      %v282 = vunpack.c.h.b16 %v234
      %v283 = vunpack.c.l.b16 %v235
      %v284 = vunpack.c.h.b16 %v235
      %v285 = vunpack.c.l.b16 %v236
      %v286 = vunpack.c.h.b16 %v236
      %v287 = vunpack.c.l.b16 %v237
      %v288 = vunpack.c.h.b16 %v237
      %v289 = vunpack.c.l.b16 %v238
      %v290 = vunpack.c.h.b16 %v238
      %v291 = vunpack.c.l.b16 %v239
      %v292 = vunpack.c.h.b16 %v239
      %v293 = vpack.c.b16 %v271, %v269
      %v294 = vpack.c.b16 %v272, %v270
      %v295 = vpack.c.b16 %v275, %v273
      %v296 = vpack.c.b16 %v276, %v274
      %v297 = vpack.c.b16 %v279, %v277
      %v298 = vpack.c.b16 %v280, %v278
      %v299 = vpack.c.b16 %v283, %v281
      %v300 = vpack.c.b16 %v284, %v282
      %v301 = vpack.c.b16 %v287, %v285
      %v302 = vpack.c.b16 %v288, %v286
      %v303 = vpack.c.b16 %v291, %v289
      %v304 = vpack.c.b16 %v292, %v290
      %vm317 = vcmask 785408
      %v319 = vsel %vm317, %v256, 0
      %321 = vmatpush.bf16.msra.mxu0 0
      %322 = vmatpush.bf16.msra.mxu0 0
      %323 = vmatpush.bf16.msra.mxu0 %v303
      %324 = vmatpush.bf16.msra.mxu0 %v301
      %325 = vmatpush.bf16.msra.mxu0 %v299
      %326 = vmatpush.bf16.msra.mxu0 %v297
      %327 = vmatpush.bf16.msra.mxu0 %v295
      %328 = vmatpush.bf16.msra.mxu0 %v293
      %329 = vmatmul.bf16.gmra.mxu0 %v319
      %v330 = vpop.f32.mrf.mxu0
      %v331 = vadd.f32 %v245, %v330
      %v332 = vpop.f32.mrf.mxu0
      %v333 = vadd.f32 %v250, %v332
      %334 = vdwg.mxu0
      %335 = vmatpush.bf16.msra.mxu0 0
      %336 = vmatpush.bf16.msra.mxu0 0
      %337 = vmatpush.bf16.msra.mxu0 %v304
      %338 = vmatpush.bf16.msra.mxu0 %v302
      %339 = vmatpush.bf16.msra.mxu0 %v300
      %340 = vmatpush.bf16.msra.mxu0 %v298
      %341 = vmatpush.bf16.msra.mxu0 %v296
      %342 = vmatpush.bf16.msra.mxu0 %v294
      %343 = vmatmul.bf16.gmra.mxu0 %v319
      %v344 = vpop.f32.mrf.mxu0
      %v345 = vadd.f32 %v245, %v344
      %v346 = vpop.f32.mrf.mxu0
      %v347 = vadd.f32 %v250, %v346
      %348 = vdwg.mxu0
      %v349 = vadd.f32 %v331, %v333
      %v350 = vrot.slane %v349, 4
      %v351 = vadd.f32 %v349, %v350
      %v352 = vrot.slane %v351, 2
      %v353 = vadd.f32 %v351, %v352
      %v354 = vrot.slane %v353, 1
      %v355 = vadd.f32 %v353, %v354
      %vm356 = vcmask 982016
      %v357 = vsel %vm356, %v345, 0.0
      %v358 = vsel %vm356, %v347, 0.0
      %v359 = vadd.f32 %v357, %v358
      %v360 = vrot.slane %v359, 4
      %v361 = vadd.f32 %v359, %v360
      %v362 = vrot.slane %v361, 2
      %v363 = vadd.f32 %v361, %v362
      %v364 = vrot.slane %v363, 1
      %v365 = vadd.f32 %v363, %v364
      %v366 = vmul.f32 %v331, %v331
      %v367 = vmul.f32 %v345, %v345
      %v368 = vmul.f32 %v333, %v333
      %v369 = vmul.f32 %v347, %v347
      %v370 = vadd.f32 %v366, %v368
      %v371 = vrot.slane %v370, 4
      %v372 = vadd.f32 %v370, %v371
      %v373 = vrot.slane %v372, 2
      %v374 = vadd.f32 %v372, %v373
      %v375 = vrot.slane %v374, 1
      %v376 = vadd.f32 %v374, %v375
      %v377 = vsel %vm356, %v367, 0.0
      %v378 = vsel %vm356, %v369, 0.0
      %v379 = vadd.f32 %v377, %v378
      %v380 = vrot.slane %v379, 4
      %v381 = vadd.f32 %v379, %v380
      %v382 = vrot.slane %v381, 2
      %v383 = vadd.f32 %v381, %v382
      %v384 = vrot.slane %v383, 1
      %v385 = vadd.f32 %v383, %v384
      %vm386 = vcmask 1040384
      %v387 = vsel %vm386, %v355, %v376
      %v388 = vsel %vm386, %v365, %v385
      %v389 = vld [vmem:[%s3] sm:$0xff]
      %v390 = vld [vmem:[%s3 + $0x8] sm:$0xff]
      %v391 = vld [vmem:[%s3 + $0x10] sm:$0xff]
      %v392 = vld [vmem:[%s3 + $0x18] sm:$0xff]
      %v393 = vld [vmem:[%s3 + $0x20] sm:$0xff]
      %v394 = vld [vmem:[%s3 + $0x28] sm:$0xff]
      %v395 = vld [vmem:[%s3 + $0x30] sm:$0xff]
      %v396 = vld [vmem:[%s3 + $0x38] sm:$0xff]
      %v397 = vld [vmem:[%s3 + $0x40] sm:$0xff]
      %v398 = vld [vmem:[%s3 + $0x48] sm:$0xff]
      %v399 = vld [vmem:[%s3 + $0x50] sm:$0xff]
      %v400 = vld [vmem:[%s3 + $0x58] sm:$0xff]
      %v401 = vld [vmem:[%s3 + $0x60] sm:$0xff]
      %v402 = vld [vmem:[%s3 + $0x68] sm:$0xff]
      %v403 = vld [vmem:[%s3 + $0x70] sm:$0xff]
      %v404 = vld [vmem:[%s3 + $0x78] sm:$0xff]
      %v405 = vld [vmem:[%s3 + $0x80] sm:$0xff]
      %v406 = vld [vmem:[%s3 + $0x88] sm:$0xff]
      %v407 = vld [vmem:[%s3 + $0x90] sm:$0xff]
      %v408 = vld [vmem:[%s3 + $0x98] sm:$0xff]
      %v409 = vld [vmem:[%s3 + $0xa0] sm:$0xff]
      %v410 = vld [vmem:[%s3 + $0xa8] sm:$0xff]
      %v411 = vld [vmem:[%s3 + $0xb0] sm:$0xff]
      %v412 = vld [vmem:[%s3 + $0xb8] sm:$0xff]
      %v413 = vld [vmem:[%s3 + $0xc0] sm:$0xff]
      %v414 = vld [vmem:[%s3 + $0xc8] sm:$0xff]
      %v415 = vld [vmem:[%s3 + $0xd0] sm:$0xff]
      %v416 = vld [vmem:[%s3 + $0xd8] sm:$0xff]
      %v417 = vld [vmem:[%s3 + $0xe0] sm:$0xff]
      %v418 = vld [vmem:[%s3 + $0xe8] sm:$0xff]
      %v419 = vld [vmem:[%s3 + $0xf0] sm:$0xff]
      %v421 = vsel %vm356, %v388, 0
      %423 = vmatpush.msra.mxu0 %v404
      %424 = vmatpush.msra.mxu0 %v403
      %425 = vmatpush.msra.mxu0 %v402
      %426 = vmatpush.msra.mxu0 %v401
      %427 = vmatpush.msra.mxu0 %v400
      %428 = vmatpush.msra.mxu0 %v399
      %429 = vmatpush.msra.mxu0 %v398
      %430 = vmatpush.msra.mxu0 %v397
      %431 = vmatpush.msra.mxu0 %v396
      %432 = vmatpush.msra.mxu0 %v395
      %433 = vmatpush.msra.mxu0 %v394
      %434 = vmatpush.msra.mxu0 %v393
      %435 = vmatpush.msra.mxu0 %v392
      %436 = vmatpush.msra.mxu0 %v391
      %437 = vmatpush.msra.mxu0 %v390
      %438 = vmatpush.msra.mxu0 %v389
      %439 = vmatmul.f32.gmra.mxu0 %v387
      %v440 = vpop.f32.mrf.mxu0
      %v441 = vadd.f32 0.0, %v440
      %442 = vdwg.mxu0
      %443 = vmatpush.msra.mxu0 0.0
      %444 = vmatpush.msra.mxu0 %v419
      %445 = vmatpush.msra.mxu0 %v418
      %446 = vmatpush.msra.mxu0 %v417
      %447 = vmatpush.msra.mxu0 %v416
      %448 = vmatpush.msra.mxu0 %v415
      %449 = vmatpush.msra.mxu0 %v414
      %450 = vmatpush.msra.mxu0 %v413
      %451 = vmatpush.msra.mxu0 %v412
      %452 = vmatpush.msra.mxu0 %v411
      %453 = vmatpush.msra.mxu0 %v410
      %454 = vmatpush.msra.mxu0 %v409
      %455 = vmatpush.msra.mxu0 %v408
      %456 = vmatpush.msra.mxu0 %v407
      %457 = vmatpush.msra.mxu0 %v406
      %458 = vmatpush.msra.mxu0 %v405
      %459 = vmatmul.f32.gmra.mxu0 %v421
      %v460 = vpop.f32.mrf.mxu0
      %v461 = vadd.f32 %v441, %v460
      %462 = vdwg.mxu0
      %v463 = vmul.f32 %v461, %v461
      %v465 = vrot.slane %v463, 7
      %v467 = vsub.f32 %v461, %v465
      %v468 = vadd.f32 %v467, 1e-05
      %v469 = vrsqrt.pop %v468
      %v470 = vmul.f32 %v469, %v468
      %v471 = vmul.f32 %v470, %v469
      %v472 = vmul.f32 0.5, %v471
      %v473 = vsub.f32 1.5, %v472
      %v474 = vmul.f32 %v469, %v473
      %vm475 = vweird.f32 %v468
      %vm476 = vweird.f32 %v469
      %vm477 = vmor %vm475, %vm476
      %v478 = vsel %vm477, %v469, %v474
      %v479 = vsel %vm386, %v461, %v478
      %v480 = vld [vmem:[%s4] sm:$0xff]
      %v481 = vld [vmem:[%s4 + $0x8] sm:$0xff]
      %vm482 = vcmask 64512
      %v484 = vsel %vm482, %v479, 0
      %486 = vmatpush.msra.mxu0 0.0
      %487 = vmatpush.msra.mxu0 0.0
      %488 = vmatpush.msra.mxu0 0.0
      %489 = vmatpush.msra.mxu0 0.0
      %490 = vmatpush.msra.mxu0 0.0
      %491 = vmatpush.msra.mxu0 0.0
      %492 = vmatpush.msra.mxu0 0.0
      %493 = vmatpush.msra.mxu0 0.0
      %494 = vmatpush.msra.mxu0 0.0
      %495 = vmatpush.msra.mxu0 0.0
      %496 = vmatpush.msra.mxu0 0.0
      %497 = vmatpush.msra.mxu0 0.0
      %498 = vmatpush.msra.mxu0 0.0
      %499 = vmatpush.msra.mxu0 0.0
      %500 = vmatpush.msra.mxu0 0.0
      %501 = vmatpush.msra.mxu0 %v480
      %502 = vmatmul.f32.gmra.mxu0 %v484
      %v503 = vpop.f32.mrf.mxu0
      %v504 = vadd.f32 0.0, %v503
      %505 = vdwg.mxu0
      %506 = vmatpush.msra.mxu0 0.0
      %507 = vmatpush.msra.mxu0 0.0
      %508 = vmatpush.msra.mxu0 0.0
      %509 = vmatpush.msra.mxu0 0.0
      %510 = vmatpush.msra.mxu0 0.0
      %511 = vmatpush.msra.mxu0 0.0
      %512 = vmatpush.msra.mxu0 0.0
      %513 = vmatpush.msra.mxu0 0.0
      %514 = vmatpush.msra.mxu0 0.0
      %515 = vmatpush.msra.mxu0 0.0
      %516 = vmatpush.msra.mxu0 0.0
      %517 = vmatpush.msra.mxu0 0.0
      %518 = vmatpush.msra.mxu0 0.0
      %519 = vmatpush.msra.mxu0 0.0
      %520 = vmatpush.msra.mxu0 0.0
      %521 = vmatpush.msra.mxu0 %v481
      %522 = vmatmul.f32.gmra.mxu0 %v484
      %v523 = vpop.f32.mrf.mxu0
      %v524 = vadd.f32 0.0, %v523
      %525 = vdwg.mxu0
      %v526 = vperm.slane %v504, 0
      %v527 = vperm.slane %v524, 0
      %v528 = vsub.f32 %v331, %v526
      %v529 = vsub.f32 %v345, %v527
      %v530 = vsub.f32 %v333, %v526
      %v531 = vsub.f32 %v347, %v527
      %v532 = vperm.slane %v504, 1
      %v533 = vperm.slane %v524, 1
      %v534 = vmul.f32 %v528, %v532
      %v535 = vmul.f32 %v529, %v533
      %v536 = vmul.f32 %v530, %v532
      %v537 = vmul.f32 %v531, %v533
      %538 = vset.pattern.permute.xlu0 1
      %539 = vperm.xlu0 %538, %v240
      %v540 = vpop.permute.xlu0 %539
      %542 = vset.pattern.permute.xlu0 1
      %543 = vperm.xlu0 %542, %v241
      %v544 = vpop.permute.xlu0 %543
      %v546 = vmul.f32 %v534, %v540
      %v547 = vmul.f32 %v535, %v540
      %v548 = vmul.f32 %v536, %v544
      %v549 = vmul.f32 %v537, %v544
      %550 = vset.pattern.permute.xlu0 2
      %551 = vperm.xlu0 %550, %v240
      %v552 = vpop.permute.xlu0 %551
      %554 = vset.pattern.permute.xlu0 2
      %555 = vperm.xlu0 %554, %v241
      %v556 = vpop.permute.xlu0 %555
      %v558 = vadd.f32 %v546, %v552
      %v559 = vadd.f32 %v547, %v552
      %v560 = vadd.f32 %v548, %v556
      %v561 = vadd.f32 %v549, %v556
      %vm562 = vcmp.gt.f32.partialorder %v558, 0.0
      %vm563 = vcmp.gt.f32.partialorder %v559, 0.0
      %vm564 = vcmp.gt.f32.partialorder %v560, 0.0
      %vm565 = vcmp.gt.f32.partialorder %v561, 0.0
      %566 = vset.pattern.permute.xlu0 3
      %567 = vperm.xlu0 %566, %v240
      %v568 = vpop.permute.xlu0 %567
      %570 = vset.pattern.permute.xlu0 3
      %571 = vperm.xlu0 %570, %v241
      %v572 = vpop.permute.xlu0 %571
      %v574 = vmul.f32 %v568, %v558
      %v575 = vmul.f32 %v568, %v559
      %v576 = vmul.f32 %v572, %v560
      %v577 = vmul.f32 %v572, %v561
      %v578 = vsel %vm562, %v558, %v574
      %v579 = vsel %vm563, %v559, %v575
      %v580 = vsel %vm564, %v560, %v576
      %v581 = vsel %vm565, %v561, %v577
      %582 = vst [vmem:[%s224] sm:$0xff] %v578
      %583 = vst.msk [vmem:[%s224 + $0x8] sm:$0xff] %vm356, %v579
      %584 = vst [vmem:[%s224 + $0x10] sm:$0xff] %v580
      %585 = vst.msk [vmem:[%s224 + $0x18] sm:$0xff] %vm356, %v581
      %p586 = scmp.lt.s32.totalorder %s16, 1
      %s587 = scalar_select %p586, %s16, 1
      %s588 = smul.addr %s587, 4
      %s589 = smul.addr %s588, 8
      %s590 = scalar_lea.vmem %s5, %s589
      // Predicated region
      $region41: #{_lambda_.33} parent=39 // pred_check
        %p591 = pneg %p144
      $region42: #{_lambda_.33} parent=39 // pred_check_branch
        %593 = sbr.rel (%p591) target = $region44
      $region43: #{_lambda_.33} parent=39 // pred_region
        _
      $region44: #{_lambda_.33} parent=39 // pred_fallthru
        _
    $region40: #{_lambda_.33} parent=5 // pred_fallthru
      _
    %p594 = scmp.le.s32.totalorder 2, %s11
    // Predicated region
    $region45: #{_lambda_.33} parent=5 // pred_check
      %p595 = pneg %p594
    $region46: #{_lambda_.33} parent=5 // pred_check_branch
      %597 = sbr.rel (%p595) target = $region48
    $region47: #{_lambda_.33} parent=5 // pred_region
      %s598 = ssub.s32 %s11, 2
      // Predicated region
      $region49: #{_lambda_.33} parent=47 // pred_check
        %p599 = pneg %p150
      $region50: #{_lambda_.33} parent=47 // pred_check_branch
        %601 = sbr.rel (%p599) target = $region52
      $region51: #{_lambda_.33} parent=47 // pred_region
        %p602 = scmp.lt.s32.totalorder %s17, 1
        %s603 = scalar_select %p602, %s17, 1
        %s604 = smul.addr %s603, 4
        %s605 = smul.addr %s604, 8
        %s606 = scalar_lea.vmem %s5, %s605
      $region52: #{_lambda_.33} parent=47 // pred_fallthru
        _
    $region48: #{_lambda_.33} parent=5 // pred_fallthru
      _
  $region6: #{_lambda_.33} parent=0 // loop_footer
    %s15 = sadd.s32 1, %s11
  $region7: #{_lambda_.33} parent=0 // loop_footer_branch
    %10 = sbr.rel target = $region3
  $region8: #{_lambda_.33} parent=0 // loop_exit
    _

// kernel: _lambda_.34
$region0: #{_lambda_.34}
  #allocation0 [shape = 'u32[]', space=smem, size = 0x4, offset = 0x4, fixed_abs, tag = 'smem constant byte address 0x4 - core index']
  #allocation1 [shape = 'u32[72,128]{1,0:T(1,128)}', space=vmem, size = 0x9000, scoped, tag = 'internal scratch']
  %s0 = inlined_call_operand.vmem [shape: bf16[2,96,120], index: 0, kind: input, shape index: {}]
  %s1 = inlined_call_operand.vmem [shape: bf16[32,96], index: 1, kind: input, shape index: {}]
  %s2 = inlined_call_operand.vmem [shape: f32[32,4], index: 2, kind: input, shape index: {}]
  %s3 = inlined_call_operand.vmem [shape: f32[120,8], index: 3, kind: input, shape index: {}]
  %s4 = inlined_call_operand.vmem [shape: f32[8,120], index: 4, kind: input, shape index: {}]
  %s5 = inlined_call_operand.vmem [shape: f32[2,16,120], index: 5, kind: output, shape index: {}]
  %s6 = sld [smem:[#allocation0]]
  $region53: #{_lambda_.34} parent=0
    _
  %s8 = ssub.s32 1, %s6
  %s9 = scalar_select 0, %s8, %s6
  loop: start=0, step=1, limit=4
  $region2: #{_lambda_.34} parent=0 // loop_pre_header
    _
  $region3: #{_lambda_.34} parent=0 // loop_header
    %s11 = sphi 0, %s15
    %p12 = scmp.ge.s32.totalorder %s11, 4
    %s21 = sphi 0, %s23
    %s24 = sphi 0, %s21
    %s25 = sphi 0, %s24
    %s41 = sphi 0, %s25
    %s45 = sphi 0, %s45
    %s47 = sphi 0, %s45
    %s48 = sphi 0, %s47
    %s62 = sphi 0, %s48
    %s66 = sphi 0, %s66
    %s68 = sphi 0, %s66
    %s69 = sphi 0, %s68
    %s83 = sphi 0, %s69
    %s87 = sphi 0, %s87
    %s89 = sphi 0, %s87
    %s90 = sphi 0, %s89
    %s104 = sphi 0, %s90
    %s108 = sphi 0, %s108
    %s110 = sphi 0, %s108
    %s111 = sphi 0, %s110
    %s125 = sphi 0, %s111
    %s131 = sphi 0, %s133
    %s134 = sphi 0, %s131
    %s135 = sphi 0, %s134
    %s151 = sphi 0, %s135
  $region4: #{_lambda_.34} parent=0 // loop_header_branch
    %14 = sbr.rel (%p12) target = $region8
  $region5: #{_lambda_.34} parent=0 // loop_body
    %s16 = ssub.s32 %s11, 1
    %s17 = ssub.s32 %s11, 2
    %s18 = sadd.s32 %s11, 1
    %s19 = ssub.s32 %s11, %s18
    %p20 = scmp.eq.s32.totalorder %s19, 0
    %s22 = sadd.s32 %s21, 1
    %s23 = scalar_select %p20, %s21, %s22
    %p26 = pneg %p20
    %p27 = scmp.eq.s32.totalorder %s11, 1
    %p28 = por %p26, %p27
    %p29 = scmp.ne.s32.totalorder %s21, %s24
    %p30 = scmp.eq.s32.totalorder %s11, 0
    %p31 = por %p29, %p30
    %p32 = scmp.ne.s32.totalorder %s21, %s24
    %p33 = scmp.eq.s32.totalorder %s16, 1
    %p34 = por %p32, %p33
    %p35 = scmp.ne.s32.totalorder %s24, %s25
    %p36 = scmp.eq.s32.totalorder %s16, 0
    %p37 = por %p35, %p36
    %p38 = scmp.ne.s32.totalorder %s24, %s25
    %p39 = scmp.eq.s32.totalorder %s17, 1
    %p40 = por %p38, %p39
    %p42 = scmp.ne.s32.totalorder %s25, %s41
    %p43 = scmp.eq.s32.totalorder %s17, 0
    %p44 = por %p42, %p43
    %s46 = sadd.s32 %s45, 1
    %p49 = scmp.eq.s32.totalorder %s11, 1
    %p50 = scmp.ne.s32.totalorder %s45, %s47
    %p51 = scmp.eq.s32.totalorder %s11, 0
    %p52 = por %p50, %p51
    %p53 = scmp.ne.s32.totalorder %s45, %s47
    %p54 = scmp.eq.s32.totalorder %s16, 1
    %p55 = por %p53, %p54
    %p56 = scmp.ne.s32.totalorder %s47, %s48
    %p57 = scmp.eq.s32.totalorder %s16, 0
    %p58 = por %p56, %p57
    %p59 = scmp.ne.s32.totalorder %s47, %s48
    %p60 = scmp.eq.s32.totalorder %s17, 1
    %p61 = por %p59, %p60
    %p63 = scmp.ne.s32.totalorder %s48, %s62
    %p64 = scmp.eq.s32.totalorder %s17, 0
    %p65 = por %p63, %p64
    %s67 = sadd.s32 %s66, 1
    %p70 = scmp.eq.s32.totalorder %s11, 1
    %p71 = scmp.ne.s32.totalorder %s66, %s68
    %p72 = scmp.eq.s32.totalorder %s11, 0
    %p73 = por %p71, %p72
    %p74 = scmp.ne.s32.totalorder %s66, %s68
    %p75 = scmp.eq.s32.totalorder %s16, 1
    %p76 = por %p74, %p75
    %p77 = scmp.ne.s32.totalorder %s68, %s69
    %p78 = scmp.eq.s32.totalorder %s16, 0
    %p79 = por %p77, %p78
    %p80 = scmp.ne.s32.totalorder %s68, %s69
    %p81 = scmp.eq.s32.totalorder %s17, 1
    %p82 = por %p80, %p81
    %p84 = scmp.ne.s32.totalorder %s69, %s83
    %p85 = scmp.eq.s32.totalorder %s17, 0
    %p86 = por %p84, %p85
    %s88 = sadd.s32 %s87, 1
    %p91 = scmp.eq.s32.totalorder %s11, 1
    %p92 = scmp.ne.s32.totalorder %s87, %s89
    %p93 = scmp.eq.s32.totalorder %s11, 0
    %p94 = por %p92, %p93
    %p95 = scmp.ne.s32.totalorder %s87, %s89
    %p96 = scmp.eq.s32.totalorder %s16, 1
    %p97 = por %p95, %p96
    %p98 = scmp.ne.s32.totalorder %s89, %s90
    %p99 = scmp.eq.s32.totalorder %s16, 0
    %p100 = por %p98, %p99
    %p101 = scmp.ne.s32.totalorder %s89, %s90
    %p102 = scmp.eq.s32.totalorder %s17, 1
    %p103 = por %p101, %p102
    %p105 = scmp.ne.s32.totalorder %s90, %s104
    %p106 = scmp.eq.s32.totalorder %s17, 0
    %p107 = por %p105, %p106
    %s109 = sadd.s32 %s108, 1
    %p112 = scmp.eq.s32.totalorder %s11, 1
    %p113 = scmp.ne.s32.totalorder %s108, %s110
    %p114 = scmp.eq.s32.totalorder %s11, 0
    %p115 = por %p113, %p114
    %p116 = scmp.ne.s32.totalorder %s108, %s110
    %p117 = scmp.eq.s32.totalorder %s16, 1
    %p118 = por %p116, %p117
    %p119 = scmp.ne.s32.totalorder %s110, %s111
    %p120 = scmp.eq.s32.totalorder %s16, 0
    %p121 = por %p119, %p120
    %p122 = scmp.ne.s32.totalorder %s110, %s111
    %p123 = scmp.eq.s32.totalorder %s17, 1
    %p124 = por %p122, %p123
    %p126 = scmp.ne.s32.totalorder %s111, %s125
    %p127 = scmp.eq.s32.totalorder %s17, 0
    %p128 = por %p126, %p127
    %s129 = ssub.s32 %s11, %s18
    %p130 = scmp.eq.s32.totalorder %s129, 0
    %s132 = sadd.s32 %s131, 1
    %s133 = scalar_select %p130, %s131, %s132
    %p136 = pneg %p130
    %p137 = scmp.eq.s32.totalorder %s11, 1
    %p138 = por %p136, %p137
    %p139 = scmp.ne.s32.totalorder %s131, %s134
    %p140 = scmp.eq.s32.totalorder %s11, 0
    %p141 = por %p139, %p140
    %p142 = scmp.ne.s32.totalorder %s131, %s134
    %p143 = scmp.eq.s32.totalorder %s16, 1
    %p144 = por %p142, %p143
    %p145 = scmp.ne.s32.totalorder %s134, %s135
    %p146 = scmp.eq.s32.totalorder %s16, 0
    %p147 = por %p145, %p146
    %p148 = scmp.ne.s32.totalorder %s134, %s135
    %p149 = scmp.eq.s32.totalorder %s17, 1
    %p150 = por %p148, %p149
    %p152 = scmp.ne.s32.totalorder %s135, %s151
    %p153 = scmp.eq.s32.totalorder %s17, 0
    %p154 = por %p152, %p153
    %p155 = scmp.le.s32.totalorder 1, %s11
    %p156 = scmp.lt.s32.totalorder %s11, 3
    %p157 = pnand %p155, %p156
    %p158 = pneg %p157
    // Predicated region
    $region9: #{_lambda_.34} parent=5 // pred_check
      _
    $region10: #{_lambda_.34} parent=5 // pred_check_branch
      %160 = sbr.rel (%p157) target = $region12
    $region11: #{_lambda_.34} parent=5 // pred_region
      %s161 = ssub.s32 %s11, 1
      // Predicated region
      $region13: #{_lambda_.34} parent=11 // pred_check
        %p162 = pneg %p58
      $region14: #{_lambda_.34} parent=11 // pred_check_branch
        %164 = sbr.rel (%p162) target = $region16
      $region15: #{_lambda_.34} parent=11 // pred_region
        _
      $region16: #{_lambda_.34} parent=11 // pred_fallthru
        _
      // Predicated region
      $region17: #{_lambda_.34} parent=11 // pred_check
        %p165 = pneg %p79
      $region18: #{_lambda_.34} parent=11 // pred_check_branch
        %167 = sbr.rel (%p165) target = $region20
      $region19: #{_lambda_.34} parent=11 // pred_region
        _
      $region20: #{_lambda_.34} parent=11 // pred_fallthru
        _
      // Predicated region
      $region21: #{_lambda_.34} parent=11 // pred_check
        %p168 = pneg %p100
      $region22: #{_lambda_.34} parent=11 // pred_check_branch
        %170 = sbr.rel (%p168) target = $region24
      $region23: #{_lambda_.34} parent=11 // pred_region
        _
      $region24: #{_lambda_.34} parent=11 // pred_fallthru
        _
      // Predicated region
      $region25: #{_lambda_.34} parent=11 // pred_check
        %p171 = pneg %p121
      $region26: #{_lambda_.34} parent=11 // pred_check_branch
        %173 = sbr.rel (%p171) target = $region28
      $region27: #{_lambda_.34} parent=11 // pred_region
        _
      $region28: #{_lambda_.34} parent=11 // pred_fallthru
        _
    $region12: #{_lambda_.34} parent=5 // pred_fallthru
      _
    %p174 = scmp.lt.s32.totalorder %s11, 2
    // Predicated region
    $region29: #{_lambda_.34} parent=5 // pred_check
      %p175 = pneg %p174
    $region30: #{_lambda_.34} parent=5 // pred_check_branch
      %177 = sbr.rel (%p175) target = $region32
    $region31: #{_lambda_.34} parent=5 // pred_region
      // Predicated region
      $region33: #{_lambda_.34} parent=31 // pred_check
        %p178 = pneg %p31
      $region34: #{_lambda_.34} parent=31 // pred_check_branch
        %180 = sbr.rel (%p178) target = $region36
      $region35: #{_lambda_.34} parent=31 // pred_region
        %p181 = scmp.lt.s32.totalorder %s11, 1
        %s182 = scalar_select %p181, %s11, 1
        %s183 = smul.addr %s182, 12
        %s184 = smul.addr %s183, 4
        %s185 = scalar_lea.vmem %s0, %s184
      $region36: #{_lambda_.34} parent=31 // pred_fallthru
        _
    $region32: #{_lambda_.34} parent=5 // pred_fallthru
      _
    %p186 = scmp.le.s32.totalorder 1, %s11
    %p187 = scmp.lt.s32.totalorder %s11, 3
    %p188 = pnand %p186, %p187
    %p189 = pneg %p188
    // Predicated region
    $region37: #{_lambda_.34} parent=5 // pred_check
      _
    $region38: #{_lambda_.34} parent=5 // pred_check_branch
      %191 = sbr.rel (%p188) target = $region40
    $region39: #{_lambda_.34} parent=5 // pred_region
      %s192 = ssub.s32 %s11, 1
      %p193 = scmp.lt.s32.totalorder %s16, 1
      %s194 = scalar_select %p193, %s16, 1
      %s195 = smul.addr %s194, 12
      %s196 = smul.addr %s195, 4
      %s197 = scalar_lea.vmem %s0, %s196
      %p198 = pneg %p37
      %p199 = pneg %p34
      %p200 = pneg %p58
      %p201 = pneg %p55
      %p202 = pneg %p79
      %p203 = pneg %p76
      %p204 = pneg %p100
      %p205 = pneg %p97
      %p206 = pneg %p121
      %p207 = pneg %p118
      %p208 = pneg %p147
      %p209 = pneg %p144
      %p210 = scmp.lt.s32.totalorder %s16, 1
      %s211 = scalar_select %p210, %s16, 1
      %s212 = smul.addr %s211, 2
      %s213 = smul.addr %s212, 8
      %s214 = scalar_lea.vmem %s5, %s213
      %p215 = scmp.lt.s32.totalorder %s16, 1
      %s216 = scalar_select %p215, %s16, 1
      %s217 = smul.addr %s216, 12
      %s218 = smul.addr %s217, 4
      %s219 = scalar_lea.vmem %s0, %s218
      %p220 = scmp.lt.s32.totalorder %s16, 1
      %s221 = scalar_select %p220, %s16, 1
      %s222 = smul.addr %s221, 2
      %s223 = smul.addr %s222, 8
      %s224 = scalar_lea.vmem %s5, %s223
      %v226 = vld [vmem:[%s1] sm:$0xf]
      %v227 = vld [vmem:[%s1 + $0x4] sm:$0xf]
      %v228 = vld [vmem:[%s1 + $0x8] sm:$0xf]
      %v229 = vld [vmem:[%s1 + $0xc] sm:$0xf]
      %v230 = vld [vmem:[%s219] sm:$0xf]
      %v231 = vld [vmem:[%s219 + $0x4] sm:$0xf]
      %v232 = vld [vmem:[%s219 + $0x8] sm:$0xf]
      %v233 = vld [vmem:[%s219 + $0xc] sm:$0xf]
      %v234 = vld [vmem:[%s219 + $0x10] sm:$0xf]
      %v235 = vld [vmem:[%s219 + $0x14] sm:$0xf]
      %v236 = vld [vmem:[%s219 + $0x18] sm:$0xf]
      %v237 = vld [vmem:[%s219 + $0x1c] sm:$0xf]
      %v238 = vld [vmem:[%s219 + $0x20] sm:$0xf]
      %v239 = vld [vmem:[%s219 + $0x24] sm:$0xf]
      %v240 = vld [vmem:[%s219 + $0x28] sm:$0xf]
      %v241 = vld [vmem:[%s219 + $0x2c] sm:$0xf]
      %v242 = vld [vmem:[%s2] sm:$0xff]
      %v243 = vld [vmem:[%s2 + $0x8] sm:$0xff]
      %v244 = vld [vmem:[%s2 + $0x10] sm:$0xff]
      %v245 = vld [vmem:[%s2 + $0x18] sm:$0xff]
      %247 = vset.pattern.permute.xlu0 0
      %248 = vperm.xlu0 %247, %v242
      %v249 = vpop.permute.xlu0 %248
      %252 = vset.pattern.permute.xlu0 0
      %253 = vperm.xlu0 %252, %v243
      %v254 = vpop.permute.xlu0 %253
      %257 = vset.pattern.permute.xlu0 0
      %258 = vperm.xlu0 %257, %v244
      %v259 = vpop.permute.xlu0 %258
      %262 = vset.pattern.permute.xlu0 0
      %263 = vperm.xlu0 %262, %v245
      %v264 = vpop.permute.xlu0 %263
      %v270 = vunpack.c.l.b16 %v226
      %v271 = vunpack.c.l.b16 %v227
      %v272 = vunpack.c.l.b16 %v228
      %v273 = vunpack.c.l.b16 %v229
      %v274 = vpack.c.b16 %v271, %v270
      %v275 = vpack.c.b16 %v273, %v272
      %v288 = vunpack.c.l.b16 %v230
      %v289 = vunpack.c.l.b16 %v231
      %v290 = vunpack.c.l.b16 %v232
      %v291 = vunpack.c.l.b16 %v233
      %v292 = vunpack.c.l.b16 %v234
      %v293 = vunpack.c.l.b16 %v235
      %v294 = vunpack.c.l.b16 %v236
      %v295 = vunpack.c.l.b16 %v237
      %v296 = vunpack.c.l.b16 %v238
      %v297 = vunpack.c.l.b16 %v239
      %v298 = vunpack.c.l.b16 %v240
      %v299 = vunpack.c.l.b16 %v241
      %v300 = vpack.c.b16 %v289, %v288
      %v301 = vpack.c.b16 %v291, %v290
      %v302 = vpack.c.b16 %v293, %v292
      %v303 = vpack.c.b16 %v295, %v294
      %v304 = vpack.c.b16 %v297, %v296
      %v305 = vpack.c.b16 %v299, %v298
      %vm312 = vcmask 785408
      %v314 = vsel %vm312, %v274, 0
      %v317 = vsel %vm312, %v275, 0
      %319 = vmatpush.bf16.msra.mxu0 0
      %320 = vmatpush.bf16.msra.mxu0 0
      %321 = vmatpush.bf16.msra.mxu0 %v305
      %322 = vmatpush.bf16.msra.mxu0 %v304
      %323 = vmatpush.bf16.msra.mxu0 %v303
      %324 = vmatpush.bf16.msra.mxu0 %v302
      %325 = vmatpush.bf16.msra.mxu0 %v301
      %326 = vmatpush.bf16.msra.mxu0 %v300
      %327 = vmatmul.bf16.gmra.mxu0 %v314
      %v328 = vpop.f32.mrf.mxu0
      %v329 = vadd.f32 %v249, %v328
      %v330 = vpop.f32.mrf.mxu0
      %v331 = vadd.f32 %v254, %v330
      %332 = vmatmul.bf16.gmra.mxu0 %v317
      %v333 = vpop.f32.mrf.mxu0
      %v334 = vadd.f32 %v259, %v333
      %v335 = vpop.f32.mrf.mxu0
      %v336 = vadd.f32 %v264, %v335
      %337 = vdwg.mxu0
      %v338 = vxor.u32 %v334, 2147483648
      %v339 = vxor.u32 %v336, 2147483648
      %v340 = vmul.f32 %v338, 1.442695
      %v341 = vpow.pop %v340
      %v342 = vmul.f32 %v339, 1.442695
      %v343 = vpow.pop %v342
      %v344 = vadd.f32 %v341, 1.0
      %v345 = vadd.f32 %v343, 1.0
      %v346 = vrcp.pop %v344
      %v347 = vmul.f32 %v344, %v346
      %v348 = vsub.f32 1.0, %v347
      %v349 = vmul.f32 %v346, %v348
      %v350 = vadd.f32 %v346, %v349
      %vm351 = vweird.f32 %v344
      %vm352 = vweird.f32 %v346
      %vm353 = vmor %vm351, %vm352
      %v354 = vsel %vm353, %v346, %v350
      %v355 = vand.u32 2147483647, %v344
      %vm356 = vcmp.eq.f32.partialorder %v355, 8.507059e+37
      %v357 = vand.u32 %v344, 2147483648
      %v358 = vor.u32 1.1754944e-38, %v357
      %v359 = vsel %vm356, %v358, %v354
      %v360 = vmul.f32 1.0, %v359
      %v361 = vrcp.pop %v345
      %v362 = vmul.f32 %v345, %v361
      %v363 = vsub.f32 1.0, %v362
      %v364 = vmul.f32 %v361, %v363
      %v365 = vadd.f32 %v361, %v364
      %vm366 = vweird.f32 %v345
      %vm367 = vweird.f32 %v361
      %vm368 = vmor %vm366, %vm367
      %v369 = vsel %vm368, %v361, %v365
      %v370 = vand.u32 2147483647, %v345
      %vm371 = vcmp.eq.f32.partialorder %v370, 8.507059e+37
      %v372 = vand.u32 %v345, 2147483648
      %v373 = vor.u32 1.1754944e-38, %v372
      %v374 = vsel %vm371, %v373, %v369
      %v375 = vmul.f32 1.0, %v374
      %v376 = vmul.f32 %v329, %v360
      %v377 = vmul.f32 %v331, %v375
      %vm378 = vcmask 982016
      %v379 = vsel %vm378, %v376, 0.0
      %v380 = vsel %vm378, %v377, 0.0
      %v381 = vadd.f32 %v379, %v380
      %v382 = vrot.slane %v381, 4
      %v383 = vadd.f32 %v381, %v382
      %v384 = vrot.slane %v383, 2
      %v385 = vadd.f32 %v383, %v384
      %v386 = vrot.slane %v385, 1
      %v387 = vadd.f32 %v385, %v386
      %v388 = vmul.f32 %v376, %v376
      %v389 = vmul.f32 %v377, %v377
      %v390 = vsel %vm378, %v388, 0.0
      %v391 = vsel %vm378, %v389, 0.0
      %v392 = vadd.f32 %v390, %v391
      %v393 = vrot.slane %v392, 4
      %v394 = vadd.f32 %v392, %v393
      %v395 = vrot.slane %v394, 2
      %v396 = vadd.f32 %v394, %v395
      %v397 = vrot.slane %v396, 1
      %v398 = vadd.f32 %v396, %v397
      %vm399 = vcmask 1040384
      %v400 = vsel %vm399, %v387, %v398
      %v401 = vld [vmem:[%s3] sm:$0xff]
      %v402 = vld [vmem:[%s3 + $0x8] sm:$0xff]
      %v403 = vld [vmem:[%s3 + $0x10] sm:$0xff]
      %v404 = vld [vmem:[%s3 + $0x18] sm:$0xff]
      %v405 = vld [vmem:[%s3 + $0x20] sm:$0xff]
      %v406 = vld [vmem:[%s3 + $0x28] sm:$0xff]
      %v407 = vld [vmem:[%s3 + $0x30] sm:$0xff]
      %v408 = vld [vmem:[%s3 + $0x38] sm:$0xff]
      %v409 = vld [vmem:[%s3 + $0x40] sm:$0xff]
      %v410 = vld [vmem:[%s3 + $0x48] sm:$0xff]
      %v411 = vld [vmem:[%s3 + $0x50] sm:$0xff]
      %v412 = vld [vmem:[%s3 + $0x58] sm:$0xff]
      %v413 = vld [vmem:[%s3 + $0x60] sm:$0xff]
      %v414 = vld [vmem:[%s3 + $0x68] sm:$0xff]
      %v415 = vld [vmem:[%s3 + $0x70] sm:$0xff]
      %v417 = vsel %vm378, %v400, 0
      %419 = vmatpush.msra.mxu0 0.0
      %420 = vmatpush.msra.mxu0 %v415
      %421 = vmatpush.msra.mxu0 %v414
      %422 = vmatpush.msra.mxu0 %v413
      %423 = vmatpush.msra.mxu0 %v412
      %424 = vmatpush.msra.mxu0 %v411
      %425 = vmatpush.msra.mxu0 %v410
      %426 = vmatpush.msra.mxu0 %v409
      %427 = vmatpush.msra.mxu0 %v408
      %428 = vmatpush.msra.mxu0 %v407
      %429 = vmatpush.msra.mxu0 %v406
      %430 = vmatpush.msra.mxu0 %v405
      %431 = vmatpush.msra.mxu0 %v404
      %432 = vmatpush.msra.mxu0 %v403
      %433 = vmatpush.msra.mxu0 %v402
      %434 = vmatpush.msra.mxu0 %v401
      %435 = vmatmul.f32.gmra.mxu0 %v417
      %v436 = vpop.f32.mrf.mxu0
      %v437 = vadd.f32 0.0, %v436
      %438 = vdwg.mxu0
      %v439 = vmul.f32 %v437, %v437
      %v441 = vrot.slane %v439, 7
      %v443 = vsub.f32 %v437, %v441
      %v444 = vadd.f32 %v443, 1e-05
      %v445 = vrsqrt.pop %v444
      %v446 = vmul.f32 %v445, %v444
      %v447 = vmul.f32 %v446, %v445
      %v448 = vmul.f32 0.5, %v447
      %v449 = vsub.f32 1.5, %v448
      %v450 = vmul.f32 %v445, %v449
      %vm451 = vweird.f32 %v444
      %vm452 = vweird.f32 %v445
      %vm453 = vmor %vm451, %vm452
      %v454 = vsel %vm453, %v445, %v450
      %v455 = vsel %vm399, %v437, %v454
      %v456 = vld [vmem:[%s4] sm:$0xff]
      %vm457 = vcmask 64512
      %v459 = vsel %vm457, %v455, 0
      %461 = vmatpush.msra.mxu0 0.0
      %462 = vmatpush.msra.mxu0 0.0
      %463 = vmatpush.msra.mxu0 0.0
      %464 = vmatpush.msra.mxu0 0.0
      %465 = vmatpush.msra.mxu0 0.0
      %466 = vmatpush.msra.mxu0 0.0
      %467 = vmatpush.msra.mxu0 0.0
      %468 = vmatpush.msra.mxu0 0.0
      %469 = vmatpush.msra.mxu0 0.0
      %470 = vmatpush.msra.mxu0 0.0
      %471 = vmatpush.msra.mxu0 0.0
      %472 = vmatpush.msra.mxu0 0.0
      %473 = vmatpush.msra.mxu0 0.0
      %474 = vmatpush.msra.mxu0 0.0
      %475 = vmatpush.msra.mxu0 0.0
      %476 = vmatpush.msra.mxu0 %v456
      %477 = vmatmul.f32.gmra.mxu0 %v459
      %v478 = vpop.f32.mrf.mxu0
      %v479 = vadd.f32 0.0, %v478
      %480 = vdwg.mxu0
      %v481 = vld [vmem:[%s2] sm:$0xff]
      %v482 = vld [vmem:[%s2 + $0x8] sm:$0xff]
      %v483 = vperm.slane %v479, 0
      %v484 = vsub.f32 %v376, %v483
      %v485 = vsub.f32 %v377, %v483
      %v486 = vperm.slane %v479, 1
      %v487 = vmul.f32 %v484, %v486
      %v488 = vmul.f32 %v485, %v486
      %490 = vset.pattern.permute.xlu0 1
      %491 = vperm.xlu0 %490, %v481
      %v492 = vpop.permute.xlu0 %491
      %495 = vset.pattern.permute.xlu0 1
      %496 = vperm.xlu0 %495, %v482
      %v497 = vpop.permute.xlu0 %496
      %v499 = vmul.f32 %v487, %v492
      %v500 = vmul.f32 %v488, %v497
      %501 = vset.pattern.permute.xlu0 2
      %502 = vperm.xlu0 %501, %v481
      %v503 = vpop.permute.xlu0 %502
      %505 = vset.pattern.permute.xlu0 2
      %506 = vperm.xlu0 %505, %v482
      %v507 = vpop.permute.xlu0 %506
      %v509 = vadd.f32 %v499, %v503
      %v510 = vadd.f32 %v500, %v507
      %vm511 = vcmp.gt.f32.partialorder %v509, 0.0
      %vm512 = vcmp.gt.f32.partialorder %v510, 0.0
      %513 = vset.pattern.permute.xlu0 3
      %514 = vperm.xlu0 %513, %v481
      %v515 = vpop.permute.xlu0 %514
      %517 = vset.pattern.permute.xlu0 3
      %518 = vperm.xlu0 %517, %v482
      %v519 = vpop.permute.xlu0 %518
      %v521 = vmul.f32 %v515, %v509
      %v522 = vmul.f32 %v519, %v510
      %v523 = vsel %vm511, %v509, %v521
      %v524 = vsel %vm512, %v510, %v522
      %525 = vst.msk [vmem:[%s224] sm:$0xff] %vm378, %v523
      %526 = vst.msk [vmem:[%s224 + $0x8] sm:$0xff] %vm378, %v524
      %p527 = scmp.lt.s32.totalorder %s16, 1
      %s528 = scalar_select %p527, %s16, 1
      %s529 = smul.addr %s528, 2
      %s530 = smul.addr %s529, 8
      %s531 = scalar_lea.vmem %s5, %s530
      // Predicated region
      $region41: #{_lambda_.34} parent=39 // pred_check
        %p532 = pneg %p144
      $region42: #{_lambda_.34} parent=39 // pred_check_branch
        %534 = sbr.rel (%p532) target = $region44
      $region43: #{_lambda_.34} parent=39 // pred_region
        _
      $region44: #{_lambda_.34} parent=39 // pred_fallthru
        _
    $region40: #{_lambda_.34} parent=5 // pred_fallthru
      _
    %p535 = scmp.le.s32.totalorder 2, %s11
    // Predicated region
    $region45: #{_lambda_.34} parent=5 // pred_check
      %p536 = pneg %p535
    $region46: #{_lambda_.34} parent=5 // pred_check_branch
      %538 = sbr.rel (%p536) target = $region48
    $region47: #{_lambda_.34} parent=5 // pred_region
      %s539 = ssub.s32 %s11, 2
      // Predicated region
      $region49: #{_lambda_.34} parent=47 // pred_check
        %p540 = pneg %p150
      $region50: #{_lambda_.34} parent=47 // pred_check_branch
        %542 = sbr.rel (%p540) target = $region52
      $region51: #{_lambda_.34} parent=47 // pred_region
        %p543 = scmp.lt.s32.totalorder %s17, 1
        %s544 = scalar_select %p543, %s17, 1
        %s545 = smul.addr %s544, 2
        %s546 = smul.addr %s545, 8
        %s547 = scalar_lea.vmem %s5, %s546
      $region52: #{_lambda_.34} parent=47 // pred_fallthru
        _
    $region48: #{_lambda_.34} parent=5 // pred_fallthru
      _
  $region6: #{_lambda_.34} parent=0 // loop_footer
    %s15 = sadd.s32 1, %s11
  $region7: #{_lambda_.34} parent=0 // loop_footer_branch
    %10 = sbr.rel target = $region3
  $region8: #{_lambda_.34} parent=0 // loop_exit
    _

// kernel: _lambda_.41
$region0: #{_lambda_.41}
  #allocation0 [shape = 'u32[]', space=smem, size = 0x4, offset = 0x4, fixed_abs, tag = 'smem constant byte address 0x4 - core index']
  #allocation1 [shape = 'u32[72,128]{1,0:T(1,128)}', space=vmem, size = 0x9000, scoped, tag = 'internal scratch']
  %s0 = inlined_call_operand.vmem [shape: bf16[2,96,56], index: 0, kind: input, shape index: {}]
  %s1 = inlined_call_operand.vmem [shape: bf16[32,96], index: 1, kind: input, shape index: {}]
  %s2 = inlined_call_operand.vmem [shape: f32[32,4], index: 2, kind: input, shape index: {}]
  %s3 = inlined_call_operand.vmem [shape: f32[56,8], index: 3, kind: input, shape index: {}]
  %s4 = inlined_call_operand.vmem [shape: f32[8,56], index: 4, kind: input, shape index: {}]
  %s5 = inlined_call_operand.vmem [shape: f32[2,16,56], index: 5, kind: output, shape index: {}]
  %s6 = sld [smem:[#allocation0]]
  $region53: #{_lambda_.41} parent=0
    _
  %s8 = ssub.s32 1, %s6
  %s9 = scalar_select 0, %s8, %s6
  loop: start=0, step=1, limit=4
  $region2: #{_lambda_.41} parent=0 // loop_pre_header
    _
  $region3: #{_lambda_.41} parent=0 // loop_header
    %s11 = sphi 0, %s15
    %p12 = scmp.ge.s32.totalorder %s11, 4
    %s21 = sphi 0, %s23
    %s24 = sphi 0, %s21
    %s25 = sphi 0, %s24
    %s41 = sphi 0, %s25
    %s45 = sphi 0, %s45
    %s47 = sphi 0, %s45
    %s48 = sphi 0, %s47
    %s62 = sphi 0, %s48
    %s66 = sphi 0, %s66
    %s68 = sphi 0, %s66
    %s69 = sphi 0, %s68
    %s83 = sphi 0, %s69
    %s87 = sphi 0, %s87
    %s89 = sphi 0, %s87
    %s90 = sphi 0, %s89
    %s104 = sphi 0, %s90
    %s108 = sphi 0, %s108
    %s110 = sphi 0, %s108
    %s111 = sphi 0, %s110
    %s125 = sphi 0, %s111
    %s131 = sphi 0, %s133
    %s134 = sphi 0, %s131
    %s135 = sphi 0, %s134
    %s151 = sphi 0, %s135
  $region4: #{_lambda_.41} parent=0 // loop_header_branch
    %14 = sbr.rel (%p12) target = $region8
  $region5: #{_lambda_.41} parent=0 // loop_body
    %s16 = ssub.s32 %s11, 1
    %s17 = ssub.s32 %s11, 2
    %s18 = sadd.s32 %s11, 1
    %s19 = ssub.s32 %s11, %s18
    %p20 = scmp.eq.s32.totalorder %s19, 0
    %s22 = sadd.s32 %s21, 1
    %s23 = scalar_select %p20, %s21, %s22
    %p26 = pneg %p20
    %p27 = scmp.eq.s32.totalorder %s11, 1
    %p28 = por %p26, %p27
    %p29 = scmp.ne.s32.totalorder %s21, %s24
    %p30 = scmp.eq.s32.totalorder %s11, 0
    %p31 = por %p29, %p30
    %p32 = scmp.ne.s32.totalorder %s21, %s24
    %p33 = scmp.eq.s32.totalorder %s16, 1
    %p34 = por %p32, %p33
    %p35 = scmp.ne.s32.totalorder %s24, %s25
    %p36 = scmp.eq.s32.totalorder %s16, 0
    %p37 = por %p35, %p36
    %p38 = scmp.ne.s32.totalorder %s24, %s25
    %p39 = scmp.eq.s32.totalorder %s17, 1
    %p40 = por %p38, %p39
    %p42 = scmp.ne.s32.totalorder %s25, %s41
    %p43 = scmp.eq.s32.totalorder %s17, 0
    %p44 = por %p42, %p43
    %s46 = sadd.s32 %s45, 1
    %p49 = scmp.eq.s32.totalorder %s11, 1
    %p50 = scmp.ne.s32.totalorder %s45, %s47
    %p51 = scmp.eq.s32.totalorder %s11, 0
    %p52 = por %p50, %p51
    %p53 = scmp.ne.s32.totalorder %s45, %s47
    %p54 = scmp.eq.s32.totalorder %s16, 1
    %p55 = por %p53, %p54
    %p56 = scmp.ne.s32.totalorder %s47, %s48
    %p57 = scmp.eq.s32.totalorder %s16, 0
    %p58 = por %p56, %p57
    %p59 = scmp.ne.s32.totalorder %s47, %s48
    %p60 = scmp.eq.s32.totalorder %s17, 1
    %p61 = por %p59, %p60
    %p63 = scmp.ne.s32.totalorder %s48, %s62
    %p64 = scmp.eq.s32.totalorder %s17, 0
    %p65 = por %p63, %p64
    %s67 = sadd.s32 %s66, 1
    %p70 = scmp.eq.s32.totalorder %s11, 1
    %p71 = scmp.ne.s32.totalorder %s66, %s68
    %p72 = scmp.eq.s32.totalorder %s11, 0
    %p73 = por %p71, %p72
    %p74 = scmp.ne.s32.totalorder %s66, %s68
    %p75 = scmp.eq.s32.totalorder %s16, 1
    %p76 = por %p74, %p75
    %p77 = scmp.ne.s32.totalorder %s68, %s69
    %p78 = scmp.eq.s32.totalorder %s16, 0
    %p79 = por %p77, %p78
    %p80 = scmp.ne.s32.totalorder %s68, %s69
    %p81 = scmp.eq.s32.totalorder %s17, 1
    %p82 = por %p80, %p81
    %p84 = scmp.ne.s32.totalorder %s69, %s83
    %p85 = scmp.eq.s32.totalorder %s17, 0
    %p86 = por %p84, %p85
    %s88 = sadd.s32 %s87, 1
    %p91 = scmp.eq.s32.totalorder %s11, 1
    %p92 = scmp.ne.s32.totalorder %s87, %s89
    %p93 = scmp.eq.s32.totalorder %s11, 0
    %p94 = por %p92, %p93
    %p95 = scmp.ne.s32.totalorder %s87, %s89
    %p96 = scmp.eq.s32.totalorder %s16, 1
    %p97 = por %p95, %p96
    %p98 = scmp.ne.s32.totalorder %s89, %s90
    %p99 = scmp.eq.s32.totalorder %s16, 0
    %p100 = por %p98, %p99
    %p101 = scmp.ne.s32.totalorder %s89, %s90
    %p102 = scmp.eq.s32.totalorder %s17, 1
    %p103 = por %p101, %p102
    %p105 = scmp.ne.s32.totalorder %s90, %s104
    %p106 = scmp.eq.s32.totalorder %s17, 0
    %p107 = por %p105, %p106
    %s109 = sadd.s32 %s108, 1
    %p112 = scmp.eq.s32.totalorder %s11, 1
    %p113 = scmp.ne.s32.totalorder %s108, %s110
    %p114 = scmp.eq.s32.totalorder %s11, 0
    %p115 = por %p113, %p114
    %p116 = scmp.ne.s32.totalorder %s108, %s110
    %p117 = scmp.eq.s32.totalorder %s16, 1
    %p118 = por %p116, %p117
    %p119 = scmp.ne.s32.totalorder %s110, %s111
    %p120 = scmp.eq.s32.totalorder %s16, 0
    %p121 = por %p119, %p120
    %p122 = scmp.ne.s32.totalorder %s110, %s111
    %p123 = scmp.eq.s32.totalorder %s17, 1
    %p124 = por %p122, %p123
    %p126 = scmp.ne.s32.totalorder %s111, %s125
    %p127 = scmp.eq.s32.totalorder %s17, 0
    %p128 = por %p126, %p127
    %s129 = ssub.s32 %s11, %s18
    %p130 = scmp.eq.s32.totalorder %s129, 0
    %s132 = sadd.s32 %s131, 1
    %s133 = scalar_select %p130, %s131, %s132
    %p136 = pneg %p130
    %p137 = scmp.eq.s32.totalorder %s11, 1
    %p138 = por %p136, %p137
    %p139 = scmp.ne.s32.totalorder %s131, %s134
    %p140 = scmp.eq.s32.totalorder %s11, 0
    %p141 = por %p139, %p140
    %p142 = scmp.ne.s32.totalorder %s131, %s134
    %p143 = scmp.eq.s32.totalorder %s16, 1
    %p144 = por %p142, %p143
    %p145 = scmp.ne.s32.totalorder %s134, %s135
    %p146 = scmp.eq.s32.totalorder %s16, 0
    %p147 = por %p145, %p146
    %p148 = scmp.ne.s32.totalorder %s134, %s135
    %p149 = scmp.eq.s32.totalorder %s17, 1
    %p150 = por %p148, %p149
    %p152 = scmp.ne.s32.totalorder %s135, %s151
    %p153 = scmp.eq.s32.totalorder %s17, 0
    %p154 = por %p152, %p153
    %p155 = scmp.le.s32.totalorder 1, %s11
    %p156 = scmp.lt.s32.totalorder %s11, 3
    %p157 = pnand %p155, %p156
    %p158 = pneg %p157
    // Predicated region
    $region9: #{_lambda_.41} parent=5 // pred_check
      _
    $region10: #{_lambda_.41} parent=5 // pred_check_branch
      %160 = sbr.rel (%p157) target = $region12
    $region11: #{_lambda_.41} parent=5 // pred_region
      %s161 = ssub.s32 %s11, 1
      // Predicated region
      $region13: #{_lambda_.41} parent=11 // pred_check
        %p162 = pneg %p58
      $region14: #{_lambda_.41} parent=11 // pred_check_branch
        %164 = sbr.rel (%p162) target = $region16
      $region15: #{_lambda_.41} parent=11 // pred_region
        _
      $region16: #{_lambda_.41} parent=11 // pred_fallthru
        _
      // Predicated region
      $region17: #{_lambda_.41} parent=11 // pred_check
        %p165 = pneg %p79
      $region18: #{_lambda_.41} parent=11 // pred_check_branch
        %167 = sbr.rel (%p165) target = $region20
      $region19: #{_lambda_.41} parent=11 // pred_region
        _
      $region20: #{_lambda_.41} parent=11 // pred_fallthru
        _
      // Predicated region
      $region21: #{_lambda_.41} parent=11 // pred_check
        %p168 = pneg %p100
      $region22: #{_lambda_.41} parent=11 // pred_check_branch
        %170 = sbr.rel (%p168) target = $region24
      $region23: #{_lambda_.41} parent=11 // pred_region
        _
      $region24: #{_lambda_.41} parent=11 // pred_fallthru
        _
      // Predicated region
      $region25: #{_lambda_.41} parent=11 // pred_check
        %p171 = pneg %p121
      $region26: #{_lambda_.41} parent=11 // pred_check_branch
        %173 = sbr.rel (%p171) target = $region28
      $region27: #{_lambda_.41} parent=11 // pred_region
        _
      $region28: #{_lambda_.41} parent=11 // pred_fallthru
        _
    $region12: #{_lambda_.41} parent=5 // pred_fallthru
      _
    %p174 = scmp.lt.s32.totalorder %s11, 2
    // Predicated region
    $region29: #{_lambda_.41} parent=5 // pred_check
      %p175 = pneg %p174
    $region30: #{_lambda_.41} parent=5 // pred_check_branch
      %177 = sbr.rel (%p175) target = $region32
    $region31: #{_lambda_.41} parent=5 // pred_region
      // Predicated region
      $region33: #{_lambda_.41} parent=31 // pred_check
        %p178 = pneg %p31
      $region34: #{_lambda_.41} parent=31 // pred_check_branch
        %180 = sbr.rel (%p178) target = $region36
      $region35: #{_lambda_.41} parent=31 // pred_region
        %p181 = scmp.lt.s32.totalorder %s11, 1
        %s182 = scalar_select %p181, %s11, 1
        %s183 = smul.addr %s182, 12
        %s184 = smul.addr %s183, 4
        %s185 = scalar_lea.vmem %s0, %s184
      $region36: #{_lambda_.41} parent=31 // pred_fallthru
        _
    $region32: #{_lambda_.41} parent=5 // pred_fallthru
      _
    %p186 = scmp.le.s32.totalorder 1, %s11
    %p187 = scmp.lt.s32.totalorder %s11, 3
    %p188 = pnand %p186, %p187
    %p189 = pneg %p188
    // Predicated region
    $region37: #{_lambda_.41} parent=5 // pred_check
      _
    $region38: #{_lambda_.41} parent=5 // pred_check_branch
      %191 = sbr.rel (%p188) target = $region40
    $region39: #{_lambda_.41} parent=5 // pred_region
      %s192 = ssub.s32 %s11, 1
      %p193 = scmp.lt.s32.totalorder %s16, 1
      %s194 = scalar_select %p193, %s16, 1
      %s195 = smul.addr %s194, 12
      %s196 = smul.addr %s195, 4
      %s197 = scalar_lea.vmem %s0, %s196
      %p198 = pneg %p37
      %p199 = pneg %p34
      %p200 = pneg %p58
      %p201 = pneg %p55
      %p202 = pneg %p79
      %p203 = pneg %p76
      %p204 = pneg %p100
      %p205 = pneg %p97
      %p206 = pneg %p121
      %p207 = pneg %p118
      %p208 = pneg %p147
      %p209 = pneg %p144
      %p210 = scmp.lt.s32.totalorder %s16, 1
      %s211 = scalar_select %p210, %s16, 1
      %s212 = smul.addr %s211, 2
      %s213 = smul.addr %s212, 8
      %s214 = scalar_lea.vmem %s5, %s213
      %p215 = scmp.lt.s32.totalorder %s16, 1
      %s216 = scalar_select %p215, %s16, 1
      %s217 = smul.addr %s216, 12
      %s218 = smul.addr %s217, 4
      %s219 = scalar_lea.vmem %s0, %s218
      %p220 = scmp.lt.s32.totalorder %s16, 1
      %s221 = scalar_select %p220, %s16, 1
      %s222 = smul.addr %s221, 2
      %s223 = smul.addr %s222, 8
      %s224 = scalar_lea.vmem %s5, %s223
      %v226 = vld [vmem:[%s1] sm:$0xf]
      %v227 = vld [vmem:[%s1 + $0x4] sm:$0xf]
      %v228 = vld [vmem:[%s1 + $0x8] sm:$0xf]
      %v229 = vld [vmem:[%s1 + $0xc] sm:$0xf]
      %v230 = vld [vmem:[%s219] sm:$0xf]
      %v231 = vld [vmem:[%s219 + $0x4] sm:$0xf]
      %v232 = vld [vmem:[%s219 + $0x8] sm:$0xf]
      %v233 = vld [vmem:[%s219 + $0xc] sm:$0xf]
      %v234 = vld [vmem:[%s219 + $0x10] sm:$0xf]
      %v235 = vld [vmem:[%s219 + $0x14] sm:$0xf]
      %v236 = vld [vmem:[%s219 + $0x18] sm:$0xf]
      %v237 = vld [vmem:[%s219 + $0x1c] sm:$0xf]
      %v238 = vld [vmem:[%s219 + $0x20] sm:$0xf]
      %v239 = vld [vmem:[%s219 + $0x24] sm:$0xf]
      %v240 = vld [vmem:[%s219 + $0x28] sm:$0xf]
      %v241 = vld [vmem:[%s219 + $0x2c] sm:$0xf]
      %v242 = vld [vmem:[%s2] sm:$0xff]
      %v243 = vld [vmem:[%s2 + $0x8] sm:$0xff]
      %v244 = vld [vmem:[%s2 + $0x10] sm:$0xff]
      %v245 = vld [vmem:[%s2 + $0x18] sm:$0xff]
      %247 = vset.pattern.permute.xlu0 0
      %248 = vperm.xlu0 %247, %v242
      %v249 = vpop.permute.xlu0 %248
      %252 = vset.pattern.permute.xlu0 0
      %253 = vperm.xlu0 %252, %v243
      %v254 = vpop.permute.xlu0 %253
      %257 = vset.pattern.permute.xlu0 0
      %258 = vperm.xlu0 %257, %v244
      %v259 = vpop.permute.xlu0 %258
      %262 = vset.pattern.permute.xlu0 0
      %263 = vperm.xlu0 %262, %v245
      %v264 = vpop.permute.xlu0 %263
      %v270 = vunpack.c.l.b16 %v226
      %v271 = vunpack.c.l.b16 %v227
      %v272 = vunpack.c.l.b16 %v228
      %v273 = vunpack.c.l.b16 %v229
      %v274 = vpack.c.b16 %v271, %v270
      %v275 = vpack.c.b16 %v273, %v272
      %v288 = vunpack.c.l.b16 %v230
      %v289 = vunpack.c.l.b16 %v231
      %v290 = vunpack.c.l.b16 %v232
      %v291 = vunpack.c.l.b16 %v233
      %v292 = vunpack.c.l.b16 %v234
      %v293 = vunpack.c.l.b16 %v235
      %v294 = vunpack.c.l.b16 %v236
      %v295 = vunpack.c.l.b16 %v237
      %v296 = vunpack.c.l.b16 %v238
      %v297 = vunpack.c.l.b16 %v239
      %v298 = vunpack.c.l.b16 %v240
      %v299 = vunpack.c.l.b16 %v241
      %v300 = vpack.c.b16 %v289, %v288
      %v301 = vpack.c.b16 %v291, %v290
      %v302 = vpack.c.b16 %v293, %v292
      %v303 = vpack.c.b16 %v295, %v294
      %v304 = vpack.c.b16 %v297, %v296
      %v305 = vpack.c.b16 %v299, %v298
      %vm312 = vcmask 785408
      %v314 = vsel %vm312, %v274, 0
      %v317 = vsel %vm312, %v275, 0
      %319 = vmatpush.bf16.msra.mxu0 0
      %320 = vmatpush.bf16.msra.mxu0 0
      %321 = vmatpush.bf16.msra.mxu0 %v305
      %322 = vmatpush.bf16.msra.mxu0 %v304
      %323 = vmatpush.bf16.msra.mxu0 %v303
      %324 = vmatpush.bf16.msra.mxu0 %v302
      %325 = vmatpush.bf16.msra.mxu0 %v301
      %326 = vmatpush.bf16.msra.mxu0 %v300
      %327 = vmatmul.bf16.gmra.mxu0 %v314
      %v328 = vpop.f32.mrf.mxu0
      %v329 = vadd.f32 %v249, %v328
      %v330 = vpop.f32.mrf.mxu0
      %v331 = vadd.f32 %v254, %v330
      %332 = vmatmul.bf16.gmra.mxu0 %v317
      %v333 = vpop.f32.mrf.mxu0
      %v334 = vadd.f32 %v259, %v333
      %v335 = vpop.f32.mrf.mxu0
      %v336 = vadd.f32 %v264, %v335
      %337 = vdwg.mxu0
      %v338 = vxor.u32 %v334, 2147483648
      %v339 = vxor.u32 %v336, 2147483648
      %v340 = vmul.f32 %v338, 1.442695
      %v341 = vpow.pop %v340
      %v342 = vmul.f32 %v339, 1.442695
      %v343 = vpow.pop %v342
      %v344 = vadd.f32 %v341, 1.0
      %v345 = vadd.f32 %v343, 1.0
      %v346 = vrcp.pop %v344
      %v347 = vmul.f32 %v344, %v346
      %v348 = vsub.f32 1.0, %v347
      %v349 = vmul.f32 %v346, %v348
      %v350 = vadd.f32 %v346, %v349
      %vm351 = vweird.f32 %v344
      %vm352 = vweird.f32 %v346
      %vm353 = vmor %vm351, %vm352
      %v354 = vsel %vm353, %v346, %v350
      %v355 = vand.u32 2147483647, %v344
      %vm356 = vcmp.eq.f32.partialorder %v355, 8.507059e+37
      %v357 = vand.u32 %v344, 2147483648
      %v358 = vor.u32 1.1754944e-38, %v357
      %v359 = vsel %vm356, %v358, %v354
      %v360 = vmul.f32 1.0, %v359
      %v361 = vrcp.pop %v345
      %v362 = vmul.f32 %v345, %v361
      %v363 = vsub.f32 1.0, %v362
      %v364 = vmul.f32 %v361, %v363
      %v365 = vadd.f32 %v361, %v364
      %vm366 = vweird.f32 %v345
      %vm367 = vweird.f32 %v361
      %vm368 = vmor %vm366, %vm367
      %v369 = vsel %vm368, %v361, %v365
      %v370 = vand.u32 2147483647, %v345
      %vm371 = vcmp.eq.f32.partialorder %v370, 8.507059e+37
      %v372 = vand.u32 %v345, 2147483648
      %v373 = vor.u32 1.1754944e-38, %v372
      %v374 = vsel %vm371, %v373, %v369
      %v375 = vmul.f32 1.0, %v374
      %v376 = vmul.f32 %v329, %v360
      %v377 = vmul.f32 %v331, %v375
      %vm378 = vcmask 457728
      %v379 = vsel %vm378, %v376, 0.0
      %v380 = vsel %vm378, %v377, 0.0
      %v381 = vadd.f32 %v379, %v380
      %v382 = vrot.slane %v381, 4
      %v383 = vadd.f32 %v381, %v382
      %v384 = vrot.slane %v383, 2
      %v385 = vadd.f32 %v383, %v384
      %v386 = vrot.slane %v385, 1
      %v387 = vadd.f32 %v385, %v386
      %v388 = vmul.f32 %v376, %v376
      %v389 = vmul.f32 %v377, %v377
      %v390 = vsel %vm378, %v388, 0.0
      %v391 = vsel %vm378, %v389, 0.0
      %v392 = vadd.f32 %v390, %v391
      %v393 = vrot.slane %v392, 4
      %v394 = vadd.f32 %v392, %v393
      %v395 = vrot.slane %v394, 2
      %v396 = vadd.f32 %v394, %v395
      %v397 = vrot.slane %v396, 1
      %v398 = vadd.f32 %v396, %v397
      %vm399 = vcmask 1040384
      %v400 = vsel %vm399, %v387, %v398
      %v401 = vld [vmem:[%s3] sm:$0xff]
      %v402 = vld [vmem:[%s3 + $0x8] sm:$0xff]
      %v403 = vld [vmem:[%s3 + $0x10] sm:$0xff]
      %v404 = vld [vmem:[%s3 + $0x18] sm:$0xff]
      %v405 = vld [vmem:[%s3 + $0x20] sm:$0xff]
      %v406 = vld [vmem:[%s3 + $0x28] sm:$0xff]
      %v407 = vld [vmem:[%s3 + $0x30] sm:$0xff]
      %v409 = vsel %vm378, %v400, 0
      %411 = vmatpush.msra.mxu0 0.0
      %412 = vmatpush.msra.mxu0 0.0
      %413 = vmatpush.msra.mxu0 0.0
      %414 = vmatpush.msra.mxu0 0.0
      %415 = vmatpush.msra.mxu0 0.0
      %416 = vmatpush.msra.mxu0 0.0
      %417 = vmatpush.msra.mxu0 0.0
      %418 = vmatpush.msra.mxu0 0.0
      %419 = vmatpush.msra.mxu0 0.0
      %420 = vmatpush.msra.mxu0 %v407
      %421 = vmatpush.msra.mxu0 %v406
      %422 = vmatpush.msra.mxu0 %v405
      %423 = vmatpush.msra.mxu0 %v404
      %424 = vmatpush.msra.mxu0 %v403
      %425 = vmatpush.msra.mxu0 %v402
      %426 = vmatpush.msra.mxu0 %v401
      %427 = vmatmul.f32.gmra.mxu0 %v409
      %v428 = vpop.f32.mrf.mxu0
      %v429 = vadd.f32 0.0, %v428
      %430 = vdwg.mxu0
      %v431 = vmul.f32 %v429, %v429
      %v433 = vrot.slane %v431, 7
      %v435 = vsub.f32 %v429, %v433
      %v436 = vadd.f32 %v435, 1e-05
      %v437 = vrsqrt.pop %v436
      %v438 = vmul.f32 %v437, %v436
      %v439 = vmul.f32 %v438, %v437
      %v440 = vmul.f32 0.5, %v439
      %v441 = vsub.f32 1.5, %v440
      %v442 = vmul.f32 %v437, %v441
      %vm443 = vweird.f32 %v436
      %vm444 = vweird.f32 %v437
      %vm445 = vmor %vm443, %vm444
      %v446 = vsel %vm445, %v437, %v442
      %v447 = vsel %vm399, %v429, %v446
      %v448 = vld [vmem:[%s4] sm:$0xff]
      %vm449 = vcmask 64512
      %v451 = vsel %vm449, %v447, 0
      %453 = vmatpush.msra.mxu0 0.0
      %454 = vmatpush.msra.mxu0 0.0
      %455 = vmatpush.msra.mxu0 0.0
      %456 = vmatpush.msra.mxu0 0.0
      %457 = vmatpush.msra.mxu0 0.0
      %458 = vmatpush.msra.mxu0 0.0
      %459 = vmatpush.msra.mxu0 0.0
      %460 = vmatpush.msra.mxu0 0.0
      %461 = vmatpush.msra.mxu0 0.0
      %462 = vmatpush.msra.mxu0 0.0
      %463 = vmatpush.msra.mxu0 0.0
      %464 = vmatpush.msra.mxu0 0.0
      %465 = vmatpush.msra.mxu0 0.0
      %466 = vmatpush.msra.mxu0 0.0
      %467 = vmatpush.msra.mxu0 0.0
      %468 = vmatpush.msra.mxu0 %v448
      %469 = vmatmul.f32.gmra.mxu0 %v451
      %v470 = vpop.f32.mrf.mxu0
      %v471 = vadd.f32 0.0, %v470
      %472 = vdwg.mxu0
      %v473 = vld [vmem:[%s2] sm:$0xff]
      %v474 = vld [vmem:[%s2 + $0x8] sm:$0xff]
      %v475 = vperm.slane %v471, 0
      %v476 = vsub.f32 %v376, %v475
      %v477 = vsub.f32 %v377, %v475
      %v478 = vperm.slane %v471, 1
      %v479 = vmul.f32 %v476, %v478
      %v480 = vmul.f32 %v477, %v478
      %482 = vset.pattern.permute.xlu0 1
      %483 = vperm.xlu0 %482, %v473
      %v484 = vpop.permute.xlu0 %483
      %487 = vset.pattern.permute.xlu0 1
      %488 = vperm.xlu0 %487, %v474
      %v489 = vpop.permute.xlu0 %488
      %v491 = vmul.f32 %v479, %v484
      %v492 = vmul.f32 %v480, %v489
      %493 = vset.pattern.permute.xlu0 2
      %494 = vperm.xlu0 %493, %v473
      %v495 = vpop.permute.xlu0 %494
      %497 = vset.pattern.permute.xlu0 2
      %498 = vperm.xlu0 %497, %v474
      %v499 = vpop.permute.xlu0 %498
      %v501 = vadd.f32 %v491, %v495
      %v502 = vadd.f32 %v492, %v499
      %vm503 = vcmp.gt.f32.partialorder %v501, 0.0
      %vm504 = vcmp.gt.f32.partialorder %v502, 0.0
      %505 = vset.pattern.permute.xlu0 3
      %506 = vperm.xlu0 %505, %v473
      %v507 = vpop.permute.xlu0 %506
      %509 = vset.pattern.permute.xlu0 3
      %510 = vperm.xlu0 %509, %v474
      %v511 = vpop.permute.xlu0 %510
      %v513 = vmul.f32 %v507, %v501
      %v514 = vmul.f32 %v511, %v502
      %v515 = vsel %vm503, %v501, %v513
      %v516 = vsel %vm504, %v502, %v514
      %517 = vst.msk [vmem:[%s224] sm:$0xff] %vm378, %v515
      %518 = vst.msk [vmem:[%s224 + $0x8] sm:$0xff] %vm378, %v516
      %p519 = scmp.lt.s32.totalorder %s16, 1
      %s520 = scalar_select %p519, %s16, 1
      %s521 = smul.addr %s520, 2
      %s522 = smul.addr %s521, 8
      %s523 = scalar_lea.vmem %s5, %s522
      // Predicated region
      $region41: #{_lambda_.41} parent=39 // pred_check
        %p524 = pneg %p144
      $region42: #{_lambda_.41} parent=39 // pred_check_branch
        %526 = sbr.rel (%p524) target = $region44
      $region43: #{_lambda_.41} parent=39 // pred_region
        _
      $region44: #{_lambda_.41} parent=39 // pred_fallthru
        _
    $region40: #{_lambda_.41} parent=5 // pred_fallthru
      _
    %p527 = scmp.le.s32.totalorder 2, %s11
    // Predicated region
    $region45: #{_lambda_.41} parent=5 // pred_check
      %p528 = pneg %p527
    $region46: #{_lambda_.41} parent=5 // pred_check_branch
      %530 = sbr.rel (%p528) target = $region48
    $region47: #{_lambda_.41} parent=5 // pred_region
      %s531 = ssub.s32 %s11, 2
      // Predicated region
      $region49: #{_lambda_.41} parent=47 // pred_check
        %p532 = pneg %p150
      $region50: #{_lambda_.41} parent=47 // pred_check_branch
        %534 = sbr.rel (%p532) target = $region52
      $region51: #{_lambda_.41} parent=47 // pred_region
        %p535 = scmp.lt.s32.totalorder %s17, 1
        %s536 = scalar_select %p535, %s17, 1
        %s537 = smul.addr %s536, 2
        %s538 = smul.addr %s537, 8
        %s539 = scalar_lea.vmem %s5, %s538
      $region52: #{_lambda_.41} parent=47 // pred_fallthru
        _
    $region48: #{_lambda_.41} parent=5 // pred_fallthru
      _
  $region6: #{_lambda_.41} parent=0 // loop_footer
    %s15 = sadd.s32 1, %s11
  $region7: #{_lambda_.41} parent=0 // loop_footer_branch
    %10 = sbr.rel target = $region3
  $region8: #{_lambda_.41} parent=0 // loop_exit
    _

// kernel: _lambda_.46
$region0: #{_lambda_.46}
  #allocation0 [shape = 'u32[]', space=smem, size = 0x4, offset = 0x4, fixed_abs, tag = 'smem constant byte address 0x4 - core index']
  #allocation1 [shape = 'u32[72,128]{1,0:T(1,128)}', space=vmem, size = 0x9000, scoped, tag = 'internal scratch']
  %s0 = inlined_call_operand.vmem [shape: bf16[2,96,24], index: 0, kind: input, shape index: {}]
  %s1 = inlined_call_operand.vmem [shape: bf16[32,96], index: 1, kind: input, shape index: {}]
  %s2 = inlined_call_operand.vmem [shape: f32[32,4], index: 2, kind: input, shape index: {}]
  %s3 = inlined_call_operand.vmem [shape: f32[24,8], index: 3, kind: input, shape index: {}]
  %s4 = inlined_call_operand.vmem [shape: f32[8,24], index: 4, kind: input, shape index: {}]
  %s5 = inlined_call_operand.vmem [shape: f32[2,16,24], index: 5, kind: output, shape index: {}]
  %s6 = sld [smem:[#allocation0]]
  $region53: #{_lambda_.46} parent=0
    _
  %s8 = ssub.s32 1, %s6
  %s9 = scalar_select 0, %s8, %s6
  loop: start=0, step=1, limit=4
  $region2: #{_lambda_.46} parent=0 // loop_pre_header
    _
  $region3: #{_lambda_.46} parent=0 // loop_header
    %s11 = sphi 0, %s15
    %p12 = scmp.ge.s32.totalorder %s11, 4
    %s21 = sphi 0, %s23
    %s24 = sphi 0, %s21
    %s25 = sphi 0, %s24
    %s41 = sphi 0, %s25
    %s45 = sphi 0, %s45
    %s47 = sphi 0, %s45
    %s48 = sphi 0, %s47
    %s62 = sphi 0, %s48
    %s66 = sphi 0, %s66
    %s68 = sphi 0, %s66
    %s69 = sphi 0, %s68
    %s83 = sphi 0, %s69
    %s87 = sphi 0, %s87
    %s89 = sphi 0, %s87
    %s90 = sphi 0, %s89
    %s104 = sphi 0, %s90
    %s108 = sphi 0, %s108
    %s110 = sphi 0, %s108
    %s111 = sphi 0, %s110
    %s125 = sphi 0, %s111
    %s131 = sphi 0, %s133
    %s134 = sphi 0, %s131
    %s135 = sphi 0, %s134
    %s151 = sphi 0, %s135
  $region4: #{_lambda_.46} parent=0 // loop_header_branch
    %14 = sbr.rel (%p12) target = $region8
  $region5: #{_lambda_.46} parent=0 // loop_body
    %s16 = ssub.s32 %s11, 1
    %s17 = ssub.s32 %s11, 2
    %s18 = sadd.s32 %s11, 1
    %s19 = ssub.s32 %s11, %s18
    %p20 = scmp.eq.s32.totalorder %s19, 0
    %s22 = sadd.s32 %s21, 1
    %s23 = scalar_select %p20, %s21, %s22
    %p26 = pneg %p20
    %p27 = scmp.eq.s32.totalorder %s11, 1
    %p28 = por %p26, %p27
    %p29 = scmp.ne.s32.totalorder %s21, %s24
    %p30 = scmp.eq.s32.totalorder %s11, 0
    %p31 = por %p29, %p30
    %p32 = scmp.ne.s32.totalorder %s21, %s24
    %p33 = scmp.eq.s32.totalorder %s16, 1
    %p34 = por %p32, %p33
    %p35 = scmp.ne.s32.totalorder %s24, %s25
    %p36 = scmp.eq.s32.totalorder %s16, 0
    %p37 = por %p35, %p36
    %p38 = scmp.ne.s32.totalorder %s24, %s25
    %p39 = scmp.eq.s32.totalorder %s17, 1
    %p40 = por %p38, %p39
    %p42 = scmp.ne.s32.totalorder %s25, %s41
    %p43 = scmp.eq.s32.totalorder %s17, 0
    %p44 = por %p42, %p43
    %s46 = sadd.s32 %s45, 1
    %p49 = scmp.eq.s32.totalorder %s11, 1
    %p50 = scmp.ne.s32.totalorder %s45, %s47
    %p51 = scmp.eq.s32.totalorder %s11, 0
    %p52 = por %p50, %p51
    %p53 = scmp.ne.s32.totalorder %s45, %s47
    %p54 = scmp.eq.s32.totalorder %s16, 1
    %p55 = por %p53, %p54
    %p56 = scmp.ne.s32.totalorder %s47, %s48
    %p57 = scmp.eq.s32.totalorder %s16, 0
    %p58 = por %p56, %p57
    %p59 = scmp.ne.s32.totalorder %s47, %s48
    %p60 = scmp.eq.s32.totalorder %s17, 1
    %p61 = por %p59, %p60
    %p63 = scmp.ne.s32.totalorder %s48, %s62
    %p64 = scmp.eq.s32.totalorder %s17, 0
    %p65 = por %p63, %p64
    %s67 = sadd.s32 %s66, 1
    %p70 = scmp.eq.s32.totalorder %s11, 1
    %p71 = scmp.ne.s32.totalorder %s66, %s68
    %p72 = scmp.eq.s32.totalorder %s11, 0
    %p73 = por %p71, %p72
    %p74 = scmp.ne.s32.totalorder %s66, %s68
    %p75 = scmp.eq.s32.totalorder %s16, 1
    %p76 = por %p74, %p75
    %p77 = scmp.ne.s32.totalorder %s68, %s69
    %p78 = scmp.eq.s32.totalorder %s16, 0
    %p79 = por %p77, %p78
    %p80 = scmp.ne.s32.totalorder %s68, %s69
    %p81 = scmp.eq.s32.totalorder %s17, 1
    %p82 = por %p80, %p81
    %p84 = scmp.ne.s32.totalorder %s69, %s83
    %p85 = scmp.eq.s32.totalorder %s17, 0
    %p86 = por %p84, %p85
    %s88 = sadd.s32 %s87, 1
    %p91 = scmp.eq.s32.totalorder %s11, 1
    %p92 = scmp.ne.s32.totalorder %s87, %s89
    %p93 = scmp.eq.s32.totalorder %s11, 0
    %p94 = por %p92, %p93
    %p95 = scmp.ne.s32.totalorder %s87, %s89
    %p96 = scmp.eq.s32.totalorder %s16, 1
    %p97 = por %p95, %p96
    %p98 = scmp.ne.s32.totalorder %s89, %s90
    %p99 = scmp.eq.s32.totalorder %s16, 0
    %p100 = por %p98, %p99
    %p101 = scmp.ne.s32.totalorder %s89, %s90
    %p102 = scmp.eq.s32.totalorder %s17, 1
    %p103 = por %p101, %p102
    %p105 = scmp.ne.s32.totalorder %s90, %s104
    %p106 = scmp.eq.s32.totalorder %s17, 0
    %p107 = por %p105, %p106
    %s109 = sadd.s32 %s108, 1
    %p112 = scmp.eq.s32.totalorder %s11, 1
    %p113 = scmp.ne.s32.totalorder %s108, %s110
    %p114 = scmp.eq.s32.totalorder %s11, 0
    %p115 = por %p113, %p114
    %p116 = scmp.ne.s32.totalorder %s108, %s110
    %p117 = scmp.eq.s32.totalorder %s16, 1
    %p118 = por %p116, %p117
    %p119 = scmp.ne.s32.totalorder %s110, %s111
    %p120 = scmp.eq.s32.totalorder %s16, 0
    %p121 = por %p119, %p120
    %p122 = scmp.ne.s32.totalorder %s110, %s111
    %p123 = scmp.eq.s32.totalorder %s17, 1
    %p124 = por %p122, %p123
    %p126 = scmp.ne.s32.totalorder %s111, %s125
    %p127 = scmp.eq.s32.totalorder %s17, 0
    %p128 = por %p126, %p127
    %s129 = ssub.s32 %s11, %s18
    %p130 = scmp.eq.s32.totalorder %s129, 0
    %s132 = sadd.s32 %s131, 1
    %s133 = scalar_select %p130, %s131, %s132
    %p136 = pneg %p130
    %p137 = scmp.eq.s32.totalorder %s11, 1
    %p138 = por %p136, %p137
    %p139 = scmp.ne.s32.totalorder %s131, %s134
    %p140 = scmp.eq.s32.totalorder %s11, 0
    %p141 = por %p139, %p140
    %p142 = scmp.ne.s32.totalorder %s131, %s134
    %p143 = scmp.eq.s32.totalorder %s16, 1
    %p144 = por %p142, %p143
    %p145 = scmp.ne.s32.totalorder %s134, %s135
    %p146 = scmp.eq.s32.totalorder %s16, 0
    %p147 = por %p145, %p146
    %p148 = scmp.ne.s32.totalorder %s134, %s135
    %p149 = scmp.eq.s32.totalorder %s17, 1
    %p150 = por %p148, %p149
    %p152 = scmp.ne.s32.totalorder %s135, %s151
    %p153 = scmp.eq.s32.totalorder %s17, 0
    %p154 = por %p152, %p153
    %p155 = scmp.le.s32.totalorder 1, %s11
    %p156 = scmp.lt.s32.totalorder %s11, 3
    %p157 = pnand %p155, %p156
    %p158 = pneg %p157
    // Predicated region
    $region9: #{_lambda_.46} parent=5 // pred_check
      _
    $region10: #{_lambda_.46} parent=5 // pred_check_branch
      %160 = sbr.rel (%p157) target = $region12
    $region11: #{_lambda_.46} parent=5 // pred_region
      %s161 = ssub.s32 %s11, 1
      // Predicated region
      $region13: #{_lambda_.46} parent=11 // pred_check
        %p162 = pneg %p58
      $region14: #{_lambda_.46} parent=11 // pred_check_branch
        %164 = sbr.rel (%p162) target = $region16
      $region15: #{_lambda_.46} parent=11 // pred_region
        _
      $region16: #{_lambda_.46} parent=11 // pred_fallthru
        _
      // Predicated region
      $region17: #{_lambda_.46} parent=11 // pred_check
        %p165 = pneg %p79
      $region18: #{_lambda_.46} parent=11 // pred_check_branch
        %167 = sbr.rel (%p165) target = $region20
      $region19: #{_lambda_.46} parent=11 // pred_region
        _
      $region20: #{_lambda_.46} parent=11 // pred_fallthru
        _
      // Predicated region
      $region21: #{_lambda_.46} parent=11 // pred_check
        %p168 = pneg %p100
      $region22: #{_lambda_.46} parent=11 // pred_check_branch
        %170 = sbr.rel (%p168) target = $region24
      $region23: #{_lambda_.46} parent=11 // pred_region
        _
      $region24: #{_lambda_.46} parent=11 // pred_fallthru
        _
      // Predicated region
      $region25: #{_lambda_.46} parent=11 // pred_check
        %p171 = pneg %p121
      $region26: #{_lambda_.46} parent=11 // pred_check_branch
        %173 = sbr.rel (%p171) target = $region28
      $region27: #{_lambda_.46} parent=11 // pred_region
        _
      $region28: #{_lambda_.46} parent=11 // pred_fallthru
        _
    $region12: #{_lambda_.46} parent=5 // pred_fallthru
      _
    %p174 = scmp.lt.s32.totalorder %s11, 2
    // Predicated region
    $region29: #{_lambda_.46} parent=5 // pred_check
      %p175 = pneg %p174
    $region30: #{_lambda_.46} parent=5 // pred_check_branch
      %177 = sbr.rel (%p175) target = $region32
    $region31: #{_lambda_.46} parent=5 // pred_region
      // Predicated region
      $region33: #{_lambda_.46} parent=31 // pred_check
        %p178 = pneg %p31
      $region34: #{_lambda_.46} parent=31 // pred_check_branch
        %180 = sbr.rel (%p178) target = $region36
      $region35: #{_lambda_.46} parent=31 // pred_region
        %p181 = scmp.lt.s32.totalorder %s11, 1
        %s182 = scalar_select %p181, %s11, 1
        %s183 = smul.addr %s182, 12
        %s184 = smul.addr %s183, 4
        %s185 = scalar_lea.vmem %s0, %s184
      $region36: #{_lambda_.46} parent=31 // pred_fallthru
        _
    $region32: #{_lambda_.46} parent=5 // pred_fallthru
      _
    %p186 = scmp.le.s32.totalorder 1, %s11
    %p187 = scmp.lt.s32.totalorder %s11, 3
    %p188 = pnand %p186, %p187
    %p189 = pneg %p188
    // Predicated region
    $region37: #{_lambda_.46} parent=5 // pred_check
      _
    $region38: #{_lambda_.46} parent=5 // pred_check_branch
      %191 = sbr.rel (%p188) target = $region40
    $region39: #{_lambda_.46} parent=5 // pred_region
      %s192 = ssub.s32 %s11, 1
      %p193 = scmp.lt.s32.totalorder %s16, 1
      %s194 = scalar_select %p193, %s16, 1
      %s195 = smul.addr %s194, 12
      %s196 = smul.addr %s195, 4
      %s197 = scalar_lea.vmem %s0, %s196
      %p198 = pneg %p37
      %p199 = pneg %p34
      %p200 = pneg %p58
      %p201 = pneg %p55
      %p202 = pneg %p79
      %p203 = pneg %p76
      %p204 = pneg %p100
      %p205 = pneg %p97
      %p206 = pneg %p121
      %p207 = pneg %p118
      %p208 = pneg %p147
      %p209 = pneg %p144
      %p210 = scmp.lt.s32.totalorder %s16, 1
      %s211 = scalar_select %p210, %s16, 1
      %s212 = smul.addr %s211, 2
      %s213 = smul.addr %s212, 8
      %s214 = scalar_lea.vmem %s5, %s213
      %p215 = scmp.lt.s32.totalorder %s16, 1
      %s216 = scalar_select %p215, %s16, 1
      %s217 = smul.addr %s216, 12
      %s218 = smul.addr %s217, 4
      %s219 = scalar_lea.vmem %s0, %s218
      %p220 = scmp.lt.s32.totalorder %s16, 1
      %s221 = scalar_select %p220, %s16, 1
      %s222 = smul.addr %s221, 2
      %s223 = smul.addr %s222, 8
      %s224 = scalar_lea.vmem %s5, %s223
      %v226 = vld [vmem:[%s1] sm:$0xf]
      %v227 = vld [vmem:[%s1 + $0x4] sm:$0xf]
      %v228 = vld [vmem:[%s1 + $0x8] sm:$0xf]
      %v229 = vld [vmem:[%s1 + $0xc] sm:$0xf]
      %v230 = vld [vmem:[%s219] sm:$0xf]
      %v231 = vld [vmem:[%s219 + $0x4] sm:$0xf]
      %v232 = vld [vmem:[%s219 + $0x8] sm:$0xf]
      %v233 = vld [vmem:[%s219 + $0xc] sm:$0xf]
      %v234 = vld [vmem:[%s219 + $0x10] sm:$0xf]
      %v235 = vld [vmem:[%s219 + $0x14] sm:$0xf]
      %v236 = vld [vmem:[%s219 + $0x18] sm:$0xf]
      %v237 = vld [vmem:[%s219 + $0x1c] sm:$0xf]
      %v238 = vld [vmem:[%s219 + $0x20] sm:$0xf]
      %v239 = vld [vmem:[%s219 + $0x24] sm:$0xf]
      %v240 = vld [vmem:[%s219 + $0x28] sm:$0xf]
      %v241 = vld [vmem:[%s219 + $0x2c] sm:$0xf]
      %v242 = vld [vmem:[%s2] sm:$0xff]
      %v243 = vld [vmem:[%s2 + $0x8] sm:$0xff]
      %v244 = vld [vmem:[%s2 + $0x10] sm:$0xff]
      %v245 = vld [vmem:[%s2 + $0x18] sm:$0xff]
      %247 = vset.pattern.permute.xlu0 0
      %248 = vperm.xlu0 %247, %v242
      %v249 = vpop.permute.xlu0 %248
      %252 = vset.pattern.permute.xlu0 0
      %253 = vperm.xlu0 %252, %v243
      %v254 = vpop.permute.xlu0 %253
      %257 = vset.pattern.permute.xlu0 0
      %258 = vperm.xlu0 %257, %v244
      %v259 = vpop.permute.xlu0 %258
      %262 = vset.pattern.permute.xlu0 0
      %263 = vperm.xlu0 %262, %v245
      %v264 = vpop.permute.xlu0 %263
      %v270 = vunpack.c.l.b16 %v226
      %v271 = vunpack.c.l.b16 %v227
      %v272 = vunpack.c.l.b16 %v228
      %v273 = vunpack.c.l.b16 %v229
      %v274 = vpack.c.b16 %v271, %v270
      %v275 = vpack.c.b16 %v273, %v272
      %v288 = vunpack.c.l.b16 %v230
      %v289 = vunpack.c.l.b16 %v231
      %v290 = vunpack.c.l.b16 %v232
      %v291 = vunpack.c.l.b16 %v233
      %v292 = vunpack.c.l.b16 %v234
      %v293 = vunpack.c.l.b16 %v235
      %v294 = vunpack.c.l.b16 %v236
      %v295 = vunpack.c.l.b16 %v237
      %v296 = vunpack.c.l.b16 %v238
      %v297 = vunpack.c.l.b16 %v239
      %v298 = vunpack.c.l.b16 %v240
      %v299 = vunpack.c.l.b16 %v241
      %v300 = vpack.c.b16 %v289, %v288
      %v301 = vpack.c.b16 %v291, %v290
      %v302 = vpack.c.b16 %v293, %v292
      %v303 = vpack.c.b16 %v295, %v294
      %v304 = vpack.c.b16 %v297, %v296
      %v305 = vpack.c.b16 %v299, %v298
      %vm312 = vcmask 785408
      %v314 = vsel %vm312, %v274, 0
      %v317 = vsel %vm312, %v275, 0
      %319 = vmatpush.bf16.msra.mxu0 0
      %320 = vmatpush.bf16.msra.mxu0 0
      %321 = vmatpush.bf16.msra.mxu0 %v305
      %322 = vmatpush.bf16.msra.mxu0 %v304
      %323 = vmatpush.bf16.msra.mxu0 %v303
      %324 = vmatpush.bf16.msra.mxu0 %v302
      %325 = vmatpush.bf16.msra.mxu0 %v301
      %326 = vmatpush.bf16.msra.mxu0 %v300
      %327 = vmatmul.bf16.gmra.mxu0 %v314
      %v328 = vpop.f32.mrf.mxu0
      %v329 = vadd.f32 %v249, %v328
      %v330 = vpop.f32.mrf.mxu0
      %v331 = vadd.f32 %v254, %v330
      %332 = vmatmul.bf16.gmra.mxu0 %v317
      %v333 = vpop.f32.mrf.mxu0
      %v334 = vadd.f32 %v259, %v333
      %v335 = vpop.f32.mrf.mxu0
      %v336 = vadd.f32 %v264, %v335
      %337 = vdwg.mxu0
      %v338 = vxor.u32 %v334, 2147483648
      %v339 = vxor.u32 %v336, 2147483648
      %v340 = vmul.f32 %v338, 1.442695
      %v341 = vpow.pop %v340
      %v342 = vmul.f32 %v339, 1.442695
      %v343 = vpow.pop %v342
      %v344 = vadd.f32 %v341, 1.0
      %v345 = vadd.f32 %v343, 1.0
      %v346 = vrcp.pop %v344
      %v347 = vmul.f32 %v344, %v346
      %v348 = vsub.f32 1.0, %v347
      %v349 = vmul.f32 %v346, %v348
      %v350 = vadd.f32 %v346, %v349
      %vm351 = vweird.f32 %v344
      %vm352 = vweird.f32 %v346
      %vm353 = vmor %vm351, %vm352
      %v354 = vsel %vm353, %v346, %v350
      %v355 = vand.u32 2147483647, %v344
      %vm356 = vcmp.eq.f32.partialorder %v355, 8.507059e+37
      %v357 = vand.u32 %v344, 2147483648
      %v358 = vor.u32 1.1754944e-38, %v357
      %v359 = vsel %vm356, %v358, %v354
      %v360 = vmul.f32 1.0, %v359
      %v361 = vrcp.pop %v345
      %v362 = vmul.f32 %v345, %v361
      %v363 = vsub.f32 1.0, %v362
      %v364 = vmul.f32 %v361, %v363
      %v365 = vadd.f32 %v361, %v364
      %vm366 = vweird.f32 %v345
      %vm367 = vweird.f32 %v361
      %vm368 = vmor %vm366, %vm367
      %v369 = vsel %vm368, %v361, %v365
      %v370 = vand.u32 2147483647, %v345
      %vm371 = vcmp.eq.f32.partialorder %v370, 8.507059e+37
      %v372 = vand.u32 %v345, 2147483648
      %v373 = vor.u32 1.1754944e-38, %v372
      %v374 = vsel %vm371, %v373, %v369
      %v375 = vmul.f32 1.0, %v374
      %v376 = vmul.f32 %v329, %v360
      %v377 = vmul.f32 %v331, %v375
      %vm378 = vcmask 195584
      %v379 = vsel %vm378, %v376, 0.0
      %v380 = vsel %vm378, %v377, 0.0
      %v381 = vadd.f32 %v379, %v380
      %v382 = vrot.slane %v381, 4
      %v383 = vadd.f32 %v381, %v382
      %v384 = vrot.slane %v383, 2
      %v385 = vadd.f32 %v383, %v384
      %v386 = vrot.slane %v385, 1
      %v387 = vadd.f32 %v385, %v386
      %v388 = vmul.f32 %v376, %v376
      %v389 = vmul.f32 %v377, %v377
      %v390 = vsel %vm378, %v388, 0.0
      %v391 = vsel %vm378, %v389, 0.0
      %v392 = vadd.f32 %v390, %v391
      %v393 = vrot.slane %v392, 4
      %v394 = vadd.f32 %v392, %v393
      %v395 = vrot.slane %v394, 2
      %v396 = vadd.f32 %v394, %v395
      %v397 = vrot.slane %v396, 1
      %v398 = vadd.f32 %v396, %v397
      %vm399 = vcmask 1040384
      %v400 = vsel %vm399, %v387, %v398
      %v401 = vld [vmem:[%s3] sm:$0xff]
      %v402 = vld [vmem:[%s3 + $0x8] sm:$0xff]
      %v403 = vld [vmem:[%s3 + $0x10] sm:$0xff]
      %v405 = vsel %vm378, %v400, 0
      %407 = vmatpush.msra.mxu0 0.0
      %408 = vmatpush.msra.mxu0 0.0
      %409 = vmatpush.msra.mxu0 0.0
      %410 = vmatpush.msra.mxu0 0.0
      %411 = vmatpush.msra.mxu0 0.0
      %412 = vmatpush.msra.mxu0 0.0
      %413 = vmatpush.msra.mxu0 0.0
      %414 = vmatpush.msra.mxu0 0.0
      %415 = vmatpush.msra.mxu0 0.0
      %416 = vmatpush.msra.mxu0 0.0
      %417 = vmatpush.msra.mxu0 0.0
      %418 = vmatpush.msra.mxu0 0.0
      %419 = vmatpush.msra.mxu0 0.0
      %420 = vmatpush.msra.mxu0 %v403
      %421 = vmatpush.msra.mxu0 %v402
      %422 = vmatpush.msra.mxu0 %v401
      %423 = vmatmul.f32.gmra.mxu0 %v405
      %v424 = vpop.f32.mrf.mxu0
      %v425 = vadd.f32 0.0, %v424
      %426 = vdwg.mxu0
      %v427 = vmul.f32 %v425, %v425
      %v429 = vrot.slane %v427, 7
      %v431 = vsub.f32 %v425, %v429
      %v432 = vadd.f32 %v431, 1e-05
      %v433 = vrsqrt.pop %v432
      %v434 = vmul.f32 %v433, %v432
      %v435 = vmul.f32 %v434, %v433
      %v436 = vmul.f32 0.5, %v435
      %v437 = vsub.f32 1.5, %v436
      %v438 = vmul.f32 %v433, %v437
      %vm439 = vweird.f32 %v432
      %vm440 = vweird.f32 %v433
      %vm441 = vmor %vm439, %vm440
      %v442 = vsel %vm441, %v433, %v438
      %v443 = vsel %vm399, %v425, %v442
      %v444 = vld [vmem:[%s4] sm:$0xff]
      %vm445 = vcmask 64512
      %v447 = vsel %vm445, %v443, 0
      %449 = vmatpush.msra.mxu0 0.0
      %450 = vmatpush.msra.mxu0 0.0
      %451 = vmatpush.msra.mxu0 0.0
      %452 = vmatpush.msra.mxu0 0.0
      %453 = vmatpush.msra.mxu0 0.0
      %454 = vmatpush.msra.mxu0 0.0
      %455 = vmatpush.msra.mxu0 0.0
      %456 = vmatpush.msra.mxu0 0.0
      %457 = vmatpush.msra.mxu0 0.0
      %458 = vmatpush.msra.mxu0 0.0
      %459 = vmatpush.msra.mxu0 0.0
      %460 = vmatpush.msra.mxu0 0.0
      %461 = vmatpush.msra.mxu0 0.0
      %462 = vmatpush.msra.mxu0 0.0
      %463 = vmatpush.msra.mxu0 0.0
      %464 = vmatpush.msra.mxu0 %v444
      %465 = vmatmul.f32.gmra.mxu0 %v447
      %v466 = vpop.f32.mrf.mxu0
      %v467 = vadd.f32 0.0, %v466
      %468 = vdwg.mxu0
      %v469 = vld [vmem:[%s2] sm:$0xff]
      %v470 = vld [vmem:[%s2 + $0x8] sm:$0xff]
      %v471 = vperm.slane %v467, 0
      %v472 = vsub.f32 %v376, %v471
      %v473 = vsub.f32 %v377, %v471
      %v474 = vperm.slane %v467, 1
      %v475 = vmul.f32 %v472, %v474
      %v476 = vmul.f32 %v473, %v474
      %478 = vset.pattern.permute.xlu0 1
      %479 = vperm.xlu0 %478, %v469
      %v480 = vpop.permute.xlu0 %479
      %483 = vset.pattern.permute.xlu0 1
      %484 = vperm.xlu0 %483, %v470
      %v485 = vpop.permute.xlu0 %484
      %v487 = vmul.f32 %v475, %v480
      %v488 = vmul.f32 %v476, %v485
      %489 = vset.pattern.permute.xlu0 2
      %490 = vperm.xlu0 %489, %v469
      %v491 = vpop.permute.xlu0 %490
      %493 = vset.pattern.permute.xlu0 2
      %494 = vperm.xlu0 %493, %v470
      %v495 = vpop.permute.xlu0 %494
      %v497 = vadd.f32 %v487, %v491
      %v498 = vadd.f32 %v488, %v495
      %vm499 = vcmp.gt.f32.partialorder %v497, 0.0
      %vm500 = vcmp.gt.f32.partialorder %v498, 0.0
      %501 = vset.pattern.permute.xlu0 3
      %502 = vperm.xlu0 %501, %v469
      %v503 = vpop.permute.xlu0 %502
      %505 = vset.pattern.permute.xlu0 3
      %506 = vperm.xlu0 %505, %v470
      %v507 = vpop.permute.xlu0 %506
      %v509 = vmul.f32 %v503, %v497
      %v510 = vmul.f32 %v507, %v498
      %v511 = vsel %vm499, %v497, %v509
      %v512 = vsel %vm500, %v498, %v510
      %513 = vst.msk [vmem:[%s224] sm:$0xff] %vm378, %v511
      %514 = vst.msk [vmem:[%s224 + $0x8] sm:$0xff] %vm378, %v512
      %p515 = scmp.lt.s32.totalorder %s16, 1
      %s516 = scalar_select %p515, %s16, 1
      %s517 = smul.addr %s516, 2
      %s518 = smul.addr %s517, 8
      %s519 = scalar_lea.vmem %s5, %s518
      // Predicated region
      $region41: #{_lambda_.46} parent=39 // pred_check
        %p520 = pneg %p144
      $region42: #{_lambda_.46} parent=39 // pred_check_branch
        %522 = sbr.rel (%p520) target = $region44
      $region43: #{_lambda_.46} parent=39 // pred_region
        _
      $region44: #{_lambda_.46} parent=39 // pred_fallthru
        _
    $region40: #{_lambda_.46} parent=5 // pred_fallthru
      _
    %p523 = scmp.le.s32.totalorder 2, %s11
    // Predicated region
    $region45: #{_lambda_.46} parent=5 // pred_check
      %p524 = pneg %p523
    $region46: #{_lambda_.46} parent=5 // pred_check_branch
      %526 = sbr.rel (%p524) target = $region48
    $region47: #{_lambda_.46} parent=5 // pred_region
      %s527 = ssub.s32 %s11, 2
      // Predicated region
      $region49: #{_lambda_.46} parent=47 // pred_check
        %p528 = pneg %p150
      $region50: #{_lambda_.46} parent=47 // pred_check_branch
        %530 = sbr.rel (%p528) target = $region52
      $region51: #{_lambda_.46} parent=47 // pred_region
        %p531 = scmp.lt.s32.totalorder %s17, 1
        %s532 = scalar_select %p531, %s17, 1
        %s533 = smul.addr %s532, 2
        %s534 = smul.addr %s533, 8
        %s535 = scalar_lea.vmem %s5, %s534
      $region52: #{_lambda_.46} parent=47 // pred_fallthru
        _
    $region48: #{_lambda_.46} parent=5 // pred_fallthru
      _
  $region6: #{_lambda_.46} parent=0 // loop_footer
    %s15 = sadd.s32 1, %s11
  $region7: #{_lambda_.46} parent=0 // loop_footer_branch
    %10 = sbr.rel target = $region3
  $region8: #{_lambda_.46} parent=0 // loop_exit
    _

// kernel: _lambda_.49
$region0: #{_lambda_.49}
  #allocation0 [shape = 'u32[]', space=smem, size = 0x4, offset = 0x4, fixed_abs, tag = 'smem constant byte address 0x4 - core index']
  #allocation1 [shape = 'u32[72,128]{1,0:T(1,128)}', space=vmem, size = 0x9000, scoped, tag = 'internal scratch']
  %s0 = inlined_call_operand.vmem [shape: bf16[2,96,8], index: 0, kind: input, shape index: {}]
  %s1 = inlined_call_operand.vmem [shape: bf16[128,96], index: 1, kind: input, shape index: {}]
  %s2 = inlined_call_operand.vmem [shape: f32[128,4], index: 2, kind: input, shape index: {}]
  %s3 = inlined_call_operand.vmem [shape: f32[8,8], index: 3, kind: input, shape index: {}]
  %s4 = inlined_call_operand.vmem [shape: f32[8,8], index: 4, kind: input, shape index: {}]
  %s5 = inlined_call_operand.vmem [shape: f32[2,64,8], index: 5, kind: output, shape index: {}]
  %s6 = sld [smem:[#allocation0]]
  $region53: #{_lambda_.49} parent=0
    _
  %s8 = ssub.s32 1, %s6
  %s9 = scalar_select 0, %s8, %s6
  loop: start=0, step=1, limit=4
  $region2: #{_lambda_.49} parent=0 // loop_pre_header
    _
  $region3: #{_lambda_.49} parent=0 // loop_header
    %s11 = sphi 0, %s15
    %p12 = scmp.ge.s32.totalorder %s11, 4
    %s21 = sphi 0, %s23
    %s24 = sphi 0, %s21
    %s25 = sphi 0, %s24
    %s41 = sphi 0, %s25
    %s45 = sphi 0, %s45
    %s47 = sphi 0, %s45
    %s48 = sphi 0, %s47
    %s62 = sphi 0, %s48
    %s66 = sphi 0, %s66
    %s68 = sphi 0, %s66
    %s69 = sphi 0, %s68
    %s83 = sphi 0, %s69
    %s87 = sphi 0, %s87
    %s89 = sphi 0, %s87
    %s90 = sphi 0, %s89
    %s104 = sphi 0, %s90
    %s108 = sphi 0, %s108
    %s110 = sphi 0, %s108
    %s111 = sphi 0, %s110
    %s125 = sphi 0, %s111
    %s131 = sphi 0, %s133
    %s134 = sphi 0, %s131
    %s135 = sphi 0, %s134
    %s151 = sphi 0, %s135
  $region4: #{_lambda_.49} parent=0 // loop_header_branch
    %14 = sbr.rel (%p12) target = $region8
  $region5: #{_lambda_.49} parent=0 // loop_body
    %s16 = ssub.s32 %s11, 1
    %s17 = ssub.s32 %s11, 2
    %s18 = sadd.s32 %s11, 1
    %s19 = ssub.s32 %s11, %s18
    %p20 = scmp.eq.s32.totalorder %s19, 0
    %s22 = sadd.s32 %s21, 1
    %s23 = scalar_select %p20, %s21, %s22
    %p26 = pneg %p20
    %p27 = scmp.eq.s32.totalorder %s11, 1
    %p28 = por %p26, %p27
    %p29 = scmp.ne.s32.totalorder %s21, %s24
    %p30 = scmp.eq.s32.totalorder %s11, 0
    %p31 = por %p29, %p30
    %p32 = scmp.ne.s32.totalorder %s21, %s24
    %p33 = scmp.eq.s32.totalorder %s16, 1
    %p34 = por %p32, %p33
    %p35 = scmp.ne.s32.totalorder %s24, %s25
    %p36 = scmp.eq.s32.totalorder %s16, 0
    %p37 = por %p35, %p36
    %p38 = scmp.ne.s32.totalorder %s24, %s25
    %p39 = scmp.eq.s32.totalorder %s17, 1
    %p40 = por %p38, %p39
    %p42 = scmp.ne.s32.totalorder %s25, %s41
    %p43 = scmp.eq.s32.totalorder %s17, 0
    %p44 = por %p42, %p43
    %s46 = sadd.s32 %s45, 1
    %p49 = scmp.eq.s32.totalorder %s11, 1
    %p50 = scmp.ne.s32.totalorder %s45, %s47
    %p51 = scmp.eq.s32.totalorder %s11, 0
    %p52 = por %p50, %p51
    %p53 = scmp.ne.s32.totalorder %s45, %s47
    %p54 = scmp.eq.s32.totalorder %s16, 1
    %p55 = por %p53, %p54
    %p56 = scmp.ne.s32.totalorder %s47, %s48
    %p57 = scmp.eq.s32.totalorder %s16, 0
    %p58 = por %p56, %p57
    %p59 = scmp.ne.s32.totalorder %s47, %s48
    %p60 = scmp.eq.s32.totalorder %s17, 1
    %p61 = por %p59, %p60
    %p63 = scmp.ne.s32.totalorder %s48, %s62
    %p64 = scmp.eq.s32.totalorder %s17, 0
    %p65 = por %p63, %p64
    %s67 = sadd.s32 %s66, 1
    %p70 = scmp.eq.s32.totalorder %s11, 1
    %p71 = scmp.ne.s32.totalorder %s66, %s68
    %p72 = scmp.eq.s32.totalorder %s11, 0
    %p73 = por %p71, %p72
    %p74 = scmp.ne.s32.totalorder %s66, %s68
    %p75 = scmp.eq.s32.totalorder %s16, 1
    %p76 = por %p74, %p75
    %p77 = scmp.ne.s32.totalorder %s68, %s69
    %p78 = scmp.eq.s32.totalorder %s16, 0
    %p79 = por %p77, %p78
    %p80 = scmp.ne.s32.totalorder %s68, %s69
    %p81 = scmp.eq.s32.totalorder %s17, 1
    %p82 = por %p80, %p81
    %p84 = scmp.ne.s32.totalorder %s69, %s83
    %p85 = scmp.eq.s32.totalorder %s17, 0
    %p86 = por %p84, %p85
    %s88 = sadd.s32 %s87, 1
    %p91 = scmp.eq.s32.totalorder %s11, 1
    %p92 = scmp.ne.s32.totalorder %s87, %s89
    %p93 = scmp.eq.s32.totalorder %s11, 0
    %p94 = por %p92, %p93
    %p95 = scmp.ne.s32.totalorder %s87, %s89
    %p96 = scmp.eq.s32.totalorder %s16, 1
    %p97 = por %p95, %p96
    %p98 = scmp.ne.s32.totalorder %s89, %s90
    %p99 = scmp.eq.s32.totalorder %s16, 0
    %p100 = por %p98, %p99
    %p101 = scmp.ne.s32.totalorder %s89, %s90
    %p102 = scmp.eq.s32.totalorder %s17, 1
    %p103 = por %p101, %p102
    %p105 = scmp.ne.s32.totalorder %s90, %s104
    %p106 = scmp.eq.s32.totalorder %s17, 0
    %p107 = por %p105, %p106
    %s109 = sadd.s32 %s108, 1
    %p112 = scmp.eq.s32.totalorder %s11, 1
    %p113 = scmp.ne.s32.totalorder %s108, %s110
    %p114 = scmp.eq.s32.totalorder %s11, 0
    %p115 = por %p113, %p114
    %p116 = scmp.ne.s32.totalorder %s108, %s110
    %p117 = scmp.eq.s32.totalorder %s16, 1
    %p118 = por %p116, %p117
    %p119 = scmp.ne.s32.totalorder %s110, %s111
    %p120 = scmp.eq.s32.totalorder %s16, 0
    %p121 = por %p119, %p120
    %p122 = scmp.ne.s32.totalorder %s110, %s111
    %p123 = scmp.eq.s32.totalorder %s17, 1
    %p124 = por %p122, %p123
    %p126 = scmp.ne.s32.totalorder %s111, %s125
    %p127 = scmp.eq.s32.totalorder %s17, 0
    %p128 = por %p126, %p127
    %s129 = ssub.s32 %s11, %s18
    %p130 = scmp.eq.s32.totalorder %s129, 0
    %s132 = sadd.s32 %s131, 1
    %s133 = scalar_select %p130, %s131, %s132
    %p136 = pneg %p130
    %p137 = scmp.eq.s32.totalorder %s11, 1
    %p138 = por %p136, %p137
    %p139 = scmp.ne.s32.totalorder %s131, %s134
    %p140 = scmp.eq.s32.totalorder %s11, 0
    %p141 = por %p139, %p140
    %p142 = scmp.ne.s32.totalorder %s131, %s134
    %p143 = scmp.eq.s32.totalorder %s16, 1
    %p144 = por %p142, %p143
    %p145 = scmp.ne.s32.totalorder %s134, %s135
    %p146 = scmp.eq.s32.totalorder %s16, 0
    %p147 = por %p145, %p146
    %p148 = scmp.ne.s32.totalorder %s134, %s135
    %p149 = scmp.eq.s32.totalorder %s17, 1
    %p150 = por %p148, %p149
    %p152 = scmp.ne.s32.totalorder %s135, %s151
    %p153 = scmp.eq.s32.totalorder %s17, 0
    %p154 = por %p152, %p153
    %p155 = scmp.le.s32.totalorder 1, %s11
    %p156 = scmp.lt.s32.totalorder %s11, 3
    %p157 = pnand %p155, %p156
    %p158 = pneg %p157
    // Predicated region
    $region9: #{_lambda_.49} parent=5 // pred_check
      _
    $region10: #{_lambda_.49} parent=5 // pred_check_branch
      %160 = sbr.rel (%p157) target = $region12
    $region11: #{_lambda_.49} parent=5 // pred_region
      %s161 = ssub.s32 %s11, 1
      // Predicated region
      $region13: #{_lambda_.49} parent=11 // pred_check
        %p162 = pneg %p58
      $region14: #{_lambda_.49} parent=11 // pred_check_branch
        %164 = sbr.rel (%p162) target = $region16
      $region15: #{_lambda_.49} parent=11 // pred_region
        _
      $region16: #{_lambda_.49} parent=11 // pred_fallthru
        _
      // Predicated region
      $region17: #{_lambda_.49} parent=11 // pred_check
        %p165 = pneg %p79
      $region18: #{_lambda_.49} parent=11 // pred_check_branch
        %167 = sbr.rel (%p165) target = $region20
      $region19: #{_lambda_.49} parent=11 // pred_region
        _
      $region20: #{_lambda_.49} parent=11 // pred_fallthru
        _
      // Predicated region
      $region21: #{_lambda_.49} parent=11 // pred_check
        %p168 = pneg %p100
      $region22: #{_lambda_.49} parent=11 // pred_check_branch
        %170 = sbr.rel (%p168) target = $region24
      $region23: #{_lambda_.49} parent=11 // pred_region
        _
      $region24: #{_lambda_.49} parent=11 // pred_fallthru
        _
      // Predicated region
      $region25: #{_lambda_.49} parent=11 // pred_check
        %p171 = pneg %p121
      $region26: #{_lambda_.49} parent=11 // pred_check_branch
        %173 = sbr.rel (%p171) target = $region28
      $region27: #{_lambda_.49} parent=11 // pred_region
        _
      $region28: #{_lambda_.49} parent=11 // pred_fallthru
        _
    $region12: #{_lambda_.49} parent=5 // pred_fallthru
      _
    %p174 = scmp.lt.s32.totalorder %s11, 2
    // Predicated region
    $region29: #{_lambda_.49} parent=5 // pred_check
      %p175 = pneg %p174
    $region30: #{_lambda_.49} parent=5 // pred_check_branch
      %177 = sbr.rel (%p175) target = $region32
    $region31: #{_lambda_.49} parent=5 // pred_region
      // Predicated region
      $region33: #{_lambda_.49} parent=31 // pred_check
        %p178 = pneg %p31
      $region34: #{_lambda_.49} parent=31 // pred_check_branch
        %180 = sbr.rel (%p178) target = $region36
      $region35: #{_lambda_.49} parent=31 // pred_region
        %p181 = scmp.lt.s32.totalorder %s11, 1
        %s182 = scalar_select %p181, %s11, 1
        %s183 = smul.addr %s182, 12
        %s184 = smul.addr %s183, 4
        %s185 = scalar_lea.vmem %s0, %s184
      $region36: #{_lambda_.49} parent=31 // pred_fallthru
        _
    $region32: #{_lambda_.49} parent=5 // pred_fallthru
      _
    %p186 = scmp.le.s32.totalorder 1, %s11
    %p187 = scmp.lt.s32.totalorder %s11, 3
    %p188 = pnand %p186, %p187
    %p189 = pneg %p188
    // Predicated region
    $region37: #{_lambda_.49} parent=5 // pred_check
      _
    $region38: #{_lambda_.49} parent=5 // pred_check_branch
      %191 = sbr.rel (%p188) target = $region40
    $region39: #{_lambda_.49} parent=5 // pred_region
      %s192 = ssub.s32 %s11, 1
      %p193 = scmp.lt.s32.totalorder %s16, 1
      %s194 = scalar_select %p193, %s16, 1
      %s195 = smul.addr %s194, 12
      %s196 = smul.addr %s195, 4
      %s197 = scalar_lea.vmem %s0, %s196
      %p198 = pneg %p37
      %p199 = pneg %p34
      %p200 = pneg %p58
      %p201 = pneg %p55
      %p202 = pneg %p79
      %p203 = pneg %p76
      %p204 = pneg %p100
      %p205 = pneg %p97
      %p206 = pneg %p121
      %p207 = pneg %p118
      %p208 = pneg %p147
      %p209 = pneg %p144
      %p210 = scmp.lt.s32.totalorder %s16, 1
      %s211 = scalar_select %p210, %s16, 1
      %s212 = smul.addr %s211, 8
      %s213 = smul.addr %s212, 8
      %s214 = scalar_lea.vmem %s5, %s213
      %p215 = scmp.lt.s32.totalorder %s16, 1
      %s216 = scalar_select %p215, %s16, 1
      %s217 = smul.addr %s216, 12
      %s218 = smul.addr %s217, 4
      %s219 = scalar_lea.vmem %s0, %s218
      %p220 = scmp.lt.s32.totalorder %s16, 1
      %s221 = scalar_select %p220, %s16, 1
      %s222 = smul.addr %s221, 8
      %s223 = smul.addr %s222, 8
      %s224 = scalar_lea.vmem %s5, %s223
      %v226 = vld [vmem:[%s1] sm:$0xf]
      %v227 = vld [vmem:[%s1 + $0x4] sm:$0xf]
      %v228 = vld [vmem:[%s1 + $0x8] sm:$0xf]
      %v229 = vld [vmem:[%s1 + $0xc] sm:$0xf]
      %v230 = vld [vmem:[%s1 + $0x10] sm:$0xf]
      %v231 = vld [vmem:[%s1 + $0x14] sm:$0xf]
      %v232 = vld [vmem:[%s1 + $0x18] sm:$0xf]
      %v233 = vld [vmem:[%s1 + $0x1c] sm:$0xf]
      %v234 = vld [vmem:[%s1 + $0x20] sm:$0xf]
      %v235 = vld [vmem:[%s1 + $0x24] sm:$0xf]
      %v236 = vld [vmem:[%s1 + $0x28] sm:$0xf]
      %v237 = vld [vmem:[%s1 + $0x2c] sm:$0xf]
      %v238 = vld [vmem:[%s1 + $0x30] sm:$0xf]
      %v239 = vld [vmem:[%s1 + $0x34] sm:$0xf]
      %v240 = vld [vmem:[%s1 + $0x38] sm:$0xf]
      %v241 = vld [vmem:[%s1 + $0x3c] sm:$0xf]
      %v242 = vld [vmem:[%s219] sm:$0xf]
      %v243 = vld [vmem:[%s219 + $0x4] sm:$0xf]
      %v244 = vld [vmem:[%s219 + $0x8] sm:$0xf]
      %v245 = vld [vmem:[%s219 + $0xc] sm:$0xf]
      %v246 = vld [vmem:[%s219 + $0x10] sm:$0xf]
      %v247 = vld [vmem:[%s219 + $0x14] sm:$0xf]
      %v248 = vld [vmem:[%s219 + $0x18] sm:$0xf]
      %v249 = vld [vmem:[%s219 + $0x1c] sm:$0xf]
      %v250 = vld [vmem:[%s219 + $0x20] sm:$0xf]
      %v251 = vld [vmem:[%s219 + $0x24] sm:$0xf]
      %v252 = vld [vmem:[%s219 + $0x28] sm:$0xf]
      %v253 = vld [vmem:[%s219 + $0x2c] sm:$0xf]
      %v254 = vld [vmem:[%s2] sm:$0xff]
      %v255 = vld [vmem:[%s2 + $0x8] sm:$0xff]
      %v256 = vld [vmem:[%s2 + $0x10] sm:$0xff]
      %v257 = vld [vmem:[%s2 + $0x18] sm:$0xff]
      %v258 = vld [vmem:[%s2 + $0x20] sm:$0xff]
      %v259 = vld [vmem:[%s2 + $0x28] sm:$0xff]
      %v260 = vld [vmem:[%s2 + $0x30] sm:$0xff]
      %v261 = vld [vmem:[%s2 + $0x38] sm:$0xff]
      %v262 = vld [vmem:[%s2 + $0x40] sm:$0xff]
      %v263 = vld [vmem:[%s2 + $0x48] sm:$0xff]
      %v264 = vld [vmem:[%s2 + $0x50] sm:$0xff]
      %v265 = vld [vmem:[%s2 + $0x58] sm:$0xff]
      %v266 = vld [vmem:[%s2 + $0x60] sm:$0xff]
      %v267 = vld [vmem:[%s2 + $0x68] sm:$0xff]
      %v268 = vld [vmem:[%s2 + $0x70] sm:$0xff]
      %v269 = vld [vmem:[%s2 + $0x78] sm:$0xff]
      %271 = vset.pattern.permute.xlu0 0
      %272 = vperm.xlu0 %271, %v254
      %v273 = vpop.permute.xlu0 %272
      %276 = vset.pattern.permute.xlu0 0
      %277 = vperm.xlu0 %276, %v255
      %v278 = vpop.permute.xlu0 %277
      %281 = vset.pattern.permute.xlu0 0
      %282 = vperm.xlu0 %281, %v256
      %v283 = vpop.permute.xlu0 %282
      %286 = vset.pattern.permute.xlu0 0
      %287 = vperm.xlu0 %286, %v257
      %v288 = vpop.permute.xlu0 %287
      %291 = vset.pattern.permute.xlu0 0
      %292 = vperm.xlu0 %291, %v258
      %v293 = vpop.permute.xlu0 %292
      %296 = vset.pattern.permute.xlu0 0
      %297 = vperm.xlu0 %296, %v259
      %v298 = vpop.permute.xlu0 %297
      %301 = vset.pattern.permute.xlu0 0
      %302 = vperm.xlu0 %301, %v260
      %v303 = vpop.permute.xlu0 %302
      %306 = vset.pattern.permute.xlu0 0
      %307 = vperm.xlu0 %306, %v261
      %v308 = vpop.permute.xlu0 %307
      %311 = vset.pattern.permute.xlu0 0
      %312 = vperm.xlu0 %311, %v262
      %v313 = vpop.permute.xlu0 %312
      %316 = vset.pattern.permute.xlu0 0
      %317 = vperm.xlu0 %316, %v263
      %v318 = vpop.permute.xlu0 %317
      %321 = vset.pattern.permute.xlu0 0
      %322 = vperm.xlu0 %321, %v264
      %v323 = vpop.permute.xlu0 %322
      %326 = vset.pattern.permute.xlu0 0
      %327 = vperm.xlu0 %326, %v265
      %v328 = vpop.permute.xlu0 %327
      %331 = vset.pattern.permute.xlu0 0
      %332 = vperm.xlu0 %331, %v266
      %v333 = vpop.permute.xlu0 %332
      %336 = vset.pattern.permute.xlu0 0
      %337 = vperm.xlu0 %336, %v267
      %v338 = vpop.permute.xlu0 %337
      %341 = vset.pattern.permute.xlu0 0
      %342 = vperm.xlu0 %341, %v268
      %v343 = vpop.permute.xlu0 %342
      %346 = vset.pattern.permute.xlu0 0
      %347 = vperm.xlu0 %346, %v269
      %v348 = vpop.permute.xlu0 %347
      %v366 = vunpack.c.l.b16 %v226
      %v367 = vunpack.c.l.b16 %v227
      %v368 = vunpack.c.l.b16 %v228
      %v369 = vunpack.c.l.b16 %v229
      %v370 = vunpack.c.l.b16 %v230
      %v371 = vunpack.c.l.b16 %v231
      %v372 = vunpack.c.l.b16 %v232
      %v373 = vunpack.c.l.b16 %v233
      %v374 = vunpack.c.l.b16 %v234
      %v375 = vunpack.c.l.b16 %v235
      %v376 = vunpack.c.l.b16 %v236
      %v377 = vunpack.c.l.b16 %v237
      %v378 = vunpack.c.l.b16 %v238
      %v379 = vunpack.c.l.b16 %v239
      %v380 = vunpack.c.l.b16 %v240
      %v381 = vunpack.c.l.b16 %v241
      %v382 = vpack.c.b16 %v367, %v366
      %v383 = vpack.c.b16 %v369, %v368
      %v384 = vpack.c.b16 %v371, %v370
      %v385 = vpack.c.b16 %v373, %v372
      %v386 = vpack.c.b16 %v375, %v374
      %v387 = vpack.c.b16 %v377, %v376
      %v388 = vpack.c.b16 %v379, %v378
      %v389 = vpack.c.b16 %v381, %v380
      %v402 = vunpack.c.l.b16 %v242
      %v403 = vunpack.c.l.b16 %v243
      %v404 = vunpack.c.l.b16 %v244
      %v405 = vunpack.c.l.b16 %v245
      %v406 = vunpack.c.l.b16 %v246
      %v407 = vunpack.c.l.b16 %v247
      %v408 = vunpack.c.l.b16 %v248
      %v409 = vunpack.c.l.b16 %v249
      %v410 = vunpack.c.l.b16 %v250
      %v411 = vunpack.c.l.b16 %v251
      %v412 = vunpack.c.l.b16 %v252
      %v413 = vunpack.c.l.b16 %v253
      %v414 = vpack.c.b16 %v403, %v402
      %v415 = vpack.c.b16 %v405, %v404
      %v416 = vpack.c.b16 %v407, %v406
      %v417 = vpack.c.b16 %v409, %v408
      %v418 = vpack.c.b16 %v411, %v410
      %v419 = vpack.c.b16 %v413, %v412
      %vm426 = vcmask 785408
      %v428 = vsel %vm426, %v382, 0
      %v431 = vsel %vm426, %v383, 0
      %v434 = vsel %vm426, %v384, 0
      %v437 = vsel %vm426, %v385, 0
      %v440 = vsel %vm426, %v386, 0
      %v443 = vsel %vm426, %v387, 0
      %v446 = vsel %vm426, %v388, 0
      %v449 = vsel %vm426, %v389, 0
      %451 = vmatpush.bf16.msra.mxu0 0
      %452 = vmatpush.bf16.msra.mxu0 0
      %453 = vmatpush.bf16.msra.mxu0 %v419
      %454 = vmatpush.bf16.msra.mxu0 %v418
      %455 = vmatpush.bf16.msra.mxu0 %v417
      %456 = vmatpush.bf16.msra.mxu0 %v416
      %457 = vmatpush.bf16.msra.mxu0 %v415
      %458 = vmatpush.bf16.msra.mxu0 %v414
      %459 = vmatmul.bf16.gmra.mxu0 %v428
      %v460 = vpop.f32.mrf.mxu0
      %v461 = vadd.f32 %v273, %v460
      %v462 = vpop.f32.mrf.mxu0
      %v463 = vadd.f32 %v278, %v462
      %464 = vmatmul.bf16.gmra.mxu0 %v431
      %v465 = vpop.f32.mrf.mxu0
      %v466 = vadd.f32 %v283, %v465
      %v467 = vpop.f32.mrf.mxu0
      %v468 = vadd.f32 %v288, %v467
      %469 = vmatmul.bf16.gmra.mxu0 %v434
      %v470 = vpop.f32.mrf.mxu0
      %v471 = vadd.f32 %v293, %v470
      %v472 = vpop.f32.mrf.mxu0
      %v473 = vadd.f32 %v298, %v472
      %474 = vmatmul.bf16.gmra.mxu0 %v437
      %v475 = vpop.f32.mrf.mxu0
      %v476 = vadd.f32 %v303, %v475
      %v477 = vpop.f32.mrf.mxu0
      %v478 = vadd.f32 %v308, %v477
      %479 = vmatmul.bf16.gmra.mxu0 %v440
      %v480 = vpop.f32.mrf.mxu0
      %v481 = vadd.f32 %v313, %v480
      %v482 = vpop.f32.mrf.mxu0
      %v483 = vadd.f32 %v318, %v482
      %484 = vmatmul.bf16.gmra.mxu0 %v443
      %v485 = vpop.f32.mrf.mxu0
      %v486 = vadd.f32 %v323, %v485
      %v487 = vpop.f32.mrf.mxu0
      %v488 = vadd.f32 %v328, %v487
      %489 = vmatmul.bf16.gmra.mxu0 %v446
      %v490 = vpop.f32.mrf.mxu0
      %v491 = vadd.f32 %v333, %v490
      %v492 = vpop.f32.mrf.mxu0
      %v493 = vadd.f32 %v338, %v492
      %494 = vmatmul.bf16.gmra.mxu0 %v449
      %v495 = vpop.f32.mrf.mxu0
      %v496 = vadd.f32 %v343, %v495
      %v497 = vpop.f32.mrf.mxu0
      %v498 = vadd.f32 %v348, %v497
      %499 = vdwg.mxu0
      %v500 = vxor.u32 %v481, 2147483648
      %v501 = vxor.u32 %v483, 2147483648
      %v502 = vxor.u32 %v486, 2147483648
      %v503 = vxor.u32 %v488, 2147483648
      %v504 = vxor.u32 %v491, 2147483648
      %v505 = vxor.u32 %v493, 2147483648
      %v506 = vxor.u32 %v496, 2147483648
      %v507 = vxor.u32 %v498, 2147483648
      %v508 = vmul.f32 %v500, 1.442695
      %v509 = vpow.pop %v508
      %v510 = vmul.f32 %v501, 1.442695
      %v511 = vpow.pop %v510
      %v512 = vmul.f32 %v502, 1.442695
      %v513 = vpow.pop %v512
      %v514 = vmul.f32 %v503, 1.442695
      %v515 = vpow.pop %v514
      %v516 = vmul.f32 %v504, 1.442695
      %v517 = vpow.pop %v516
      %v518 = vmul.f32 %v505, 1.442695
      %v519 = vpow.pop %v518
      %v520 = vmul.f32 %v506, 1.442695
      %v521 = vpow.pop %v520
      %v522 = vmul.f32 %v507, 1.442695
      %v523 = vpow.pop %v522
      %v524 = vadd.f32 %v509, 1.0
      %v525 = vadd.f32 %v511, 1.0
      %v526 = vadd.f32 %v513, 1.0
      %v527 = vadd.f32 %v515, 1.0
      %v528 = vadd.f32 %v517, 1.0
      %v529 = vadd.f32 %v519, 1.0
      %v530 = vadd.f32 %v521, 1.0
      %v531 = vadd.f32 %v523, 1.0
      %v532 = vrcp.pop %v524
      %v533 = vmul.f32 %v524, %v532
      %v534 = vsub.f32 1.0, %v533
      %v535 = vmul.f32 %v532, %v534
      %v536 = vadd.f32 %v532, %v535
      %vm537 = vweird.f32 %v524
      %vm538 = vweird.f32 %v532
      %vm539 = vmor %vm537, %vm538
      %v540 = vsel %vm539, %v532, %v536
      %v541 = vand.u32 2147483647, %v524
      %vm542 = vcmp.eq.f32.partialorder %v541, 8.507059e+37
      %v543 = vand.u32 %v524, 2147483648
      %v544 = vor.u32 1.1754944e-38, %v543
      %v545 = vsel %vm542, %v544, %v540
      %v546 = vmul.f32 1.0, %v545
      %v547 = vrcp.pop %v525
      %v548 = vmul.f32 %v525, %v547
      %v549 = vsub.f32 1.0, %v548
      %v550 = vmul.f32 %v547, %v549
      %v551 = vadd.f32 %v547, %v550
      %vm552 = vweird.f32 %v525
      %vm553 = vweird.f32 %v547
      %vm554 = vmor %vm552, %vm553
      %v555 = vsel %vm554, %v547, %v551
      %v556 = vand.u32 2147483647, %v525
      %vm557 = vcmp.eq.f32.partialorder %v556, 8.507059e+37
      %v558 = vand.u32 %v525, 2147483648
      %v559 = vor.u32 1.1754944e-38, %v558
      %v560 = vsel %vm557, %v559, %v555
      %v561 = vmul.f32 1.0, %v560
      %v562 = vrcp.pop %v526
      %v563 = vmul.f32 %v526, %v562
      %v564 = vsub.f32 1.0, %v563
      %v565 = vmul.f32 %v562, %v564
      %v566 = vadd.f32 %v562, %v565
      %vm567 = vweird.f32 %v526
      %vm568 = vweird.f32 %v562
      %vm569 = vmor %vm567, %vm568
      %v570 = vsel %vm569, %v562, %v566
      %v571 = vand.u32 2147483647, %v526
      %vm572 = vcmp.eq.f32.partialorder %v571, 8.507059e+37
      %v573 = vand.u32 %v526, 2147483648
      %v574 = vor.u32 1.1754944e-38, %v573
      %v575 = vsel %vm572, %v574, %v570
      %v576 = vmul.f32 1.0, %v575
      %v577 = vrcp.pop %v527
      %v578 = vmul.f32 %v527, %v577
      %v579 = vsub.f32 1.0, %v578
      %v580 = vmul.f32 %v577, %v579
      %v581 = vadd.f32 %v577, %v580
      %vm582 = vweird.f32 %v527
      %vm583 = vweird.f32 %v577
      %vm584 = vmor %vm582, %vm583
      %v585 = vsel %vm584, %v577, %v581
      %v586 = vand.u32 2147483647, %v527
      %vm587 = vcmp.eq.f32.partialorder %v586, 8.507059e+37
      %v588 = vand.u32 %v527, 2147483648
      %v589 = vor.u32 1.1754944e-38, %v588
      %v590 = vsel %vm587, %v589, %v585
      %v591 = vmul.f32 1.0, %v590
      %v592 = vrcp.pop %v528
      %v593 = vmul.f32 %v528, %v592
      %v594 = vsub.f32 1.0, %v593
      %v595 = vmul.f32 %v592, %v594
      %v596 = vadd.f32 %v592, %v595
      %vm597 = vweird.f32 %v528
      %vm598 = vweird.f32 %v592
      %vm599 = vmor %vm597, %vm598
      %v600 = vsel %vm599, %v592, %v596
      %v601 = vand.u32 2147483647, %v528
      %vm602 = vcmp.eq.f32.partialorder %v601, 8.507059e+37
      %v603 = vand.u32 %v528, 2147483648
      %v604 = vor.u32 1.1754944e-38, %v603
      %v605 = vsel %vm602, %v604, %v600
      %v606 = vmul.f32 1.0, %v605
      %v607 = vrcp.pop %v529
      %v608 = vmul.f32 %v529, %v607
      %v609 = vsub.f32 1.0, %v608
      %v610 = vmul.f32 %v607, %v609
      %v611 = vadd.f32 %v607, %v610
      %vm612 = vweird.f32 %v529
      %vm613 = vweird.f32 %v607
      %vm614 = vmor %vm612, %vm613
      %v615 = vsel %vm614, %v607, %v611
      %v616 = vand.u32 2147483647, %v529
      %vm617 = vcmp.eq.f32.partialorder %v616, 8.507059e+37
      %v618 = vand.u32 %v529, 2147483648
      %v619 = vor.u32 1.1754944e-38, %v618
      %v620 = vsel %vm617, %v619, %v615
      %v621 = vmul.f32 1.0, %v620
      %v622 = vrcp.pop %v530
      %v623 = vmul.f32 %v530, %v622
      %v624 = vsub.f32 1.0, %v623
      %v625 = vmul.f32 %v622, %v624
      %v626 = vadd.f32 %v622, %v625
      %vm627 = vweird.f32 %v530
      %vm628 = vweird.f32 %v622
      %vm629 = vmor %vm627, %vm628
      %v630 = vsel %vm629, %v622, %v626
      %v631 = vand.u32 2147483647, %v530
      %vm632 = vcmp.eq.f32.partialorder %v631, 8.507059e+37
      %v633 = vand.u32 %v530, 2147483648
      %v634 = vor.u32 1.1754944e-38, %v633
      %v635 = vsel %vm632, %v634, %v630
      %v636 = vmul.f32 1.0, %v635
      %v637 = vrcp.pop %v531
      %v638 = vmul.f32 %v531, %v637
      %v639 = vsub.f32 1.0, %v638
      %v640 = vmul.f32 %v637, %v639
      %v641 = vadd.f32 %v637, %v640
      %vm642 = vweird.f32 %v531
      %vm643 = vweird.f32 %v637
      %vm644 = vmor %vm642, %vm643
      %v645 = vsel %vm644, %v637, %v641
      %v646 = vand.u32 2147483647, %v531
      %vm647 = vcmp.eq.f32.partialorder %v646, 8.507059e+37
      %v648 = vand.u32 %v531, 2147483648
      %v649 = vor.u32 1.1754944e-38, %v648
      %v650 = vsel %vm647, %v649, %v645
      %v651 = vmul.f32 1.0, %v650
      %v652 = vmul.f32 %v461, %v546
      %v653 = vmul.f32 %v463, %v561
      %v654 = vmul.f32 %v466, %v576
      %v655 = vmul.f32 %v468, %v591
      %v656 = vmul.f32 %v471, %v606
      %v657 = vmul.f32 %v473, %v621
      %v658 = vmul.f32 %v476, %v636
      %v659 = vmul.f32 %v478, %v651
      %vm660 = vcmask 64512
      %v661 = vsel %vm660, %v652, 0.0
      %v662 = vsel %vm660, %v653, 0.0
      %v663 = vadd.f32 %v661, %v662
      %v664 = vsel %vm660, %v654, 0.0
      %v665 = vadd.f32 %v663, %v664
      %v666 = vsel %vm660, %v655, 0.0
      %v667 = vadd.f32 %v665, %v666
      %v668 = vsel %vm660, %v656, 0.0
      %v669 = vadd.f32 %v667, %v668
      %v670 = vsel %vm660, %v657, 0.0
      %v671 = vadd.f32 %v669, %v670
      %v672 = vsel %vm660, %v658, 0.0
      %v673 = vadd.f32 %v671, %v672
      %v674 = vsel %vm660, %v659, 0.0
      %v675 = vadd.f32 %v673, %v674
      %v676 = vrot.slane %v675, 4
      %v677 = vadd.f32 %v675, %v676
      %v678 = vrot.slane %v677, 2
      %v679 = vadd.f32 %v677, %v678
      %v680 = vrot.slane %v679, 1
      %v681 = vadd.f32 %v679, %v680
      %v682 = vmul.f32 %v652, %v652
      %v683 = vmul.f32 %v653, %v653
      %v684 = vmul.f32 %v654, %v654
      %v685 = vmul.f32 %v655, %v655
      %v686 = vmul.f32 %v656, %v656
      %v687 = vmul.f32 %v657, %v657
      %v688 = vmul.f32 %v658, %v658
      %v689 = vmul.f32 %v659, %v659
      %v690 = vsel %vm660, %v682, 0.0
      %v691 = vsel %vm660, %v683, 0.0
      %v692 = vadd.f32 %v690, %v691
      %v693 = vsel %vm660, %v684, 0.0
      %v694 = vadd.f32 %v692, %v693
      %v695 = vsel %vm660, %v685, 0.0
      %v696 = vadd.f32 %v694, %v695
      %v697 = vsel %vm660, %v686, 0.0
      %v698 = vadd.f32 %v696, %v697
      %v699 = vsel %vm660, %v687, 0.0
      %v700 = vadd.f32 %v698, %v699
      %v701 = vsel %vm660, %v688, 0.0
      %v702 = vadd.f32 %v700, %v701
      %v703 = vsel %vm660, %v689, 0.0
      %v704 = vadd.f32 %v702, %v703
      %v705 = vrot.slane %v704, 4
      %v706 = vadd.f32 %v704, %v705
      %v707 = vrot.slane %v706, 2
      %v708 = vadd.f32 %v706, %v707
      %v709 = vrot.slane %v708, 1
      %v710 = vadd.f32 %v708, %v709
      %vm711 = vcmask 1040384
      %v712 = vsel %vm711, %v681, %v710
      %v713 = vld [vmem:[%s3] sm:$0xff]
      %v715 = vsel %vm660, %v712, 0
      %717 = vmatpush.msra.mxu0 0.0
      %718 = vmatpush.msra.mxu0 0.0
      %719 = vmatpush.msra.mxu0 0.0
      %720 = vmatpush.msra.mxu0 0.0
      %721 = vmatpush.msra.mxu0 0.0
      %722 = vmatpush.msra.mxu0 0.0
      %723 = vmatpush.msra.mxu0 0.0
      %724 = vmatpush.msra.mxu0 0.0
      %725 = vmatpush.msra.mxu0 0.0
      %726 = vmatpush.msra.mxu0 0.0
      %727 = vmatpush.msra.mxu0 0.0
      %728 = vmatpush.msra.mxu0 0.0
      %729 = vmatpush.msra.mxu0 0.0
      %730 = vmatpush.msra.mxu0 0.0
      %731 = vmatpush.msra.mxu0 0.0
      %732 = vmatpush.msra.mxu0 %v713
      %733 = vmatmul.f32.gmra.mxu0 %v715
      %v734 = vpop.f32.mrf.mxu0
      %v735 = vadd.f32 0.0, %v734
      %736 = vdwg.mxu0
      %v737 = vmul.f32 %v735, %v735
      %v739 = vrot.slane %v737, 7
      %v741 = vsub.f32 %v735, %v739
      %v742 = vadd.f32 %v741, 1e-05
      %v743 = vrsqrt.pop %v742
      %v744 = vmul.f32 %v743, %v742
      %v745 = vmul.f32 %v744, %v743
      %v746 = vmul.f32 0.5, %v745
      %v747 = vsub.f32 1.5, %v746
      %v748 = vmul.f32 %v743, %v747
      %vm749 = vweird.f32 %v742
      %vm750 = vweird.f32 %v743
      %vm751 = vmor %vm749, %vm750
      %v752 = vsel %vm751, %v743, %v748
      %v753 = vsel %vm711, %v735, %v752
      %v754 = vld [vmem:[%s4] sm:$0xff]
      %v756 = vsel %vm660, %v753, 0
      %758 = vmatpush.msra.mxu0 0.0
      %759 = vmatpush.msra.mxu0 0.0
      %760 = vmatpush.msra.mxu0 0.0
      %761 = vmatpush.msra.mxu0 0.0
      %762 = vmatpush.msra.mxu0 0.0
      %763 = vmatpush.msra.mxu0 0.0
      %764 = vmatpush.msra.mxu0 0.0
      %765 = vmatpush.msra.mxu0 0.0
      %766 = vmatpush.msra.mxu0 0.0
      %767 = vmatpush.msra.mxu0 0.0
      %768 = vmatpush.msra.mxu0 0.0
      %769 = vmatpush.msra.mxu0 0.0
      %770 = vmatpush.msra.mxu0 0.0
      %771 = vmatpush.msra.mxu0 0.0
      %772 = vmatpush.msra.mxu0 0.0
      %773 = vmatpush.msra.mxu0 %v754
      %774 = vmatmul.f32.gmra.mxu0 %v756
      %v775 = vpop.f32.mrf.mxu0
      %v776 = vadd.f32 0.0, %v775
      %777 = vdwg.mxu0
      %v778 = vld [vmem:[%s2] sm:$0xff]
      %v779 = vld [vmem:[%s2 + $0x8] sm:$0xff]
      %v780 = vld [vmem:[%s2 + $0x10] sm:$0xff]
      %v781 = vld [vmem:[%s2 + $0x18] sm:$0xff]
      %v782 = vld [vmem:[%s2 + $0x20] sm:$0xff]
      %v783 = vld [vmem:[%s2 + $0x28] sm:$0xff]
      %v784 = vld [vmem:[%s2 + $0x30] sm:$0xff]
      %v785 = vld [vmem:[%s2 + $0x38] sm:$0xff]
      %v786 = vperm.slane %v776, 0
      %v787 = vsub.f32 %v652, %v786
      %v788 = vsub.f32 %v653, %v786
      %v789 = vsub.f32 %v654, %v786
      %v790 = vsub.f32 %v655, %v786
      %v791 = vsub.f32 %v656, %v786
      %v792 = vsub.f32 %v657, %v786
      %v793 = vsub.f32 %v658, %v786
      %v794 = vsub.f32 %v659, %v786
      %v795 = vperm.slane %v776, 1
      %v796 = vmul.f32 %v787, %v795
      %v797 = vmul.f32 %v788, %v795
      %v798 = vmul.f32 %v789, %v795
      %v799 = vmul.f32 %v790, %v795
      %v800 = vmul.f32 %v791, %v795
      %v801 = vmul.f32 %v792, %v795
      %v802 = vmul.f32 %v793, %v795
      %v803 = vmul.f32 %v794, %v795
      %805 = vset.pattern.permute.xlu0 1
      %806 = vperm.xlu0 %805, %v778
      %v807 = vpop.permute.xlu0 %806
      %810 = vset.pattern.permute.xlu0 1
      %811 = vperm.xlu0 %810, %v779
      %v812 = vpop.permute.xlu0 %811
      %815 = vset.pattern.permute.xlu0 1
      %816 = vperm.xlu0 %815, %v780
      %v817 = vpop.permute.xlu0 %816
      %820 = vset.pattern.permute.xlu0 1
      %821 = vperm.xlu0 %820, %v781
      %v822 = vpop.permute.xlu0 %821
      %825 = vset.pattern.permute.xlu0 1
      %826 = vperm.xlu0 %825, %v782
      %v827 = vpop.permute.xlu0 %826
      %830 = vset.pattern.permute.xlu0 1
      %831 = vperm.xlu0 %830, %v783
      %v832 = vpop.permute.xlu0 %831
      %835 = vset.pattern.permute.xlu0 1
      %836 = vperm.xlu0 %835, %v784
      %v837 = vpop.permute.xlu0 %836
      %840 = vset.pattern.permute.xlu0 1
      %841 = vperm.xlu0 %840, %v785
      %v842 = vpop.permute.xlu0 %841
      %v844 = vmul.f32 %v796, %v807
      %v845 = vmul.f32 %v797, %v812
      %v846 = vmul.f32 %v798, %v817
      %v847 = vmul.f32 %v799, %v822
      %v848 = vmul.f32 %v800, %v827
      %v849 = vmul.f32 %v801, %v832
      %v850 = vmul.f32 %v802, %v837
      %v851 = vmul.f32 %v803, %v842
      %852 = vset.pattern.permute.xlu0 2
      %853 = vperm.xlu0 %852, %v778
      %v854 = vpop.permute.xlu0 %853
      %856 = vset.pattern.permute.xlu0 2
      %857 = vperm.xlu0 %856, %v779
      %v858 = vpop.permute.xlu0 %857
      %860 = vset.pattern.permute.xlu0 2
      %861 = vperm.xlu0 %860, %v780
      %v862 = vpop.permute.xlu0 %861
      %864 = vset.pattern.permute.xlu0 2
      %865 = vperm.xlu0 %864, %v781
      %v866 = vpop.permute.xlu0 %865
      %868 = vset.pattern.permute.xlu0 2
      %869 = vperm.xlu0 %868, %v782
      %v870 = vpop.permute.xlu0 %869
      %872 = vset.pattern.permute.xlu0 2
      %873 = vperm.xlu0 %872, %v783
      %v874 = vpop.permute.xlu0 %873
      %876 = vset.pattern.permute.xlu0 2
      %877 = vperm.xlu0 %876, %v784
      %v878 = vpop.permute.xlu0 %877
      %880 = vset.pattern.permute.xlu0 2
      %881 = vperm.xlu0 %880, %v785
      %v882 = vpop.permute.xlu0 %881
      %v884 = vadd.f32 %v844, %v854
      %v885 = vadd.f32 %v845, %v858
      %v886 = vadd.f32 %v846, %v862
      %v887 = vadd.f32 %v847, %v866
      %v888 = vadd.f32 %v848, %v870
      %v889 = vadd.f32 %v849, %v874
      %v890 = vadd.f32 %v850, %v878
      %v891 = vadd.f32 %v851, %v882
      %vm892 = vcmp.gt.f32.partialorder %v884, 0.0
      %vm893 = vcmp.gt.f32.partialorder %v885, 0.0
      %vm894 = vcmp.gt.f32.partialorder %v886, 0.0
      %vm895 = vcmp.gt.f32.partialorder %v887, 0.0
      %vm896 = vcmp.gt.f32.partialorder %v888, 0.0
      %vm897 = vcmp.gt.f32.partialorder %v889, 0.0
      %vm898 = vcmp.gt.f32.partialorder %v890, 0.0
      %vm899 = vcmp.gt.f32.partialorder %v891, 0.0
      %900 = vset.pattern.permute.xlu0 3
      %901 = vperm.xlu0 %900, %v778
      %v902 = vpop.permute.xlu0 %901
      %904 = vset.pattern.permute.xlu0 3
      %905 = vperm.xlu0 %904, %v779
      %v906 = vpop.permute.xlu0 %905
      %908 = vset.pattern.permute.xlu0 3
      %909 = vperm.xlu0 %908, %v780
      %v910 = vpop.permute.xlu0 %909
      %912 = vset.pattern.permute.xlu0 3
      %913 = vperm.xlu0 %912, %v781
      %v914 = vpop.permute.xlu0 %913
      %916 = vset.pattern.permute.xlu0 3
      %917 = vperm.xlu0 %916, %v782
      %v918 = vpop.permute.xlu0 %917
      %920 = vset.pattern.permute.xlu0 3
      %921 = vperm.xlu0 %920, %v783
      %v922 = vpop.permute.xlu0 %921
      %924 = vset.pattern.permute.xlu0 3
      %925 = vperm.xlu0 %924, %v784
      %v926 = vpop.permute.xlu0 %925
      %928 = vset.pattern.permute.xlu0 3
      %929 = vperm.xlu0 %928, %v785
      %v930 = vpop.permute.xlu0 %929
      %v932 = vmul.f32 %v902, %v884
      %v933 = vmul.f32 %v906, %v885
      %v934 = vmul.f32 %v910, %v886
      %v935 = vmul.f32 %v914, %v887
      %v936 = vmul.f32 %v918, %v888
      %v937 = vmul.f32 %v922, %v889
      %v938 = vmul.f32 %v926, %v890
      %v939 = vmul.f32 %v930, %v891
      %v940 = vsel %vm892, %v884, %v932
      %v941 = vsel %vm893, %v885, %v933
      %v942 = vsel %vm894, %v886, %v934
      %v943 = vsel %vm895, %v887, %v935
      %v944 = vsel %vm896, %v888, %v936
      %v945 = vsel %vm897, %v889, %v937
      %v946 = vsel %vm898, %v890, %v938
      %v947 = vsel %vm899, %v891, %v939
      %948 = vst.msk [vmem:[%s224] sm:$0xff] %vm660, %v940
      %949 = vst.msk [vmem:[%s224 + $0x8] sm:$0xff] %vm660, %v941
      %950 = vst.msk [vmem:[%s224 + $0x10] sm:$0xff] %vm660, %v942
      %951 = vst.msk [vmem:[%s224 + $0x18] sm:$0xff] %vm660, %v943
      %952 = vst.msk [vmem:[%s224 + $0x20] sm:$0xff] %vm660, %v944
      %953 = vst.msk [vmem:[%s224 + $0x28] sm:$0xff] %vm660, %v945
      %954 = vst.msk [vmem:[%s224 + $0x30] sm:$0xff] %vm660, %v946
      %955 = vst.msk [vmem:[%s224 + $0x38] sm:$0xff] %vm660, %v947
      %p956 = scmp.lt.s32.totalorder %s16, 1
      %s957 = scalar_select %p956, %s16, 1
      %s958 = smul.addr %s957, 8
      %s959 = smul.addr %s958, 8
      %s960 = scalar_lea.vmem %s5, %s959
      // Predicated region
      $region41: #{_lambda_.49} parent=39 // pred_check
        %p961 = pneg %p144
      $region42: #{_lambda_.49} parent=39 // pred_check_branch
        %963 = sbr.rel (%p961) target = $region44
      $region43: #{_lambda_.49} parent=39 // pred_region
        _
      $region44: #{_lambda_.49} parent=39 // pred_fallthru
        _
    $region40: #{_lambda_.49} parent=5 // pred_fallthru
      _
    %p964 = scmp.le.s32.totalorder 2, %s11
    // Predicated region
    $region45: #{_lambda_.49} parent=5 // pred_check
      %p965 = pneg %p964
    $region46: #{_lambda_.49} parent=5 // pred_check_branch
      %967 = sbr.rel (%p965) target = $region48
    $region47: #{_lambda_.49} parent=5 // pred_region
      %s968 = ssub.s32 %s11, 2
      // Predicated region
      $region49: #{_lambda_.49} parent=47 // pred_check
        %p969 = pneg %p150
      $region50: #{_lambda_.49} parent=47 // pred_check_branch
        %971 = sbr.rel (%p969) target = $region52
      $region51: #{_lambda_.49} parent=47 // pred_region
        %p972 = scmp.lt.s32.totalorder %s17, 1
        %s973 = scalar_select %p972, %s17, 1
        %s974 = smul.addr %s973, 8
        %s975 = smul.addr %s974, 8
        %s976 = scalar_lea.vmem %s5, %s975
      $region52: #{_lambda_.49} parent=47 // pred_fallthru
        _
    $region48: #{_lambda_.49} parent=5 // pred_fallthru
      _
  $region6: #{_lambda_.49} parent=0 // loop_footer
    %s15 = sadd.s32 1, %s11
  $region7: #{_lambda_.49} parent=0 // loop_footer_branch
    %10 = sbr.rel target = $region3
  $region8: #{_lambda_.49} parent=0 // loop_exit
    _

</llo_original>
